<compile_context>
chip_gen: v5e
topology: v5e:2x2
jax: 0.10.0
libtpu: 0.0.40
codegen_flags: <defaults>
</compile_context>

<pallas_src>
import functools

import numpy as np
import jax
import jax.numpy as jnp
from jax.experimental import pallas as pl
from jax.experimental.pallas import tpu as pltpu

_BN_EPS = 1e-5
_LN_EPS = 1e-5
_VMEM_LIMIT = 48 * 1024 * 1024   # explicit scoped-VMEM budget (safe on v5e/v6e/v7x)


# --------------------------- in-kernel helpers ---------------------------

def _erf(x):
    # Abramowitz & Stegun 7.1.26 polynomial, |err| < 1.5e-7: only exp/mul/add,
    # so it always lowers on Mosaic (no dependence on an erf primitive).
    a1, a2, a3, a4, a5 = 0.254829592, -0.284496736, 1.421413741, -1.453152027, 1.061405429
    p = 0.3275911
    ax = jnp.abs(x)
    t = 1.0 / (1.0 + p * ax)
    poly = ((((a5 * t + a4) * t + a3) * t + a2) * t + a1) * t
    y = 1.0 - poly * jnp.exp(-ax * ax)
    return jnp.where(x >= 0.0, y, -y)


def _gelu_exact(x):
    # matches nn.GELU() (erf form) to ~1e-7
    return 0.5 * x * (1.0 + _erf(x * 0.7071067811865476))


def _layernorm(x, g, b, eps=_LN_EPS):
    mu = jnp.mean(x, axis=-1, keepdims=True)
    var = jnp.mean((x - mu) ** 2, axis=-1, keepdims=True)
    return (x - mu) * jax.lax.rsqrt(var + eps) * g + b


def _dwconv3x3_flat(x, w9, pad_ref, H, W, pad_off):
    """Depthwise 3x3 conv (stride 1, zero pad 1) on a row-major flattened image.

    x:       (N, Ch) value, N = H*W, rows ordered (h, w).
    w9:      (9, Ch) value, row index = kh*3 + kw (torch cross-correlation).
    pad_ref: VMEM scratch (pad_off + N + pad_off, Ch). Only the halo rows are
             zeroed (the interior is fully overwritten below).
    """
    N, Ch = x.shape
    pad_ref[0:pad_off, :] = jnp.zeros((pad_off, Ch), jnp.float32)
    pad_ref[pad_off + N:pad_off + N + pad_off, :] = jnp.zeros((pad_off, Ch), jnp.float32)
    pad_ref[pad_off:pad_off + N, :] = x          # aligned store (pad_off % 8 == 0)
    if (W & (W - 1)) == 0:
        col = jax.lax.broadcasted_iota(jnp.int32, (N, Ch), 0) & (W - 1)
    else:
        col = jax.lax.broadcasted_iota(jnp.int32, (N, Ch), 0) % W
    mask_l = (col != 0).astype(jnp.float32)      # valid taps for dw = -1
    mask_r = (col != W - 1).astype(jnp.float32)  # valid taps for dw = +1
    acc = jnp.zeros((N, Ch), jnp.float32)
    for dh in (-1, 0, 1):
        for dw in (-1, 0, 1):
            start = pad_off + dh * W + dw
            tap = pad_ref[start:start + N, :]
            if dw == -1:
                tap = tap * mask_l
            elif dw == 1:
                tap = tap * mask_r
            t = (dh + 1) * 3 + (dw + 1)
            acc = acc + tap * w9[t:t + 1, :]
    return acc


def _stat_slab(v):
    """Pack per-image channel sum / sum-of-squares into an (8, Ch) slab."""
    ch = v.shape[-1]
    return jnp.concatenate(
        [jnp.sum(v, axis=0, keepdims=True),
         jnp.sum(v * v, axis=0, keepdims=True),
         jnp.zeros((6, ch), jnp.float32)], axis=0)


# ------------------------------ stage 1 kernel ------------------------------

def _stage1_kernel(x_ref, lpw_ref, lpb_ref, ln1g_ref, ln1b_ref,
                   wqkv_ref, bias_ref, wp_ref, pb_ref,
                   ln2g_ref, ln2b_ref, w1_ref, b1_ref,
                   x2_ref, h1g_ref, st1_ref, pad_ref,
                   *, num_heads, head_dim, H, W, pad_off):
    N, C = x_ref.shape
    d = head_dim
    bf16 = jnp.bfloat16

    x0 = x_ref[...]
    # ---- LPU: depthwise 3x3 (+bias, no activation) + residual ----
    lpu = _dwconv3x3_flat(x0, lpw_ref[...], pad_ref, H, W, pad_off) + lpb_ref[...]
    x1 = x0 + lpu

    # ---- LayerNorm 1 ----
    n1 = _layernorm(x1, ln1g_ref[...], ln1b_ref[...]).astype(bf16)

    # ---- LMHSA (sr_ratio = 1): fused Q|K|V projection (qk scale folded in Wq) ----
    qkv = jnp.dot(n1, wqkv_ref[...], preferred_element_type=jnp.float32)    # (N, 3C)
    qkv_b = qkv.astype(bf16)                          # single bf16 cast for head loop
    bias = bias_ref[...].astype(jnp.float32)          # (N, N), shared across heads

    heads = []
    for h in range(num_heads):
        qh = qkv_b[:, h * d:(h + 1) * d]
        kh = qkv_b[:, C + h * d:C + (h + 1) * d]
        vh = qkv_b[:, 2 * C + h * d:2 * C + (h + 1) * d]
        s = jax.lax.dot_general(qh, kh, (((1,), (1,)), ((), ())),
                                preferred_element_type=jnp.float32) + bias
        s = s - jnp.max(s, axis=-1, keepdims=True)
        p = jnp.exp(s)
        p = p / jnp.sum(p, axis=-1, keepdims=True)    # exact softmax divide
        heads.append(jnp.dot(p.astype(bf16), vh, preferred_element_type=jnp.float32))
    o = jnp.concatenate(heads, axis=-1)               # (N, C), head-major (torch reshape)

    # single full-width output projection (K = C) instead of num_heads K=d matmuls
    attn = jnp.dot(o.astype(bf16), wp_ref[...],
                   preferred_element_type=jnp.float32) + pb_ref[...]
    x2 = x1 + attn
    x2_ref[...] = x2

    # ---- LayerNorm 2 + IRFFN 1x1 conv + exact GELU (BN1 applied in stage 2a) ----
    n2 = _layernorm(x2, ln2g_ref[...], ln2b_ref[...])
    h1 = jnp.dot(n2.astype(bf16), w1_ref[...],
                 preferred_element_type=jnp.float32) + b1_ref[...]
    h1 = _gelu_exact(h1)
    h1g_ref[...] = h1.astype(h1g_ref.dtype)           # bf16 inter-stage storage
    st1_ref[...] = _stat_slab(h1)                      # BN1 partial stats (f32)


# ------------------------------ stage 2a kernel ------------------------------

def _stage2a_kernel(h1g_ref, a1_ref, c1_ref, dww_ref, dwb_ref,
                    act_ref, st2_ref, pad_ref, *, H, W, pad_off):
    # BN1 applied as a precombined per-channel affine
    h1 = h1g_ref[...].astype(jnp.float32) * a1_ref[...] + c1_ref[...]
    conv = _dwconv3x3_flat(h1, dww_ref[...], pad_ref, H, W, pad_off) + dwb_ref[...]
    act = _gelu_exact(conv)
    act_ref[...] = act.astype(act_ref.dtype)           # bf16 inter-stage storage
    st2_ref[...] = _stat_slab(act)                      # BN2 partial stats


# ------------------------------ stage 2b kernel ------------------------------

def _stage2b_kernel(h1g_ref, act_ref, a1_ref, c1_ref, a2_ref, c2_ref,
                    w2_ref, b2_ref, out_ref, st3_ref):
    h1 = h1g_ref[...].astype(jnp.float32) * a1_ref[...] + c1_ref[...]   # BN1 applied
    a = act_ref[...].astype(jnp.float32) * a2_ref[...] + c2_ref[...]    # BN2 applied
    mid = (h1 + a).astype(jnp.bfloat16)
    out = jnp.dot(mid, w2_ref[...], preferred_element_type=jnp.float32) + b2_ref[...]
    out_ref[...] = out
    st3_ref[...] = _stat_slab(out)                       # BN3 partial stats


# ----------------------------- glue / wrapper -----------------------------

def relative_indices(fsize):
    idx = np.array([[x, y] for x in range(fsize) for y in range(fsize)])
    dist = idx[None, :, :] - idx[:, None, :] + fsize - 1
    return dist  # (fsize^2, fsize^2, 2), host-side numpy


def init_params(key, dim, num_heads, ffn_ratio, features_size):
    del num_heads
    hidden = int(ffn_ratio * dim)
    keys = jax.random.split(key, 24)
    it = iter(keys)

    def nrm(shape, s=0.1):
        return s * jax.random.normal(next(it), shape, jnp.float32)

    return dict(
        ln1_g=1.0 + nrm((dim,)), ln1_b=nrm((dim,)),
        ln2_g=1.0 + nrm((dim,)), ln2_b=nrm((dim,)),
        lpu_w=nrm((dim, 3, 3)), lpu_b=nrm((dim,)),
        q_w=nrm((dim, dim)), kv_w=nrm((2 * dim, dim)),
        proj_w=nrm((dim, dim)), proj_b=nrm((dim,)),
        # TODO(synk): trunc_normal_ init approximated by plain normal (synthetic values).
        pos_emb=0.2 * jax.random.normal(
            next(it), (2 * features_size - 1, 2 * features_size - 1), jnp.float32),
        ir1_w=nrm((hidden, dim)), ir1_b=nrm((hidden,)),
        ir1_bn_g=1.0 + nrm((hidden,)), ir1_bn_b=nrm((hidden,)),
        ir_dw_w=nrm((hidden, 3, 3)), ir_dw_b=nrm((hidden,)),
        ir_act_bn_g=1.0 + nrm((hidden,)), ir_act_bn_b=nrm((hidden,)),
        ir2_w=nrm((dim, hidden)), ir2_b=nrm((dim,)),
        ir2_bn_g=1.0 + nrm((dim,)), ir2_bn_b=nrm((dim,)),
    )


def _bn_affine(stat_slab, gamma, beta, rows):
    """Combine per-image (sum, sum^2) partials into the training-mode BN affine."""
    s = jnp.sum(stat_slab[:, 0, :], axis=0)
    q = jnp.sum(stat_slab[:, 1, :], axis=0)
    mean = s / rows
    var = q / rows - mean * mean          # biased variance, as torch BN training mode
    a = gamma * jax.lax.rsqrt(var + _BN_EPS)
    c = beta - mean * a
    return a.reshape(1, -1), c.reshape(1, -1)


def cmt_layer_forward(x_nchw, params, *, num_heads, features_size):
    x_nchw = x_nchw.astype(jnp.float32)
    B, C, H, W = x_nchw.shape
    N = H * W
    d = C // num_heads
    hidden = params['ir1_w'].shape[0]
    scale = float(d) ** -0.5
    assert N == features_size * features_size, \
        "relative-position bias assumes H*W == features_size**2"

    pad_off = ((W + 1 + 7) // 8) * 8          # sublane-aligned halo for the flat dw-conv
    pad_rows = N + 2 * pad_off
    bf16 = jnp.bfloat16

    # channels-last, flattened rows (B*H*W, C): C sits on the lane axis
    xf = jnp.transpose(x_nchw, (0, 2, 3, 1)).reshape(B * N, C)

    # ---- parameter prep (layout + bf16 MXU operands), done once per call ----
    lpu_w9 = jnp.transpose(params['lpu_w'].reshape(C, 9))          # (9, C)
    dw_w9 = jnp.transpose(params['ir_dw_w'].reshape(hidden, 9))    # (9, hidden)
    wq_t = jnp.transpose(params['q_w']) * scale                    # qk scale folded in
    # einops '(dim h l)' split (dim slowest, l fastest): permute kv out-features so the
    # projection emerges head-major as [k_h0..k_h{nh-1} | v_h0..v_h{nh-1}]
    k_rows = np.array([dd * 2 * num_heads + h * 2
                       for h in range(num_heads) for dd in range(d)])
    perm = np.concatenate([k_rows, k_rows + 1])
    wkv_t = jnp.transpose(params['kv_w'][perm, :])                 # (C, 2C)
    wqkv = jnp.concatenate([wq_t, wkv_t], axis=1).astype(bf16)     # fused (C, 3C) weight
    wp_t = jnp.transpose(params['proj_w']).astype(bf16)            # (C, C)
    w1_t = jnp.transpose(params['ir1_w']).astype(bf16)             # (C, hidden)
    w2_t = jnp.transpose(params['ir2_w']).astype(bf16)             # (hidden, C)

    rel = relative_indices(features_size)
    # shared across heads in the reference; stored bf16 to halve resident VMEM
    pos_bias = params['pos_emb'][rel[..., 0], rel[..., 1]][:, :N].astype(bf16)

    row = lambda v: v.reshape(1, -1)
    shared = lambda b: (0, 0)
    cparams = pltpu.CompilerParams(dimension_semantics=("parallel",),
                                   vmem_limit_bytes=_VMEM_LIMIT)

    # -------- stage 1: LPU + LN1 + LMHSA + LN2 + 1x1-conv/GELU + BN1 partials --------
    stage1 = functools.partial(_stage1_kernel, num_heads=num_heads, head_dim=d,
                               H=H, W=W, pad_off=pad_off)
    x2, h1g, st1 = pl.pallas_call(
        stage1,
        out_shape=(jax.ShapeDtypeStruct((B * N, C), jnp.float32),
                   jax.ShapeDtypeStruct((B * N, hidden), bf16),
                   jax.ShapeDtypeStruct((B * 8, hidden), jnp.float32)),
        grid=(B,),
        in_specs=[
            pl.BlockSpec((N, C), lambda b: (b, 0)),        # x (per image)
            pl.BlockSpec((9, C), shared),                  # LPU dw weight
            pl.BlockSpec((1, C), shared),                  # LPU dw bias
            pl.BlockSpec((1, C), shared),                  # LN1 gamma
            pl.BlockSpec((1, C), shared),                  # LN1 beta
            pl.BlockSpec((C, 3 * C), shared),              # fused [Wq*scale | Wkv]^T (bf16)
            pl.BlockSpec((N, N), shared),                  # relative-position bias (bf16)
            pl.BlockSpec((C, C), shared),                  # Wproj^T (bf16)
            pl.BlockSpec((1, C), shared),                  # proj bias
            pl.BlockSpec((1, C), shared),                  # LN2 gamma
            pl.BlockSpec((1, C), shared),                  # LN2 beta
            pl.BlockSpec((C, hidden), shared),             # W1^T (bf16)
            pl.BlockSpec((1, hidden), shared),             # b1
        ],
        out_specs=(pl.BlockSpec((N, C), lambda b: (b, 0)),
                   pl.BlockSpec((N, hidden), lambda b: (b, 0)),
                   pl.BlockSpec((8, hidden), lambda b: (b, 0))),
        scratch_shapes=[pltpu.VMEM((pad_rows, C), jnp.float32)],
        compiler_params=cparams,
    )(xf, lpu_w9, row(params['lpu_b']), row(params['ln1_g']), row(params['ln1_b']),
      wqkv, pos_bias, wp_t, row(params['proj_b']),
      row(params['ln2_g']), row(params['ln2_b']), w1_t, row(params['ir1_b']))

    rows = float(B * N)
    a1, c1 = _bn_affine(st1.reshape(B, 8, hidden),
                        params['ir1_bn_g'], params['ir1_bn_b'], rows)

    # -------- stage 2a: BN1 apply + depthwise 3x3 + GELU + BN2 partials --------
    stage2a = functools.partial(_stage2a_kernel, H=H, W=W, pad_off=pad_off)
    act, st2 = pl.pallas_call(
        stage2a,
        out_shape=(jax.ShapeDtypeStruct((B * N, hidden), bf16),
                   jax.ShapeDtypeStruct((B * 8, hidden), jnp.float32)),
        grid=(B,),
        in_specs=[
            pl.BlockSpec((N, hidden), lambda b: (b, 0)),   # h1g (bf16, per image)
            pl.BlockSpec((1, hidden), shared),             # BN1 scale
            pl.BlockSpec((1, hidden), shared),             # BN1 shift
            pl.BlockSpec((9, hidden), shared),             # dw conv weight
            pl.BlockSpec((1, hidden), shared),             # dw conv bias
        ],
        out_specs=(pl.BlockSpec((N, hidden), lambda b: (b, 0)),
                   pl.BlockSpec((8, hidden), lambda b: (b, 0))),
        scratch_shapes=[pltpu.VMEM((pad_rows, hidden), jnp.float32)],
        compiler_params=cparams,
    )(h1g, a1, c1, dw_w9, row(params['ir_dw_b']))

    a2, c2 = _bn_affine(st2.reshape(B, 8, hidden),
                        params['ir_act_bn_g'], params['ir_act_bn_b'], rows)

    # -------- stage 2b: BN1/BN2 apply + residual + 1x1 conv + BN3 partials --------
    out_pre, st3 = pl.pallas_call(
        _stage2b_kernel,
        out_shape=(jax.ShapeDtypeStruct((B * N, C), jnp.float32),
                   jax.ShapeDtypeStruct((B * 8, C), jnp.float32)),
        grid=(B,),
        in_specs=[
            pl.BlockSpec((N, hidden), lambda b: (b, 0)),   # h1g (bf16)
            pl.BlockSpec((N, hidden), lambda b: (b, 0)),   # act (bf16)
            pl.BlockSpec((1, hidden), shared),             # BN1 scale
            pl.BlockSpec((1, hidden), shared),             # BN1 shift
            pl.BlockSpec((1, hidden), shared),             # BN2 scale
            pl.BlockSpec((1, hidden), shared),             # BN2 shift
            pl.BlockSpec((hidden, C), shared),             # W2^T (bf16)
            pl.BlockSpec((1, C), shared),                  # b2
        ],
        out_specs=(pl.BlockSpec((N, C), lambda b: (b, 0)),
                   pl.BlockSpec((8, C), lambda b: (b, 0))),
        compiler_params=cparams,
    )(h1g, act, a1, c1, a2, c2, w2_t, row(params['ir2_b']))

    a3, c3 = _bn_affine(st3.reshape(B, 8, C),
                        params['ir2_bn_g'], params['ir2_bn_b'], rows)

    # TODO(synk): final BN3 affine + residual is a trivial elementwise op left to
    # XLA (it fuses with the NHWC->NCHW transpose) rather than a 4th pallas_call.
    y = x2 + out_pre * a3 + c3
    return jnp.transpose(y.reshape(B, H, W, C), (0, 3, 1, 2))  # back to NCHW


if __name__ == "__main__":
    B, C, H, W = 2, 32, 8, 8
    num_heads = 8
    features_size = 8  # must equal H (= W) for the relative-position bias

    key = jax.random.PRNGKey(0)
    kx, kp = jax.random.split(key)
    x = jax.random.normal(kx, (B, C, H, W), jnp.float32)
    params = init_params(kp, C, num_heads, 4.0, features_size)

    fwd = jax.jit(functools.partial(cmt_layer_forward,
                                    num_heads=num_heads,
                                    features_size=features_size))
    y = jax.block_until_ready(fwd(x, params))
    assert y.shape == (B, C, H, W)
    assert bool(jnp.all(jnp.isfinite(y)))
    print("KERNEL_OK")
</pallas_src>

<mosaic_0001>
module attributes {stable_mosaic.version = 11 : i64} {
  func.func @_stage2b_kernel(%arg0: i32, %arg1: memref<64x128xbf16, #tpu.memory_space<vmem>>, %arg2: memref<64x128xbf16, #tpu.memory_space<vmem>>, %arg3: memref<1x128xf32, #tpu.memory_space<vmem>>, %arg4: memref<1x128xf32, #tpu.memory_space<vmem>>, %arg5: memref<1x128xf32, #tpu.memory_space<vmem>>, %arg6: memref<1x128xf32, #tpu.memory_space<vmem>>, %arg7: memref<128x32xbf16, #tpu.memory_space<vmem>>, %arg8: memref<1x32xf32, #tpu.memory_space<vmem>>, %arg9: memref<64x32xf32, #tpu.memory_space<vmem>>, %arg10: memref<8x32xf32, #tpu.memory_space<vmem>>) attributes {dimension_semantics = [#tpu.dimension_semantics<parallel>], iteration_bounds = array<i64: 2>, scalar_prefetch = 0 : i64, scratch_operands = 0 : i64, tpu.core_type = #tpu.core_type<tc>, window_params = [{transform_indices = @transform_0, window_bounds = array<i64: 64, 128>}, {transform_indices = @transform_1, window_bounds = array<i64: 64, 128>}, {pipeline_mode = #tpu.pipeline_mode<synchronous>, transform_indices = @transform_2, window_bounds = array<i64: 1, 128>}, {pipeline_mode = #tpu.pipeline_mode<synchronous>, transform_indices = @transform_3, window_bounds = array<i64: 1, 128>}, {pipeline_mode = #tpu.pipeline_mode<synchronous>, transform_indices = @transform_4, window_bounds = array<i64: 1, 128>}, {pipeline_mode = #tpu.pipeline_mode<synchronous>, transform_indices = @transform_5, window_bounds = array<i64: 1, 128>}, {pipeline_mode = #tpu.pipeline_mode<synchronous>, transform_indices = @transform_6, window_bounds = array<i64: 128, 32>}, {pipeline_mode = #tpu.pipeline_mode<synchronous>, transform_indices = @transform_7, window_bounds = array<i64: 1, 32>}, {transform_indices = @transform_8, window_bounds = array<i64: 64, 32>}, {transform_indices = @transform_9, window_bounds = array<i64: 8, 32>}]} {
    %c0 = arith.constant 0 : index
    %c0_0 = arith.constant 0 : index
    %0 = vector.load %arg1[%c0, %c0_0] : memref<64x128xbf16, #tpu.memory_space<vmem>>, vector<64x128xbf16>
    %1 = arith.extf %0 : vector<64x128xbf16> to vector<64x128xf32>
    %c0_1 = arith.constant 0 : index
    %c0_2 = arith.constant 0 : index
    %2 = vector.load %arg3[%c0_1, %c0_2] : memref<1x128xf32, #tpu.memory_space<vmem>>, vector<1x128xf32>
    %3 = vector.broadcast %2 : vector<1x128xf32> to vector<64x128xf32>
    %4 = arith.mulf %1, %3 : vector<64x128xf32>
    %c0_3 = arith.constant 0 : index
    %c0_4 = arith.constant 0 : index
    %5 = vector.load %arg4[%c0_3, %c0_4] : memref<1x128xf32, #tpu.memory_space<vmem>>, vector<1x128xf32>
    %6 = vector.broadcast %5 : vector<1x128xf32> to vector<64x128xf32>
    %7 = arith.addf %4, %6 : vector<64x128xf32>
    %c0_5 = arith.constant 0 : index
    %c0_6 = arith.constant 0 : index
    %8 = vector.load %arg2[%c0_5, %c0_6] : memref<64x128xbf16, #tpu.memory_space<vmem>>, vector<64x128xbf16>
    %9 = arith.extf %8 : vector<64x128xbf16> to vector<64x128xf32>
    %c0_7 = arith.constant 0 : index
    %c0_8 = arith.constant 0 : index
    %10 = vector.load %arg5[%c0_7, %c0_8] : memref<1x128xf32, #tpu.memory_space<vmem>>, vector<1x128xf32>
    %11 = vector.broadcast %10 : vector<1x128xf32> to vector<64x128xf32>
    %12 = arith.mulf %9, %11 : vector<64x128xf32>
    %c0_9 = arith.constant 0 : index
    %c0_10 = arith.constant 0 : index
    %13 = vector.load %arg6[%c0_9, %c0_10] : memref<1x128xf32, #tpu.memory_space<vmem>>, vector<1x128xf32>
    %14 = vector.broadcast %13 : vector<1x128xf32> to vector<64x128xf32>
    %15 = arith.addf %12, %14 : vector<64x128xf32>
    %16 = arith.addf %7, %15 : vector<64x128xf32>
    %17 = arith.truncf %16 : vector<64x128xf32> to vector<64x128xbf16>
    %c0_11 = arith.constant 0 : index
    %c0_12 = arith.constant 0 : index
    %18 = vector.load %arg7[%c0_11, %c0_12] : memref<128x32xbf16, #tpu.memory_space<vmem>>, vector<128x32xbf16>
    %cst = arith.constant dense<0.000000e+00> : vector<64x32xf32>
    %19 = tpu.matmul %17, %18, %cst {dimension_numbers = #tpu.dot_dimension_numbers<[1], [0], [0], [1], [0, 0, 1, 1], [], []>} : vector<64x128xbf16>, vector<128x32xbf16>, vector<64x32xf32> -> vector<64x32xf32>
    %c0_13 = arith.constant 0 : index
    %c0_14 = arith.constant 0 : index
    %20 = vector.load %arg8[%c0_13, %c0_14] : memref<1x32xf32, #tpu.memory_space<vmem>>, vector<1x32xf32>
    %21 = vector.broadcast %20 : vector<1x32xf32> to vector<64x32xf32>
    %22 = arith.addf %19, %21 : vector<64x32xf32>
    %c0_15 = arith.constant 0 : index
    %c0_16 = arith.constant 0 : index
    %23 = vector.load %arg9[%c0_15, %c0_16] : memref<64x32xf32, #tpu.memory_space<vmem>>, vector<64x32xf32>
    tpu.vector_store %arg9[%c0_15, %c0_16], %22 {strides = array<i32>} : memref<64x32xf32, #tpu.memory_space<vmem>>, vector<64x32xf32>,
    %cst_17 = arith.constant dense<0.000000e+00> : vector<32xf32>
    %24 = vector.multi_reduction <add>, %22, %cst_17 [0] : vector<64x32xf32> to vector<32xf32>
    %25 = vector.shape_cast %24 : vector<32xf32> to vector<1x32xf32>
    %26 = arith.mulf %22, %22 : vector<64x32xf32>
    %cst_18 = arith.constant dense<0.000000e+00> : vector<32xf32>
    %27 = vector.multi_reduction <add>, %26, %cst_18 [0] : vector<64x32xf32> to vector<32xf32>
    %28 = vector.shape_cast %27 : vector<32xf32> to vector<1x32xf32>
    %cst_19 = arith.constant 0.000000e+00 : f32
    %29 = vector.broadcast %cst_19 : f32 to vector<6x32xf32>
    %30 = tpu.concatenate %25, %28, %29 in 0 : vector<1x32xf32>, vector<1x32xf32>, vector<6x32xf32> -> vector<8x32xf32>
    %c0_20 = arith.constant 0 : index
    %c0_21 = arith.constant 0 : index
    %31 = vector.load %arg10[%c0_20, %c0_21] : memref<8x32xf32, #tpu.memory_space<vmem>>, vector<8x32xf32>
    tpu.vector_store %arg10[%c0_20, %c0_21], %30 {strides = array<i32>} : memref<8x32xf32, #tpu.memory_space<vmem>>, vector<8x32xf32>,
    return
  }
  func.func @transform_0(%arg0: i32) -> (i32, i32) {
    %c0_i32 = arith.constant 0 : i32
    %c0_i32_0 = arith.constant 0 : i32
    return %arg0, %c0_i32 : i32, i32
  }
  func.func @transform_1(%arg0: i32) -> (i32, i32) {
    %c0_i32 = arith.constant 0 : i32
    %c0_i32_0 = arith.constant 0 : i32
    return %arg0, %c0_i32 : i32, i32
  }
  func.func @transform_2(%arg0: i32) -> (i32, i32) {
    %c0_i32 = arith.constant 0 : i32
    %c0_i32_0 = arith.constant 0 : i32
    %c0_i32_1 = arith.constant 0 : i32
    return %c0_i32, %c0_i32_0 : i32, i32
  }
  func.func @transform_3(%arg0: i32) -> (i32, i32) {
    %c0_i32 = arith.constant 0 : i32
    %c0_i32_0 = arith.constant 0 : i32
    %c0_i32_1 = arith.constant 0 : i32
    return %c0_i32, %c0_i32_0 : i32, i32
  }
  func.func @transform_4(%arg0: i32) -> (i32, i32) {
    %c0_i32 = arith.constant 0 : i32
    %c0_i32_0 = arith.constant 0 : i32
    %c0_i32_1 = arith.constant 0 : i32
    return %c0_i32, %c0_i32_0 : i32, i32
  }
  func.func @transform_5(%arg0: i32) -> (i32, i32) {
    %c0_i32 = arith.constant 0 : i32
    %c0_i32_0 = arith.constant 0 : i32
    %c0_i32_1 = arith.constant 0 : i32
    return %c0_i32, %c0_i32_0 : i32, i32
  }
  func.func @transform_6(%arg0: i32) -> (i32, i32) {
    %c0_i32 = arith.constant 0 : i32
    %c0_i32_0 = arith.constant 0 : i32
    %c0_i32_1 = arith.constant 0 : i32
    return %c0_i32, %c0_i32_0 : i32, i32
  }
  func.func @transform_7(%arg0: i32) -> (i32, i32) {
    %c0_i32 = arith.constant 0 : i32
    %c0_i32_0 = arith.constant 0 : i32
    %c0_i32_1 = arith.constant 0 : i32
    return %c0_i32, %c0_i32_0 : i32, i32
  }
  func.func @transform_8(%arg0: i32) -> (i32, i32) {
    %c0_i32 = arith.constant 0 : i32
    %c0_i32_0 = arith.constant 0 : i32
    return %arg0, %c0_i32 : i32, i32
  }
  func.func @transform_9(%arg0: i32) -> (i32, i32) {
    %c0_i32 = arith.constant 0 : i32
    %c0_i32_0 = arith.constant 0 : i32
    return %arg0, %c0_i32 : i32, i32
  }
}

module attributes {stable_mosaic.version = 11 : i64} {
  func.func @_stage1_kernel(%arg0: i32, %arg1: memref<64x32xf32, #tpu.memory_space<vmem>>, %arg2: memref<9x32xf32, #tpu.memory_space<vmem>>, %arg3: memref<1x32xf32, #tpu.memory_space<vmem>>, %arg4: memref<1x32xf32, #tpu.memory_space<vmem>>, %arg5: memref<1x32xf32, #tpu.memory_space<vmem>>, %arg6: memref<32x96xbf16, #tpu.memory_space<vmem>>, %arg7: memref<64x64xbf16, #tpu.memory_space<vmem>>, %arg8: memref<32x32xbf16, #tpu.memory_space<vmem>>, %arg9: memref<1x32xf32, #tpu.memory_space<vmem>>, %arg10: memref<1x32xf32, #tpu.memory_space<vmem>>, %arg11: memref<1x32xf32, #tpu.memory_space<vmem>>, %arg12: memref<32x128xbf16, #tpu.memory_space<vmem>>, %arg13: memref<1x128xf32, #tpu.memory_space<vmem>>, %arg14: memref<64x32xf32, #tpu.memory_space<vmem>>, %arg15: memref<64x128xbf16, #tpu.memory_space<vmem>>, %arg16: memref<8x128xf32, #tpu.memory_space<vmem>>, %arg17: memref<96x32xf32, #tpu.memory_space<vmem>>) attributes {dimension_semantics = [#tpu.dimension_semantics<parallel>], iteration_bounds = array<i64: 2>, scalar_prefetch = 0 : i64, scratch_operands = 1 : i64, tpu.core_type = #tpu.core_type<tc>, window_params = [{transform_indices = @transform_0, window_bounds = array<i64: 64, 32>}, {pipeline_mode = #tpu.pipeline_mode<synchronous>, transform_indices = @transform_1, window_bounds = array<i64: 9, 32>}, {pipeline_mode = #tpu.pipeline_mode<synchronous>, transform_indices = @transform_2, window_bounds = array<i64: 1, 32>}, {pipeline_mode = #tpu.pipeline_mode<synchronous>, transform_indices = @transform_3, window_bounds = array<i64: 1, 32>}, {pipeline_mode = #tpu.pipeline_mode<synchronous>, transform_indices = @transform_4, window_bounds = array<i64: 1, 32>}, {pipeline_mode = #tpu.pipeline_mode<synchronous>, transform_indices = @transform_5, window_bounds = array<i64: 32, 96>}, {pipeline_mode = #tpu.pipeline_mode<synchronous>, transform_indices = @transform_6, window_bounds = array<i64: 64, 64>}, {pipeline_mode = #tpu.pipeline_mode<synchronous>, transform_indices = @transform_7, window_bounds = array<i64: 32, 32>}, {pipeline_mode = #tpu.pipeline_mode<synchronous>, transform_indices = @transform_8, window_bounds = array<i64: 1, 32>}, {pipeline_mode = #tpu.pipeline_mode<synchronous>, transform_indices = @transform_9, window_bounds = array<i64: 1, 32>}, {pipeline_mode = #tpu.pipeline_mode<synchronous>, transform_indices = @transform_10, window_bounds = array<i64: 1, 32>}, {pipeline_mode = #tpu.pipeline_mode<synchronous>, transform_indices = @transform_11, window_bounds = array<i64: 32, 128>}, {pipeline_mode = #tpu.pipeline_mode<synchronous>, transform_indices = @transform_12, window_bounds = array<i64: 1, 128>}, {transform_indices = @transform_13, window_bounds = array<i64: 64, 32>}, {transform_indices = @transform_14, window_bounds = array<i64: 64, 128>}, {transform_indices = @transform_15, window_bounds = array<i64: 8, 128>}]} {
    %c0 = arith.constant 0 : index
    %c0_0 = arith.constant 0 : index
    %0 = vector.load %arg1[%c0, %c0_0] : memref<64x32xf32, #tpu.memory_space<vmem>>, vector<64x32xf32>
    %c0_1 = arith.constant 0 : index
    %c0_2 = arith.constant 0 : index
    %1 = vector.load %arg2[%c0_1, %c0_2] : memref<9x32xf32, #tpu.memory_space<vmem>>, vector<9x32xf32>
    %cst = arith.constant 0.000000e+00 : f32
    %2 = vector.broadcast %cst : f32 to vector<16x32xf32>
    %c0_3 = arith.constant 0 : index
    %c0_4 = arith.constant 0 : index
    %3 = vector.load %arg17[%c0_3, %c0_4] : memref<96x32xf32, #tpu.memory_space<vmem>>, vector<16x32xf32>
    tpu.vector_store %arg17[%c0_3, %c0_4], %2 {strides = array<i32>} : memref<96x32xf32, #tpu.memory_space<vmem>>, vector<16x32xf32>,
    %cst_5 = arith.constant 0.000000e+00 : f32
    %4 = vector.broadcast %cst_5 : f32 to vector<16x32xf32>
    %c80 = arith.constant 80 : index
    %c0_6 = arith.constant 0 : index
    %5 = vector.load %arg17[%c80, %c0_6] : memref<96x32xf32, #tpu.memory_space<vmem>>, vector<16x32xf32>
    tpu.vector_store %arg17[%c80, %c0_6], %4 {strides = array<i32>} : memref<96x32xf32, #tpu.memory_space<vmem>>, vector<16x32xf32>,
    %c16 = arith.constant 16 : index
    %c0_7 = arith.constant 0 : index
    %6 = vector.load %arg17[%c16, %c0_7] : memref<96x32xf32, #tpu.memory_space<vmem>>, vector<64x32xf32>
    tpu.vector_store %arg17[%c16, %c0_7], %0 {strides = array<i32>} : memref<96x32xf32, #tpu.memory_space<vmem>>, vector<64x32xf32>,
    %7 = tpu.iota {dimensions = array<i32: 0>} : vector<64x32xi32>
    %c7_i32 = arith.constant 7 : i32
    %8 = vector.broadcast %c7_i32 : i32 to vector<64x32xi32>
    %9 = arith.andi %7, %8 : vector<64x32xi32>
    %c0_i32 = arith.constant 0 : i32
    %10 = vector.broadcast %c0_i32 : i32 to vector<64x32xi32>
    %11 = arith.cmpi ne, %9, %10 : vector<64x32xi32>
    %12 = arith.extui %11 : vector<64x32xi1> to vector<64x32xi32>
    %13 = arith.sitofp %12 : vector<64x32xi32> to vector<64x32xf32>
    %c7_i32_8 = arith.constant 7 : i32
    %14 = vector.broadcast %c7_i32_8 : i32 to vector<64x32xi32>
    %15 = arith.cmpi ne, %9, %14 : vector<64x32xi32>
    %16 = arith.extui %15 : vector<64x32xi1> to vector<64x32xi32>
    %17 = arith.sitofp %16 : vector<64x32xi32> to vector<64x32xf32>
    %cst_9 = arith.constant 0.000000e+00 : f32
    %18 = vector.broadcast %cst_9 : f32 to vector<64x32xf32>
    %c7 = arith.constant 7 : index
    %c0_10 = arith.constant 0 : index
    %19 = vector.load %arg17[%c7, %c0_10] : memref<96x32xf32, #tpu.memory_space<vmem>>, vector<64x32xf32>
    %20 = arith.mulf %19, %13 : vector<64x32xf32>
    %21 = vector.extract_strided_slice %1 {offsets = [0, 0], sizes = [1, 32], strides = [1, 1]} : vector<9x32xf32> to vector<1x32xf32>
    %22 = vector.broadcast %21 : vector<1x32xf32> to vector<64x32xf32>
    %23 = arith.mulf %20, %22 : vector<64x32xf32>
    %24 = arith.addf %18, %23 : vector<64x32xf32>
    %c8 = arith.constant 8 : index
    %c0_11 = arith.constant 0 : index
    %25 = vector.load %arg17[%c8, %c0_11] : memref<96x32xf32, #tpu.memory_space<vmem>>, vector<64x32xf32>
    %26 = vector.extract_strided_slice %1 {offsets = [1, 0], sizes = [1, 32], strides = [1, 1]} : vector<9x32xf32> to vector<1x32xf32>
    %27 = vector.broadcast %26 : vector<1x32xf32> to vector<64x32xf32>
    %28 = arith.mulf %25, %27 : vector<64x32xf32>
    %29 = arith.addf %24, %28 : vector<64x32xf32>
    %c9 = arith.constant 9 : index
    %c0_12 = arith.constant 0 : index
    %30 = vector.load %arg17[%c9, %c0_12] : memref<96x32xf32, #tpu.memory_space<vmem>>, vector<64x32xf32>
    %31 = arith.mulf %30, %17 : vector<64x32xf32>
    %32 = vector.extract_strided_slice %1 {offsets = [2, 0], sizes = [1, 32], strides = [1, 1]} : vector<9x32xf32> to vector<1x32xf32>
    %33 = vector.broadcast %32 : vector<1x32xf32> to vector<64x32xf32>
    %34 = arith.mulf %31, %33 : vector<64x32xf32>
    %35 = arith.addf %29, %34 : vector<64x32xf32>
    %c15 = arith.constant 15 : index
    %c0_13 = arith.constant 0 : index
    %36 = vector.load %arg17[%c15, %c0_13] : memref<96x32xf32, #tpu.memory_space<vmem>>, vector<64x32xf32>
    %37 = arith.mulf %36, %13 : vector<64x32xf32>
    %38 = vector.extract_strided_slice %1 {offsets = [3, 0], sizes = [1, 32], strides = [1, 1]} : vector<9x32xf32> to vector<1x32xf32>
    %39 = vector.broadcast %38 : vector<1x32xf32> to vector<64x32xf32>
    %40 = arith.mulf %37, %39 : vector<64x32xf32>
    %41 = arith.addf %35, %40 : vector<64x32xf32>
    %c16_14 = arith.constant 16 : index
    %c0_15 = arith.constant 0 : index
    %42 = vector.load %arg17[%c16_14, %c0_15] : memref<96x32xf32, #tpu.memory_space<vmem>>, vector<64x32xf32>
    %43 = vector.extract_strided_slice %1 {offsets = [4, 0], sizes = [1, 32], strides = [1, 1]} : vector<9x32xf32> to vector<1x32xf32>
    %44 = vector.broadcast %43 : vector<1x32xf32> to vector<64x32xf32>
    %45 = arith.mulf %42, %44 : vector<64x32xf32>
    %46 = arith.addf %41, %45 : vector<64x32xf32>
    %c17 = arith.constant 17 : index
    %c0_16 = arith.constant 0 : index
    %47 = vector.load %arg17[%c17, %c0_16] : memref<96x32xf32, #tpu.memory_space<vmem>>, vector<64x32xf32>
    %48 = arith.mulf %47, %17 : vector<64x32xf32>
    %49 = vector.extract_strided_slice %1 {offsets = [5, 0], sizes = [1, 32], strides = [1, 1]} : vector<9x32xf32> to vector<1x32xf32>
    %50 = vector.broadcast %49 : vector<1x32xf32> to vector<64x32xf32>
    %51 = arith.mulf %48, %50 : vector<64x32xf32>
    %52 = arith.addf %46, %51 : vector<64x32xf32>
    %c23 = arith.constant 23 : index
    %c0_17 = arith.constant 0 : index
    %53 = vector.load %arg17[%c23, %c0_17] : memref<96x32xf32, #tpu.memory_space<vmem>>, vector<64x32xf32>
    %54 = arith.mulf %53, %13 : vector<64x32xf32>
    %55 = vector.extract_strided_slice %1 {offsets = [6, 0], sizes = [1, 32], strides = [1, 1]} : vector<9x32xf32> to vector<1x32xf32>
    %56 = vector.broadcast %55 : vector<1x32xf32> to vector<64x32xf32>
    %57 = arith.mulf %54, %56 : vector<64x32xf32>
    %58 = arith.addf %52, %57 : vector<64x32xf32>
    %c24 = arith.constant 24 : index
    %c0_18 = arith.constant 0 : index
    %59 = vector.load %arg17[%c24, %c0_18] : memref<96x32xf32, #tpu.memory_space<vmem>>, vector<64x32xf32>
    %60 = vector.extract_strided_slice %1 {offsets = [7, 0], sizes = [1, 32], strides = [1, 1]} : vector<9x32xf32> to vector<1x32xf32>
    %61 = vector.broadcast %60 : vector<1x32xf32> to vector<64x32xf32>
    %62 = arith.mulf %59, %61 : vector<64x32xf32>
    %63 = arith.addf %58, %62 : vector<64x32xf32>
    %c25 = arith.constant 25 : index
    %c0_19 = arith.constant 0 : index
    %64 = vector.load %arg17[%c25, %c0_19] : memref<96x32xf32, #tpu.memory_space<vmem>>, vector<64x32xf32>
    %65 = arith.mulf %64, %17 : vector<64x32xf32>
    %66 = vector.extract_strided_slice %1 {offsets = [8, 0], sizes = [1, 32], strides = [1, 1]} : vector<9x32xf32> to vector<1x32xf32>
    %67 = vector.broadcast %66 : vector<1x32xf32> to vector<64x32xf32>
    %68 = arith.mulf %65, %67 : vector<64x32xf32>
    %69 = arith.addf %63, %68 : vector<64x32xf32>
    %c0_20 = arith.constant 0 : index
    %c0_21 = arith.constant 0 : index
    %70 = vector.load %arg3[%c0_20, %c0_21] : memref<1x32xf32, #tpu.memory_space<vmem>>, vector<1x32xf32>
    %71 = vector.broadcast %70 : vector<1x32xf32> to vector<64x32xf32>
    %72 = arith.addf %69, %71 : vector<64x32xf32>
    %73 = arith.addf %0, %72 : vector<64x32xf32>
    %c0_22 = arith.constant 0 : index
    %c0_23 = arith.constant 0 : index
    %74 = vector.load %arg4[%c0_22, %c0_23] : memref<1x32xf32, #tpu.memory_space<vmem>>, vector<1x32xf32>
    %c0_24 = arith.constant 0 : index
    %c0_25 = arith.constant 0 : index
    %75 = vector.load %arg5[%c0_24, %c0_25] : memref<1x32xf32, #tpu.memory_space<vmem>>, vector<1x32xf32>
    %cst_26 = arith.constant dense<0.000000e+00> : vector<64xf32>
    %76 = vector.multi_reduction <add>, %73, %cst_26 [1] : vector<64x32xf32> to vector<64xf32>
    %77 = vector.shape_cast %76 : vector<64xf32> to vector<64x1xf32>
    %cst_27 = arith.constant 3.200000e+01 : f32
    %78 = vector.broadcast %cst_27 : f32 to vector<64x1xf32>
    %79 = arith.divf %77, %78 : vector<64x1xf32>
    %80 = vector.broadcast %79 : vector<64x1xf32> to vector<64x32xf32>
    %81 = arith.subf %73, %80 : vector<64x32xf32>
    %82 = arith.mulf %81, %81 : vector<64x32xf32>
    %cst_28 = arith.constant dense<0.000000e+00> : vector<64xf32>
    %83 = vector.multi_reduction <add>, %82, %cst_28 [1] : vector<64x32xf32> to vector<64xf32>
    %84 = vector.shape_cast %83 : vector<64xf32> to vector<64x1xf32>
    %cst_29 = arith.constant 3.200000e+01 : f32
    %85 = vector.broadcast %cst_29 : f32 to vector<64x1xf32>
    %86 = arith.divf %84, %85 : vector<64x1xf32>
    %87 = vector.broadcast %79 : vector<64x1xf32> to vector<64x32xf32>
    %88 = arith.subf %73, %87 : vector<64x32xf32>
    %cst_30 = arith.constant 9.99999974E-6 : f32
    %89 = vector.broadcast %cst_30 : f32 to vector<64x1xf32>
    %90 = arith.addf %86, %89 : vector<64x1xf32>
    %91 = math.rsqrt %90 : vector<64x1xf32>
    %92 = vector.broadcast %91 : vector<64x1xf32> to vector<64x32xf32>
    %93 = arith.mulf %88, %92 : vector<64x32xf32>
    %94 = vector.broadcast %74 : vector<1x32xf32> to vector<64x32xf32>
    %95 = arith.mulf %93, %94 : vector<64x32xf32>
    %96 = vector.broadcast %75 : vector<1x32xf32> to vector<64x32xf32>
    %97 = arith.addf %95, %96 : vector<64x32xf32>
    %98 = arith.truncf %97 : vector<64x32xf32> to vector<64x32xbf16>
    %c0_31 = arith.constant 0 : index
    %c0_32 = arith.constant 0 : index
    %99 = vector.load %arg6[%c0_31, %c0_32] : memref<32x96xbf16, #tpu.memory_space<vmem>>, vector<32x96xbf16>
    %cst_33 = arith.constant dense<0.000000e+00> : vector<64x96xf32>
    %100 = tpu.matmul %98, %99, %cst_33 {dimension_numbers = #tpu.dot_dimension_numbers<[1], [0], [0], [1], [0, 0, 1, 1], [], []>} : vector<64x32xbf16>, vector<32x96xbf16>, vector<64x96xf32> -> vector<64x96xf32>
    %101 = arith.truncf %100 : vector<64x96xf32> to vector<64x96xbf16>
    %c0_34 = arith.constant 0 : index
    %c0_35 = arith.constant 0 : index
    %102 = vector.load %arg7[%c0_34, %c0_35] : memref<64x64xbf16, #tpu.memory_space<vmem>>, vector<64x64xbf16>
    %103 = arith.extf %102 : vector<64x64xbf16> to vector<64x64xf32>
    %104 = vector.extract_strided_slice %101 {offsets = [0, 0], sizes = [64, 4], strides = [1, 1]} : vector<64x96xbf16> to vector<64x4xbf16>
    %105 = vector.extract_strided_slice %101 {offsets = [0, 32], sizes = [64, 4], strides = [1, 1]} : vector<64x96xbf16> to vector<64x4xbf16>
    %106 = vector.extract_strided_slice %101 {offsets = [0, 64], sizes = [64, 4], strides = [1, 1]} : vector<64x96xbf16> to vector<64x4xbf16>
    %cst_36 = arith.constant dense<0.000000e+00> : vector<64x64xf32>
    %107 = tpu.matmul %104, %105, %cst_36 {dimension_numbers = #tpu.dot_dimension_numbers<[1], [1], [0], [0], [0, 0, 1, 0], [], []>} : vector<64x4xbf16>, vector<64x4xbf16>, vector<64x64xf32> -> vector<64x64xf32>
    %108 = arith.addf %107, %103 : vector<64x64xf32>
    %cst_37 = arith.constant dense<0xFF800000> : vector<64xf32>
    %109 = vector.multi_reduction <maximumf>, %108, %cst_37 [1] : vector<64x64xf32> to vector<64xf32>
    %110 = vector.shape_cast %109 : vector<64xf32> to vector<64x1xf32>
    %111 = vector.broadcast %110 : vector<64x1xf32> to vector<64x64xf32>
    %112 = arith.subf %108, %111 : vector<64x64xf32>
    %113 = math.exp %112 : vector<64x64xf32>
    %cst_38 = arith.constant dense<0.000000e+00> : vector<64xf32>
    %114 = vector.multi_reduction <add>, %113, %cst_38 [1] : vector<64x64xf32> to vector<64xf32>
    %115 = vector.shape_cast %114 : vector<64xf32> to vector<64x1xf32>
    %116 = vector.broadcast %115 : vector<64x1xf32> to vector<64x64xf32>
    %117 = arith.divf %113, %116 : vector<64x64xf32>
    %118 = arith.truncf %117 : vector<64x64xf32> to vector<64x64xbf16>
    %cst_39 = arith.constant dense<0.000000e+00> : vector<64x4xf32>
    %119 = tpu.matmul %118, %106, %cst_39 {dimension_numbers = #tpu.dot_dimension_numbers<[1], [0], [0], [1], [0, 0, 1, 1], [], []>} : vector<64x64xbf16>, vector<64x4xbf16>, vector<64x4xf32> -> vector<64x4xf32>
    %120 = vector.extract_strided_slice %101 {offsets = [0, 4], sizes = [64, 4], strides = [1, 1]} : vector<64x96xbf16> to vector<64x4xbf16>
    %121 = vector.extract_strided_slice %101 {offsets = [0, 36], sizes = [64, 4], strides = [1, 1]} : vector<64x96xbf16> to vector<64x4xbf16>
    %122 = vector.extract_strided_slice %101 {offsets = [0, 68], sizes = [64, 4], strides = [1, 1]} : vector<64x96xbf16> to vector<64x4xbf16>
    %cst_40 = arith.constant dense<0.000000e+00> : vector<64x64xf32>
    %123 = tpu.matmul %120, %121, %cst_40 {dimension_numbers = #tpu.dot_dimension_numbers<[1], [1], [0], [0], [0, 0, 1, 0], [], []>} : vector<64x4xbf16>, vector<64x4xbf16>, vector<64x64xf32> -> vector<64x64xf32>
    %124 = arith.addf %123, %103 : vector<64x64xf32>
    %cst_41 = arith.constant dense<0xFF800000> : vector<64xf32>
    %125 = vector.multi_reduction <maximumf>, %124, %cst_41 [1] : vector<64x64xf32> to vector<64xf32>
    %126 = vector.shape_cast %125 : vector<64xf32> to vector<64x1xf32>
    %127 = vector.broadcast %126 : vector<64x1xf32> to vector<64x64xf32>
    %128 = arith.subf %124, %127 : vector<64x64xf32>
    %129 = math.exp %128 : vector<64x64xf32>
    %cst_42 = arith.constant dense<0.000000e+00> : vector<64xf32>
    %130 = vector.multi_reduction <add>, %129, %cst_42 [1] : vector<64x64xf32> to vector<64xf32>
    %131 = vector.shape_cast %130 : vector<64xf32> to vector<64x1xf32>
    %132 = vector.broadcast %131 : vector<64x1xf32> to vector<64x64xf32>
    %133 = arith.divf %129, %132 : vector<64x64xf32>
    %134 = arith.truncf %133 : vector<64x64xf32> to vector<64x64xbf16>
    %cst_43 = arith.constant dense<0.000000e+00> : vector<64x4xf32>
    %135 = tpu.matmul %134, %122, %cst_43 {dimension_numbers = #tpu.dot_dimension_numbers<[1], [0], [0], [1], [0, 0, 1, 1], [], []>} : vector<64x64xbf16>, vector<64x4xbf16>, vector<64x4xf32> -> vector<64x4xf32>
    %136 = vector.extract_strided_slice %101 {offsets = [0, 8], sizes = [64, 4], strides = [1, 1]} : vector<64x96xbf16> to vector<64x4xbf16>
    %137 = vector.extract_strided_slice %101 {offsets = [0, 40], sizes = [64, 4], strides = [1, 1]} : vector<64x96xbf16> to vector<64x4xbf16>
    %138 = vector.extract_strided_slice %101 {offsets = [0, 72], sizes = [64, 4], strides = [1, 1]} : vector<64x96xbf16> to vector<64x4xbf16>
    %cst_44 = arith.constant dense<0.000000e+00> : vector<64x64xf32>
    %139 = tpu.matmul %136, %137, %cst_44 {dimension_numbers = #tpu.dot_dimension_numbers<[1], [1], [0], [0], [0, 0, 1, 0], [], []>} : vector<64x4xbf16>, vector<64x4xbf16>, vector<64x64xf32> -> vector<64x64xf32>
    %140 = arith.addf %139, %103 : vector<64x64xf32>
    %cst_45 = arith.constant dense<0xFF800000> : vector<64xf32>
    %141 = vector.multi_reduction <maximumf>, %140, %cst_45 [1] : vector<64x64xf32> to vector<64xf32>
    %142 = vector.shape_cast %141 : vector<64xf32> to vector<64x1xf32>
    %143 = vector.broadcast %142 : vector<64x1xf32> to vector<64x64xf32>
    %144 = arith.subf %140, %143 : vector<64x64xf32>
    %145 = math.exp %144 : vector<64x64xf32>
    %cst_46 = arith.constant dense<0.000000e+00> : vector<64xf32>
    %146 = vector.multi_reduction <add>, %145, %cst_46 [1] : vector<64x64xf32> to vector<64xf32>
    %147 = vector.shape_cast %146 : vector<64xf32> to vector<64x1xf32>
    %148 = vector.broadcast %147 : vector<64x1xf32> to vector<64x64xf32>
    %149 = arith.divf %145, %148 : vector<64x64xf32>
    %150 = arith.truncf %149 : vector<64x64xf32> to vector<64x64xbf16>
    %cst_47 = arith.constant dense<0.000000e+00> : vector<64x4xf32>
    %151 = tpu.matmul %150, %138, %cst_47 {dimension_numbers = #tpu.dot_dimension_numbers<[1], [0], [0], [1], [0, 0, 1, 1], [], []>} : vector<64x64xbf16>, vector<64x4xbf16>, vector<64x4xf32> -> vector<64x4xf32>
    %152 = vector.extract_strided_slice %101 {offsets = [0, 12], sizes = [64, 4], strides = [1, 1]} : vector<64x96xbf16> to vector<64x4xbf16>
    %153 = vector.extract_strided_slice %101 {offsets = [0, 44], sizes = [64, 4], strides = [1, 1]} : vector<64x96xbf16> to vector<64x4xbf16>
    %154 = vector.extract_strided_slice %101 {offsets = [0, 76], sizes = [64, 4], strides = [1, 1]} : vector<64x96xbf16> to vector<64x4xbf16>
    %cst_48 = arith.constant dense<0.000000e+00> : vector<64x64xf32>
    %155 = tpu.matmul %152, %153, %cst_48 {dimension_numbers = #tpu.dot_dimension_numbers<[1], [1], [0], [0], [0, 0, 1, 0], [], []>} : vector<64x4xbf16>, vector<64x4xbf16>, vector<64x64xf32> -> vector<64x64xf32>
    %156 = arith.addf %155, %103 : vector<64x64xf32>
    %cst_49 = arith.constant dense<0xFF800000> : vector<64xf32>
    %157 = vector.multi_reduction <maximumf>, %156, %cst_49 [1] : vector<64x64xf32> to vector<64xf32>
    %158 = vector.shape_cast %157 : vector<64xf32> to vector<64x1xf32>
    %159 = vector.broadcast %158 : vector<64x1xf32> to vector<64x64xf32>
    %160 = arith.subf %156, %159 : vector<64x64xf32>
    %161 = math.exp %160 : vector<64x64xf32>
    %cst_50 = arith.constant dense<0.000000e+00> : vector<64xf32>
    %162 = vector.multi_reduction <add>, %161, %cst_50 [1] : vector<64x64xf32> to vector<64xf32>
    %163 = vector.shape_cast %162 : vector<64xf32> to vector<64x1xf32>
    %164 = vector.broadcast %163 : vector<64x1xf32> to vector<64x64xf32>
    %165 = arith.divf %161, %164 : vector<64x64xf32>
    %166 = arith.truncf %165 : vector<64x64xf32> to vector<64x64xbf16>
    %cst_51 = arith.constant dense<0.000000e+00> : vector<64x4xf32>
    %167 = tpu.matmul %166, %154, %cst_51 {dimension_numbers = #tpu.dot_dimension_numbers<[1], [0], [0], [1], [0, 0, 1, 1], [], []>} : vector<64x64xbf16>, vector<64x4xbf16>, vector<64x4xf32> -> vector<64x4xf32>
    %168 = vector.extract_strided_slice %101 {offsets = [0, 16], sizes = [64, 4], strides = [1, 1]} : vector<64x96xbf16> to vector<64x4xbf16>
    %169 = vector.extract_strided_slice %101 {offsets = [0, 48], sizes = [64, 4], strides = [1, 1]} : vector<64x96xbf16> to vector<64x4xbf16>
    %170 = vector.extract_strided_slice %101 {offsets = [0, 80], sizes = [64, 4], strides = [1, 1]} : vector<64x96xbf16> to vector<64x4xbf16>
    %cst_52 = arith.constant dense<0.000000e+00> : vector<64x64xf32>
    %171 = tpu.matmul %168, %169, %cst_52 {dimension_numbers = #tpu.dot_dimension_numbers<[1], [1], [0], [0], [0, 0, 1, 0], [], []>} : vector<64x4xbf16>, vector<64x4xbf16>, vector<64x64xf32> -> vector<64x64xf32>
    %172 = arith.addf %171, %103 : vector<64x64xf32>
    %cst_53 = arith.constant dense<0xFF800000> : vector<64xf32>
    %173 = vector.multi_reduction <maximumf>, %172, %cst_53 [1] : vector<64x64xf32> to vector<64xf32>
    %174 = vector.shape_cast %173 : vector<64xf32> to vector<64x1xf32>
    %175 = vector.broadcast %174 : vector<64x1xf32> to vector<64x64xf32>
    %176 = arith.subf %172, %175 : vector<64x64xf32>
    %177 = math.exp %176 : vector<64x64xf32>
    %cst_54 = arith.constant dense<0.000000e+00> : vector<64xf32>
    %178 = vector.multi_reduction <add>, %177, %cst_54 [1] : vector<64x64xf32> to vector<64xf32>
    %179 = vector.shape_cast %178 : vector<64xf32> to vector<64x1xf32>
    %180 = vector.broadcast %179 : vector<64x1xf32> to vector<64x64xf32>
    %181 = arith.divf %177, %180 : vector<64x64xf32>
    %182 = arith.truncf %181 : vector<64x64xf32> to vector<64x64xbf16>
    %cst_55 = arith.constant dense<0.000000e+00> : vector<64x4xf32>
    %183 = tpu.matmul %182, %170, %cst_55 {dimension_numbers = #tpu.dot_dimension_numbers<[1], [0], [0], [1], [0, 0, 1, 1], [], []>} : vector<64x64xbf16>, vector<64x4xbf16>, vector<64x4xf32> -> vector<64x4xf32>
    %184 = vector.extract_strided_slice %101 {offsets = [0, 20], sizes = [64, 4], strides = [1, 1]} : vector<64x96xbf16> to vector<64x4xbf16>
    %185 = vector.extract_strided_slice %101 {offsets = [0, 52], sizes = [64, 4], strides = [1, 1]} : vector<64x96xbf16> to vector<64x4xbf16>
    %186 = vector.extract_strided_slice %101 {offsets = [0, 84], sizes = [64, 4], strides = [1, 1]} : vector<64x96xbf16> to vector<64x4xbf16>
    %cst_56 = arith.constant dense<0.000000e+00> : vector<64x64xf32>
    %187 = tpu.matmul %184, %185, %cst_56 {dimension_numbers = #tpu.dot_dimension_numbers<[1], [1], [0], [0], [0, 0, 1, 0], [], []>} : vector<64x4xbf16>, vector<64x4xbf16>, vector<64x64xf32> -> vector<64x64xf32>
    %188 = arith.addf %187, %103 : vector<64x64xf32>
    %cst_57 = arith.constant dense<0xFF800000> : vector<64xf32>
    %189 = vector.multi_reduction <maximumf>, %188, %cst_57 [1] : vector<64x64xf32> to vector<64xf32>
    %190 = vector.shape_cast %189 : vector<64xf32> to vector<64x1xf32>
    %191 = vector.broadcast %190 : vector<64x1xf32> to vector<64x64xf32>
    %192 = arith.subf %188, %191 : vector<64x64xf32>
    %193 = math.exp %192 : vector<64x64xf32>
    %cst_58 = arith.constant dense<0.000000e+00> : vector<64xf32>
    %194 = vector.multi_reduction <add>, %193, %cst_58 [1] : vector<64x64xf32> to vector<64xf32>
    %195 = vector.shape_cast %194 : vector<64xf32> to vector<64x1xf32>
    %196 = vector.broadcast %195 : vector<64x1xf32> to vector<64x64xf32>
    %197 = arith.divf %193, %196 : vector<64x64xf32>
    %198 = arith.truncf %197 : vector<64x64xf32> to vector<64x64xbf16>
    %cst_59 = arith.constant dense<0.000000e+00> : vector<64x4xf32>
    %199 = tpu.matmul %198, %186, %cst_59 {dimension_numbers = #tpu.dot_dimension_numbers<[1], [0], [0], [1], [0, 0, 1, 1], [], []>} : vector<64x64xbf16>, vector<64x4xbf16>, vector<64x4xf32> -> vector<64x4xf32>
    %200 = vector.extract_strided_slice %101 {offsets = [0, 24], sizes = [64, 4], strides = [1, 1]} : vector<64x96xbf16> to vector<64x4xbf16>
    %201 = vector.extract_strided_slice %101 {offsets = [0, 56], sizes = [64, 4], strides = [1, 1]} : vector<64x96xbf16> to vector<64x4xbf16>
    %202 = vector.extract_strided_slice %101 {offsets = [0, 88], sizes = [64, 4], strides = [1, 1]} : vector<64x96xbf16> to vector<64x4xbf16>
    %cst_60 = arith.constant dense<0.000000e+00> : vector<64x64xf32>
    %203 = tpu.matmul %200, %201, %cst_60 {dimension_numbers = #tpu.dot_dimension_numbers<[1], [1], [0], [0], [0, 0, 1, 0], [], []>} : vector<64x4xbf16>, vector<64x4xbf16>, vector<64x64xf32> -> vector<64x64xf32>
    %204 = arith.addf %203, %103 : vector<64x64xf32>
    %cst_61 = arith.constant dense<0xFF800000> : vector<64xf32>
    %205 = vector.multi_reduction <maximumf>, %204, %cst_61 [1] : vector<64x64xf32> to vector<64xf32>
    %206 = vector.shape_cast %205 : vector<64xf32> to vector<64x1xf32>
    %207 = vector.broadcast %206 : vector<64x1xf32> to vector<64x64xf32>
    %208 = arith.subf %204, %207 : vector<64x64xf32>
    %209 = math.exp %208 : vector<64x64xf32>
    %cst_62 = arith.constant dense<0.000000e+00> : vector<64xf32>
    %210 = vector.multi_reduction <add>, %209, %cst_62 [1] : vector<64x64xf32> to vector<64xf32>
    %211 = vector.shape_cast %210 : vector<64xf32> to vector<64x1xf32>
    %212 = vector.broadcast %211 : vector<64x1xf32> to vector<64x64xf32>
    %213 = arith.divf %209, %212 : vector<64x64xf32>
    %214 = arith.truncf %213 : vector<64x64xf32> to vector<64x64xbf16>
    %cst_63 = arith.constant dense<0.000000e+00> : vector<64x4xf32>
    %215 = tpu.matmul %214, %202, %cst_63 {dimension_numbers = #tpu.dot_dimension_numbers<[1], [0], [0], [1], [0, 0, 1, 1], [], []>} : vector<64x64xbf16>, vector<64x4xbf16>, vector<64x4xf32> -> vector<64x4xf32>
    %216 = vector.extract_strided_slice %101 {offsets = [0, 28], sizes = [64, 4], strides = [1, 1]} : vector<64x96xbf16> to vector<64x4xbf16>
    %217 = vector.extract_strided_slice %101 {offsets = [0, 60], sizes = [64, 4], strides = [1, 1]} : vector<64x96xbf16> to vector<64x4xbf16>
    %218 = vector.extract_strided_slice %101 {offsets = [0, 92], sizes = [64, 4], strides = [1, 1]} : vector<64x96xbf16> to vector<64x4xbf16>
    %cst_64 = arith.constant dense<0.000000e+00> : vector<64x64xf32>
    %219 = tpu.matmul %216, %217, %cst_64 {dimension_numbers = #tpu.dot_dimension_numbers<[1], [1], [0], [0], [0, 0, 1, 0], [], []>} : vector<64x4xbf16>, vector<64x4xbf16>, vector<64x64xf32> -> vector<64x64xf32>
    %220 = arith.addf %219, %103 : vector<64x64xf32>
    %cst_65 = arith.constant dense<0xFF800000> : vector<64xf32>
    %221 = vector.multi_reduction <maximumf>, %220, %cst_65 [1] : vector<64x64xf32> to vector<64xf32>
    %222 = vector.shape_cast %221 : vector<64xf32> to vector<64x1xf32>
    %223 = vector.broadcast %222 : vector<64x1xf32> to vector<64x64xf32>
    %224 = arith.subf %220, %223 : vector<64x64xf32>
    %225 = math.exp %224 : vector<64x64xf32>
    %cst_66 = arith.constant dense<0.000000e+00> : vector<64xf32>
    %226 = vector.multi_reduction <add>, %225, %cst_66 [1] : vector<64x64xf32> to vector<64xf32>
    %227 = vector.shape_cast %226 : vector<64xf32> to vector<64x1xf32>
    %228 = vector.broadcast %227 : vector<64x1xf32> to vector<64x64xf32>
    %229 = arith.divf %225, %228 : vector<64x64xf32>
    %230 = arith.truncf %229 : vector<64x64xf32> to vector<64x64xbf16>
    %cst_67 = arith.constant dense<0.000000e+00> : vector<64x4xf32>
    %231 = tpu.matmul %230, %218, %cst_67 {dimension_numbers = #tpu.dot_dimension_numbers<[1], [0], [0], [1], [0, 0, 1, 1], [], []>} : vector<64x64xbf16>, vector<64x4xbf16>, vector<64x4xf32> -> vector<64x4xf32>
    %232 = tpu.concatenate %119, %135, %151, %167, %183, %199, %215, %231 in 1 : vector<64x4xf32>, vector<64x4xf32>, vector<64x4xf32>, vector<64x4xf32>, vector<64x4xf32>, vector<64x4xf32>, vector<64x4xf32>, vector<64x4xf32> -> vector<64x32xf32>
    %233 = arith.truncf %232 : vector<64x32xf32> to vector<64x32xbf16>
    %c0_68 = arith.constant 0 : index
    %c0_69 = arith.constant 0 : index
    %234 = vector.load %arg8[%c0_68, %c0_69] : memref<32x32xbf16, #tpu.memory_space<vmem>>, vector<32x32xbf16>
    %cst_70 = arith.constant dense<0.000000e+00> : vector<64x32xf32>
    %235 = tpu.matmul %233, %234, %cst_70 {dimension_numbers = #tpu.dot_dimension_numbers<[1], [0], [0], [1], [0, 0, 1, 1], [], []>} : vector<64x32xbf16>, vector<32x32xbf16>, vector<64x32xf32> -> vector<64x32xf32>
    %c0_71 = arith.constant 0 : index
    %c0_72 = arith.constant 0 : index
    %236 = vector.load %arg9[%c0_71, %c0_72] : memref<1x32xf32, #tpu.memory_space<vmem>>, vector<1x32xf32>
    %237 = vector.broadcast %236 : vector<1x32xf32> to vector<64x32xf32>
    %238 = arith.addf %235, %237 : vector<64x32xf32>
    %239 = arith.addf %73, %238 : vector<64x32xf32>
    %c0_73 = arith.constant 0 : index
    %c0_74 = arith.constant 0 : index
    %240 = vector.load %arg14[%c0_73, %c0_74] : memref<64x32xf32, #tpu.memory_space<vmem>>, vector<64x32xf32>
    tpu.vector_store %arg14[%c0_73, %c0_74], %239 {strides = array<i32>} : memref<64x32xf32, #tpu.memory_space<vmem>>, vector<64x32xf32>,
    %c0_75 = arith.constant 0 : index
    %c0_76 = arith.constant 0 : index
    %241 = vector.load %arg10[%c0_75, %c0_76] : memref<1x32xf32, #tpu.memory_space<vmem>>, vector<1x32xf32>
    %c0_77 = arith.constant 0 : index
    %c0_78 = arith.constant 0 : index
    %242 = vector.load %arg11[%c0_77, %c0_78] : memref<1x32xf32, #tpu.memory_space<vmem>>, vector<1x32xf32>
    %cst_79 = arith.constant dense<0.000000e+00> : vector<64xf32>
    %243 = vector.multi_reduction <add>, %239, %cst_79 [1] : vector<64x32xf32> to vector<64xf32>
    %244 = vector.shape_cast %243 : vector<64xf32> to vector<64x1xf32>
    %cst_80 = arith.constant 3.200000e+01 : f32
    %245 = vector.broadcast %cst_80 : f32 to vector<64x1xf32>
    %246 = arith.divf %244, %245 : vector<64x1xf32>
    %247 = vector.broadcast %246 : vector<64x1xf32> to vector<64x32xf32>
    %248 = arith.subf %239, %247 : vector<64x32xf32>
    %249 = arith.mulf %248, %248 : vector<64x32xf32>
    %cst_81 = arith.constant dense<0.000000e+00> : vector<64xf32>
    %250 = vector.multi_reduction <add>, %249, %cst_81 [1] : vector<64x32xf32> to vector<64xf32>
    %251 = vector.shape_cast %250 : vector<64xf32> to vector<64x1xf32>
    %cst_82 = arith.constant 3.200000e+01 : f32
    %252 = vector.broadcast %cst_82 : f32 to vector<64x1xf32>
    %253 = arith.divf %251, %252 : vector<64x1xf32>
    %254 = vector.broadcast %246 : vector<64x1xf32> to vector<64x32xf32>
    %255 = arith.subf %239, %254 : vector<64x32xf32>
    %cst_83 = arith.constant 9.99999974E-6 : f32
    %256 = vector.broadcast %cst_83 : f32 to vector<64x1xf32>
    %257 = arith.addf %253, %256 : vector<64x1xf32>
    %258 = math.rsqrt %257 : vector<64x1xf32>
    %259 = vector.broadcast %258 : vector<64x1xf32> to vector<64x32xf32>
    %260 = arith.mulf %255, %259 : vector<64x32xf32>
    %261 = vector.broadcast %241 : vector<1x32xf32> to vector<64x32xf32>
    %262 = arith.mulf %260, %261 : vector<64x32xf32>
    %263 = vector.broadcast %242 : vector<1x32xf32> to vector<64x32xf32>
    %264 = arith.addf %262, %263 : vector<64x32xf32>
    %265 = arith.truncf %264 : vector<64x32xf32> to vector<64x32xbf16>
    %c0_84 = arith.constant 0 : index
    %c0_85 = arith.constant 0 : index
    %266 = vector.load %arg12[%c0_84, %c0_85] : memref<32x128xbf16, #tpu.memory_space<vmem>>, vector<32x128xbf16>
    %cst_86 = arith.constant dense<0.000000e+00> : vector<64x128xf32>
    %267 = tpu.matmul %265, %266, %cst_86 {dimension_numbers = #tpu.dot_dimension_numbers<[1], [0], [0], [1], [0, 0, 1, 1], [], []>} : vector<64x32xbf16>, vector<32x128xbf16>, vector<64x128xf32> -> vector<64x128xf32>
    %c0_87 = arith.constant 0 : index
    %c0_88 = arith.constant 0 : index
    %268 = vector.load %arg13[%c0_87, %c0_88] : memref<1x128xf32, #tpu.memory_space<vmem>>, vector<1x128xf32>
    %269 = vector.broadcast %268 : vector<1x128xf32> to vector<64x128xf32>
    %270 = arith.addf %267, %269 : vector<64x128xf32>
    %cst_89 = arith.constant 5.000000e-01 : f32
    %271 = vector.broadcast %cst_89 : f32 to vector<64x128xf32>
    %272 = arith.mulf %271, %270 : vector<64x128xf32>
    %cst_90 = arith.constant 0.707106769 : f32
    %273 = vector.broadcast %cst_90 : f32 to vector<64x128xf32>
    %274 = arith.mulf %270, %273 : vector<64x128xf32>
    %275 = math.absf %274 : vector<64x128xf32>
    %cst_91 = arith.constant 0.327591091 : f32
    %276 = vector.broadcast %cst_91 : f32 to vector<64x128xf32>
    %277 = arith.mulf %276, %275 : vector<64x128xf32>
    %cst_92 = arith.constant 1.000000e+00 : f32
    %278 = vector.broadcast %cst_92 : f32 to vector<64x128xf32>
    %279 = arith.addf %278, %277 : vector<64x128xf32>
    %cst_93 = arith.constant 1.000000e+00 : f32
    %280 = vector.broadcast %cst_93 : f32 to vector<64x128xf32>
    %281 = arith.divf %280, %279 : vector<64x128xf32>
    %cst_94 = arith.constant 1.06140542 : f32
    %282 = vector.broadcast %cst_94 : f32 to vector<64x128xf32>
    %283 = arith.mulf %282, %281 : vector<64x128xf32>
    %cst_95 = arith.constant -1.45315206 : f32
    %284 = vector.broadcast %cst_95 : f32 to vector<64x128xf32>
    %285 = arith.addf %283, %284 : vector<64x128xf32>
    %286 = arith.mulf %285, %281 : vector<64x128xf32>
    %cst_96 = arith.constant 1.42141378 : f32
    %287 = vector.broadcast %cst_96 : f32 to vector<64x128xf32>
    %288 = arith.addf %286, %287 : vector<64x128xf32>
    %289 = arith.mulf %288, %281 : vector<64x128xf32>
    %cst_97 = arith.constant -0.284496725 : f32
    %290 = vector.broadcast %cst_97 : f32 to vector<64x128xf32>
    %291 = arith.addf %289, %290 : vector<64x128xf32>
    %292 = arith.mulf %291, %281 : vector<64x128xf32>
    %cst_98 = arith.constant 0.254829586 : f32
    %293 = vector.broadcast %cst_98 : f32 to vector<64x128xf32>
    %294 = arith.addf %292, %293 : vector<64x128xf32>
    %295 = arith.mulf %294, %281 : vector<64x128xf32>
    %cst_99 = arith.constant 0.000000e+00 : f32
    %296 = vector.broadcast %cst_99 : f32 to vector<64x128xf32>
    %297 = arith.subf %296, %275 : vector<64x128xf32>
    %298 = arith.mulf %297, %275 : vector<64x128xf32>
    %299 = math.exp %298 : vector<64x128xf32>
    %300 = arith.mulf %295, %299 : vector<64x128xf32>
    %cst_100 = arith.constant 1.000000e+00 : f32
    %301 = vector.broadcast %cst_100 : f32 to vector<64x128xf32>
    %302 = arith.subf %301, %300 : vector<64x128xf32>
    %cst_101 = arith.constant 0.000000e+00 : f32
    %303 = vector.broadcast %cst_101 : f32 to vector<64x128xf32>
    %304 = arith.cmpf oge, %274, %303 : vector<64x128xf32>
    %cst_102 = arith.constant 0.000000e+00 : f32
    %305 = vector.broadcast %cst_102 : f32 to vector<64x128xf32>
    %306 = arith.subf %305, %302 : vector<64x128xf32>
    %307 = arith.select %304, %302, %306 : vector<64x128xi1>, vector<64x128xf32>
    %cst_103 = arith.constant 1.000000e+00 : f32
    %308 = vector.broadcast %cst_103 : f32 to vector<64x128xf32>
    %309 = arith.addf %308, %307 : vector<64x128xf32>
    %310 = arith.mulf %272, %309 : vector<64x128xf32>
    %311 = arith.truncf %310 : vector<64x128xf32> to vector<64x128xbf16>
    %c0_104 = arith.constant 0 : index
    %c0_105 = arith.constant 0 : index
    %312 = vector.load %arg15[%c0_104, %c0_105] : memref<64x128xbf16, #tpu.memory_space<vmem>>, vector<64x128xbf16>
    tpu.vector_store %arg15[%c0_104, %c0_105], %311 {strides = array<i32>} : memref<64x128xbf16, #tpu.memory_space<vmem>>, vector<64x128xbf16>,
    %cst_106 = arith.constant dense<0.000000e+00> : vector<128xf32>
    %313 = vector.multi_reduction <add>, %310, %cst_106 [0] : vector<64x128xf32> to vector<128xf32>
    %314 = vector.shape_cast %313 : vector<128xf32> to vector<1x128xf32>
    %315 = arith.mulf %310, %310 : vector<64x128xf32>
    %cst_107 = arith.constant dense<0.000000e+00> : vector<128xf32>
    %316 = vector.multi_reduction <add>, %315, %cst_107 [0] : vector<64x128xf32> to vector<128xf32>
    %317 = vector.shape_cast %316 : vector<128xf32> to vector<1x128xf32>
    %cst_108 = arith.constant 0.000000e+00 : f32
    %318 = vector.broadcast %cst_108 : f32 to vector<6x128xf32>
    %319 = tpu.concatenate %314, %317, %318 in 0 : vector<1x128xf32>, vector<1x128xf32>, vector<6x128xf32> -> vector<8x128xf32>
    %c0_109 = arith.constant 0 : index
    %c0_110 = arith.constant 0 : index
    %320 = vector.load %arg16[%c0_109, %c0_110] : memref<8x128xf32, #tpu.memory_space<vmem>>, vector<8x128xf32>
    tpu.vector_store %arg16[%c0_109, %c0_110], %319 {strides = array<i32>} : memref<8x128xf32, #tpu.memory_space<vmem>>, vector<8x128xf32>,
    return
  }
  func.func @transform_0(%arg0: i32) -> (i32, i32) {
    %c0_i32 = arith.constant 0 : i32
    %c0_i32_0 = arith.constant 0 : i32
    return %arg0, %c0_i32 : i32, i32
  }
  func.func @transform_1(%arg0: i32) -> (i32, i32) {
    %c0_i32 = arith.constant 0 : i32
    %c0_i32_0 = arith.constant 0 : i32
    %c0_i32_1 = arith.constant 0 : i32
    return %c0_i32, %c0_i32_0 : i32, i32
  }
  func.func @transform_2(%arg0: i32) -> (i32, i32) {
    %c0_i32 = arith.constant 0 : i32
    %c0_i32_0 = arith.constant 0 : i32
    %c0_i32_1 = arith.constant 0 : i32
    return %c0_i32, %c0_i32_0 : i32, i32
  }
  func.func @transform_3(%arg0: i32) -> (i32, i32) {
    %c0_i32 = arith.constant 0 : i32
    %c0_i32_0 = arith.constant 0 : i32
    %c0_i32_1 = arith.constant 0 : i32
    return %c0_i32, %c0_i32_0 : i32, i32
  }
  func.func @transform_4(%arg0: i32) -> (i32, i32) {
    %c0_i32 = arith.constant 0 : i32
    %c0_i32_0 = arith.constant 0 : i32
    %c0_i32_1 = arith.constant 0 : i32
    return %c0_i32, %c0_i32_0 : i32, i32
  }
  func.func @transform_5(%arg0: i32) -> (i32, i32) {
    %c0_i32 = arith.constant 0 : i32
    %c0_i32_0 = arith.constant 0 : i32
    %c0_i32_1 = arith.constant 0 : i32
    return %c0_i32, %c0_i32_0 : i32, i32
  }
  func.func @transform_6(%arg0: i32) -> (i32, i32) {
    %c0_i32 = arith.constant 0 : i32
    %c0_i32_0 = arith.constant 0 : i32
    %c0_i32_1 = arith.constant 0 : i32
    return %c0_i32, %c0_i32_0 : i32, i32
  }
  func.func @transform_7(%arg0: i32) -> (i32, i32) {
    %c0_i32 = arith.constant 0 : i32
    %c0_i32_0 = arith.constant 0 : i32
    %c0_i32_1 = arith.constant 0 : i32
    return %c0_i32, %c0_i32_0 : i32, i32
  }
  func.func @transform_8(%arg0: i32) -> (i32, i32) {
    %c0_i32 = arith.constant 0 : i32
    %c0_i32_0 = arith.constant 0 : i32
    %c0_i32_1 = arith.constant 0 : i32
    return %c0_i32, %c0_i32_0 : i32, i32
  }
  func.func @transform_9(%arg0: i32) -> (i32, i32) {
    %c0_i32 = arith.constant 0 : i32
    %c0_i32_0 = arith.constant 0 : i32
    %c0_i32_1 = arith.constant 0 : i32
    return %c0_i32, %c0_i32_0 : i32, i32
  }
  func.func @transform_10(%arg0: i32) -> (i32, i32) {
    %c0_i32 = arith.constant 0 : i32
    %c0_i32_0 = arith.constant 0 : i32
    %c0_i32_1 = arith.constant 0 : i32
    return %c0_i32, %c0_i32_0 : i32, i32
  }
  func.func @transform_11(%arg0: i32) -> (i32, i32) {
    %c0_i32 = arith.constant 0 : i32
    %c0_i32_0 = arith.constant 0 : i32
    %c0_i32_1 = arith.constant 0 : i32
    return %c0_i32, %c0_i32_0 : i32, i32
  }
  func.func @transform_12(%arg0: i32) -> (i32, i32) {
    %c0_i32 = arith.constant 0 : i32
    %c0_i32_0 = arith.constant 0 : i32
    %c0_i32_1 = arith.constant 0 : i32
    return %c0_i32, %c0_i32_0 : i32, i32
  }
  func.func @transform_13(%arg0: i32) -> (i32, i32) {
    %c0_i32 = arith.constant 0 : i32
    %c0_i32_0 = arith.constant 0 : i32
    return %arg0, %c0_i32 : i32, i32
  }
  func.func @transform_14(%arg0: i32) -> (i32, i32) {
    %c0_i32 = arith.constant 0 : i32
    %c0_i32_0 = arith.constant 0 : i32
    return %arg0, %c0_i32 : i32, i32
  }
  func.func @transform_15(%arg0: i32) -> (i32, i32) {
    %c0_i32 = arith.constant 0 : i32
    %c0_i32_0 = arith.constant 0 : i32
    return %arg0, %c0_i32 : i32, i32
  }
}

module attributes {stable_mosaic.version = 11 : i64} {
  func.func @_stage2a_kernel(%arg0: i32, %arg1: memref<64x128xbf16, #tpu.memory_space<vmem>>, %arg2: memref<1x128xf32, #tpu.memory_space<vmem>>, %arg3: memref<1x128xf32, #tpu.memory_space<vmem>>, %arg4: memref<9x128xf32, #tpu.memory_space<vmem>>, %arg5: memref<1x128xf32, #tpu.memory_space<vmem>>, %arg6: memref<64x128xbf16, #tpu.memory_space<vmem>>, %arg7: memref<8x128xf32, #tpu.memory_space<vmem>>, %arg8: memref<96x128xf32, #tpu.memory_space<vmem>>) attributes {dimension_semantics = [#tpu.dimension_semantics<parallel>], iteration_bounds = array<i64: 2>, scalar_prefetch = 0 : i64, scratch_operands = 1 : i64, tpu.core_type = #tpu.core_type<tc>, window_params = [{transform_indices = @transform_0, window_bounds = array<i64: 64, 128>}, {pipeline_mode = #tpu.pipeline_mode<synchronous>, transform_indices = @transform_1, window_bounds = array<i64: 1, 128>}, {pipeline_mode = #tpu.pipeline_mode<synchronous>, transform_indices = @transform_2, window_bounds = array<i64: 1, 128>}, {pipeline_mode = #tpu.pipeline_mode<synchronous>, transform_indices = @transform_3, window_bounds = array<i64: 9, 128>}, {pipeline_mode = #tpu.pipeline_mode<synchronous>, transform_indices = @transform_4, window_bounds = array<i64: 1, 128>}, {transform_indices = @transform_5, window_bounds = array<i64: 64, 128>}, {transform_indices = @transform_6, window_bounds = array<i64: 8, 128>}]} {
    %c0 = arith.constant 0 : index
    %c0_0 = arith.constant 0 : index
    %0 = vector.load %arg1[%c0, %c0_0] : memref<64x128xbf16, #tpu.memory_space<vmem>>, vector<64x128xbf16>
    %1 = arith.extf %0 : vector<64x128xbf16> to vector<64x128xf32>
    %c0_1 = arith.constant 0 : index
    %c0_2 = arith.constant 0 : index
    %2 = vector.load %arg2[%c0_1, %c0_2] : memref<1x128xf32, #tpu.memory_space<vmem>>, vector<1x128xf32>
    %3 = vector.broadcast %2 : vector<1x128xf32> to vector<64x128xf32>
    %4 = arith.mulf %1, %3 : vector<64x128xf32>
    %c0_3 = arith.constant 0 : index
    %c0_4 = arith.constant 0 : index
    %5 = vector.load %arg3[%c0_3, %c0_4] : memref<1x128xf32, #tpu.memory_space<vmem>>, vector<1x128xf32>
    %6 = vector.broadcast %5 : vector<1x128xf32> to vector<64x128xf32>
    %7 = arith.addf %4, %6 : vector<64x128xf32>
    %c0_5 = arith.constant 0 : index
    %c0_6 = arith.constant 0 : index
    %8 = vector.load %arg4[%c0_5, %c0_6] : memref<9x128xf32, #tpu.memory_space<vmem>>, vector<9x128xf32>
    %cst = arith.constant 0.000000e+00 : f32
    %9 = vector.broadcast %cst : f32 to vector<16x128xf32>
    %c0_7 = arith.constant 0 : index
    %c0_8 = arith.constant 0 : index
    %10 = vector.load %arg8[%c0_7, %c0_8] : memref<96x128xf32, #tpu.memory_space<vmem>>, vector<16x128xf32>
    tpu.vector_store %arg8[%c0_7, %c0_8], %9 {strides = array<i32>} : memref<96x128xf32, #tpu.memory_space<vmem>>, vector<16x128xf32>,
    %cst_9 = arith.constant 0.000000e+00 : f32
    %11 = vector.broadcast %cst_9 : f32 to vector<16x128xf32>
    %c80 = arith.constant 80 : index
    %c0_10 = arith.constant 0 : index
    %12 = vector.load %arg8[%c80, %c0_10] : memref<96x128xf32, #tpu.memory_space<vmem>>, vector<16x128xf32>
    tpu.vector_store %arg8[%c80, %c0_10], %11 {strides = array<i32>} : memref<96x128xf32, #tpu.memory_space<vmem>>, vector<16x128xf32>,
    %c16 = arith.constant 16 : index
    %c0_11 = arith.constant 0 : index
    %13 = vector.load %arg8[%c16, %c0_11] : memref<96x128xf32, #tpu.memory_space<vmem>>, vector<64x128xf32>
    tpu.vector_store %arg8[%c16, %c0_11], %7 {strides = array<i32>} : memref<96x128xf32, #tpu.memory_space<vmem>>, vector<64x128xf32>,
    %14 = tpu.iota {dimensions = array<i32: 0>} : vector<64x128xi32>
    %c7_i32 = arith.constant 7 : i32
    %15 = vector.broadcast %c7_i32 : i32 to vector<64x128xi32>
    %16 = arith.andi %14, %15 : vector<64x128xi32>
    %c0_i32 = arith.constant 0 : i32
    %17 = vector.broadcast %c0_i32 : i32 to vector<64x128xi32>
    %18 = arith.cmpi ne, %16, %17 : vector<64x128xi32>
    %19 = arith.extui %18 : vector<64x128xi1> to vector<64x128xi32>
    %20 = arith.sitofp %19 : vector<64x128xi32> to vector<64x128xf32>
    %c7_i32_12 = arith.constant 7 : i32
    %21 = vector.broadcast %c7_i32_12 : i32 to vector<64x128xi32>
    %22 = arith.cmpi ne, %16, %21 : vector<64x128xi32>
    %23 = arith.extui %22 : vector<64x128xi1> to vector<64x128xi32>
    %24 = arith.sitofp %23 : vector<64x128xi32> to vector<64x128xf32>
    %cst_13 = arith.constant 0.000000e+00 : f32
    %25 = vector.broadcast %cst_13 : f32 to vector<64x128xf32>
    %c7 = arith.constant 7 : index
    %c0_14 = arith.constant 0 : index
    %26 = vector.load %arg8[%c7, %c0_14] : memref<96x128xf32, #tpu.memory_space<vmem>>, vector<64x128xf32>
    %27 = arith.mulf %26, %20 : vector<64x128xf32>
    %28 = vector.extract_strided_slice %8 {offsets = [0, 0], sizes = [1, 128], strides = [1, 1]} : vector<9x128xf32> to vector<1x128xf32>
    %29 = vector.broadcast %28 : vector<1x128xf32> to vector<64x128xf32>
    %30 = arith.mulf %27, %29 : vector<64x128xf32>
    %31 = arith.addf %25, %30 : vector<64x128xf32>
    %c8 = arith.constant 8 : index
    %c0_15 = arith.constant 0 : index
    %32 = vector.load %arg8[%c8, %c0_15] : memref<96x128xf32, #tpu.memory_space<vmem>>, vector<64x128xf32>
    %33 = vector.extract_strided_slice %8 {offsets = [1, 0], sizes = [1, 128], strides = [1, 1]} : vector<9x128xf32> to vector<1x128xf32>
    %34 = vector.broadcast %33 : vector<1x128xf32> to vector<64x128xf32>
    %35 = arith.mulf %32, %34 : vector<64x128xf32>
    %36 = arith.addf %31, %35 : vector<64x128xf32>
    %c9 = arith.constant 9 : index
    %c0_16 = arith.constant 0 : index
    %37 = vector.load %arg8[%c9, %c0_16] : memref<96x128xf32, #tpu.memory_space<vmem>>, vector<64x128xf32>
    %38 = arith.mulf %37, %24 : vector<64x128xf32>
    %39 = vector.extract_strided_slice %8 {offsets = [2, 0], sizes = [1, 128], strides = [1, 1]} : vector<9x128xf32> to vector<1x128xf32>
    %40 = vector.broadcast %39 : vector<1x128xf32> to vector<64x128xf32>
    %41 = arith.mulf %38, %40 : vector<64x128xf32>
    %42 = arith.addf %36, %41 : vector<64x128xf32>
    %c15 = arith.constant 15 : index
    %c0_17 = arith.constant 0 : index
    %43 = vector.load %arg8[%c15, %c0_17] : memref<96x128xf32, #tpu.memory_space<vmem>>, vector<64x128xf32>
    %44 = arith.mulf %43, %20 : vector<64x128xf32>
    %45 = vector.extract_strided_slice %8 {offsets = [3, 0], sizes = [1, 128], strides = [1, 1]} : vector<9x128xf32> to vector<1x128xf32>
    %46 = vector.broadcast %45 : vector<1x128xf32> to vector<64x128xf32>
    %47 = arith.mulf %44, %46 : vector<64x128xf32>
    %48 = arith.addf %42, %47 : vector<64x128xf32>
    %c16_18 = arith.constant 16 : index
    %c0_19 = arith.constant 0 : index
    %49 = vector.load %arg8[%c16_18, %c0_19] : memref<96x128xf32, #tpu.memory_space<vmem>>, vector<64x128xf32>
    %50 = vector.extract_strided_slice %8 {offsets = [4, 0], sizes = [1, 128], strides = [1, 1]} : vector<9x128xf32> to vector<1x128xf32>
    %51 = vector.broadcast %50 : vector<1x128xf32> to vector<64x128xf32>
    %52 = arith.mulf %49, %51 : vector<64x128xf32>
    %53 = arith.addf %48, %52 : vector<64x128xf32>
    %c17 = arith.constant 17 : index
    %c0_20 = arith.constant 0 : index
    %54 = vector.load %arg8[%c17, %c0_20] : memref<96x128xf32, #tpu.memory_space<vmem>>, vector<64x128xf32>
    %55 = arith.mulf %54, %24 : vector<64x128xf32>
    %56 = vector.extract_strided_slice %8 {offsets = [5, 0], sizes = [1, 128], strides = [1, 1]} : vector<9x128xf32> to vector<1x128xf32>
    %57 = vector.broadcast %56 : vector<1x128xf32> to vector<64x128xf32>
    %58 = arith.mulf %55, %57 : vector<64x128xf32>
    %59 = arith.addf %53, %58 : vector<64x128xf32>
    %c23 = arith.constant 23 : index
    %c0_21 = arith.constant 0 : index
    %60 = vector.load %arg8[%c23, %c0_21] : memref<96x128xf32, #tpu.memory_space<vmem>>, vector<64x128xf32>
    %61 = arith.mulf %60, %20 : vector<64x128xf32>
    %62 = vector.extract_strided_slice %8 {offsets = [6, 0], sizes = [1, 128], strides = [1, 1]} : vector<9x128xf32> to vector<1x128xf32>
    %63 = vector.broadcast %62 : vector<1x128xf32> to vector<64x128xf32>
    %64 = arith.mulf %61, %63 : vector<64x128xf32>
    %65 = arith.addf %59, %64 : vector<64x128xf32>
    %c24 = arith.constant 24 : index
    %c0_22 = arith.constant 0 : index
    %66 = vector.load %arg8[%c24, %c0_22] : memref<96x128xf32, #tpu.memory_space<vmem>>, vector<64x128xf32>
    %67 = vector.extract_strided_slice %8 {offsets = [7, 0], sizes = [1, 128], strides = [1, 1]} : vector<9x128xf32> to vector<1x128xf32>
    %68 = vector.broadcast %67 : vector<1x128xf32> to vector<64x128xf32>
    %69 = arith.mulf %66, %68 : vector<64x128xf32>
    %70 = arith.addf %65, %69 : vector<64x128xf32>
    %c25 = arith.constant 25 : index
    %c0_23 = arith.constant 0 : index
    %71 = vector.load %arg8[%c25, %c0_23] : memref<96x128xf32, #tpu.memory_space<vmem>>, vector<64x128xf32>
    %72 = arith.mulf %71, %24 : vector<64x128xf32>
    %73 = vector.extract_strided_slice %8 {offsets = [8, 0], sizes = [1, 128], strides = [1, 1]} : vector<9x128xf32> to vector<1x128xf32>
    %74 = vector.broadcast %73 : vector<1x128xf32> to vector<64x128xf32>
    %75 = arith.mulf %72, %74 : vector<64x128xf32>
    %76 = arith.addf %70, %75 : vector<64x128xf32>
    %c0_24 = arith.constant 0 : index
    %c0_25 = arith.constant 0 : index
    %77 = vector.load %arg5[%c0_24, %c0_25] : memref<1x128xf32, #tpu.memory_space<vmem>>, vector<1x128xf32>
    %78 = vector.broadcast %77 : vector<1x128xf32> to vector<64x128xf32>
    %79 = arith.addf %76, %78 : vector<64x128xf32>
    %cst_26 = arith.constant 5.000000e-01 : f32
    %80 = vector.broadcast %cst_26 : f32 to vector<64x128xf32>
    %81 = arith.mulf %80, %79 : vector<64x128xf32>
    %cst_27 = arith.constant 0.707106769 : f32
    %82 = vector.broadcast %cst_27 : f32 to vector<64x128xf32>
    %83 = arith.mulf %79, %82 : vector<64x128xf32>
    %84 = math.absf %83 : vector<64x128xf32>
    %cst_28 = arith.constant 0.327591091 : f32
    %85 = vector.broadcast %cst_28 : f32 to vector<64x128xf32>
    %86 = arith.mulf %85, %84 : vector<64x128xf32>
    %cst_29 = arith.constant 1.000000e+00 : f32
    %87 = vector.broadcast %cst_29 : f32 to vector<64x128xf32>
    %88 = arith.addf %87, %86 : vector<64x128xf32>
    %cst_30 = arith.constant 1.000000e+00 : f32
    %89 = vector.broadcast %cst_30 : f32 to vector<64x128xf32>
    %90 = arith.divf %89, %88 : vector<64x128xf32>
    %cst_31 = arith.constant 1.06140542 : f32
    %91 = vector.broadcast %cst_31 : f32 to vector<64x128xf32>
    %92 = arith.mulf %91, %90 : vector<64x128xf32>
    %cst_32 = arith.constant -1.45315206 : f32
    %93 = vector.broadcast %cst_32 : f32 to vector<64x128xf32>
    %94 = arith.addf %92, %93 : vector<64x128xf32>
    %95 = arith.mulf %94, %90 : vector<64x128xf32>
    %cst_33 = arith.constant 1.42141378 : f32
    %96 = vector.broadcast %cst_33 : f32 to vector<64x128xf32>
    %97 = arith.addf %95, %96 : vector<64x128xf32>
    %98 = arith.mulf %97, %90 : vector<64x128xf32>
    %cst_34 = arith.constant -0.284496725 : f32
    %99 = vector.broadcast %cst_34 : f32 to vector<64x128xf32>
    %100 = arith.addf %98, %99 : vector<64x128xf32>
    %101 = arith.mulf %100, %90 : vector<64x128xf32>
    %cst_35 = arith.constant 0.254829586 : f32
    %102 = vector.broadcast %cst_35 : f32 to vector<64x128xf32>
    %103 = arith.addf %101, %102 : vector<64x128xf32>
    %104 = arith.mulf %103, %90 : vector<64x128xf32>
    %cst_36 = arith.constant 0.000000e+00 : f32
    %105 = vector.broadcast %cst_36 : f32 to vector<64x128xf32>
    %106 = arith.subf %105, %84 : vector<64x128xf32>
    %107 = arith.mulf %106, %84 : vector<64x128xf32>
    %108 = math.exp %107 : vector<64x128xf32>
    %109 = arith.mulf %104, %108 : vector<64x128xf32>
    %cst_37 = arith.constant 1.000000e+00 : f32
    %110 = vector.broadcast %cst_37 : f32 to vector<64x128xf32>
    %111 = arith.subf %110, %109 : vector<64x128xf32>
    %cst_38 = arith.constant 0.000000e+00 : f32
    %112 = vector.broadcast %cst_38 : f32 to vector<64x128xf32>
    %113 = arith.cmpf oge, %83, %112 : vector<64x128xf32>
    %cst_39 = arith.constant 0.000000e+00 : f32
    %114 = vector.broadcast %cst_39 : f32 to vector<64x128xf32>
    %115 = arith.subf %114, %111 : vector<64x128xf32>
    %116 = arith.select %113, %111, %115 : vector<64x128xi1>, vector<64x128xf32>
    %cst_40 = arith.constant 1.000000e+00 : f32
    %117 = vector.broadcast %cst_40 : f32 to vector<64x128xf32>
    %118 = arith.addf %117, %116 : vector<64x128xf32>
    %119 = arith.mulf %81, %118 : vector<64x128xf32>
    %120 = arith.truncf %119 : vector<64x128xf32> to vector<64x128xbf16>
    %c0_41 = arith.constant 0 : index
    %c0_42 = arith.constant 0 : index
    %121 = vector.load %arg6[%c0_41, %c0_42] : memref<64x128xbf16, #tpu.memory_space<vmem>>, vector<64x128xbf16>
    tpu.vector_store %arg6[%c0_41, %c0_42], %120 {strides = array<i32>} : memref<64x128xbf16, #tpu.memory_space<vmem>>, vector<64x128xbf16>,
    %cst_43 = arith.constant dense<0.000000e+00> : vector<128xf32>
    %122 = vector.multi_reduction <add>, %119, %cst_43 [0] : vector<64x128xf32> to vector<128xf32>
    %123 = vector.shape_cast %122 : vector<128xf32> to vector<1x128xf32>
    %124 = arith.mulf %119, %119 : vector<64x128xf32>
    %cst_44 = arith.constant dense<0.000000e+00> : vector<128xf32>
    %125 = vector.multi_reduction <add>, %124, %cst_44 [0] : vector<64x128xf32> to vector<128xf32>
    %126 = vector.shape_cast %125 : vector<128xf32> to vector<1x128xf32>
    %cst_45 = arith.constant 0.000000e+00 : f32
    %127 = vector.broadcast %cst_45 : f32 to vector<6x128xf32>
    %128 = tpu.concatenate %123, %126, %127 in 0 : vector<1x128xf32>, vector<1x128xf32>, vector<6x128xf32> -> vector<8x128xf32>
    %c0_46 = arith.constant 0 : index
    %c0_47 = arith.constant 0 : index
    %129 = vector.load %arg7[%c0_46, %c0_47] : memref<8x128xf32, #tpu.memory_space<vmem>>, vector<8x128xf32>
    tpu.vector_store %arg7[%c0_46, %c0_47], %128 {strides = array<i32>} : memref<8x128xf32, #tpu.memory_space<vmem>>, vector<8x128xf32>,
    return
  }
  func.func @transform_0(%arg0: i32) -> (i32, i32) {
    %c0_i32 = arith.constant 0 : i32
    %c0_i32_0 = arith.constant 0 : i32
    return %arg0, %c0_i32 : i32, i32
  }
  func.func @transform_1(%arg0: i32) -> (i32, i32) {
    %c0_i32 = arith.constant 0 : i32
    %c0_i32_0 = arith.constant 0 : i32
    %c0_i32_1 = arith.constant 0 : i32
    return %c0_i32, %c0_i32_0 : i32, i32
  }
  func.func @transform_2(%arg0: i32) -> (i32, i32) {
    %c0_i32 = arith.constant 0 : i32
    %c0_i32_0 = arith.constant 0 : i32
    %c0_i32_1 = arith.constant 0 : i32
    return %c0_i32, %c0_i32_0 : i32, i32
  }
  func.func @transform_3(%arg0: i32) -> (i32, i32) {
    %c0_i32 = arith.constant 0 : i32
    %c0_i32_0 = arith.constant 0 : i32
    %c0_i32_1 = arith.constant 0 : i32
    return %c0_i32, %c0_i32_0 : i32, i32
  }
  func.func @transform_4(%arg0: i32) -> (i32, i32) {
    %c0_i32 = arith.constant 0 : i32
    %c0_i32_0 = arith.constant 0 : i32
    %c0_i32_1 = arith.constant 0 : i32
    return %c0_i32, %c0_i32_0 : i32, i32
  }
  func.func @transform_5(%arg0: i32) -> (i32, i32) {
    %c0_i32 = arith.constant 0 : i32
    %c0_i32_0 = arith.constant 0 : i32
    return %arg0, %c0_i32 : i32, i32
  }
  func.func @transform_6(%arg0: i32) -> (i32, i32) {
    %c0_i32 = arith.constant 0 : i32
    %c0_i32_0 = arith.constant 0 : i32
    return %arg0, %c0_i32 : i32, i32
  }
}

</mosaic_0001>

<llo_original>
// kernel: cmt_layer_forward.5
$region0: #{cmt_layer_forward.5}
  #allocation0 [shape = 'u32[]', space=smem, size = 0x4, offset = 0x4, fixed_abs, tag = 'smem constant byte address 0x4 - core index']
  #allocation1 [shape = 'u32[72,128]{1,0:T(1,128)}', space=vmem, size = 0x9000, scoped, tag = 'internal scratch']
  %s0 = inlined_call_operand.vmem [shape: bf16[128,128], index: 0, kind: input, shape index: {}]
  %s1 = inlined_call_operand.vmem [shape: bf16[128,128], index: 1, kind: input, shape index: {}]
  %s2 = inlined_call_operand.vmem [shape: f32[1,128], index: 2, kind: input, shape index: {}]
  %s3 = inlined_call_operand.vmem [shape: f32[1,128], index: 3, kind: input, shape index: {}]
  %s4 = inlined_call_operand.vmem [shape: f32[1,128], index: 4, kind: input, shape index: {}]
  %s5 = inlined_call_operand.vmem [shape: f32[1,128], index: 5, kind: input, shape index: {}]
  %s6 = inlined_call_operand.vmem [shape: bf16[128,32], index: 6, kind: input, shape index: {}]
  %s7 = inlined_call_operand.vmem [shape: f32[1,32], index: 7, kind: input, shape index: {}]
  %s8 = inlined_call_operand.vmem [shape: f32[128,32], index: 8, kind: output, shape index: {0}]
  %s9 = inlined_call_operand.vmem [shape: f32[16,32], index: 9, kind: output, shape index: {1}]
  %10 = xla_tuple %s8, %s9
  %s11 = sld [smem:[#allocation0]]
  $region73: #{cmt_layer_forward.5} parent=0
    _
  %s13 = ssub.s32 1, %s11
  %s14 = scalar_select 0, %s13, %s11
  loop: start=0, step=1, limit=4
  $region2: #{cmt_layer_forward.5} parent=0 // loop_pre_header
    _
  $region3: #{cmt_layer_forward.5} parent=0 // loop_header
    %s16 = sphi 0, %s20
    %p17 = scmp.ge.s32.totalorder %s16, 4
    %s26 = sphi 0, %s28
    %s29 = sphi 0, %s26
    %s30 = sphi 0, %s29
    %s46 = sphi 0, %s30
    %s52 = sphi 0, %s54
    %s55 = sphi 0, %s52
    %s56 = sphi 0, %s55
    %s72 = sphi 0, %s56
    %s76 = sphi 0, %s76
    %s78 = sphi 0, %s76
    %s79 = sphi 0, %s78
    %s93 = sphi 0, %s79
    %s97 = sphi 0, %s97
    %s99 = sphi 0, %s97
    %s100 = sphi 0, %s99
    %s114 = sphi 0, %s100
    %s118 = sphi 0, %s118
    %s120 = sphi 0, %s118
    %s121 = sphi 0, %s120
    %s135 = sphi 0, %s121
    %s139 = sphi 0, %s139
    %s141 = sphi 0, %s139
    %s142 = sphi 0, %s141
    %s156 = sphi 0, %s142
    %s160 = sphi 0, %s160
    %s162 = sphi 0, %s160
    %s163 = sphi 0, %s162
    %s177 = sphi 0, %s163
    %s181 = sphi 0, %s181
    %s183 = sphi 0, %s181
    %s184 = sphi 0, %s183
    %s198 = sphi 0, %s184
    %s204 = sphi 0, %s206
    %s207 = sphi 0, %s204
    %s208 = sphi 0, %s207
    %s224 = sphi 0, %s208
    %s230 = sphi 0, %s232
    %s233 = sphi 0, %s230
    %s234 = sphi 0, %s233
    %s250 = sphi 0, %s234
  $region4: #{cmt_layer_forward.5} parent=0 // loop_header_branch
    %19 = sbr.rel (%p17) target = $region8
  $region5: #{cmt_layer_forward.5} parent=0 // loop_body
    %s21 = ssub.s32 %s16, 1
    %s22 = ssub.s32 %s16, 2
    %s23 = sadd.s32 %s16, 1
    %s24 = ssub.s32 %s16, %s23
    %p25 = scmp.eq.s32.totalorder %s24, 0
    %s27 = sadd.s32 %s26, 1
    %s28 = scalar_select %p25, %s26, %s27
    %p31 = pneg %p25
    %p32 = scmp.eq.s32.totalorder %s16, 1
    %p33 = por %p31, %p32
    %p34 = scmp.ne.s32.totalorder %s26, %s29
    %p35 = scmp.eq.s32.totalorder %s16, 0
    %p36 = por %p34, %p35
    %p37 = scmp.ne.s32.totalorder %s26, %s29
    %p38 = scmp.eq.s32.totalorder %s21, 1
    %p39 = por %p37, %p38
    %p40 = scmp.ne.s32.totalorder %s29, %s30
    %p41 = scmp.eq.s32.totalorder %s21, 0
    %p42 = por %p40, %p41
    %p43 = scmp.ne.s32.totalorder %s29, %s30
    %p44 = scmp.eq.s32.totalorder %s22, 1
    %p45 = por %p43, %p44
    %p47 = scmp.ne.s32.totalorder %s30, %s46
    %p48 = scmp.eq.s32.totalorder %s22, 0
    %p49 = por %p47, %p48
    %s50 = ssub.s32 %s16, %s23
    %p51 = scmp.eq.s32.totalorder %s50, 0
    %s53 = sadd.s32 %s52, 1
    %s54 = scalar_select %p51, %s52, %s53
    %p57 = pneg %p51
    %p58 = scmp.eq.s32.totalorder %s16, 1
    %p59 = por %p57, %p58
    %p60 = scmp.ne.s32.totalorder %s52, %s55
    %p61 = scmp.eq.s32.totalorder %s16, 0
    %p62 = por %p60, %p61
    %p63 = scmp.ne.s32.totalorder %s52, %s55
    %p64 = scmp.eq.s32.totalorder %s21, 1
    %p65 = por %p63, %p64
    %p66 = scmp.ne.s32.totalorder %s55, %s56
    %p67 = scmp.eq.s32.totalorder %s21, 0
    %p68 = por %p66, %p67
    %p69 = scmp.ne.s32.totalorder %s55, %s56
    %p70 = scmp.eq.s32.totalorder %s22, 1
    %p71 = por %p69, %p70
    %p73 = scmp.ne.s32.totalorder %s56, %s72
    %p74 = scmp.eq.s32.totalorder %s22, 0
    %p75 = por %p73, %p74
    %s77 = sadd.s32 %s76, 1
    %p80 = scmp.eq.s32.totalorder %s16, 1
    %p81 = scmp.ne.s32.totalorder %s76, %s78
    %p82 = scmp.eq.s32.totalorder %s16, 0
    %p83 = por %p81, %p82
    %p84 = scmp.ne.s32.totalorder %s76, %s78
    %p85 = scmp.eq.s32.totalorder %s21, 1
    %p86 = por %p84, %p85
    %p87 = scmp.ne.s32.totalorder %s78, %s79
    %p88 = scmp.eq.s32.totalorder %s21, 0
    %p89 = por %p87, %p88
    %p90 = scmp.ne.s32.totalorder %s78, %s79
    %p91 = scmp.eq.s32.totalorder %s22, 1
    %p92 = por %p90, %p91
    %p94 = scmp.ne.s32.totalorder %s79, %s93
    %p95 = scmp.eq.s32.totalorder %s22, 0
    %p96 = por %p94, %p95
    %s98 = sadd.s32 %s97, 1
    %p101 = scmp.eq.s32.totalorder %s16, 1
    %p102 = scmp.ne.s32.totalorder %s97, %s99
    %p103 = scmp.eq.s32.totalorder %s16, 0
    %p104 = por %p102, %p103
    %p105 = scmp.ne.s32.totalorder %s97, %s99
    %p106 = scmp.eq.s32.totalorder %s21, 1
    %p107 = por %p105, %p106
    %p108 = scmp.ne.s32.totalorder %s99, %s100
    %p109 = scmp.eq.s32.totalorder %s21, 0
    %p110 = por %p108, %p109
    %p111 = scmp.ne.s32.totalorder %s99, %s100
    %p112 = scmp.eq.s32.totalorder %s22, 1
    %p113 = por %p111, %p112
    %p115 = scmp.ne.s32.totalorder %s100, %s114
    %p116 = scmp.eq.s32.totalorder %s22, 0
    %p117 = por %p115, %p116
    %s119 = sadd.s32 %s118, 1
    %p122 = scmp.eq.s32.totalorder %s16, 1
    %p123 = scmp.ne.s32.totalorder %s118, %s120
    %p124 = scmp.eq.s32.totalorder %s16, 0
    %p125 = por %p123, %p124
    %p126 = scmp.ne.s32.totalorder %s118, %s120
    %p127 = scmp.eq.s32.totalorder %s21, 1
    %p128 = por %p126, %p127
    %p129 = scmp.ne.s32.totalorder %s120, %s121
    %p130 = scmp.eq.s32.totalorder %s21, 0
    %p131 = por %p129, %p130
    %p132 = scmp.ne.s32.totalorder %s120, %s121
    %p133 = scmp.eq.s32.totalorder %s22, 1
    %p134 = por %p132, %p133
    %p136 = scmp.ne.s32.totalorder %s121, %s135
    %p137 = scmp.eq.s32.totalorder %s22, 0
    %p138 = por %p136, %p137
    %s140 = sadd.s32 %s139, 1
    %p143 = scmp.eq.s32.totalorder %s16, 1
    %p144 = scmp.ne.s32.totalorder %s139, %s141
    %p145 = scmp.eq.s32.totalorder %s16, 0
    %p146 = por %p144, %p145
    %p147 = scmp.ne.s32.totalorder %s139, %s141
    %p148 = scmp.eq.s32.totalorder %s21, 1
    %p149 = por %p147, %p148
    %p150 = scmp.ne.s32.totalorder %s141, %s142
    %p151 = scmp.eq.s32.totalorder %s21, 0
    %p152 = por %p150, %p151
    %p153 = scmp.ne.s32.totalorder %s141, %s142
    %p154 = scmp.eq.s32.totalorder %s22, 1
    %p155 = por %p153, %p154
    %p157 = scmp.ne.s32.totalorder %s142, %s156
    %p158 = scmp.eq.s32.totalorder %s22, 0
    %p159 = por %p157, %p158
    %s161 = sadd.s32 %s160, 1
    %p164 = scmp.eq.s32.totalorder %s16, 1
    %p165 = scmp.ne.s32.totalorder %s160, %s162
    %p166 = scmp.eq.s32.totalorder %s16, 0
    %p167 = por %p165, %p166
    %p168 = scmp.ne.s32.totalorder %s160, %s162
    %p169 = scmp.eq.s32.totalorder %s21, 1
    %p170 = por %p168, %p169
    %p171 = scmp.ne.s32.totalorder %s162, %s163
    %p172 = scmp.eq.s32.totalorder %s21, 0
    %p173 = por %p171, %p172
    %p174 = scmp.ne.s32.totalorder %s162, %s163
    %p175 = scmp.eq.s32.totalorder %s22, 1
    %p176 = por %p174, %p175
    %p178 = scmp.ne.s32.totalorder %s163, %s177
    %p179 = scmp.eq.s32.totalorder %s22, 0
    %p180 = por %p178, %p179
    %s182 = sadd.s32 %s181, 1
    %p185 = scmp.eq.s32.totalorder %s16, 1
    %p186 = scmp.ne.s32.totalorder %s181, %s183
    %p187 = scmp.eq.s32.totalorder %s16, 0
    %p188 = por %p186, %p187
    %p189 = scmp.ne.s32.totalorder %s181, %s183
    %p190 = scmp.eq.s32.totalorder %s21, 1
    %p191 = por %p189, %p190
    %p192 = scmp.ne.s32.totalorder %s183, %s184
    %p193 = scmp.eq.s32.totalorder %s21, 0
    %p194 = por %p192, %p193
    %p195 = scmp.ne.s32.totalorder %s183, %s184
    %p196 = scmp.eq.s32.totalorder %s22, 1
    %p197 = por %p195, %p196
    %p199 = scmp.ne.s32.totalorder %s184, %s198
    %p200 = scmp.eq.s32.totalorder %s22, 0
    %p201 = por %p199, %p200
    %s202 = ssub.s32 %s16, %s23
    %p203 = scmp.eq.s32.totalorder %s202, 0
    %s205 = sadd.s32 %s204, 1
    %s206 = scalar_select %p203, %s204, %s205
    %p209 = pneg %p203
    %p210 = scmp.eq.s32.totalorder %s16, 1
    %p211 = por %p209, %p210
    %p212 = scmp.ne.s32.totalorder %s204, %s207
    %p213 = scmp.eq.s32.totalorder %s16, 0
    %p214 = por %p212, %p213
    %p215 = scmp.ne.s32.totalorder %s204, %s207
    %p216 = scmp.eq.s32.totalorder %s21, 1
    %p217 = por %p215, %p216
    %p218 = scmp.ne.s32.totalorder %s207, %s208
    %p219 = scmp.eq.s32.totalorder %s21, 0
    %p220 = por %p218, %p219
    %p221 = scmp.ne.s32.totalorder %s207, %s208
    %p222 = scmp.eq.s32.totalorder %s22, 1
    %p223 = por %p221, %p222
    %p225 = scmp.ne.s32.totalorder %s208, %s224
    %p226 = scmp.eq.s32.totalorder %s22, 0
    %p227 = por %p225, %p226
    %s228 = ssub.s32 %s16, %s23
    %p229 = scmp.eq.s32.totalorder %s228, 0
    %s231 = sadd.s32 %s230, 1
    %s232 = scalar_select %p229, %s230, %s231
    %p235 = pneg %p229
    %p236 = scmp.eq.s32.totalorder %s16, 1
    %p237 = por %p235, %p236
    %p238 = scmp.ne.s32.totalorder %s230, %s233
    %p239 = scmp.eq.s32.totalorder %s16, 0
    %p240 = por %p238, %p239
    %p241 = scmp.ne.s32.totalorder %s230, %s233
    %p242 = scmp.eq.s32.totalorder %s21, 1
    %p243 = por %p241, %p242
    %p244 = scmp.ne.s32.totalorder %s233, %s234
    %p245 = scmp.eq.s32.totalorder %s21, 0
    %p246 = por %p244, %p245
    %p247 = scmp.ne.s32.totalorder %s233, %s234
    %p248 = scmp.eq.s32.totalorder %s22, 1
    %p249 = por %p247, %p248
    %p251 = scmp.ne.s32.totalorder %s234, %s250
    %p252 = scmp.eq.s32.totalorder %s22, 0
    %p253 = por %p251, %p252
    %p254 = scmp.le.s32.totalorder 1, %s16
    %p255 = scmp.lt.s32.totalorder %s16, 3
    %p256 = pnand %p254, %p255
    %p257 = pneg %p256
    // Predicated region
    $region9: #{cmt_layer_forward.5} parent=5 // pred_check
      _
    $region10: #{cmt_layer_forward.5} parent=5 // pred_check_branch
      %259 = sbr.rel (%p256) target = $region12
    $region11: #{cmt_layer_forward.5} parent=5 // pred_region
      %s260 = ssub.s32 %s16, 1
      // Predicated region
      $region13: #{cmt_layer_forward.5} parent=11 // pred_check
        %p261 = pneg %p89
      $region14: #{cmt_layer_forward.5} parent=11 // pred_check_branch
        %263 = sbr.rel (%p261) target = $region16
      $region15: #{cmt_layer_forward.5} parent=11 // pred_region
        _
      $region16: #{cmt_layer_forward.5} parent=11 // pred_fallthru
        _
      // Predicated region
      $region17: #{cmt_layer_forward.5} parent=11 // pred_check
        %p264 = pneg %p110
      $region18: #{cmt_layer_forward.5} parent=11 // pred_check_branch
        %266 = sbr.rel (%p264) target = $region20
      $region19: #{cmt_layer_forward.5} parent=11 // pred_region
        _
      $region20: #{cmt_layer_forward.5} parent=11 // pred_fallthru
        _
      // Predicated region
      $region21: #{cmt_layer_forward.5} parent=11 // pred_check
        %p267 = pneg %p131
      $region22: #{cmt_layer_forward.5} parent=11 // pred_check_branch
        %269 = sbr.rel (%p267) target = $region24
      $region23: #{cmt_layer_forward.5} parent=11 // pred_region
        _
      $region24: #{cmt_layer_forward.5} parent=11 // pred_fallthru
        _
      // Predicated region
      $region25: #{cmt_layer_forward.5} parent=11 // pred_check
        %p270 = pneg %p152
      $region26: #{cmt_layer_forward.5} parent=11 // pred_check_branch
        %272 = sbr.rel (%p270) target = $region28
      $region27: #{cmt_layer_forward.5} parent=11 // pred_region
        _
      $region28: #{cmt_layer_forward.5} parent=11 // pred_fallthru
        _
      // Predicated region
      $region29: #{cmt_layer_forward.5} parent=11 // pred_check
        %p273 = pneg %p173
      $region30: #{cmt_layer_forward.5} parent=11 // pred_check_branch
        %275 = sbr.rel (%p273) target = $region32
      $region31: #{cmt_layer_forward.5} parent=11 // pred_region
        _
      $region32: #{cmt_layer_forward.5} parent=11 // pred_fallthru
        _
      // Predicated region
      $region33: #{cmt_layer_forward.5} parent=11 // pred_check
        %p276 = pneg %p194
      $region34: #{cmt_layer_forward.5} parent=11 // pred_check_branch
        %278 = sbr.rel (%p276) target = $region36
      $region35: #{cmt_layer_forward.5} parent=11 // pred_region
        _
      $region36: #{cmt_layer_forward.5} parent=11 // pred_fallthru
        _
    $region12: #{cmt_layer_forward.5} parent=5 // pred_fallthru
      _
    %p279 = scmp.lt.s32.totalorder %s16, 2
    // Predicated region
    $region37: #{cmt_layer_forward.5} parent=5 // pred_check
      %p280 = pneg %p279
    $region38: #{cmt_layer_forward.5} parent=5 // pred_check_branch
      %282 = sbr.rel (%p280) target = $region40
    $region39: #{cmt_layer_forward.5} parent=5 // pred_region
      // Predicated region
      $region41: #{cmt_layer_forward.5} parent=39 // pred_check
        %p283 = pneg %p36
      $region42: #{cmt_layer_forward.5} parent=39 // pred_check_branch
        %285 = sbr.rel (%p283) target = $region44
      $region43: #{cmt_layer_forward.5} parent=39 // pred_region
        %s286 = smul.u32 8, %s16
        %p287 = scmp.lt.s32.totalorder %s286, 15
        %s288 = scalar_select %p287, %s286, 15
        %s289 = smul.addr %s288, 4
        %s290 = scalar_lea.vmem %s0, %s289
        %s291 = smul.u32 8, %s16
      $region44: #{cmt_layer_forward.5} parent=39 // pred_fallthru
        _
      // Predicated region
      $region45: #{cmt_layer_forward.5} parent=39 // pred_check
        %p292 = pneg %p62
      $region46: #{cmt_layer_forward.5} parent=39 // pred_check_branch
        %294 = sbr.rel (%p292) target = $region48
      $region47: #{cmt_layer_forward.5} parent=39 // pred_region
        %s295 = smul.u32 8, %s16
        %p296 = scmp.lt.s32.totalorder %s295, 15
        %s297 = scalar_select %p296, %s295, 15
        %s298 = smul.addr %s297, 4
        %s299 = scalar_lea.vmem %s1, %s298
        %s300 = smul.u32 8, %s16
      $region48: #{cmt_layer_forward.5} parent=39 // pred_fallthru
        _
    $region40: #{cmt_layer_forward.5} parent=5 // pred_fallthru
      _
    %p301 = scmp.le.s32.totalorder 1, %s16
    %p302 = scmp.lt.s32.totalorder %s16, 3
    %p303 = pnand %p301, %p302
    %p304 = pneg %p303
    // Predicated region
    $region49: #{cmt_layer_forward.5} parent=5 // pred_check
      _
    $region50: #{cmt_layer_forward.5} parent=5 // pred_check_branch
      %306 = sbr.rel (%p303) target = $region52
    $region51: #{cmt_layer_forward.5} parent=5 // pred_region
      %s307 = ssub.s32 %s16, 1
      %s308 = smul.u32 8, %s21
      %p309 = scmp.lt.s32.totalorder %s308, 15
      %s310 = scalar_select %p309, %s308, 15
      %s311 = smul.addr %s310, 4
      %s312 = scalar_lea.vmem %s0, %s311
      %p313 = pneg %p42
      %p314 = pneg %p39
      %s315 = smul.u32 8, %s21
      %p316 = scmp.lt.s32.totalorder %s315, 15
      %s317 = scalar_select %p316, %s315, 15
      %s318 = smul.addr %s317, 4
      %s319 = scalar_lea.vmem %s1, %s318
      %p320 = pneg %p68
      %p321 = pneg %p65
      %p322 = pneg %p89
      %p323 = pneg %p86
      %p324 = pneg %p110
      %p325 = pneg %p107
      %p326 = pneg %p131
      %p327 = pneg %p128
      %p328 = pneg %p152
      %p329 = pneg %p149
      %p330 = pneg %p173
      %p331 = pneg %p170
      %p332 = pneg %p194
      %p333 = pneg %p191
      %p334 = pneg %p220
      %p335 = pneg %p217
      %s336 = smul.u32 8, %s21
      %p337 = scmp.lt.s32.totalorder %s336, 15
      %s338 = scalar_select %p337, %s336, 15
      %s339 = smul.addr %s338, 8
      %s340 = scalar_lea.vmem %s8, %s339
      %p341 = pneg %p246
      %p342 = pneg %p243
      %p343 = scmp.lt.s32.totalorder %s21, 1
      %s344 = scalar_select %p343, %s21, 1
      %s345 = smul.addr %s344, 8
      %s346 = scalar_lea.vmem %s9, %s345
      %s347 = smul.u32 8, %s21
      %p348 = scmp.lt.s32.totalorder %s347, 15
      %s349 = scalar_select %p348, %s347, 15
      %s350 = smul.addr %s349, 4
      %s351 = scalar_lea.vmem %s0, %s350
      %s352 = smul.u32 8, %s21
      %s353 = smul.u32 8, %s21
      %p354 = scmp.lt.s32.totalorder %s353, 15
      %s355 = scalar_select %p354, %s353, 15
      %s356 = smul.addr %s355, 4
      %s357 = scalar_lea.vmem %s1, %s356
      %s358 = smul.u32 8, %s21
      %s359 = smul.u32 8, %s21
      %p360 = scmp.lt.s32.totalorder %s359, 15
      %s361 = scalar_select %p360, %s359, 15
      %s362 = smul.addr %s361, 8
      %s363 = scalar_lea.vmem %s8, %s362
      %s364 = smul.u32 8, %s21
      %p365 = scmp.lt.s32.totalorder %s21, 1
      %s366 = scalar_select %p365, %s21, 1
      %s367 = smul.addr %s366, 8
      %s368 = scalar_lea.vmem %s9, %s367
      %v369 = vld [vmem:[%s351] sm:$0xf]
      %v370 = vld [vmem:[%s351 + $0x4] sm:$0xf]
      %v371 = vld [vmem:[%s351 + $0x8] sm:$0xf]
      %v372 = vld [vmem:[%s351 + $0xc] sm:$0xf]
      %v373 = vld [vmem:[%s351 + $0x10] sm:$0xf]
      %v374 = vld [vmem:[%s351 + $0x14] sm:$0xf]
      %v375 = vld [vmem:[%s351 + $0x18] sm:$0xf]
      %v376 = vld [vmem:[%s351 + $0x1c] sm:$0xf]
      %v377 = vunpack.c.l.bf16 %v369
      %v378 = vunpack.c.l.bf16 %v370
      %v379 = vunpack.c.l.bf16 %v371
      %v380 = vunpack.c.l.bf16 %v372
      %v381 = vunpack.c.l.bf16 %v373
      %v382 = vunpack.c.l.bf16 %v374
      %v383 = vunpack.c.l.bf16 %v375
      %v384 = vunpack.c.l.bf16 %v376
      %v385 = vld [vmem:[%s2] sm:$0x1]
      %v387 = vperm.slane %v385, 0
      %v389 = vmul.f32 %v377, %v387
      %v390 = vmul.f32 %v378, %v387
      %v391 = vmul.f32 %v379, %v387
      %v392 = vmul.f32 %v380, %v387
      %v393 = vmul.f32 %v381, %v387
      %v394 = vmul.f32 %v382, %v387
      %v395 = vmul.f32 %v383, %v387
      %v396 = vmul.f32 %v384, %v387
      %v397 = vld [vmem:[%s3] sm:$0x1]
      %v399 = vperm.slane %v397, 0
      %v401 = vadd.f32 %v389, %v399
      %v402 = vadd.f32 %v390, %v399
      %v403 = vadd.f32 %v391, %v399
      %v404 = vadd.f32 %v392, %v399
      %v405 = vadd.f32 %v393, %v399
      %v406 = vadd.f32 %v394, %v399
      %v407 = vadd.f32 %v395, %v399
      %v408 = vadd.f32 %v396, %v399
      %v409 = vld [vmem:[%s357] sm:$0xf]
      %v410 = vld [vmem:[%s357 + $0x4] sm:$0xf]
      %v411 = vld [vmem:[%s357 + $0x8] sm:$0xf]
      %v412 = vld [vmem:[%s357 + $0xc] sm:$0xf]
      %v413 = vld [vmem:[%s357 + $0x10] sm:$0xf]
      %v414 = vld [vmem:[%s357 + $0x14] sm:$0xf]
      %v415 = vld [vmem:[%s357 + $0x18] sm:$0xf]
      %v416 = vld [vmem:[%s357 + $0x1c] sm:$0xf]
      %v417 = vunpack.c.l.bf16 %v409
      %v418 = vunpack.c.l.bf16 %v410
      %v419 = vunpack.c.l.bf16 %v411
      %v420 = vunpack.c.l.bf16 %v412
      %v421 = vunpack.c.l.bf16 %v413
      %v422 = vunpack.c.l.bf16 %v414
      %v423 = vunpack.c.l.bf16 %v415
      %v424 = vunpack.c.l.bf16 %v416
      %v425 = vld [vmem:[%s4] sm:$0x1]
      %v427 = vperm.slane %v425, 0
      %v429 = vmul.f32 %v417, %v427
      %v430 = vmul.f32 %v418, %v427
      %v431 = vmul.f32 %v419, %v427
      %v432 = vmul.f32 %v420, %v427
      %v433 = vmul.f32 %v421, %v427
      %v434 = vmul.f32 %v422, %v427
      %v435 = vmul.f32 %v423, %v427
      %v436 = vmul.f32 %v424, %v427
      %v437 = vld [vmem:[%s5] sm:$0x1]
      %v439 = vperm.slane %v437, 0
      %v441 = vadd.f32 %v429, %v439
      %v442 = vadd.f32 %v430, %v439
      %v443 = vadd.f32 %v431, %v439
      %v444 = vadd.f32 %v432, %v439
      %v445 = vadd.f32 %v433, %v439
      %v446 = vadd.f32 %v434, %v439
      %v447 = vadd.f32 %v435, %v439
      %v448 = vadd.f32 %v436, %v439
      %v449 = vadd.f32 %v401, %v441
      %v450 = vadd.f32 %v402, %v442
      %v451 = vadd.f32 %v403, %v443
      %v452 = vadd.f32 %v404, %v444
      %v453 = vadd.f32 %v405, %v445
      %v454 = vadd.f32 %v406, %v446
      %v455 = vadd.f32 %v407, %v447
      %v456 = vadd.f32 %v408, %v448
      %v457 = vpack.c.bf16 %v450, %v449
      %v458 = vpack.c.bf16 %v452, %v451
      %v459 = vpack.c.bf16 %v454, %v453
      %v460 = vpack.c.bf16 %v456, %v455
      %v461 = vld [vmem:[%s6] sm:$0xf]
      %v462 = vld [vmem:[%s6 + $0x4] sm:$0xf]
      %v463 = vld [vmem:[%s6 + $0x8] sm:$0xf]
      %v464 = vld [vmem:[%s6 + $0xc] sm:$0xf]
      %v465 = vld [vmem:[%s6 + $0x10] sm:$0xf]
      %v466 = vld [vmem:[%s6 + $0x14] sm:$0xf]
      %v467 = vld [vmem:[%s6 + $0x18] sm:$0xf]
      %v468 = vld [vmem:[%s6 + $0x1c] sm:$0xf]
      %v469 = vld [vmem:[%s6 + $0x20] sm:$0xf]
      %v470 = vld [vmem:[%s6 + $0x24] sm:$0xf]
      %v471 = vld [vmem:[%s6 + $0x28] sm:$0xf]
      %v472 = vld [vmem:[%s6 + $0x2c] sm:$0xf]
      %v473 = vld [vmem:[%s6 + $0x30] sm:$0xf]
      %v474 = vld [vmem:[%s6 + $0x34] sm:$0xf]
      %v475 = vld [vmem:[%s6 + $0x38] sm:$0xf]
      %v476 = vld [vmem:[%s6 + $0x3c] sm:$0xf]
      %v477 = vld [vmem:[%s7] sm:$0x1]
      %v479 = vperm.slane %v477, 0
      %v497 = vunpack.c.l.b16 %v461
      %v498 = vunpack.c.l.b16 %v462
      %v499 = vunpack.c.l.b16 %v463
      %v500 = vunpack.c.l.b16 %v464
      %v501 = vunpack.c.l.b16 %v465
      %v502 = vunpack.c.l.b16 %v466
      %v503 = vunpack.c.l.b16 %v467
      %v504 = vunpack.c.l.b16 %v468
      %v505 = vunpack.c.l.b16 %v469
      %v506 = vunpack.c.l.b16 %v470
      %v507 = vunpack.c.l.b16 %v471
      %v508 = vunpack.c.l.b16 %v472
      %v509 = vunpack.c.l.b16 %v473
      %v510 = vunpack.c.l.b16 %v474
      %v511 = vunpack.c.l.b16 %v475
      %v512 = vunpack.c.l.b16 %v476
      %v513 = vpack.c.b16 %v498, %v497
      %v514 = vpack.c.b16 %v500, %v499
      %v515 = vpack.c.b16 %v502, %v501
      %v516 = vpack.c.b16 %v504, %v503
      %v517 = vpack.c.b16 %v506, %v505
      %v518 = vpack.c.b16 %v508, %v507
      %v519 = vpack.c.b16 %v510, %v509
      %v520 = vpack.c.b16 %v512, %v511
      %529 = vmatpush.bf16.msra.mxu0 %v520
      %530 = vmatpush.bf16.msra.mxu0 %v519
      %531 = vmatpush.bf16.msra.mxu0 %v518
      %532 = vmatpush.bf16.msra.mxu0 %v517
      %533 = vmatpush.bf16.msra.mxu0 %v516
      %534 = vmatpush.bf16.msra.mxu0 %v515
      %535 = vmatpush.bf16.msra.mxu0 %v514
      %536 = vmatpush.bf16.msra.mxu0 %v513
      %537 = vmatmul.bf16.gmra.mxu0 %v457
      %v538 = vpop.f32.mrf.mxu0
      %v539 = vadd.f32 %v479, %v538
      %v540 = vpop.f32.mrf.mxu0
      %v541 = vadd.f32 %v479, %v540
      %542 = vmatmul.bf16.gmra.mxu0 %v458
      %v543 = vpop.f32.mrf.mxu0
      %v544 = vadd.f32 %v479, %v543
      %v545 = vpop.f32.mrf.mxu0
      %v546 = vadd.f32 %v479, %v545
      %547 = vmatmul.bf16.gmra.mxu0 %v459
      %v548 = vpop.f32.mrf.mxu0
      %v549 = vadd.f32 %v479, %v548
      %v550 = vpop.f32.mrf.mxu0
      %v551 = vadd.f32 %v479, %v550
      %552 = vmatmul.bf16.gmra.mxu0 %v460
      %v553 = vpop.f32.mrf.mxu0
      %v554 = vadd.f32 %v479, %v553
      %v555 = vpop.f32.mrf.mxu0
      %v556 = vadd.f32 %v479, %v555
      %557 = vdwg.mxu0
      %vm558 = vcmask 261120
      %559 = vst.msk [vmem:[%s363] sm:$0xff] %vm558, %v539
      %560 = vst.msk [vmem:[%s363 + $0x8] sm:$0xff] %vm558, %v541
      %561 = vst.msk [vmem:[%s363 + $0x10] sm:$0xff] %vm558, %v544
      %562 = vst.msk [vmem:[%s363 + $0x18] sm:$0xff] %vm558, %v546
      %563 = vst.msk [vmem:[%s363 + $0x20] sm:$0xff] %vm558, %v549
      %564 = vst.msk [vmem:[%s363 + $0x28] sm:$0xff] %vm558, %v551
      %565 = vst.msk [vmem:[%s363 + $0x30] sm:$0xff] %vm558, %v554
      %566 = vst.msk [vmem:[%s363 + $0x38] sm:$0xff] %vm558, %v556
      %v567 = vsel %vm558, %v539, 0.0
      %v568 = vsel %vm558, %v541, 0.0
      %v569 = vadd.f32 %v567, %v568
      %v570 = vsel %vm558, %v544, 0.0
      %v571 = vadd.f32 %v569, %v570
      %v572 = vsel %vm558, %v546, 0.0
      %v573 = vadd.f32 %v571, %v572
      %v574 = vsel %vm558, %v549, 0.0
      %v575 = vadd.f32 %v573, %v574
      %v576 = vsel %vm558, %v551, 0.0
      %v577 = vadd.f32 %v575, %v576
      %v578 = vsel %vm558, %v554, 0.0
      %v579 = vadd.f32 %v577, %v578
      %v580 = vsel %vm558, %v556, 0.0
      %v581 = vadd.f32 %v579, %v580
      %v582 = vrot.slane %v581, 4
      %v583 = vadd.f32 %v581, %v582
      %v584 = vrot.slane %v583, 2
      %v585 = vadd.f32 %v583, %v584
      %v586 = vrot.slane %v585, 1
      %v587 = vadd.f32 %v585, %v586
      %v588 = vmul.f32 %v539, %v539
      %v589 = vmul.f32 %v541, %v541
      %v590 = vmul.f32 %v544, %v544
      %v591 = vmul.f32 %v546, %v546
      %v592 = vmul.f32 %v549, %v549
      %v593 = vmul.f32 %v551, %v551
      %v594 = vmul.f32 %v554, %v554
      %v595 = vmul.f32 %v556, %v556
      %v596 = vsel %vm558, %v588, 0.0
      %v597 = vsel %vm558, %v589, 0.0
      %v598 = vadd.f32 %v596, %v597
      %v599 = vsel %vm558, %v590, 0.0
      %v600 = vadd.f32 %v598, %v599
      %v601 = vsel %vm558, %v591, 0.0
      %v602 = vadd.f32 %v600, %v601
      %v603 = vsel %vm558, %v592, 0.0
      %v604 = vadd.f32 %v602, %v603
      %v605 = vsel %vm558, %v593, 0.0
      %v606 = vadd.f32 %v604, %v605
      %v607 = vsel %vm558, %v594, 0.0
      %v608 = vadd.f32 %v606, %v607
      %v609 = vsel %vm558, %v595, 0.0
      %v610 = vadd.f32 %v608, %v609
      %v611 = vrot.slane %v610, 4
      %v612 = vadd.f32 %v610, %v611
      %v613 = vrot.slane %v612, 2
      %v614 = vadd.f32 %v612, %v613
      %v615 = vrot.slane %v614, 1
      %v616 = vadd.f32 %v614, %v615
      %vm617 = vcmask 1040384
      %v618 = vsel %vm617, %v587, %v616
      %vm619 = vcmask 1041408
      %v620 = vsel %vm619, %v618, 0.0
      %621 = vst.msk [vmem:[%s368] sm:$0xff] %vm558, %v620
      %s622 = smul.u32 8, %s21
      %p623 = scmp.lt.s32.totalorder %s622, 15
      %s624 = scalar_select %p623, %s622, 15
      %s625 = smul.addr %s624, 8
      %s626 = scalar_lea.vmem %s8, %s625
      %p627 = scmp.lt.s32.totalorder %s21, 1
      %s628 = scalar_select %p627, %s21, 1
      %s629 = smul.addr %s628, 8
      %s630 = scalar_lea.vmem %s9, %s629
      // Predicated region
      $region53: #{cmt_layer_forward.5} parent=51 // pred_check
        %p631 = pneg %p217
      $region54: #{cmt_layer_forward.5} parent=51 // pred_check_branch
        %633 = sbr.rel (%p631) target = $region56
      $region55: #{cmt_layer_forward.5} parent=51 // pred_region
        %s634 = smul.u32 8, %s21
      $region56: #{cmt_layer_forward.5} parent=51 // pred_fallthru
        _
      // Predicated region
      $region57: #{cmt_layer_forward.5} parent=51 // pred_check
        %p635 = pneg %p243
      $region58: #{cmt_layer_forward.5} parent=51 // pred_check_branch
        %637 = sbr.rel (%p635) target = $region60
      $region59: #{cmt_layer_forward.5} parent=51 // pred_region
        _
      $region60: #{cmt_layer_forward.5} parent=51 // pred_fallthru
        _
    $region52: #{cmt_layer_forward.5} parent=5 // pred_fallthru
      _
    %p638 = scmp.le.s32.totalorder 2, %s16
    // Predicated region
    $region61: #{cmt_layer_forward.5} parent=5 // pred_check
      %p639 = pneg %p638
    $region62: #{cmt_layer_forward.5} parent=5 // pred_check_branch
      %641 = sbr.rel (%p639) target = $region64
    $region63: #{cmt_layer_forward.5} parent=5 // pred_region
      %s642 = ssub.s32 %s16, 2
      // Predicated region
      $region65: #{cmt_layer_forward.5} parent=63 // pred_check
        %p643 = pneg %p223
      $region66: #{cmt_layer_forward.5} parent=63 // pred_check_branch
        %645 = sbr.rel (%p643) target = $region68
      $region67: #{cmt_layer_forward.5} parent=63 // pred_region
        %s646 = smul.u32 8, %s22
        %p647 = scmp.lt.s32.totalorder %s646, 15
        %s648 = scalar_select %p647, %s646, 15
        %s649 = smul.addr %s648, 8
        %s650 = scalar_lea.vmem %s8, %s649
      $region68: #{cmt_layer_forward.5} parent=63 // pred_fallthru
        _
      // Predicated region
      $region69: #{cmt_layer_forward.5} parent=63 // pred_check
        %p651 = pneg %p249
      $region70: #{cmt_layer_forward.5} parent=63 // pred_check_branch
        %653 = sbr.rel (%p651) target = $region72
      $region71: #{cmt_layer_forward.5} parent=63 // pred_region
        %p654 = scmp.lt.s32.totalorder %s22, 1
        %s655 = scalar_select %p654, %s22, 1
        %s656 = smul.addr %s655, 8
        %s657 = scalar_lea.vmem %s9, %s656
      $region72: #{cmt_layer_forward.5} parent=63 // pred_fallthru
        _
    $region64: #{cmt_layer_forward.5} parent=5 // pred_fallthru
      _
  $region6: #{cmt_layer_forward.5} parent=0 // loop_footer
    %s20 = sadd.s32 1, %s16
  $region7: #{cmt_layer_forward.5} parent=0 // loop_footer_branch
    %15 = sbr.rel target = $region3
  $region8: #{cmt_layer_forward.5} parent=0 // loop_exit
    _

// kernel: cmt_layer_forward.4
$region0: #{cmt_layer_forward.4}
  #allocation0 [shape = 'u32[]', space=smem, size = 0x4, offset = 0x4, fixed_abs, tag = 'smem constant byte address 0x4 - core index']
  #allocation1 [shape = 'u32[72,128]{1,0:T(1,128)}', space=vmem, size = 0x9000, scoped, tag = 'internal scratch']
  #allocation2 [shape = 'f32[96,128]{1,0:T(8,128)}', space=vmem, size = 0xc000, scoped, tag = 'scratch operand']
  %s0 = inlined_call_operand.vmem [shape: bf16[128,128], index: 0, kind: input, shape index: {}]
  %s1 = inlined_call_operand.vmem [shape: f32[1,128], index: 1, kind: input, shape index: {}]
  %s2 = inlined_call_operand.vmem [shape: f32[1,128], index: 2, kind: input, shape index: {}]
  %s3 = inlined_call_operand.vmem [shape: f32[9,128], index: 3, kind: input, shape index: {}]
  %s4 = inlined_call_operand.vmem [shape: f32[1,128], index: 4, kind: input, shape index: {}]
  %s5 = inlined_call_operand.vmem [shape: bf16[128,128], index: 5, kind: output, shape index: {0}]
  %s6 = inlined_call_operand.vmem [shape: f32[16,128], index: 6, kind: output, shape index: {1}]
  %7 = xla_tuple %s5, %s6
  %s8 = sld [smem:[#allocation0]]
  $region61: #{cmt_layer_forward.4} parent=0
    _
  %s10 = ssub.s32 1, %s8
  %s11 = scalar_select 0, %s10, %s8
  loop: start=0, step=1, limit=4
  $region2: #{cmt_layer_forward.4} parent=0 // loop_pre_header
    _
  $region3: #{cmt_layer_forward.4} parent=0 // loop_header
    %s13 = sphi 0, %s17
    %p14 = scmp.ge.s32.totalorder %s13, 4
    %s23 = sphi 0, %s25
    %s26 = sphi 0, %s23
    %s27 = sphi 0, %s26
    %s43 = sphi 0, %s27
    %s47 = sphi 0, %s47
    %s49 = sphi 0, %s47
    %s50 = sphi 0, %s49
    %s64 = sphi 0, %s50
    %s68 = sphi 0, %s68
    %s70 = sphi 0, %s68
    %s71 = sphi 0, %s70
    %s85 = sphi 0, %s71
    %s89 = sphi 0, %s89
    %s91 = sphi 0, %s89
    %s92 = sphi 0, %s91
    %s106 = sphi 0, %s92
    %s110 = sphi 0, %s110
    %s112 = sphi 0, %s110
    %s113 = sphi 0, %s112
    %s127 = sphi 0, %s113
    %s133 = sphi 0, %s135
    %s136 = sphi 0, %s133
    %s137 = sphi 0, %s136
    %s153 = sphi 0, %s137
    %s159 = sphi 0, %s161
    %s162 = sphi 0, %s159
    %s163 = sphi 0, %s162
    %s179 = sphi 0, %s163
  $region4: #{cmt_layer_forward.4} parent=0 // loop_header_branch
    %16 = sbr.rel (%p14) target = $region8
  $region5: #{cmt_layer_forward.4} parent=0 // loop_body
    %s18 = ssub.s32 %s13, 1
    %s19 = ssub.s32 %s13, 2
    %s20 = sadd.s32 %s13, 1
    %s21 = ssub.s32 %s13, %s20
    %p22 = scmp.eq.s32.totalorder %s21, 0
    %s24 = sadd.s32 %s23, 1
    %s25 = scalar_select %p22, %s23, %s24
    %p28 = pneg %p22
    %p29 = scmp.eq.s32.totalorder %s13, 1
    %p30 = por %p28, %p29
    %p31 = scmp.ne.s32.totalorder %s23, %s26
    %p32 = scmp.eq.s32.totalorder %s13, 0
    %p33 = por %p31, %p32
    %p34 = scmp.ne.s32.totalorder %s23, %s26
    %p35 = scmp.eq.s32.totalorder %s18, 1
    %p36 = por %p34, %p35
    %p37 = scmp.ne.s32.totalorder %s26, %s27
    %p38 = scmp.eq.s32.totalorder %s18, 0
    %p39 = por %p37, %p38
    %p40 = scmp.ne.s32.totalorder %s26, %s27
    %p41 = scmp.eq.s32.totalorder %s19, 1
    %p42 = por %p40, %p41
    %p44 = scmp.ne.s32.totalorder %s27, %s43
    %p45 = scmp.eq.s32.totalorder %s19, 0
    %p46 = por %p44, %p45
    %s48 = sadd.s32 %s47, 1
    %p51 = scmp.eq.s32.totalorder %s13, 1
    %p52 = scmp.ne.s32.totalorder %s47, %s49
    %p53 = scmp.eq.s32.totalorder %s13, 0
    %p54 = por %p52, %p53
    %p55 = scmp.ne.s32.totalorder %s47, %s49
    %p56 = scmp.eq.s32.totalorder %s18, 1
    %p57 = por %p55, %p56
    %p58 = scmp.ne.s32.totalorder %s49, %s50
    %p59 = scmp.eq.s32.totalorder %s18, 0
    %p60 = por %p58, %p59
    %p61 = scmp.ne.s32.totalorder %s49, %s50
    %p62 = scmp.eq.s32.totalorder %s19, 1
    %p63 = por %p61, %p62
    %p65 = scmp.ne.s32.totalorder %s50, %s64
    %p66 = scmp.eq.s32.totalorder %s19, 0
    %p67 = por %p65, %p66
    %s69 = sadd.s32 %s68, 1
    %p72 = scmp.eq.s32.totalorder %s13, 1
    %p73 = scmp.ne.s32.totalorder %s68, %s70
    %p74 = scmp.eq.s32.totalorder %s13, 0
    %p75 = por %p73, %p74
    %p76 = scmp.ne.s32.totalorder %s68, %s70
    %p77 = scmp.eq.s32.totalorder %s18, 1
    %p78 = por %p76, %p77
    %p79 = scmp.ne.s32.totalorder %s70, %s71
    %p80 = scmp.eq.s32.totalorder %s18, 0
    %p81 = por %p79, %p80
    %p82 = scmp.ne.s32.totalorder %s70, %s71
    %p83 = scmp.eq.s32.totalorder %s19, 1
    %p84 = por %p82, %p83
    %p86 = scmp.ne.s32.totalorder %s71, %s85
    %p87 = scmp.eq.s32.totalorder %s19, 0
    %p88 = por %p86, %p87
    %s90 = sadd.s32 %s89, 1
    %p93 = scmp.eq.s32.totalorder %s13, 1
    %p94 = scmp.ne.s32.totalorder %s89, %s91
    %p95 = scmp.eq.s32.totalorder %s13, 0
    %p96 = por %p94, %p95
    %p97 = scmp.ne.s32.totalorder %s89, %s91
    %p98 = scmp.eq.s32.totalorder %s18, 1
    %p99 = por %p97, %p98
    %p100 = scmp.ne.s32.totalorder %s91, %s92
    %p101 = scmp.eq.s32.totalorder %s18, 0
    %p102 = por %p100, %p101
    %p103 = scmp.ne.s32.totalorder %s91, %s92
    %p104 = scmp.eq.s32.totalorder %s19, 1
    %p105 = por %p103, %p104
    %p107 = scmp.ne.s32.totalorder %s92, %s106
    %p108 = scmp.eq.s32.totalorder %s19, 0
    %p109 = por %p107, %p108
    %s111 = sadd.s32 %s110, 1
    %p114 = scmp.eq.s32.totalorder %s13, 1
    %p115 = scmp.ne.s32.totalorder %s110, %s112
    %p116 = scmp.eq.s32.totalorder %s13, 0
    %p117 = por %p115, %p116
    %p118 = scmp.ne.s32.totalorder %s110, %s112
    %p119 = scmp.eq.s32.totalorder %s18, 1
    %p120 = por %p118, %p119
    %p121 = scmp.ne.s32.totalorder %s112, %s113
    %p122 = scmp.eq.s32.totalorder %s18, 0
    %p123 = por %p121, %p122
    %p124 = scmp.ne.s32.totalorder %s112, %s113
    %p125 = scmp.eq.s32.totalorder %s19, 1
    %p126 = por %p124, %p125
    %p128 = scmp.ne.s32.totalorder %s113, %s127
    %p129 = scmp.eq.s32.totalorder %s19, 0
    %p130 = por %p128, %p129
    %s131 = ssub.s32 %s13, %s20
    %p132 = scmp.eq.s32.totalorder %s131, 0
    %s134 = sadd.s32 %s133, 1
    %s135 = scalar_select %p132, %s133, %s134
    %p138 = pneg %p132
    %p139 = scmp.eq.s32.totalorder %s13, 1
    %p140 = por %p138, %p139
    %p141 = scmp.ne.s32.totalorder %s133, %s136
    %p142 = scmp.eq.s32.totalorder %s13, 0
    %p143 = por %p141, %p142
    %p144 = scmp.ne.s32.totalorder %s133, %s136
    %p145 = scmp.eq.s32.totalorder %s18, 1
    %p146 = por %p144, %p145
    %p147 = scmp.ne.s32.totalorder %s136, %s137
    %p148 = scmp.eq.s32.totalorder %s18, 0
    %p149 = por %p147, %p148
    %p150 = scmp.ne.s32.totalorder %s136, %s137
    %p151 = scmp.eq.s32.totalorder %s19, 1
    %p152 = por %p150, %p151
    %p154 = scmp.ne.s32.totalorder %s137, %s153
    %p155 = scmp.eq.s32.totalorder %s19, 0
    %p156 = por %p154, %p155
    %s157 = ssub.s32 %s13, %s20
    %p158 = scmp.eq.s32.totalorder %s157, 0
    %s160 = sadd.s32 %s159, 1
    %s161 = scalar_select %p158, %s159, %s160
    %p164 = pneg %p158
    %p165 = scmp.eq.s32.totalorder %s13, 1
    %p166 = por %p164, %p165
    %p167 = scmp.ne.s32.totalorder %s159, %s162
    %p168 = scmp.eq.s32.totalorder %s13, 0
    %p169 = por %p167, %p168
    %p170 = scmp.ne.s32.totalorder %s159, %s162
    %p171 = scmp.eq.s32.totalorder %s18, 1
    %p172 = por %p170, %p171
    %p173 = scmp.ne.s32.totalorder %s162, %s163
    %p174 = scmp.eq.s32.totalorder %s18, 0
    %p175 = por %p173, %p174
    %p176 = scmp.ne.s32.totalorder %s162, %s163
    %p177 = scmp.eq.s32.totalorder %s19, 1
    %p178 = por %p176, %p177
    %p180 = scmp.ne.s32.totalorder %s163, %s179
    %p181 = scmp.eq.s32.totalorder %s19, 0
    %p182 = por %p180, %p181
    %p183 = scmp.le.s32.totalorder 1, %s13
    %p184 = scmp.lt.s32.totalorder %s13, 3
    %p185 = pnand %p183, %p184
    %p186 = pneg %p185
    // Predicated region
    $region9: #{cmt_layer_forward.4} parent=5 // pred_check
      _
    $region10: #{cmt_layer_forward.4} parent=5 // pred_check_branch
      %188 = sbr.rel (%p185) target = $region12
    $region11: #{cmt_layer_forward.4} parent=5 // pred_region
      %s189 = ssub.s32 %s13, 1
      // Predicated region
      $region13: #{cmt_layer_forward.4} parent=11 // pred_check
        %p190 = pneg %p60
      $region14: #{cmt_layer_forward.4} parent=11 // pred_check_branch
        %192 = sbr.rel (%p190) target = $region16
      $region15: #{cmt_layer_forward.4} parent=11 // pred_region
        _
      $region16: #{cmt_layer_forward.4} parent=11 // pred_fallthru
        _
      // Predicated region
      $region17: #{cmt_layer_forward.4} parent=11 // pred_check
        %p193 = pneg %p81
      $region18: #{cmt_layer_forward.4} parent=11 // pred_check_branch
        %195 = sbr.rel (%p193) target = $region20
      $region19: #{cmt_layer_forward.4} parent=11 // pred_region
        _
      $region20: #{cmt_layer_forward.4} parent=11 // pred_fallthru
        _
      // Predicated region
      $region21: #{cmt_layer_forward.4} parent=11 // pred_check
        %p196 = pneg %p102
      $region22: #{cmt_layer_forward.4} parent=11 // pred_check_branch
        %198 = sbr.rel (%p196) target = $region24
      $region23: #{cmt_layer_forward.4} parent=11 // pred_region
        _
      $region24: #{cmt_layer_forward.4} parent=11 // pred_fallthru
        _
      // Predicated region
      $region25: #{cmt_layer_forward.4} parent=11 // pred_check
        %p199 = pneg %p123
      $region26: #{cmt_layer_forward.4} parent=11 // pred_check_branch
        %201 = sbr.rel (%p199) target = $region28
      $region27: #{cmt_layer_forward.4} parent=11 // pred_region
        _
      $region28: #{cmt_layer_forward.4} parent=11 // pred_fallthru
        _
    $region12: #{cmt_layer_forward.4} parent=5 // pred_fallthru
      _
    %p202 = scmp.lt.s32.totalorder %s13, 2
    // Predicated region
    $region29: #{cmt_layer_forward.4} parent=5 // pred_check
      %p203 = pneg %p202
    $region30: #{cmt_layer_forward.4} parent=5 // pred_check_branch
      %205 = sbr.rel (%p203) target = $region32
    $region31: #{cmt_layer_forward.4} parent=5 // pred_region
      // Predicated region
      $region33: #{cmt_layer_forward.4} parent=31 // pred_check
        %p206 = pneg %p33
      $region34: #{cmt_layer_forward.4} parent=31 // pred_check_branch
        %208 = sbr.rel (%p206) target = $region36
      $region35: #{cmt_layer_forward.4} parent=31 // pred_region
        %s209 = smul.u32 8, %s13
        %p210 = scmp.lt.s32.totalorder %s209, 15
        %s211 = scalar_select %p210, %s209, 15
        %s212 = smul.addr %s211, 4
        %s213 = scalar_lea.vmem %s0, %s212
        %s214 = smul.u32 8, %s13
      $region36: #{cmt_layer_forward.4} parent=31 // pred_fallthru
        _
    $region32: #{cmt_layer_forward.4} parent=5 // pred_fallthru
      _
    %p215 = scmp.le.s32.totalorder 1, %s13
    %p216 = scmp.lt.s32.totalorder %s13, 3
    %p217 = pnand %p215, %p216
    %p218 = pneg %p217
    // Predicated region
    $region37: #{cmt_layer_forward.4} parent=5 // pred_check
      _
    $region38: #{cmt_layer_forward.4} parent=5 // pred_check_branch
      %220 = sbr.rel (%p217) target = $region40
    $region39: #{cmt_layer_forward.4} parent=5 // pred_region
      %s221 = ssub.s32 %s13, 1
      %s222 = smul.u32 8, %s18
      %p223 = scmp.lt.s32.totalorder %s222, 15
      %s224 = scalar_select %p223, %s222, 15
      %s225 = smul.addr %s224, 4
      %s226 = scalar_lea.vmem %s0, %s225
      %p227 = pneg %p39
      %p228 = pneg %p36
      %p229 = pneg %p60
      %p230 = pneg %p57
      %p231 = pneg %p81
      %p232 = pneg %p78
      %p233 = pneg %p102
      %p234 = pneg %p99
      %p235 = pneg %p123
      %p236 = pneg %p120
      %p237 = pneg %p149
      %p238 = pneg %p146
      %s239 = smul.u32 8, %s18
      %p240 = scmp.lt.s32.totalorder %s239, 15
      %s241 = scalar_select %p240, %s239, 15
      %s242 = smul.addr %s241, 4
      %s243 = scalar_lea.vmem %s5, %s242
      %p244 = pneg %p175
      %p245 = pneg %p172
      %p246 = scmp.lt.s32.totalorder %s18, 1
      %s247 = scalar_select %p246, %s18, 1
      %s248 = smul.addr %s247, 8
      %s249 = scalar_lea.vmem %s6, %s248
      %s250 = smul.u32 8, %s18
      %p251 = scmp.lt.s32.totalorder %s250, 15
      %s252 = scalar_select %p251, %s250, 15
      %s253 = smul.addr %s252, 4
      %s254 = scalar_lea.vmem %s0, %s253
      %s255 = smul.u32 8, %s18
      %s256 = smul.u32 8, %s18
      %p257 = scmp.lt.s32.totalorder %s256, 15
      %s258 = scalar_select %p257, %s256, 15
      %s259 = smul.addr %s258, 4
      %s260 = scalar_lea.vmem %s5, %s259
      %s261 = smul.u32 8, %s18
      %p262 = scmp.lt.s32.totalorder %s18, 1
      %s263 = scalar_select %p262, %s18, 1
      %s264 = smul.addr %s263, 8
      %s265 = scalar_lea.vmem %s6, %s264
      %v266 = vld [vmem:[%s254] sm:$0xf]
      %v267 = vld [vmem:[%s254 + $0x4] sm:$0xf]
      %v268 = vld [vmem:[%s254 + $0x8] sm:$0xf]
      %v269 = vld [vmem:[%s254 + $0xc] sm:$0xf]
      %v270 = vld [vmem:[%s254 + $0x10] sm:$0xf]
      %v271 = vld [vmem:[%s254 + $0x14] sm:$0xf]
      %v272 = vld [vmem:[%s254 + $0x18] sm:$0xf]
      %v273 = vld [vmem:[%s254 + $0x1c] sm:$0xf]
      %v274 = vunpack.c.l.bf16 %v266
      %v275 = vunpack.c.l.bf16 %v267
      %v276 = vunpack.c.l.bf16 %v268
      %v277 = vunpack.c.l.bf16 %v269
      %v278 = vunpack.c.l.bf16 %v270
      %v279 = vunpack.c.l.bf16 %v271
      %v280 = vunpack.c.l.bf16 %v272
      %v281 = vunpack.c.l.bf16 %v273
      %v282 = vld [vmem:[%s1] sm:$0x1]
      %v284 = vperm.slane %v282, 0
      %v286 = vmul.f32 %v274, %v284
      %v287 = vmul.f32 %v275, %v284
      %v288 = vmul.f32 %v276, %v284
      %v289 = vmul.f32 %v277, %v284
      %v290 = vmul.f32 %v278, %v284
      %v291 = vmul.f32 %v279, %v284
      %v292 = vmul.f32 %v280, %v284
      %v293 = vmul.f32 %v281, %v284
      %v294 = vld [vmem:[%s2] sm:$0x1]
      %v296 = vperm.slane %v294, 0
      %v298 = vadd.f32 %v286, %v296
      %v299 = vadd.f32 %v287, %v296
      %v300 = vadd.f32 %v288, %v296
      %v301 = vadd.f32 %v289, %v296
      %v302 = vadd.f32 %v290, %v296
      %v303 = vadd.f32 %v291, %v296
      %v304 = vadd.f32 %v292, %v296
      %v305 = vadd.f32 %v293, %v296
      %v306 = vld [vmem:[%s3] sm:$0xff]
      %v307 = vld [vmem:[%s3 + $0x8] sm:$0x1]
      %308 = vst [vmem:[#allocation2] sm:$0xff] 0.0
      %309 = vst [vmem:[#allocation2 + $0x8] sm:$0xff] 0.0
      %310 = vst [vmem:[#allocation2 + $0x50] sm:$0xff] 0.0
      %311 = vst [vmem:[#allocation2 + $0x58] sm:$0xff] 0.0
      %312 = vst [vmem:[#allocation2 + $0x10] sm:$0xff] %v298
      %313 = vst [vmem:[#allocation2 + $0x18] sm:$0xff] %v299
      %314 = vst [vmem:[#allocation2 + $0x20] sm:$0xff] %v300
      %315 = vst [vmem:[#allocation2 + $0x28] sm:$0xff] %v301
      %316 = vst [vmem:[#allocation2 + $0x30] sm:$0xff] %v302
      %317 = vst [vmem:[#allocation2 + $0x38] sm:$0xff] %v303
      %318 = vst [vmem:[#allocation2 + $0x40] sm:$0xff] %v304
      %319 = vst [vmem:[#allocation2 + $0x48] sm:$0xff] %v305
      %v320 = vlaneseq
      %v321 = vshrl.u32 %v320, 7
      %v322 = vadd.s32 %v321, 8
      %v323 = vadd.s32 %v321, 16
      %v324 = vadd.s32 %v321, 24
      %v325 = vadd.s32 %v321, 32
      %v326 = vadd.s32 %v321, 40
      %v327 = vadd.s32 %v321, 48
      %v328 = vadd.s32 %v321, 56
      %v329 = vand.u32 %v321, 7
      %v330 = vand.u32 %v322, 7
      %v331 = vand.u32 %v323, 7
      %v332 = vand.u32 %v324, 7
      %v333 = vand.u32 %v325, 7
      %v334 = vand.u32 %v326, 7
      %v335 = vand.u32 %v327, 7
      %v336 = vand.u32 %v328, 7
      %vm337 = vcmp.ne.s32.totalorder %v329, 0
      %vm338 = vcmp.ne.s32.totalorder %v330, 0
      %vm339 = vcmp.ne.s32.totalorder %v331, 0
      %vm340 = vcmp.ne.s32.totalorder %v332, 0
      %vm341 = vcmp.ne.s32.totalorder %v333, 0
      %vm342 = vcmp.ne.s32.totalorder %v334, 0
      %vm343 = vcmp.ne.s32.totalorder %v335, 0
      %vm344 = vcmp.ne.s32.totalorder %v336, 0
      %v345 = vsel %vm337, 1, 0
      %v346 = vsel %vm338, 1, 0
      %v347 = vsel %vm339, 1, 0
      %v348 = vsel %vm340, 1, 0
      %v349 = vsel %vm341, 1, 0
      %v350 = vsel %vm342, 1, 0
      %v351 = vsel %vm343, 1, 0
      %v352 = vsel %vm344, 1, 0
      %v353 = vcvt.s32.f32 %v345
      %v354 = vcvt.s32.f32 %v346
      %v355 = vcvt.s32.f32 %v347
      %v356 = vcvt.s32.f32 %v348
      %v357 = vcvt.s32.f32 %v349
      %v358 = vcvt.s32.f32 %v350
      %v359 = vcvt.s32.f32 %v351
      %v360 = vcvt.s32.f32 %v352
      %vm361 = vcmp.ne.s32.totalorder %v329, 7
      %vm362 = vcmp.ne.s32.totalorder %v330, 7
      %vm363 = vcmp.ne.s32.totalorder %v331, 7
      %vm364 = vcmp.ne.s32.totalorder %v332, 7
      %vm365 = vcmp.ne.s32.totalorder %v333, 7
      %vm366 = vcmp.ne.s32.totalorder %v334, 7
      %vm367 = vcmp.ne.s32.totalorder %v335, 7
      %vm368 = vcmp.ne.s32.totalorder %v336, 7
      %v369 = vsel %vm361, 1, 0
      %v370 = vsel %vm362, 1, 0
      %v371 = vsel %vm363, 1, 0
      %v372 = vsel %vm364, 1, 0
      %v373 = vsel %vm365, 1, 0
      %v374 = vsel %vm366, 1, 0
      %v375 = vsel %vm367, 1, 0
      %v376 = vsel %vm368, 1, 0
      %v377 = vcvt.s32.f32 %v369
      %v378 = vcvt.s32.f32 %v370
      %v379 = vcvt.s32.f32 %v371
      %v380 = vcvt.s32.f32 %v372
      %v381 = vcvt.s32.f32 %v373
      %v382 = vcvt.s32.f32 %v374
      %v383 = vcvt.s32.f32 %v375
      %v384 = vcvt.s32.f32 %v376
      %v385 = vld [vmem:[#allocation2 + $0x7] sm:$0xff]
      %v386 = vld [vmem:[#allocation2 + $0xf] sm:$0xff]
      %v387 = vld [vmem:[#allocation2 + $0x17] sm:$0xff]
      %v388 = vld [vmem:[#allocation2 + $0x1f] sm:$0xff]
      %v389 = vld [vmem:[#allocation2 + $0x27] sm:$0xff]
      %v390 = vld [vmem:[#allocation2 + $0x2f] sm:$0xff]
      %v391 = vld [vmem:[#allocation2 + $0x37] sm:$0xff]
      %v392 = vld [vmem:[#allocation2 + $0x3f] sm:$0xff]
      %v393 = vmul.f32 %v385, %v353
      %v394 = vmul.f32 %v386, %v354
      %v395 = vmul.f32 %v387, %v355
      %v396 = vmul.f32 %v388, %v356
      %v397 = vmul.f32 %v389, %v357
      %v398 = vmul.f32 %v390, %v358
      %v399 = vmul.f32 %v391, %v359
      %v400 = vmul.f32 %v392, %v360
      %v401 = vperm.slane %v306, 0
      %v402 = vmul.f32 %v393, %v401
      %v403 = vmul.f32 %v394, %v401
      %v404 = vmul.f32 %v395, %v401
      %v405 = vmul.f32 %v396, %v401
      %v406 = vmul.f32 %v397, %v401
      %v407 = vmul.f32 %v398, %v401
      %v408 = vmul.f32 %v399, %v401
      %v409 = vmul.f32 %v400, %v401
      %v410 = vadd.f32 %v402, 0.0
      %v411 = vadd.f32 %v403, 0.0
      %v412 = vadd.f32 %v404, 0.0
      %v413 = vadd.f32 %v405, 0.0
      %v414 = vadd.f32 %v406, 0.0
      %v415 = vadd.f32 %v407, 0.0
      %v416 = vadd.f32 %v408, 0.0
      %v417 = vadd.f32 %v409, 0.0
      %v418 = vld [vmem:[#allocation2 + $0x8] sm:$0xff]
      %v419 = vld [vmem:[#allocation2 + $0x10] sm:$0xff]
      %v420 = vld [vmem:[#allocation2 + $0x18] sm:$0xff]
      %v421 = vld [vmem:[#allocation2 + $0x20] sm:$0xff]
      %v422 = vld [vmem:[#allocation2 + $0x28] sm:$0xff]
      %v423 = vld [vmem:[#allocation2 + $0x30] sm:$0xff]
      %v424 = vld [vmem:[#allocation2 + $0x38] sm:$0xff]
      %v425 = vld [vmem:[#allocation2 + $0x40] sm:$0xff]
      %v426 = vperm.slane %v306, 1
      %v427 = vmul.f32 %v418, %v426
      %v428 = vmul.f32 %v419, %v426
      %v429 = vmul.f32 %v420, %v426
      %v430 = vmul.f32 %v421, %v426
      %v431 = vmul.f32 %v422, %v426
      %v432 = vmul.f32 %v423, %v426
      %v433 = vmul.f32 %v424, %v426
      %v434 = vmul.f32 %v425, %v426
      %v435 = vadd.f32 %v410, %v427
      %v436 = vadd.f32 %v411, %v428
      %v437 = vadd.f32 %v412, %v429
      %v438 = vadd.f32 %v413, %v430
      %v439 = vadd.f32 %v414, %v431
      %v440 = vadd.f32 %v415, %v432
      %v441 = vadd.f32 %v416, %v433
      %v442 = vadd.f32 %v417, %v434
      %v443 = vld [vmem:[#allocation2 + $0x9] sm:$0xff]
      %v444 = vld [vmem:[#allocation2 + $0x11] sm:$0xff]
      %v445 = vld [vmem:[#allocation2 + $0x19] sm:$0xff]
      %v446 = vld [vmem:[#allocation2 + $0x21] sm:$0xff]
      %v447 = vld [vmem:[#allocation2 + $0x29] sm:$0xff]
      %v448 = vld [vmem:[#allocation2 + $0x31] sm:$0xff]
      %v449 = vld [vmem:[#allocation2 + $0x39] sm:$0xff]
      %v450 = vld [vmem:[#allocation2 + $0x41] sm:$0xff]
      %v451 = vmul.f32 %v443, %v377
      %v452 = vmul.f32 %v444, %v378
      %v453 = vmul.f32 %v445, %v379
      %v454 = vmul.f32 %v446, %v380
      %v455 = vmul.f32 %v447, %v381
      %v456 = vmul.f32 %v448, %v382
      %v457 = vmul.f32 %v449, %v383
      %v458 = vmul.f32 %v450, %v384
      %v459 = vperm.slane %v306, 2
      %v460 = vmul.f32 %v451, %v459
      %v461 = vmul.f32 %v452, %v459
      %v462 = vmul.f32 %v453, %v459
      %v463 = vmul.f32 %v454, %v459
      %v464 = vmul.f32 %v455, %v459
      %v465 = vmul.f32 %v456, %v459
      %v466 = vmul.f32 %v457, %v459
      %v467 = vmul.f32 %v458, %v459
      %v468 = vadd.f32 %v435, %v460
      %v469 = vadd.f32 %v436, %v461
      %v470 = vadd.f32 %v437, %v462
      %v471 = vadd.f32 %v438, %v463
      %v472 = vadd.f32 %v439, %v464
      %v473 = vadd.f32 %v440, %v465
      %v474 = vadd.f32 %v441, %v466
      %v475 = vadd.f32 %v442, %v467
      %v476 = vld [vmem:[#allocation2 + $0x47] sm:$0xff]
      %v477 = vmul.f32 %v386, %v353
      %v478 = vmul.f32 %v387, %v354
      %v479 = vmul.f32 %v388, %v355
      %v480 = vmul.f32 %v389, %v356
      %v481 = vmul.f32 %v390, %v357
      %v482 = vmul.f32 %v391, %v358
      %v483 = vmul.f32 %v392, %v359
      %v484 = vmul.f32 %v476, %v360
      %v485 = vperm.slane %v306, 3
      %v486 = vmul.f32 %v477, %v485
      %v487 = vmul.f32 %v478, %v485
      %v488 = vmul.f32 %v479, %v485
      %v489 = vmul.f32 %v480, %v485
      %v490 = vmul.f32 %v481, %v485
      %v491 = vmul.f32 %v482, %v485
      %v492 = vmul.f32 %v483, %v485
      %v493 = vmul.f32 %v484, %v485
      %v494 = vadd.f32 %v468, %v486
      %v495 = vadd.f32 %v469, %v487
      %v496 = vadd.f32 %v470, %v488
      %v497 = vadd.f32 %v471, %v489
      %v498 = vadd.f32 %v472, %v490
      %v499 = vadd.f32 %v473, %v491
      %v500 = vadd.f32 %v474, %v492
      %v501 = vadd.f32 %v475, %v493
      %v502 = vld [vmem:[#allocation2 + $0x48] sm:$0xff]
      %v503 = vperm.slane %v306, 4
      %v504 = vmul.f32 %v419, %v503
      %v505 = vmul.f32 %v420, %v503
      %v506 = vmul.f32 %v421, %v503
      %v507 = vmul.f32 %v422, %v503
      %v508 = vmul.f32 %v423, %v503
      %v509 = vmul.f32 %v424, %v503
      %v510 = vmul.f32 %v425, %v503
      %v511 = vmul.f32 %v502, %v503
      %v512 = vadd.f32 %v494, %v504
      %v513 = vadd.f32 %v495, %v505
      %v514 = vadd.f32 %v496, %v506
      %v515 = vadd.f32 %v497, %v507
      %v516 = vadd.f32 %v498, %v508
      %v517 = vadd.f32 %v499, %v509
      %v518 = vadd.f32 %v500, %v510
      %v519 = vadd.f32 %v501, %v511
      %v520 = vld [vmem:[#allocation2 + $0x49] sm:$0xff]
      %v521 = vmul.f32 %v444, %v377
      %v522 = vmul.f32 %v445, %v378
      %v523 = vmul.f32 %v446, %v379
      %v524 = vmul.f32 %v447, %v380
      %v525 = vmul.f32 %v448, %v381
      %v526 = vmul.f32 %v449, %v382
      %v527 = vmul.f32 %v450, %v383
      %v528 = vmul.f32 %v520, %v384
      %v529 = vperm.slane %v306, 5
      %v530 = vmul.f32 %v521, %v529
      %v531 = vmul.f32 %v522, %v529
      %v532 = vmul.f32 %v523, %v529
      %v533 = vmul.f32 %v524, %v529
      %v534 = vmul.f32 %v525, %v529
      %v535 = vmul.f32 %v526, %v529
      %v536 = vmul.f32 %v527, %v529
      %v537 = vmul.f32 %v528, %v529
      %v538 = vadd.f32 %v512, %v530
      %v539 = vadd.f32 %v513, %v531
      %v540 = vadd.f32 %v514, %v532
      %v541 = vadd.f32 %v515, %v533
      %v542 = vadd.f32 %v516, %v534
      %v543 = vadd.f32 %v517, %v535
      %v544 = vadd.f32 %v518, %v536
      %v545 = vadd.f32 %v519, %v537
      %v546 = vld [vmem:[#allocation2 + $0x4f] sm:$0xff]
      %v547 = vmul.f32 %v387, %v353
      %v548 = vmul.f32 %v388, %v354
      %v549 = vmul.f32 %v389, %v355
      %v550 = vmul.f32 %v390, %v356
      %v551 = vmul.f32 %v391, %v357
      %v552 = vmul.f32 %v392, %v358
      %v553 = vmul.f32 %v476, %v359
      %v554 = vmul.f32 %v546, %v360
      %v555 = vperm.slane %v306, 6
      %v556 = vmul.f32 %v547, %v555
      %v557 = vmul.f32 %v548, %v555
      %v558 = vmul.f32 %v549, %v555
      %v559 = vmul.f32 %v550, %v555
      %v560 = vmul.f32 %v551, %v555
      %v561 = vmul.f32 %v552, %v555
      %v562 = vmul.f32 %v553, %v555
      %v563 = vmul.f32 %v554, %v555
      %v564 = vadd.f32 %v538, %v556
      %v565 = vadd.f32 %v539, %v557
      %v566 = vadd.f32 %v540, %v558
      %v567 = vadd.f32 %v541, %v559
      %v568 = vadd.f32 %v542, %v560
      %v569 = vadd.f32 %v543, %v561
      %v570 = vadd.f32 %v544, %v562
      %v571 = vadd.f32 %v545, %v563
      %v572 = vld [vmem:[#allocation2 + $0x50] sm:$0xff]
      %v573 = vperm.slane %v306, 7
      %v574 = vmul.f32 %v420, %v573
      %v575 = vmul.f32 %v421, %v573
      %v576 = vmul.f32 %v422, %v573
      %v577 = vmul.f32 %v423, %v573
      %v578 = vmul.f32 %v424, %v573
      %v579 = vmul.f32 %v425, %v573
      %v580 = vmul.f32 %v502, %v573
      %v581 = vmul.f32 %v572, %v573
      %v582 = vadd.f32 %v564, %v574
      %v583 = vadd.f32 %v565, %v575
      %v584 = vadd.f32 %v566, %v576
      %v585 = vadd.f32 %v567, %v577
      %v586 = vadd.f32 %v568, %v578
      %v587 = vadd.f32 %v569, %v579
      %v588 = vadd.f32 %v570, %v580
      %v589 = vadd.f32 %v571, %v581
      %v590 = vld [vmem:[#allocation2 + $0x51] sm:$0xff]
      %v591 = vmul.f32 %v445, %v377
      %v592 = vmul.f32 %v446, %v378
      %v593 = vmul.f32 %v447, %v379
      %v594 = vmul.f32 %v448, %v380
      %v595 = vmul.f32 %v449, %v381
      %v596 = vmul.f32 %v450, %v382
      %v597 = vmul.f32 %v520, %v383
      %v598 = vmul.f32 %v590, %v384
      %v599 = vperm.slane %v307, 0
      %v600 = vmul.f32 %v591, %v599
      %v601 = vmul.f32 %v592, %v599
      %v602 = vmul.f32 %v593, %v599
      %v603 = vmul.f32 %v594, %v599
      %v604 = vmul.f32 %v595, %v599
      %v605 = vmul.f32 %v596, %v599
      %v606 = vmul.f32 %v597, %v599
      %v607 = vmul.f32 %v598, %v599
      %v608 = vadd.f32 %v582, %v600
      %v609 = vadd.f32 %v583, %v601
      %v610 = vadd.f32 %v584, %v602
      %v611 = vadd.f32 %v585, %v603
      %v612 = vadd.f32 %v586, %v604
      %v613 = vadd.f32 %v587, %v605
      %v614 = vadd.f32 %v588, %v606
      %v615 = vadd.f32 %v589, %v607
      %v616 = vld [vmem:[%s4] sm:$0x1]
      %v618 = vperm.slane %v616, 0
      %v620 = vadd.f32 %v608, %v618
      %v621 = vadd.f32 %v609, %v618
      %v622 = vadd.f32 %v610, %v618
      %v623 = vadd.f32 %v611, %v618
      %v624 = vadd.f32 %v612, %v618
      %v625 = vadd.f32 %v613, %v618
      %v626 = vadd.f32 %v614, %v618
      %v627 = vadd.f32 %v615, %v618
      %v628 = vmul.f32 %v620, 0.5
      %v629 = vmul.f32 %v621, 0.5
      %v630 = vmul.f32 %v622, 0.5
      %v631 = vmul.f32 %v623, 0.5
      %v632 = vmul.f32 %v624, 0.5
      %v633 = vmul.f32 %v625, 0.5
      %v634 = vmul.f32 %v626, 0.5
      %v635 = vmul.f32 %v627, 0.5
      %v636 = vmul.f32 %v620, 0.70710677
      %v637 = vmul.f32 %v621, 0.70710677
      %v638 = vmul.f32 %v622, 0.70710677
      %v639 = vmul.f32 %v623, 0.70710677
      %v640 = vmul.f32 %v624, 0.70710677
      %v641 = vmul.f32 %v625, 0.70710677
      %v642 = vmul.f32 %v626, 0.70710677
      %v643 = vmul.f32 %v627, 0.70710677
      %v644 = vand.u32 2147483647, %v636
      %v645 = vand.u32 2147483647, %v637
      %v646 = vand.u32 2147483647, %v638
      %v647 = vand.u32 2147483647, %v639
      %v648 = vand.u32 2147483647, %v640
      %v649 = vand.u32 2147483647, %v641
      %v650 = vand.u32 2147483647, %v642
      %v651 = vand.u32 2147483647, %v643
      %v652 = vmul.f32 %v644, 0.3275911
      %v653 = vmul.f32 %v645, 0.3275911
      %v654 = vmul.f32 %v646, 0.3275911
      %v655 = vmul.f32 %v647, 0.3275911
      %v656 = vmul.f32 %v648, 0.3275911
      %v657 = vmul.f32 %v649, 0.3275911
      %v658 = vmul.f32 %v650, 0.3275911
      %v659 = vmul.f32 %v651, 0.3275911
      %v660 = vadd.f32 %v652, 1.0
      %v661 = vadd.f32 %v653, 1.0
      %v662 = vadd.f32 %v654, 1.0
      %v663 = vadd.f32 %v655, 1.0
      %v664 = vadd.f32 %v656, 1.0
      %v665 = vadd.f32 %v657, 1.0
      %v666 = vadd.f32 %v658, 1.0
      %v667 = vadd.f32 %v659, 1.0
      %v668 = vrcp.pop %v660
      %v669 = vmul.f32 %v660, %v668
      %v670 = vsub.f32 1.0, %v669
      %v671 = vmul.f32 %v668, %v670
      %v672 = vadd.f32 %v668, %v671
      %vm673 = vweird.f32 %v660
      %vm674 = vweird.f32 %v668
      %vm675 = vmor %vm673, %vm674
      %v676 = vsel %vm675, %v668, %v672
      %v677 = vand.u32 2147483647, %v660
      %vm678 = vcmp.eq.f32.partialorder %v677, 8.507059e+37
      %v679 = vand.u32 %v660, 2147483648
      %v680 = vor.u32 1.1754944e-38, %v679
      %v681 = vsel %vm678, %v680, %v676
      %v682 = vmul.f32 1.0, %v681
      %v683 = vrcp.pop %v661
      %v684 = vmul.f32 %v661, %v683
      %v685 = vsub.f32 1.0, %v684
      %v686 = vmul.f32 %v683, %v685
      %v687 = vadd.f32 %v683, %v686
      %vm688 = vweird.f32 %v661
      %vm689 = vweird.f32 %v683
      %vm690 = vmor %vm688, %vm689
      %v691 = vsel %vm690, %v683, %v687
      %v692 = vand.u32 2147483647, %v661
      %vm693 = vcmp.eq.f32.partialorder %v692, 8.507059e+37
      %v694 = vand.u32 %v661, 2147483648
      %v695 = vor.u32 1.1754944e-38, %v694
      %v696 = vsel %vm693, %v695, %v691
      %v697 = vmul.f32 1.0, %v696
      %v698 = vrcp.pop %v662
      %v699 = vmul.f32 %v662, %v698
      %v700 = vsub.f32 1.0, %v699
      %v701 = vmul.f32 %v698, %v700
      %v702 = vadd.f32 %v698, %v701
      %vm703 = vweird.f32 %v662
      %vm704 = vweird.f32 %v698
      %vm705 = vmor %vm703, %vm704
      %v706 = vsel %vm705, %v698, %v702
      %v707 = vand.u32 2147483647, %v662
      %vm708 = vcmp.eq.f32.partialorder %v707, 8.507059e+37
      %v709 = vand.u32 %v662, 2147483648
      %v710 = vor.u32 1.1754944e-38, %v709
      %v711 = vsel %vm708, %v710, %v706
      %v712 = vmul.f32 1.0, %v711
      %v713 = vrcp.pop %v663
      %v714 = vmul.f32 %v663, %v713
      %v715 = vsub.f32 1.0, %v714
      %v716 = vmul.f32 %v713, %v715
      %v717 = vadd.f32 %v713, %v716
      %vm718 = vweird.f32 %v663
      %vm719 = vweird.f32 %v713
      %vm720 = vmor %vm718, %vm719
      %v721 = vsel %vm720, %v713, %v717
      %v722 = vand.u32 2147483647, %v663
      %vm723 = vcmp.eq.f32.partialorder %v722, 8.507059e+37
      %v724 = vand.u32 %v663, 2147483648
      %v725 = vor.u32 1.1754944e-38, %v724
      %v726 = vsel %vm723, %v725, %v721
      %v727 = vmul.f32 1.0, %v726
      %v728 = vrcp.pop %v664
      %v729 = vmul.f32 %v664, %v728
      %v730 = vsub.f32 1.0, %v729
      %v731 = vmul.f32 %v728, %v730
      %v732 = vadd.f32 %v728, %v731
      %vm733 = vweird.f32 %v664
      %vm734 = vweird.f32 %v728
      %vm735 = vmor %vm733, %vm734
      %v736 = vsel %vm735, %v728, %v732
      %v737 = vand.u32 2147483647, %v664
      %vm738 = vcmp.eq.f32.partialorder %v737, 8.507059e+37
      %v739 = vand.u32 %v664, 2147483648
      %v740 = vor.u32 1.1754944e-38, %v739
      %v741 = vsel %vm738, %v740, %v736
      %v742 = vmul.f32 1.0, %v741
      %v743 = vrcp.pop %v665
      %v744 = vmul.f32 %v665, %v743
      %v745 = vsub.f32 1.0, %v744
      %v746 = vmul.f32 %v743, %v745
      %v747 = vadd.f32 %v743, %v746
      %vm748 = vweird.f32 %v665
      %vm749 = vweird.f32 %v743
      %vm750 = vmor %vm748, %vm749
      %v751 = vsel %vm750, %v743, %v747
      %v752 = vand.u32 2147483647, %v665
      %vm753 = vcmp.eq.f32.partialorder %v752, 8.507059e+37
      %v754 = vand.u32 %v665, 2147483648
      %v755 = vor.u32 1.1754944e-38, %v754
      %v756 = vsel %vm753, %v755, %v751
      %v757 = vmul.f32 1.0, %v756
      %v758 = vrcp.pop %v666
      %v759 = vmul.f32 %v666, %v758
      %v760 = vsub.f32 1.0, %v759
      %v761 = vmul.f32 %v758, %v760
      %v762 = vadd.f32 %v758, %v761
      %vm763 = vweird.f32 %v666
      %vm764 = vweird.f32 %v758
      %vm765 = vmor %vm763, %vm764
      %v766 = vsel %vm765, %v758, %v762
      %v767 = vand.u32 2147483647, %v666
      %vm768 = vcmp.eq.f32.partialorder %v767, 8.507059e+37
      %v769 = vand.u32 %v666, 2147483648
      %v770 = vor.u32 1.1754944e-38, %v769
      %v771 = vsel %vm768, %v770, %v766
      %v772 = vmul.f32 1.0, %v771
      %v773 = vrcp.pop %v667
      %v774 = vmul.f32 %v667, %v773
      %v775 = vsub.f32 1.0, %v774
      %v776 = vmul.f32 %v773, %v775
      %v777 = vadd.f32 %v773, %v776
      %vm778 = vweird.f32 %v667
      %vm779 = vweird.f32 %v773
      %vm780 = vmor %vm778, %vm779
      %v781 = vsel %vm780, %v773, %v777
      %v782 = vand.u32 2147483647, %v667
      %vm783 = vcmp.eq.f32.partialorder %v782, 8.507059e+37
      %v784 = vand.u32 %v667, 2147483648
      %v785 = vor.u32 1.1754944e-38, %v784
      %v786 = vsel %vm783, %v785, %v781
      %v787 = vmul.f32 1.0, %v786
      %v788 = vmul.f32 %v682, 1.0614054
      %v789 = vmul.f32 %v697, 1.0614054
      %v790 = vmul.f32 %v712, 1.0614054
      %v791 = vmul.f32 %v727, 1.0614054
      %v792 = vmul.f32 %v742, 1.0614054
      %v793 = vmul.f32 %v757, 1.0614054
      %v794 = vmul.f32 %v772, 1.0614054
      %v795 = vmul.f32 %v787, 1.0614054
      %v796 = vadd.f32 %v788, -1.4531521
      %v797 = vadd.f32 %v789, -1.4531521
      %v798 = vadd.f32 %v790, -1.4531521
      %v799 = vadd.f32 %v791, -1.4531521
      %v800 = vadd.f32 %v792, -1.4531521
      %v801 = vadd.f32 %v793, -1.4531521
      %v802 = vadd.f32 %v794, -1.4531521
      %v803 = vadd.f32 %v795, -1.4531521
      %v804 = vmul.f32 %v796, %v682
      %v805 = vmul.f32 %v797, %v697
      %v806 = vmul.f32 %v798, %v712
      %v807 = vmul.f32 %v799, %v727
      %v808 = vmul.f32 %v800, %v742
      %v809 = vmul.f32 %v801, %v757
      %v810 = vmul.f32 %v802, %v772
      %v811 = vmul.f32 %v803, %v787
      %v812 = vadd.f32 %v804, 1.4214138
      %v813 = vadd.f32 %v805, 1.4214138
      %v814 = vadd.f32 %v806, 1.4214138
      %v815 = vadd.f32 %v807, 1.4214138
      %v816 = vadd.f32 %v808, 1.4214138
      %v817 = vadd.f32 %v809, 1.4214138
      %v818 = vadd.f32 %v810, 1.4214138
      %v819 = vadd.f32 %v811, 1.4214138
      %v820 = vmul.f32 %v812, %v682
      %v821 = vmul.f32 %v813, %v697
      %v822 = vmul.f32 %v814, %v712
      %v823 = vmul.f32 %v815, %v727
      %v824 = vmul.f32 %v816, %v742
      %v825 = vmul.f32 %v817, %v757
      %v826 = vmul.f32 %v818, %v772
      %v827 = vmul.f32 %v819, %v787
      %v828 = vadd.f32 %v820, -0.28449672
      %v829 = vadd.f32 %v821, -0.28449672
      %v830 = vadd.f32 %v822, -0.28449672
      %v831 = vadd.f32 %v823, -0.28449672
      %v832 = vadd.f32 %v824, -0.28449672
      %v833 = vadd.f32 %v825, -0.28449672
      %v834 = vadd.f32 %v826, -0.28449672
      %v835 = vadd.f32 %v827, -0.28449672
      %v836 = vmul.f32 %v828, %v682
      %v837 = vmul.f32 %v829, %v697
      %v838 = vmul.f32 %v830, %v712
      %v839 = vmul.f32 %v831, %v727
      %v840 = vmul.f32 %v832, %v742
      %v841 = vmul.f32 %v833, %v757
      %v842 = vmul.f32 %v834, %v772
      %v843 = vmul.f32 %v835, %v787
      %v844 = vadd.f32 %v836, 0.2548296
      %v845 = vadd.f32 %v837, 0.2548296
      %v846 = vadd.f32 %v838, 0.2548296
      %v847 = vadd.f32 %v839, 0.2548296
      %v848 = vadd.f32 %v840, 0.2548296
      %v849 = vadd.f32 %v841, 0.2548296
      %v850 = vadd.f32 %v842, 0.2548296
      %v851 = vadd.f32 %v843, 0.2548296
      %v852 = vmul.f32 %v844, %v682
      %v853 = vmul.f32 %v845, %v697
      %v854 = vmul.f32 %v846, %v712
      %v855 = vmul.f32 %v847, %v727
      %v856 = vmul.f32 %v848, %v742
      %v857 = vmul.f32 %v849, %v757
      %v858 = vmul.f32 %v850, %v772
      %v859 = vmul.f32 %v851, %v787
      %v860 = vsub.f32 0.0, %v644
      %v861 = vsub.f32 0.0, %v645
      %v862 = vsub.f32 0.0, %v646
      %v863 = vsub.f32 0.0, %v647
      %v864 = vsub.f32 0.0, %v648
      %v865 = vsub.f32 0.0, %v649
      %v866 = vsub.f32 0.0, %v650
      %v867 = vsub.f32 0.0, %v651
      %v868 = vmul.f32 %v860, %v644
      %v869 = vmul.f32 %v861, %v645
      %v870 = vmul.f32 %v862, %v646
      %v871 = vmul.f32 %v863, %v647
      %v872 = vmul.f32 %v864, %v648
      %v873 = vmul.f32 %v865, %v649
      %v874 = vmul.f32 %v866, %v650
      %v875 = vmul.f32 %v867, %v651
      %v876 = vmul.f32 %v868, 1.442695
      %v877 = vpow.pop %v876
      %v878 = vmul.f32 %v869, 1.442695
      %v879 = vpow.pop %v878
      %v880 = vmul.f32 %v870, 1.442695
      %v881 = vpow.pop %v880
      %v882 = vmul.f32 %v871, 1.442695
      %v883 = vpow.pop %v882
      %v884 = vmul.f32 %v872, 1.442695
      %v885 = vpow.pop %v884
      %v886 = vmul.f32 %v873, 1.442695
      %v887 = vpow.pop %v886
      %v888 = vmul.f32 %v874, 1.442695
      %v889 = vpow.pop %v888
      %v890 = vmul.f32 %v875, 1.442695
      %v891 = vpow.pop %v890
      %v892 = vmul.f32 %v852, %v877
      %v893 = vmul.f32 %v853, %v879
      %v894 = vmul.f32 %v854, %v881
      %v895 = vmul.f32 %v855, %v883
      %v896 = vmul.f32 %v856, %v885
      %v897 = vmul.f32 %v857, %v887
      %v898 = vmul.f32 %v858, %v889
      %v899 = vmul.f32 %v859, %v891
      %v900 = vsub.f32 1.0, %v892
      %v901 = vsub.f32 1.0, %v893
      %v902 = vsub.f32 1.0, %v894
      %v903 = vsub.f32 1.0, %v895
      %v904 = vsub.f32 1.0, %v896
      %v905 = vsub.f32 1.0, %v897
      %v906 = vsub.f32 1.0, %v898
      %v907 = vsub.f32 1.0, %v899
      %vm908 = vcmp.ge.f32.partialorder %v636, 0.0
      %vm909 = vcmp.ge.f32.partialorder %v637, 0.0
      %vm910 = vcmp.ge.f32.partialorder %v638, 0.0
      %vm911 = vcmp.ge.f32.partialorder %v639, 0.0
      %vm912 = vcmp.ge.f32.partialorder %v640, 0.0
      %vm913 = vcmp.ge.f32.partialorder %v641, 0.0
      %vm914 = vcmp.ge.f32.partialorder %v642, 0.0
      %vm915 = vcmp.ge.f32.partialorder %v643, 0.0
      %v916 = vsub.f32 0.0, %v900
      %v917 = vsub.f32 0.0, %v901
      %v918 = vsub.f32 0.0, %v902
      %v919 = vsub.f32 0.0, %v903
      %v920 = vsub.f32 0.0, %v904
      %v921 = vsub.f32 0.0, %v905
      %v922 = vsub.f32 0.0, %v906
      %v923 = vsub.f32 0.0, %v907
      %v924 = vsel %vm908, %v900, %v916
      %v925 = vsel %vm909, %v901, %v917
      %v926 = vsel %vm910, %v902, %v918
      %v927 = vsel %vm911, %v903, %v919
      %v928 = vsel %vm912, %v904, %v920
      %v929 = vsel %vm913, %v905, %v921
      %v930 = vsel %vm914, %v906, %v922
      %v931 = vsel %vm915, %v907, %v923
      %v932 = vadd.f32 %v924, 1.0
      %v933 = vadd.f32 %v925, 1.0
      %v934 = vadd.f32 %v926, 1.0
      %v935 = vadd.f32 %v927, 1.0
      %v936 = vadd.f32 %v928, 1.0
      %v937 = vadd.f32 %v929, 1.0
      %v938 = vadd.f32 %v930, 1.0
      %v939 = vadd.f32 %v931, 1.0
      %v940 = vmul.f32 %v628, %v932
      %v941 = vmul.f32 %v629, %v933
      %v942 = vmul.f32 %v630, %v934
      %v943 = vmul.f32 %v631, %v935
      %v944 = vmul.f32 %v632, %v936
      %v945 = vmul.f32 %v633, %v937
      %v946 = vmul.f32 %v634, %v938
      %v947 = vmul.f32 %v635, %v939
      %v948 = vpack.c.bf16 %v940, %v940
      %v949 = vpack.c.bf16 %v941, %v941
      %v950 = vpack.c.bf16 %v942, %v942
      %v951 = vpack.c.bf16 %v943, %v943
      %v952 = vpack.c.bf16 %v944, %v944
      %v953 = vpack.c.bf16 %v945, %v945
      %v954 = vpack.c.bf16 %v946, %v946
      %v955 = vpack.c.bf16 %v947, %v947
      %956 = vst [vmem:[%s260] sm:$0xf] %v948
      %957 = vst [vmem:[%s260 + $0x4] sm:$0xf] %v949
      %958 = vst [vmem:[%s260 + $0x8] sm:$0xf] %v950
      %959 = vst [vmem:[%s260 + $0xc] sm:$0xf] %v951
      %960 = vst [vmem:[%s260 + $0x10] sm:$0xf] %v952
      %961 = vst [vmem:[%s260 + $0x14] sm:$0xf] %v953
      %962 = vst [vmem:[%s260 + $0x18] sm:$0xf] %v954
      %963 = vst [vmem:[%s260 + $0x1c] sm:$0xf] %v955
      %v964 = vadd.f32 %v940, %v941
      %v965 = vadd.f32 %v964, %v942
      %v966 = vadd.f32 %v965, %v943
      %v967 = vadd.f32 %v966, %v944
      %v968 = vadd.f32 %v967, %v945
      %v969 = vadd.f32 %v968, %v946
      %v970 = vadd.f32 %v969, %v947
      %v971 = vrot.slane %v970, 4
      %v972 = vadd.f32 %v970, %v971
      %v973 = vrot.slane %v972, 2
      %v974 = vadd.f32 %v972, %v973
      %v975 = vrot.slane %v974, 1
      %v976 = vadd.f32 %v974, %v975
      %v977 = vmul.f32 %v940, %v940
      %v978 = vmul.f32 %v941, %v941
      %v979 = vmul.f32 %v942, %v942
      %v980 = vmul.f32 %v943, %v943
      %v981 = vmul.f32 %v944, %v944
      %v982 = vmul.f32 %v945, %v945
      %v983 = vmul.f32 %v946, %v946
      %v984 = vmul.f32 %v947, %v947
      %v985 = vadd.f32 %v977, %v978
      %v986 = vadd.f32 %v985, %v979
      %v987 = vadd.f32 %v986, %v980
      %v988 = vadd.f32 %v987, %v981
      %v989 = vadd.f32 %v988, %v982
      %v990 = vadd.f32 %v989, %v983
      %v991 = vadd.f32 %v990, %v984
      %v992 = vrot.slane %v991, 4
      %v993 = vadd.f32 %v991, %v992
      %v994 = vrot.slane %v993, 2
      %v995 = vadd.f32 %v993, %v994
      %v996 = vrot.slane %v995, 1
      %v997 = vadd.f32 %v995, %v996
      %vm998 = vcmask 1040384
      %v999 = vsel %vm998, %v976, %v997
      %vm1000 = vcmask 1041408
      %v1001 = vsel %vm1000, %v999, 0.0
      %1002 = vst [vmem:[%s265] sm:$0xff] %v1001
      %s1003 = smul.u32 8, %s18
      %p1004 = scmp.lt.s32.totalorder %s1003, 15
      %s1005 = scalar_select %p1004, %s1003, 15
      %s1006 = smul.addr %s1005, 4
      %s1007 = scalar_lea.vmem %s5, %s1006
      %p1008 = scmp.lt.s32.totalorder %s18, 1
      %s1009 = scalar_select %p1008, %s18, 1
      %s1010 = smul.addr %s1009, 8
      %s1011 = scalar_lea.vmem %s6, %s1010
      // Predicated region
      $region41: #{cmt_layer_forward.4} parent=39 // pred_check
        %p1012 = pneg %p146
      $region42: #{cmt_layer_forward.4} parent=39 // pred_check_branch
        %1014 = sbr.rel (%p1012) target = $region44
      $region43: #{cmt_layer_forward.4} parent=39 // pred_region
        %s1015 = smul.u32 8, %s18
      $region44: #{cmt_layer_forward.4} parent=39 // pred_fallthru
        _
      // Predicated region
      $region45: #{cmt_layer_forward.4} parent=39 // pred_check
        %p1016 = pneg %p172
      $region46: #{cmt_layer_forward.4} parent=39 // pred_check_branch
        %1018 = sbr.rel (%p1016) target = $region48
      $region47: #{cmt_layer_forward.4} parent=39 // pred_region
        _
      $region48: #{cmt_layer_forward.4} parent=39 // pred_fallthru
        _
    $region40: #{cmt_layer_forward.4} parent=5 // pred_fallthru
      _
    %p1019 = scmp.le.s32.totalorder 2, %s13
    // Predicated region
    $region49: #{cmt_layer_forward.4} parent=5 // pred_check
      %p1020 = pneg %p1019
    $region50: #{cmt_layer_forward.4} parent=5 // pred_check_branch
      %1022 = sbr.rel (%p1020) target = $region52
    $region51: #{cmt_layer_forward.4} parent=5 // pred_region
      %s1023 = ssub.s32 %s13, 2
      // Predicated region
      $region53: #{cmt_layer_forward.4} parent=51 // pred_check
        %p1024 = pneg %p152
      $region54: #{cmt_layer_forward.4} parent=51 // pred_check_branch
        %1026 = sbr.rel (%p1024) target = $region56
      $region55: #{cmt_layer_forward.4} parent=51 // pred_region
        %s1027 = smul.u32 8, %s19
        %p1028 = scmp.lt.s32.totalorder %s1027, 15
        %s1029 = scalar_select %p1028, %s1027, 15
        %s1030 = smul.addr %s1029, 4
        %s1031 = scalar_lea.vmem %s5, %s1030
      $region56: #{cmt_layer_forward.4} parent=51 // pred_fallthru
        _
      // Predicated region
      $region57: #{cmt_layer_forward.4} parent=51 // pred_check
        %p1032 = pneg %p178
      $region58: #{cmt_layer_forward.4} parent=51 // pred_check_branch
        %1034 = sbr.rel (%p1032) target = $region60
      $region59: #{cmt_layer_forward.4} parent=51 // pred_region
        %p1035 = scmp.lt.s32.totalorder %s19, 1
        %s1036 = scalar_select %p1035, %s19, 1
        %s1037 = smul.addr %s1036, 8
        %s1038 = scalar_lea.vmem %s6, %s1037
      $region60: #{cmt_layer_forward.4} parent=51 // pred_fallthru
        _
    $region52: #{cmt_layer_forward.4} parent=5 // pred_fallthru
      _
  $region6: #{cmt_layer_forward.4} parent=0 // loop_footer
    %s17 = sadd.s32 1, %s13
  $region7: #{cmt_layer_forward.4} parent=0 // loop_footer_branch
    %12 = sbr.rel target = $region3
  $region8: #{cmt_layer_forward.4} parent=0 // loop_exit
    _

// kernel: cmt_layer_forward.3
$region0: #{cmt_layer_forward.3}
  #allocation0 [shape = 'u32[]', space=smem, size = 0x4, offset = 0x4, fixed_abs, tag = 'smem constant byte address 0x4 - core index']
  #allocation1 [shape = 'u32[72,128]{1,0:T(1,128)}', space=vmem, size = 0x9000, scoped, tag = 'internal scratch']
  #allocation2 [shape = 'f32[96,32]{1,0:T(8,128)}', space=vmem, size = 0xc000, scoped, tag = 'scratch operand']
  %s0 = inlined_call_operand.vmem [shape: f32[128,32], index: 0, kind: input, shape index: {}]
  %s1 = inlined_call_operand.vmem [shape: f32[9,32], index: 1, kind: input, shape index: {}]
  %s2 = inlined_call_operand.vmem [shape: f32[1,32], index: 2, kind: input, shape index: {}]
  %s3 = inlined_call_operand.vmem [shape: f32[1,32], index: 3, kind: input, shape index: {}]
  %s4 = inlined_call_operand.vmem [shape: f32[1,32], index: 4, kind: input, shape index: {}]
  %s5 = inlined_call_operand.vmem [shape: bf16[32,96], index: 5, kind: input, shape index: {}]
  %s6 = inlined_call_operand.vmem [shape: bf16[64,64], index: 6, kind: input, shape index: {}]
  %s7 = inlined_call_operand.vmem [shape: bf16[32,32], index: 7, kind: input, shape index: {}]
  %s8 = inlined_call_operand.vmem [shape: f32[1,32], index: 8, kind: input, shape index: {}]
  %s9 = inlined_call_operand.vmem [shape: f32[1,32], index: 9, kind: input, shape index: {}]
  %s10 = inlined_call_operand.vmem [shape: f32[1,32], index: 10, kind: input, shape index: {}]
  %s11 = inlined_call_operand.vmem [shape: bf16[32,128], index: 11, kind: input, shape index: {}]
  %s12 = inlined_call_operand.vmem [shape: f32[1,128], index: 12, kind: input, shape index: {}]
  %s13 = inlined_call_operand.vmem [shape: f32[128,32], index: 13, kind: output, shape index: {0}]
  %s14 = inlined_call_operand.vmem [shape: bf16[128,128], index: 14, kind: output, shape index: {1}]
  %s15 = inlined_call_operand.vmem [shape: f32[16,128], index: 15, kind: output, shape index: {2}]
  %16 = xla_tuple %s13, %s14, %s15
  %s17 = sld [smem:[#allocation0]]
  $region101: #{cmt_layer_forward.3} parent=0
    _
  %s19 = ssub.s32 1, %s17
  %s20 = scalar_select 0, %s19, %s17
  loop: start=0, step=1, limit=4
  $region2: #{cmt_layer_forward.3} parent=0 // loop_pre_header
    _
  $region3: #{cmt_layer_forward.3} parent=0 // loop_header
    %s22 = sphi 0, %s26
    %p23 = scmp.ge.s32.totalorder %s22, 4
    %s32 = sphi 0, %s34
    %s35 = sphi 0, %s32
    %s36 = sphi 0, %s35
    %s52 = sphi 0, %s36
    %s56 = sphi 0, %s56
    %s58 = sphi 0, %s56
    %s59 = sphi 0, %s58
    %s73 = sphi 0, %s59
    %s77 = sphi 0, %s77
    %s79 = sphi 0, %s77
    %s80 = sphi 0, %s79
    %s94 = sphi 0, %s80
    %s98 = sphi 0, %s98
    %s100 = sphi 0, %s98
    %s101 = sphi 0, %s100
    %s115 = sphi 0, %s101
    %s119 = sphi 0, %s119
    %s121 = sphi 0, %s119
    %s122 = sphi 0, %s121
    %s136 = sphi 0, %s122
    %s140 = sphi 0, %s140
    %s142 = sphi 0, %s140
    %s143 = sphi 0, %s142
    %s157 = sphi 0, %s143
    %s161 = sphi 0, %s161
    %s163 = sphi 0, %s161
    %s164 = sphi 0, %s163
    %s178 = sphi 0, %s164
    %s182 = sphi 0, %s182
    %s184 = sphi 0, %s182
    %s185 = sphi 0, %s184
    %s199 = sphi 0, %s185
    %s203 = sphi 0, %s203
    %s205 = sphi 0, %s203
    %s206 = sphi 0, %s205
    %s220 = sphi 0, %s206
    %s224 = sphi 0, %s224
    %s226 = sphi 0, %s224
    %s227 = sphi 0, %s226
    %s241 = sphi 0, %s227
    %s245 = sphi 0, %s245
    %s247 = sphi 0, %s245
    %s248 = sphi 0, %s247
    %s262 = sphi 0, %s248
    %s266 = sphi 0, %s266
    %s268 = sphi 0, %s266
    %s269 = sphi 0, %s268
    %s283 = sphi 0, %s269
    %s287 = sphi 0, %s287
    %s289 = sphi 0, %s287
    %s290 = sphi 0, %s289
    %s304 = sphi 0, %s290
    %s310 = sphi 0, %s312
    %s313 = sphi 0, %s310
    %s314 = sphi 0, %s313
    %s330 = sphi 0, %s314
    %s336 = sphi 0, %s338
    %s339 = sphi 0, %s336
    %s340 = sphi 0, %s339
    %s356 = sphi 0, %s340
    %s362 = sphi 0, %s364
    %s365 = sphi 0, %s362
    %s366 = sphi 0, %s365
    %s382 = sphi 0, %s366
  $region4: #{cmt_layer_forward.3} parent=0 // loop_header_branch
    %25 = sbr.rel (%p23) target = $region8
  $region5: #{cmt_layer_forward.3} parent=0 // loop_body
    %s27 = ssub.s32 %s22, 1
    %s28 = ssub.s32 %s22, 2
    %s29 = sadd.s32 %s22, 1
    %s30 = ssub.s32 %s22, %s29
    %p31 = scmp.eq.s32.totalorder %s30, 0
    %s33 = sadd.s32 %s32, 1
    %s34 = scalar_select %p31, %s32, %s33
    %p37 = pneg %p31
    %p38 = scmp.eq.s32.totalorder %s22, 1
    %p39 = por %p37, %p38
    %p40 = scmp.ne.s32.totalorder %s32, %s35
    %p41 = scmp.eq.s32.totalorder %s22, 0
    %p42 = por %p40, %p41
    %p43 = scmp.ne.s32.totalorder %s32, %s35
    %p44 = scmp.eq.s32.totalorder %s27, 1
    %p45 = por %p43, %p44
    %p46 = scmp.ne.s32.totalorder %s35, %s36
    %p47 = scmp.eq.s32.totalorder %s27, 0
    %p48 = por %p46, %p47
    %p49 = scmp.ne.s32.totalorder %s35, %s36
    %p50 = scmp.eq.s32.totalorder %s28, 1
    %p51 = por %p49, %p50
    %p53 = scmp.ne.s32.totalorder %s36, %s52
    %p54 = scmp.eq.s32.totalorder %s28, 0
    %p55 = por %p53, %p54
    %s57 = sadd.s32 %s56, 1
    %p60 = scmp.eq.s32.totalorder %s22, 1
    %p61 = scmp.ne.s32.totalorder %s56, %s58
    %p62 = scmp.eq.s32.totalorder %s22, 0
    %p63 = por %p61, %p62
    %p64 = scmp.ne.s32.totalorder %s56, %s58
    %p65 = scmp.eq.s32.totalorder %s27, 1
    %p66 = por %p64, %p65
    %p67 = scmp.ne.s32.totalorder %s58, %s59
    %p68 = scmp.eq.s32.totalorder %s27, 0
    %p69 = por %p67, %p68
    %p70 = scmp.ne.s32.totalorder %s58, %s59
    %p71 = scmp.eq.s32.totalorder %s28, 1
    %p72 = por %p70, %p71
    %p74 = scmp.ne.s32.totalorder %s59, %s73
    %p75 = scmp.eq.s32.totalorder %s28, 0
    %p76 = por %p74, %p75
    %s78 = sadd.s32 %s77, 1
    %p81 = scmp.eq.s32.totalorder %s22, 1
    %p82 = scmp.ne.s32.totalorder %s77, %s79
    %p83 = scmp.eq.s32.totalorder %s22, 0
    %p84 = por %p82, %p83
    %p85 = scmp.ne.s32.totalorder %s77, %s79
    %p86 = scmp.eq.s32.totalorder %s27, 1
    %p87 = por %p85, %p86
    %p88 = scmp.ne.s32.totalorder %s79, %s80
    %p89 = scmp.eq.s32.totalorder %s27, 0
    %p90 = por %p88, %p89
    %p91 = scmp.ne.s32.totalorder %s79, %s80
    %p92 = scmp.eq.s32.totalorder %s28, 1
    %p93 = por %p91, %p92
    %p95 = scmp.ne.s32.totalorder %s80, %s94
    %p96 = scmp.eq.s32.totalorder %s28, 0
    %p97 = por %p95, %p96
    %s99 = sadd.s32 %s98, 1
    %p102 = scmp.eq.s32.totalorder %s22, 1
    %p103 = scmp.ne.s32.totalorder %s98, %s100
    %p104 = scmp.eq.s32.totalorder %s22, 0
    %p105 = por %p103, %p104
    %p106 = scmp.ne.s32.totalorder %s98, %s100
    %p107 = scmp.eq.s32.totalorder %s27, 1
    %p108 = por %p106, %p107
    %p109 = scmp.ne.s32.totalorder %s100, %s101
    %p110 = scmp.eq.s32.totalorder %s27, 0
    %p111 = por %p109, %p110
    %p112 = scmp.ne.s32.totalorder %s100, %s101
    %p113 = scmp.eq.s32.totalorder %s28, 1
    %p114 = por %p112, %p113
    %p116 = scmp.ne.s32.totalorder %s101, %s115
    %p117 = scmp.eq.s32.totalorder %s28, 0
    %p118 = por %p116, %p117
    %s120 = sadd.s32 %s119, 1
    %p123 = scmp.eq.s32.totalorder %s22, 1
    %p124 = scmp.ne.s32.totalorder %s119, %s121
    %p125 = scmp.eq.s32.totalorder %s22, 0
    %p126 = por %p124, %p125
    %p127 = scmp.ne.s32.totalorder %s119, %s121
    %p128 = scmp.eq.s32.totalorder %s27, 1
    %p129 = por %p127, %p128
    %p130 = scmp.ne.s32.totalorder %s121, %s122
    %p131 = scmp.eq.s32.totalorder %s27, 0
    %p132 = por %p130, %p131
    %p133 = scmp.ne.s32.totalorder %s121, %s122
    %p134 = scmp.eq.s32.totalorder %s28, 1
    %p135 = por %p133, %p134
    %p137 = scmp.ne.s32.totalorder %s122, %s136
    %p138 = scmp.eq.s32.totalorder %s28, 0
    %p139 = por %p137, %p138
    %s141 = sadd.s32 %s140, 1
    %p144 = scmp.eq.s32.totalorder %s22, 1
    %p145 = scmp.ne.s32.totalorder %s140, %s142
    %p146 = scmp.eq.s32.totalorder %s22, 0
    %p147 = por %p145, %p146
    %p148 = scmp.ne.s32.totalorder %s140, %s142
    %p149 = scmp.eq.s32.totalorder %s27, 1
    %p150 = por %p148, %p149
    %p151 = scmp.ne.s32.totalorder %s142, %s143
    %p152 = scmp.eq.s32.totalorder %s27, 0
    %p153 = por %p151, %p152
    %p154 = scmp.ne.s32.totalorder %s142, %s143
    %p155 = scmp.eq.s32.totalorder %s28, 1
    %p156 = por %p154, %p155
    %p158 = scmp.ne.s32.totalorder %s143, %s157
    %p159 = scmp.eq.s32.totalorder %s28, 0
    %p160 = por %p158, %p159
    %s162 = sadd.s32 %s161, 1
    %p165 = scmp.eq.s32.totalorder %s22, 1
    %p166 = scmp.ne.s32.totalorder %s161, %s163
    %p167 = scmp.eq.s32.totalorder %s22, 0
    %p168 = por %p166, %p167
    %p169 = scmp.ne.s32.totalorder %s161, %s163
    %p170 = scmp.eq.s32.totalorder %s27, 1
    %p171 = por %p169, %p170
    %p172 = scmp.ne.s32.totalorder %s163, %s164
    %p173 = scmp.eq.s32.totalorder %s27, 0
    %p174 = por %p172, %p173
    %p175 = scmp.ne.s32.totalorder %s163, %s164
    %p176 = scmp.eq.s32.totalorder %s28, 1
    %p177 = por %p175, %p176
    %p179 = scmp.ne.s32.totalorder %s164, %s178
    %p180 = scmp.eq.s32.totalorder %s28, 0
    %p181 = por %p179, %p180
    %s183 = sadd.s32 %s182, 1
    %p186 = scmp.eq.s32.totalorder %s22, 1
    %p187 = scmp.ne.s32.totalorder %s182, %s184
    %p188 = scmp.eq.s32.totalorder %s22, 0
    %p189 = por %p187, %p188
    %p190 = scmp.ne.s32.totalorder %s182, %s184
    %p191 = scmp.eq.s32.totalorder %s27, 1
    %p192 = por %p190, %p191
    %p193 = scmp.ne.s32.totalorder %s184, %s185
    %p194 = scmp.eq.s32.totalorder %s27, 0
    %p195 = por %p193, %p194
    %p196 = scmp.ne.s32.totalorder %s184, %s185
    %p197 = scmp.eq.s32.totalorder %s28, 1
    %p198 = por %p196, %p197
    %p200 = scmp.ne.s32.totalorder %s185, %s199
    %p201 = scmp.eq.s32.totalorder %s28, 0
    %p202 = por %p200, %p201
    %s204 = sadd.s32 %s203, 1
    %p207 = scmp.eq.s32.totalorder %s22, 1
    %p208 = scmp.ne.s32.totalorder %s203, %s205
    %p209 = scmp.eq.s32.totalorder %s22, 0
    %p210 = por %p208, %p209
    %p211 = scmp.ne.s32.totalorder %s203, %s205
    %p212 = scmp.eq.s32.totalorder %s27, 1
    %p213 = por %p211, %p212
    %p214 = scmp.ne.s32.totalorder %s205, %s206
    %p215 = scmp.eq.s32.totalorder %s27, 0
    %p216 = por %p214, %p215
    %p217 = scmp.ne.s32.totalorder %s205, %s206
    %p218 = scmp.eq.s32.totalorder %s28, 1
    %p219 = por %p217, %p218
    %p221 = scmp.ne.s32.totalorder %s206, %s220
    %p222 = scmp.eq.s32.totalorder %s28, 0
    %p223 = por %p221, %p222
    %s225 = sadd.s32 %s224, 1
    %p228 = scmp.eq.s32.totalorder %s22, 1
    %p229 = scmp.ne.s32.totalorder %s224, %s226
    %p230 = scmp.eq.s32.totalorder %s22, 0
    %p231 = por %p229, %p230
    %p232 = scmp.ne.s32.totalorder %s224, %s226
    %p233 = scmp.eq.s32.totalorder %s27, 1
    %p234 = por %p232, %p233
    %p235 = scmp.ne.s32.totalorder %s226, %s227
    %p236 = scmp.eq.s32.totalorder %s27, 0
    %p237 = por %p235, %p236
    %p238 = scmp.ne.s32.totalorder %s226, %s227
    %p239 = scmp.eq.s32.totalorder %s28, 1
    %p240 = por %p238, %p239
    %p242 = scmp.ne.s32.totalorder %s227, %s241
    %p243 = scmp.eq.s32.totalorder %s28, 0
    %p244 = por %p242, %p243
    %s246 = sadd.s32 %s245, 1
    %p249 = scmp.eq.s32.totalorder %s22, 1
    %p250 = scmp.ne.s32.totalorder %s245, %s247
    %p251 = scmp.eq.s32.totalorder %s22, 0
    %p252 = por %p250, %p251
    %p253 = scmp.ne.s32.totalorder %s245, %s247
    %p254 = scmp.eq.s32.totalorder %s27, 1
    %p255 = por %p253, %p254
    %p256 = scmp.ne.s32.totalorder %s247, %s248
    %p257 = scmp.eq.s32.totalorder %s27, 0
    %p258 = por %p256, %p257
    %p259 = scmp.ne.s32.totalorder %s247, %s248
    %p260 = scmp.eq.s32.totalorder %s28, 1
    %p261 = por %p259, %p260
    %p263 = scmp.ne.s32.totalorder %s248, %s262
    %p264 = scmp.eq.s32.totalorder %s28, 0
    %p265 = por %p263, %p264
    %s267 = sadd.s32 %s266, 1
    %p270 = scmp.eq.s32.totalorder %s22, 1
    %p271 = scmp.ne.s32.totalorder %s266, %s268
    %p272 = scmp.eq.s32.totalorder %s22, 0
    %p273 = por %p271, %p272
    %p274 = scmp.ne.s32.totalorder %s266, %s268
    %p275 = scmp.eq.s32.totalorder %s27, 1
    %p276 = por %p274, %p275
    %p277 = scmp.ne.s32.totalorder %s268, %s269
    %p278 = scmp.eq.s32.totalorder %s27, 0
    %p279 = por %p277, %p278
    %p280 = scmp.ne.s32.totalorder %s268, %s269
    %p281 = scmp.eq.s32.totalorder %s28, 1
    %p282 = por %p280, %p281
    %p284 = scmp.ne.s32.totalorder %s269, %s283
    %p285 = scmp.eq.s32.totalorder %s28, 0
    %p286 = por %p284, %p285
    %s288 = sadd.s32 %s287, 1
    %p291 = scmp.eq.s32.totalorder %s22, 1
    %p292 = scmp.ne.s32.totalorder %s287, %s289
    %p293 = scmp.eq.s32.totalorder %s22, 0
    %p294 = por %p292, %p293
    %p295 = scmp.ne.s32.totalorder %s287, %s289
    %p296 = scmp.eq.s32.totalorder %s27, 1
    %p297 = por %p295, %p296
    %p298 = scmp.ne.s32.totalorder %s289, %s290
    %p299 = scmp.eq.s32.totalorder %s27, 0
    %p300 = por %p298, %p299
    %p301 = scmp.ne.s32.totalorder %s289, %s290
    %p302 = scmp.eq.s32.totalorder %s28, 1
    %p303 = por %p301, %p302
    %p305 = scmp.ne.s32.totalorder %s290, %s304
    %p306 = scmp.eq.s32.totalorder %s28, 0
    %p307 = por %p305, %p306
    %s308 = ssub.s32 %s22, %s29
    %p309 = scmp.eq.s32.totalorder %s308, 0
    %s311 = sadd.s32 %s310, 1
    %s312 = scalar_select %p309, %s310, %s311
    %p315 = pneg %p309
    %p316 = scmp.eq.s32.totalorder %s22, 1
    %p317 = por %p315, %p316
    %p318 = scmp.ne.s32.totalorder %s310, %s313
    %p319 = scmp.eq.s32.totalorder %s22, 0
    %p320 = por %p318, %p319
    %p321 = scmp.ne.s32.totalorder %s310, %s313
    %p322 = scmp.eq.s32.totalorder %s27, 1
    %p323 = por %p321, %p322
    %p324 = scmp.ne.s32.totalorder %s313, %s314
    %p325 = scmp.eq.s32.totalorder %s27, 0
    %p326 = por %p324, %p325
    %p327 = scmp.ne.s32.totalorder %s313, %s314
    %p328 = scmp.eq.s32.totalorder %s28, 1
    %p329 = por %p327, %p328
    %p331 = scmp.ne.s32.totalorder %s314, %s330
    %p332 = scmp.eq.s32.totalorder %s28, 0
    %p333 = por %p331, %p332
    %s334 = ssub.s32 %s22, %s29
    %p335 = scmp.eq.s32.totalorder %s334, 0
    %s337 = sadd.s32 %s336, 1
    %s338 = scalar_select %p335, %s336, %s337
    %p341 = pneg %p335
    %p342 = scmp.eq.s32.totalorder %s22, 1
    %p343 = por %p341, %p342
    %p344 = scmp.ne.s32.totalorder %s336, %s339
    %p345 = scmp.eq.s32.totalorder %s22, 0
    %p346 = por %p344, %p345
    %p347 = scmp.ne.s32.totalorder %s336, %s339
    %p348 = scmp.eq.s32.totalorder %s27, 1
    %p349 = por %p347, %p348
    %p350 = scmp.ne.s32.totalorder %s339, %s340
    %p351 = scmp.eq.s32.totalorder %s27, 0
    %p352 = por %p350, %p351
    %p353 = scmp.ne.s32.totalorder %s339, %s340
    %p354 = scmp.eq.s32.totalorder %s28, 1
    %p355 = por %p353, %p354
    %p357 = scmp.ne.s32.totalorder %s340, %s356
    %p358 = scmp.eq.s32.totalorder %s28, 0
    %p359 = por %p357, %p358
    %s360 = ssub.s32 %s22, %s29
    %p361 = scmp.eq.s32.totalorder %s360, 0
    %s363 = sadd.s32 %s362, 1
    %s364 = scalar_select %p361, %s362, %s363
    %p367 = pneg %p361
    %p368 = scmp.eq.s32.totalorder %s22, 1
    %p369 = por %p367, %p368
    %p370 = scmp.ne.s32.totalorder %s362, %s365
    %p371 = scmp.eq.s32.totalorder %s22, 0
    %p372 = por %p370, %p371
    %p373 = scmp.ne.s32.totalorder %s362, %s365
    %p374 = scmp.eq.s32.totalorder %s27, 1
    %p375 = por %p373, %p374
    %p376 = scmp.ne.s32.totalorder %s365, %s366
    %p377 = scmp.eq.s32.totalorder %s27, 0
    %p378 = por %p376, %p377
    %p379 = scmp.ne.s32.totalorder %s365, %s366
    %p380 = scmp.eq.s32.totalorder %s28, 1
    %p381 = por %p379, %p380
    %p383 = scmp.ne.s32.totalorder %s366, %s382
    %p384 = scmp.eq.s32.totalorder %s28, 0
    %p385 = por %p383, %p384
    %p386 = scmp.le.s32.totalorder 1, %s22
    %p387 = scmp.lt.s32.totalorder %s22, 3
    %p388 = pnand %p386, %p387
    %p389 = pneg %p388
    // Predicated region
    $region9: #{cmt_layer_forward.3} parent=5 // pred_check
      _
    $region10: #{cmt_layer_forward.3} parent=5 // pred_check_branch
      %391 = sbr.rel (%p388) target = $region12
    $region11: #{cmt_layer_forward.3} parent=5 // pred_region
      %s392 = ssub.s32 %s22, 1
      // Predicated region
      $region13: #{cmt_layer_forward.3} parent=11 // pred_check
        %p393 = pneg %p69
      $region14: #{cmt_layer_forward.3} parent=11 // pred_check_branch
        %395 = sbr.rel (%p393) target = $region16
      $region15: #{cmt_layer_forward.3} parent=11 // pred_region
        _
      $region16: #{cmt_layer_forward.3} parent=11 // pred_fallthru
        _
      // Predicated region
      $region17: #{cmt_layer_forward.3} parent=11 // pred_check
        %p396 = pneg %p90
      $region18: #{cmt_layer_forward.3} parent=11 // pred_check_branch
        %398 = sbr.rel (%p396) target = $region20
      $region19: #{cmt_layer_forward.3} parent=11 // pred_region
        _
      $region20: #{cmt_layer_forward.3} parent=11 // pred_fallthru
        _
      // Predicated region
      $region21: #{cmt_layer_forward.3} parent=11 // pred_check
        %p399 = pneg %p111
      $region22: #{cmt_layer_forward.3} parent=11 // pred_check_branch
        %401 = sbr.rel (%p399) target = $region24
      $region23: #{cmt_layer_forward.3} parent=11 // pred_region
        _
      $region24: #{cmt_layer_forward.3} parent=11 // pred_fallthru
        _
      // Predicated region
      $region25: #{cmt_layer_forward.3} parent=11 // pred_check
        %p402 = pneg %p132
      $region26: #{cmt_layer_forward.3} parent=11 // pred_check_branch
        %404 = sbr.rel (%p402) target = $region28
      $region27: #{cmt_layer_forward.3} parent=11 // pred_region
        _
      $region28: #{cmt_layer_forward.3} parent=11 // pred_fallthru
        _
      // Predicated region
      $region29: #{cmt_layer_forward.3} parent=11 // pred_check
        %p405 = pneg %p153
      $region30: #{cmt_layer_forward.3} parent=11 // pred_check_branch
        %407 = sbr.rel (%p405) target = $region32
      $region31: #{cmt_layer_forward.3} parent=11 // pred_region
        _
      $region32: #{cmt_layer_forward.3} parent=11 // pred_fallthru
        _
      // Predicated region
      $region33: #{cmt_layer_forward.3} parent=11 // pred_check
        %p408 = pneg %p174
      $region34: #{cmt_layer_forward.3} parent=11 // pred_check_branch
        %410 = sbr.rel (%p408) target = $region36
      $region35: #{cmt_layer_forward.3} parent=11 // pred_region
        _
      $region36: #{cmt_layer_forward.3} parent=11 // pred_fallthru
        _
      // Predicated region
      $region37: #{cmt_layer_forward.3} parent=11 // pred_check
        %p411 = pneg %p195
      $region38: #{cmt_layer_forward.3} parent=11 // pred_check_branch
        %413 = sbr.rel (%p411) target = $region40
      $region39: #{cmt_layer_forward.3} parent=11 // pred_region
        _
      $region40: #{cmt_layer_forward.3} parent=11 // pred_fallthru
        _
      // Predicated region
      $region41: #{cmt_layer_forward.3} parent=11 // pred_check
        %p414 = pneg %p216
      $region42: #{cmt_layer_forward.3} parent=11 // pred_check_branch
        %416 = sbr.rel (%p414) target = $region44
      $region43: #{cmt_layer_forward.3} parent=11 // pred_region
        _
      $region44: #{cmt_layer_forward.3} parent=11 // pred_fallthru
        _
      // Predicated region
      $region45: #{cmt_layer_forward.3} parent=11 // pred_check
        %p417 = pneg %p237
      $region46: #{cmt_layer_forward.3} parent=11 // pred_check_branch
        %419 = sbr.rel (%p417) target = $region48
      $region47: #{cmt_layer_forward.3} parent=11 // pred_region
        _
      $region48: #{cmt_layer_forward.3} parent=11 // pred_fallthru
        _
      // Predicated region
      $region49: #{cmt_layer_forward.3} parent=11 // pred_check
        %p420 = pneg %p258
      $region50: #{cmt_layer_forward.3} parent=11 // pred_check_branch
        %422 = sbr.rel (%p420) target = $region52
      $region51: #{cmt_layer_forward.3} parent=11 // pred_region
        _
      $region52: #{cmt_layer_forward.3} parent=11 // pred_fallthru
        _
      // Predicated region
      $region53: #{cmt_layer_forward.3} parent=11 // pred_check
        %p423 = pneg %p279
      $region54: #{cmt_layer_forward.3} parent=11 // pred_check_branch
        %425 = sbr.rel (%p423) target = $region56
      $region55: #{cmt_layer_forward.3} parent=11 // pred_region
        _
      $region56: #{cmt_layer_forward.3} parent=11 // pred_fallthru
        _
      // Predicated region
      $region57: #{cmt_layer_forward.3} parent=11 // pred_check
        %p426 = pneg %p300
      $region58: #{cmt_layer_forward.3} parent=11 // pred_check_branch
        %428 = sbr.rel (%p426) target = $region60
      $region59: #{cmt_layer_forward.3} parent=11 // pred_region
        _
      $region60: #{cmt_layer_forward.3} parent=11 // pred_fallthru
        _
    $region12: #{cmt_layer_forward.3} parent=5 // pred_fallthru
      _
    %p429 = scmp.lt.s32.totalorder %s22, 2
    // Predicated region
    $region61: #{cmt_layer_forward.3} parent=5 // pred_check
      %p430 = pneg %p429
    $region62: #{cmt_layer_forward.3} parent=5 // pred_check_branch
      %432 = sbr.rel (%p430) target = $region64
    $region63: #{cmt_layer_forward.3} parent=5 // pred_region
      // Predicated region
      $region65: #{cmt_layer_forward.3} parent=63 // pred_check
        %p433 = pneg %p42
      $region66: #{cmt_layer_forward.3} parent=63 // pred_check_branch
        %435 = sbr.rel (%p433) target = $region68
      $region67: #{cmt_layer_forward.3} parent=63 // pred_region
        %s436 = smul.u32 8, %s22
        %p437 = scmp.lt.s32.totalorder %s436, 15
        %s438 = scalar_select %p437, %s436, 15
        %s439 = smul.addr %s438, 8
        %s440 = scalar_lea.vmem %s0, %s439
        %s441 = smul.u32 8, %s22
      $region68: #{cmt_layer_forward.3} parent=63 // pred_fallthru
        _
    $region64: #{cmt_layer_forward.3} parent=5 // pred_fallthru
      _
    %p442 = scmp.le.s32.totalorder 1, %s22
    %p443 = scmp.lt.s32.totalorder %s22, 3
    %p444 = pnand %p442, %p443
    %p445 = pneg %p444
    // Predicated region
    $region69: #{cmt_layer_forward.3} parent=5 // pred_check
      _
    $region70: #{cmt_layer_forward.3} parent=5 // pred_check_branch
      %447 = sbr.rel (%p444) target = $region72
    $region71: #{cmt_layer_forward.3} parent=5 // pred_region
      %s448 = ssub.s32 %s22, 1
      %s449 = smul.u32 8, %s27
      %p450 = scmp.lt.s32.totalorder %s449, 15
      %s451 = scalar_select %p450, %s449, 15
      %s452 = smul.addr %s451, 8
      %s453 = scalar_lea.vmem %s0, %s452
      %p454 = pneg %p48
      %p455 = pneg %p45
      %p456 = pneg %p69
      %p457 = pneg %p66
      %p458 = pneg %p90
      %p459 = pneg %p87
      %p460 = pneg %p111
      %p461 = pneg %p108
      %p462 = pneg %p132
      %p463 = pneg %p129
      %p464 = pneg %p153
      %p465 = pneg %p150
      %p466 = pneg %p174
      %p467 = pneg %p171
      %p468 = pneg %p195
      %p469 = pneg %p192
      %p470 = pneg %p216
      %p471 = pneg %p213
      %p472 = pneg %p237
      %p473 = pneg %p234
      %p474 = pneg %p258
      %p475 = pneg %p255
      %p476 = pneg %p279
      %p477 = pneg %p276
      %p478 = pneg %p300
      %p479 = pneg %p297
      %p480 = pneg %p326
      %p481 = pneg %p323
      %s482 = smul.u32 8, %s27
      %p483 = scmp.lt.s32.totalorder %s482, 15
      %s484 = scalar_select %p483, %s482, 15
      %s485 = smul.addr %s484, 8
      %s486 = scalar_lea.vmem %s13, %s485
      %p487 = pneg %p352
      %p488 = pneg %p349
      %s489 = smul.u32 8, %s27
      %p490 = scmp.lt.s32.totalorder %s489, 15
      %s491 = scalar_select %p490, %s489, 15
      %s492 = smul.addr %s491, 4
      %s493 = scalar_lea.vmem %s14, %s492
      %p494 = pneg %p378
      %p495 = pneg %p375
      %p496 = scmp.lt.s32.totalorder %s27, 1
      %s497 = scalar_select %p496, %s27, 1
      %s498 = smul.addr %s497, 8
      %s499 = scalar_lea.vmem %s15, %s498
      %s500 = smul.u32 8, %s27
      %p501 = scmp.lt.s32.totalorder %s500, 15
      %s502 = scalar_select %p501, %s500, 15
      %s503 = smul.addr %s502, 8
      %s504 = scalar_lea.vmem %s0, %s503
      %s505 = smul.u32 8, %s27
      %s506 = smul.u32 8, %s27
      %p507 = scmp.lt.s32.totalorder %s506, 15
      %s508 = scalar_select %p507, %s506, 15
      %s509 = smul.addr %s508, 8
      %s510 = scalar_lea.vmem %s13, %s509
      %s511 = smul.u32 8, %s27
      %s512 = smul.u32 8, %s27
      %p513 = scmp.lt.s32.totalorder %s512, 15
      %s514 = scalar_select %p513, %s512, 15
      %s515 = smul.addr %s514, 4
      %s516 = scalar_lea.vmem %s14, %s515
      %s517 = smul.u32 8, %s27
      %p518 = scmp.lt.s32.totalorder %s27, 1
      %s519 = scalar_select %p518, %s27, 1
      %s520 = smul.addr %s519, 8
      %s521 = scalar_lea.vmem %s15, %s520
      %v523 = vld [vmem:[%s504] sm:$0xff]
      %v524 = vld [vmem:[%s504 + $0x8] sm:$0xff]
      %v525 = vld [vmem:[%s504 + $0x10] sm:$0xff]
      %v526 = vld [vmem:[%s504 + $0x18] sm:$0xff]
      %v527 = vld [vmem:[%s504 + $0x20] sm:$0xff]
      %v528 = vld [vmem:[%s504 + $0x28] sm:$0xff]
      %v529 = vld [vmem:[%s504 + $0x30] sm:$0xff]
      %v530 = vld [vmem:[%s504 + $0x38] sm:$0xff]
      %v531 = vld [vmem:[%s1] sm:$0xff]
      %v532 = vld [vmem:[%s1 + $0x8] sm:$0x1]
      %vm533 = vcmask 261120
      %534 = vst.msk [vmem:[#allocation2] sm:$0xff] %vm533, 0.0
      %535 = vst.msk [vmem:[#allocation2 + $0x8] sm:$0xff] %vm533, 0.0
      %536 = vst.msk [vmem:[#allocation2 + $0x50] sm:$0xff] %vm533, 0.0
      %537 = vst.msk [vmem:[#allocation2 + $0x58] sm:$0xff] %vm533, 0.0
      %538 = vst.msk [vmem:[#allocation2 + $0x10] sm:$0xff] %vm533, %v523
      %539 = vst.msk [vmem:[#allocation2 + $0x18] sm:$0xff] %vm533, %v524
      %540 = vst.msk [vmem:[#allocation2 + $0x20] sm:$0xff] %vm533, %v525
      %541 = vst.msk [vmem:[#allocation2 + $0x28] sm:$0xff] %vm533, %v526
      %542 = vst.msk [vmem:[#allocation2 + $0x30] sm:$0xff] %vm533, %v527
      %543 = vst.msk [vmem:[#allocation2 + $0x38] sm:$0xff] %vm533, %v528
      %544 = vst.msk [vmem:[#allocation2 + $0x40] sm:$0xff] %vm533, %v529
      %545 = vst.msk [vmem:[#allocation2 + $0x48] sm:$0xff] %vm533, %v530
      %v546 = vlaneseq
      %v547 = vshrl.u32 %v546, 7
      %v548 = vadd.s32 %v547, 8
      %v549 = vadd.s32 %v547, 16
      %v550 = vadd.s32 %v547, 24
      %v551 = vadd.s32 %v547, 32
      %v552 = vadd.s32 %v547, 40
      %v553 = vadd.s32 %v547, 48
      %v554 = vadd.s32 %v547, 56
      %v555 = vand.u32 %v547, 7
      %v556 = vand.u32 %v548, 7
      %v557 = vand.u32 %v549, 7
      %v558 = vand.u32 %v550, 7
      %v559 = vand.u32 %v551, 7
      %v560 = vand.u32 %v552, 7
      %v561 = vand.u32 %v553, 7
      %v562 = vand.u32 %v554, 7
      %vm563 = vcmp.ne.s32.totalorder %v555, 0
      %vm564 = vcmp.ne.s32.totalorder %v556, 0
      %vm565 = vcmp.ne.s32.totalorder %v557, 0
      %vm566 = vcmp.ne.s32.totalorder %v558, 0
      %vm567 = vcmp.ne.s32.totalorder %v559, 0
      %vm568 = vcmp.ne.s32.totalorder %v560, 0
      %vm569 = vcmp.ne.s32.totalorder %v561, 0
      %vm570 = vcmp.ne.s32.totalorder %v562, 0
      %v571 = vsel %vm563, 1, 0
      %v572 = vsel %vm564, 1, 0
      %v573 = vsel %vm565, 1, 0
      %v574 = vsel %vm566, 1, 0
      %v575 = vsel %vm567, 1, 0
      %v576 = vsel %vm568, 1, 0
      %v577 = vsel %vm569, 1, 0
      %v578 = vsel %vm570, 1, 0
      %v579 = vcvt.s32.f32 %v571
      %v580 = vcvt.s32.f32 %v572
      %v581 = vcvt.s32.f32 %v573
      %v582 = vcvt.s32.f32 %v574
      %v583 = vcvt.s32.f32 %v575
      %v584 = vcvt.s32.f32 %v576
      %v585 = vcvt.s32.f32 %v577
      %v586 = vcvt.s32.f32 %v578
      %vm587 = vcmp.ne.s32.totalorder %v555, 7
      %vm588 = vcmp.ne.s32.totalorder %v556, 7
      %vm589 = vcmp.ne.s32.totalorder %v557, 7
      %vm590 = vcmp.ne.s32.totalorder %v558, 7
      %vm591 = vcmp.ne.s32.totalorder %v559, 7
      %vm592 = vcmp.ne.s32.totalorder %v560, 7
      %vm593 = vcmp.ne.s32.totalorder %v561, 7
      %vm594 = vcmp.ne.s32.totalorder %v562, 7
      %v595 = vsel %vm587, 1, 0
      %v596 = vsel %vm588, 1, 0
      %v597 = vsel %vm589, 1, 0
      %v598 = vsel %vm590, 1, 0
      %v599 = vsel %vm591, 1, 0
      %v600 = vsel %vm592, 1, 0
      %v601 = vsel %vm593, 1, 0
      %v602 = vsel %vm594, 1, 0
      %v603 = vcvt.s32.f32 %v595
      %v604 = vcvt.s32.f32 %v596
      %v605 = vcvt.s32.f32 %v597
      %v606 = vcvt.s32.f32 %v598
      %v607 = vcvt.s32.f32 %v599
      %v608 = vcvt.s32.f32 %v600
      %v609 = vcvt.s32.f32 %v601
      %v610 = vcvt.s32.f32 %v602
      %v611 = vld [vmem:[#allocation2 + $0x7] sm:$0xff]
      %v612 = vld [vmem:[#allocation2 + $0xf] sm:$0xff]
      %v613 = vld [vmem:[#allocation2 + $0x17] sm:$0xff]
      %v614 = vld [vmem:[#allocation2 + $0x1f] sm:$0xff]
      %v615 = vld [vmem:[#allocation2 + $0x27] sm:$0xff]
      %v616 = vld [vmem:[#allocation2 + $0x2f] sm:$0xff]
      %v617 = vld [vmem:[#allocation2 + $0x37] sm:$0xff]
      %v618 = vld [vmem:[#allocation2 + $0x3f] sm:$0xff]
      %v619 = vmul.f32 %v611, %v579
      %v620 = vmul.f32 %v612, %v580
      %v621 = vmul.f32 %v613, %v581
      %v622 = vmul.f32 %v614, %v582
      %v623 = vmul.f32 %v615, %v583
      %v624 = vmul.f32 %v616, %v584
      %v625 = vmul.f32 %v617, %v585
      %v626 = vmul.f32 %v618, %v586
      %v627 = vperm.slane %v531, 0
      %v628 = vmul.f32 %v619, %v627
      %v629 = vmul.f32 %v620, %v627
      %v630 = vmul.f32 %v621, %v627
      %v631 = vmul.f32 %v622, %v627
      %v632 = vmul.f32 %v623, %v627
      %v633 = vmul.f32 %v624, %v627
      %v634 = vmul.f32 %v625, %v627
      %v635 = vmul.f32 %v626, %v627
      %v636 = vadd.f32 %v628, 0.0
      %v637 = vadd.f32 %v629, 0.0
      %v638 = vadd.f32 %v630, 0.0
      %v639 = vadd.f32 %v631, 0.0
      %v640 = vadd.f32 %v632, 0.0
      %v641 = vadd.f32 %v633, 0.0
      %v642 = vadd.f32 %v634, 0.0
      %v643 = vadd.f32 %v635, 0.0
      %v644 = vld [vmem:[#allocation2 + $0x8] sm:$0xff]
      %v645 = vld [vmem:[#allocation2 + $0x10] sm:$0xff]
      %v646 = vld [vmem:[#allocation2 + $0x18] sm:$0xff]
      %v647 = vld [vmem:[#allocation2 + $0x20] sm:$0xff]
      %v648 = vld [vmem:[#allocation2 + $0x28] sm:$0xff]
      %v649 = vld [vmem:[#allocation2 + $0x30] sm:$0xff]
      %v650 = vld [vmem:[#allocation2 + $0x38] sm:$0xff]
      %v651 = vld [vmem:[#allocation2 + $0x40] sm:$0xff]
      %v652 = vperm.slane %v531, 1
      %v653 = vmul.f32 %v644, %v652
      %v654 = vmul.f32 %v645, %v652
      %v655 = vmul.f32 %v646, %v652
      %v656 = vmul.f32 %v647, %v652
      %v657 = vmul.f32 %v648, %v652
      %v658 = vmul.f32 %v649, %v652
      %v659 = vmul.f32 %v650, %v652
      %v660 = vmul.f32 %v651, %v652
      %v661 = vadd.f32 %v636, %v653
      %v662 = vadd.f32 %v637, %v654
      %v663 = vadd.f32 %v638, %v655
      %v664 = vadd.f32 %v639, %v656
      %v665 = vadd.f32 %v640, %v657
      %v666 = vadd.f32 %v641, %v658
      %v667 = vadd.f32 %v642, %v659
      %v668 = vadd.f32 %v643, %v660
      %v669 = vld [vmem:[#allocation2 + $0x9] sm:$0xff]
      %v670 = vld [vmem:[#allocation2 + $0x11] sm:$0xff]
      %v671 = vld [vmem:[#allocation2 + $0x19] sm:$0xff]
      %v672 = vld [vmem:[#allocation2 + $0x21] sm:$0xff]
      %v673 = vld [vmem:[#allocation2 + $0x29] sm:$0xff]
      %v674 = vld [vmem:[#allocation2 + $0x31] sm:$0xff]
      %v675 = vld [vmem:[#allocation2 + $0x39] sm:$0xff]
      %v676 = vld [vmem:[#allocation2 + $0x41] sm:$0xff]
      %v677 = vmul.f32 %v669, %v603
      %v678 = vmul.f32 %v670, %v604
      %v679 = vmul.f32 %v671, %v605
      %v680 = vmul.f32 %v672, %v606
      %v681 = vmul.f32 %v673, %v607
      %v682 = vmul.f32 %v674, %v608
      %v683 = vmul.f32 %v675, %v609
      %v684 = vmul.f32 %v676, %v610
      %v685 = vperm.slane %v531, 2
      %v686 = vmul.f32 %v677, %v685
      %v687 = vmul.f32 %v678, %v685
      %v688 = vmul.f32 %v679, %v685
      %v689 = vmul.f32 %v680, %v685
      %v690 = vmul.f32 %v681, %v685
      %v691 = vmul.f32 %v682, %v685
      %v692 = vmul.f32 %v683, %v685
      %v693 = vmul.f32 %v684, %v685
      %v694 = vadd.f32 %v661, %v686
      %v695 = vadd.f32 %v662, %v687
      %v696 = vadd.f32 %v663, %v688
      %v697 = vadd.f32 %v664, %v689
      %v698 = vadd.f32 %v665, %v690
      %v699 = vadd.f32 %v666, %v691
      %v700 = vadd.f32 %v667, %v692
      %v701 = vadd.f32 %v668, %v693
      %v702 = vld [vmem:[#allocation2 + $0x47] sm:$0xff]
      %v703 = vmul.f32 %v612, %v579
      %v704 = vmul.f32 %v613, %v580
      %v705 = vmul.f32 %v614, %v581
      %v706 = vmul.f32 %v615, %v582
      %v707 = vmul.f32 %v616, %v583
      %v708 = vmul.f32 %v617, %v584
      %v709 = vmul.f32 %v618, %v585
      %v710 = vmul.f32 %v702, %v586
      %v711 = vperm.slane %v531, 3
      %v712 = vmul.f32 %v703, %v711
      %v713 = vmul.f32 %v704, %v711
      %v714 = vmul.f32 %v705, %v711
      %v715 = vmul.f32 %v706, %v711
      %v716 = vmul.f32 %v707, %v711
      %v717 = vmul.f32 %v708, %v711
      %v718 = vmul.f32 %v709, %v711
      %v719 = vmul.f32 %v710, %v711
      %v720 = vadd.f32 %v694, %v712
      %v721 = vadd.f32 %v695, %v713
      %v722 = vadd.f32 %v696, %v714
      %v723 = vadd.f32 %v697, %v715
      %v724 = vadd.f32 %v698, %v716
      %v725 = vadd.f32 %v699, %v717
      %v726 = vadd.f32 %v700, %v718
      %v727 = vadd.f32 %v701, %v719
      %v728 = vld [vmem:[#allocation2 + $0x48] sm:$0xff]
      %v729 = vperm.slane %v531, 4
      %v730 = vmul.f32 %v645, %v729
      %v731 = vmul.f32 %v646, %v729
      %v732 = vmul.f32 %v647, %v729
      %v733 = vmul.f32 %v648, %v729
      %v734 = vmul.f32 %v649, %v729
      %v735 = vmul.f32 %v650, %v729
      %v736 = vmul.f32 %v651, %v729
      %v737 = vmul.f32 %v728, %v729
      %v738 = vadd.f32 %v720, %v730
      %v739 = vadd.f32 %v721, %v731
      %v740 = vadd.f32 %v722, %v732
      %v741 = vadd.f32 %v723, %v733
      %v742 = vadd.f32 %v724, %v734
      %v743 = vadd.f32 %v725, %v735
      %v744 = vadd.f32 %v726, %v736
      %v745 = vadd.f32 %v727, %v737
      %v746 = vld [vmem:[#allocation2 + $0x49] sm:$0xff]
      %v747 = vmul.f32 %v670, %v603
      %v748 = vmul.f32 %v671, %v604
      %v749 = vmul.f32 %v672, %v605
      %v750 = vmul.f32 %v673, %v606
      %v751 = vmul.f32 %v674, %v607
      %v752 = vmul.f32 %v675, %v608
      %v753 = vmul.f32 %v676, %v609
      %v754 = vmul.f32 %v746, %v610
      %v755 = vperm.slane %v531, 5
      %v756 = vmul.f32 %v747, %v755
      %v757 = vmul.f32 %v748, %v755
      %v758 = vmul.f32 %v749, %v755
      %v759 = vmul.f32 %v750, %v755
      %v760 = vmul.f32 %v751, %v755
      %v761 = vmul.f32 %v752, %v755
      %v762 = vmul.f32 %v753, %v755
      %v763 = vmul.f32 %v754, %v755
      %v764 = vadd.f32 %v738, %v756
      %v765 = vadd.f32 %v739, %v757
      %v766 = vadd.f32 %v740, %v758
      %v767 = vadd.f32 %v741, %v759
      %v768 = vadd.f32 %v742, %v760
      %v769 = vadd.f32 %v743, %v761
      %v770 = vadd.f32 %v744, %v762
      %v771 = vadd.f32 %v745, %v763
      %v772 = vld [vmem:[#allocation2 + $0x4f] sm:$0xff]
      %v773 = vmul.f32 %v613, %v579
      %v774 = vmul.f32 %v614, %v580
      %v775 = vmul.f32 %v615, %v581
      %v776 = vmul.f32 %v616, %v582
      %v777 = vmul.f32 %v617, %v583
      %v778 = vmul.f32 %v618, %v584
      %v779 = vmul.f32 %v702, %v585
      %v780 = vmul.f32 %v772, %v586
      %v781 = vperm.slane %v531, 6
      %v782 = vmul.f32 %v773, %v781
      %v783 = vmul.f32 %v774, %v781
      %v784 = vmul.f32 %v775, %v781
      %v785 = vmul.f32 %v776, %v781
      %v786 = vmul.f32 %v777, %v781
      %v787 = vmul.f32 %v778, %v781
      %v788 = vmul.f32 %v779, %v781
      %v789 = vmul.f32 %v780, %v781
      %v790 = vadd.f32 %v764, %v782
      %v791 = vadd.f32 %v765, %v783
      %v792 = vadd.f32 %v766, %v784
      %v793 = vadd.f32 %v767, %v785
      %v794 = vadd.f32 %v768, %v786
      %v795 = vadd.f32 %v769, %v787
      %v796 = vadd.f32 %v770, %v788
      %v797 = vadd.f32 %v771, %v789
      %v798 = vld [vmem:[#allocation2 + $0x50] sm:$0xff]
      %v799 = vperm.slane %v531, 7
      %v800 = vmul.f32 %v646, %v799
      %v801 = vmul.f32 %v647, %v799
      %v802 = vmul.f32 %v648, %v799
      %v803 = vmul.f32 %v649, %v799
      %v804 = vmul.f32 %v650, %v799
      %v805 = vmul.f32 %v651, %v799
      %v806 = vmul.f32 %v728, %v799
      %v807 = vmul.f32 %v798, %v799
      %v808 = vadd.f32 %v790, %v800
      %v809 = vadd.f32 %v791, %v801
      %v810 = vadd.f32 %v792, %v802
      %v811 = vadd.f32 %v793, %v803
      %v812 = vadd.f32 %v794, %v804
      %v813 = vadd.f32 %v795, %v805
      %v814 = vadd.f32 %v796, %v806
      %v815 = vadd.f32 %v797, %v807
      %v816 = vld [vmem:[#allocation2 + $0x51] sm:$0xff]
      %v817 = vmul.f32 %v671, %v603
      %v818 = vmul.f32 %v672, %v604
      %v819 = vmul.f32 %v673, %v605
      %v820 = vmul.f32 %v674, %v606
      %v821 = vmul.f32 %v675, %v607
      %v822 = vmul.f32 %v676, %v608
      %v823 = vmul.f32 %v746, %v609
      %v824 = vmul.f32 %v816, %v610
      %v825 = vperm.slane %v532, 0
      %v826 = vmul.f32 %v817, %v825
      %v827 = vmul.f32 %v818, %v825
      %v828 = vmul.f32 %v819, %v825
      %v829 = vmul.f32 %v820, %v825
      %v830 = vmul.f32 %v821, %v825
      %v831 = vmul.f32 %v822, %v825
      %v832 = vmul.f32 %v823, %v825
      %v833 = vmul.f32 %v824, %v825
      %v834 = vadd.f32 %v808, %v826
      %v835 = vadd.f32 %v809, %v827
      %v836 = vadd.f32 %v810, %v828
      %v837 = vadd.f32 %v811, %v829
      %v838 = vadd.f32 %v812, %v830
      %v839 = vadd.f32 %v813, %v831
      %v840 = vadd.f32 %v814, %v832
      %v841 = vadd.f32 %v815, %v833
      %v842 = vld [vmem:[%s2] sm:$0x1]
      %v844 = vperm.slane %v842, 0
      %v846 = vadd.f32 %v834, %v844
      %v847 = vadd.f32 %v835, %v844
      %v848 = vadd.f32 %v836, %v844
      %v849 = vadd.f32 %v837, %v844
      %v850 = vadd.f32 %v838, %v844
      %v851 = vadd.f32 %v839, %v844
      %v852 = vadd.f32 %v840, %v844
      %v853 = vadd.f32 %v841, %v844
      %v854 = vadd.f32 %v523, %v846
      %v855 = vadd.f32 %v524, %v847
      %v856 = vadd.f32 %v525, %v848
      %v857 = vadd.f32 %v526, %v849
      %v858 = vadd.f32 %v527, %v850
      %v859 = vadd.f32 %v528, %v851
      %v860 = vadd.f32 %v529, %v852
      %v861 = vadd.f32 %v530, %v853
      %v862 = vld [vmem:[%s3] sm:$0x1]
      %v863 = vld [vmem:[%s4] sm:$0x1]
      %v864 = vsel %vm533, %v854, 0.0
      %865 = vadd.xlane.f32.xlu0 %v864
      %v866 = vpop.xlane.xlu0 %865
      %v867 = vsel %vm533, %v855, 0.0
      %868 = vadd.xlane.f32.xlu0 %v867
      %v869 = vpop.xlane.xlu0 %868
      %v870 = vsel %vm533, %v856, 0.0
      %871 = vadd.xlane.f32.xlu0 %v870
      %v872 = vpop.xlane.xlu0 %871
      %v873 = vsel %vm533, %v857, 0.0
      %874 = vadd.xlane.f32.xlu0 %v873
      %v875 = vpop.xlane.xlu0 %874
      %v876 = vsel %vm533, %v858, 0.0
      %877 = vadd.xlane.f32.xlu0 %v876
      %v878 = vpop.xlane.xlu0 %877
      %v879 = vsel %vm533, %v859, 0.0
      %880 = vadd.xlane.f32.xlu0 %v879
      %v881 = vpop.xlane.xlu0 %880
      %v882 = vsel %vm533, %v860, 0.0
      %883 = vadd.xlane.f32.xlu0 %v882
      %v884 = vpop.xlane.xlu0 %883
      %v885 = vsel %vm533, %v861, 0.0
      %886 = vadd.xlane.f32.xlu0 %v885
      %v887 = vpop.xlane.xlu0 %886
      %v888 = vrcp.pop 32.0
      %v889 = vmul.f32 32.0, %v888
      %v890 = vsub.f32 1.0, %v889
      %v891 = vmul.f32 %v888, %v890
      %v892 = vadd.f32 %v888, %v891
      %vm893 = vweird.f32 %v888
      %v894 = vsel %vm893, %v888, %v892
      %v895 = vmul.f32 %v866, %v894
      %v896 = vmul.f32 %v869, %v894
      %v897 = vmul.f32 %v872, %v894
      %v898 = vmul.f32 %v875, %v894
      %v899 = vmul.f32 %v878, %v894
      %v900 = vmul.f32 %v881, %v894
      %v901 = vmul.f32 %v884, %v894
      %v902 = vmul.f32 %v887, %v894
      %v903 = vsub.f32 %v854, %v895
      %v904 = vsub.f32 %v855, %v896
      %v905 = vsub.f32 %v856, %v897
      %v906 = vsub.f32 %v857, %v898
      %v907 = vsub.f32 %v858, %v899
      %v908 = vsub.f32 %v859, %v900
      %v909 = vsub.f32 %v860, %v901
      %v910 = vsub.f32 %v861, %v902
      %v911 = vmul.f32 %v903, %v903
      %v912 = vmul.f32 %v904, %v904
      %v913 = vmul.f32 %v905, %v905
      %v914 = vmul.f32 %v906, %v906
      %v915 = vmul.f32 %v907, %v907
      %v916 = vmul.f32 %v908, %v908
      %v917 = vmul.f32 %v909, %v909
      %v918 = vmul.f32 %v910, %v910
      %v919 = vsel %vm533, %v911, 0.0
      %920 = vadd.xlane.f32.xlu0 %v919
      %v921 = vpop.xlane.xlu0 %920
      %v922 = vsel %vm533, %v912, 0.0
      %923 = vadd.xlane.f32.xlu0 %v922
      %v924 = vpop.xlane.xlu0 %923
      %v925 = vsel %vm533, %v913, 0.0
      %926 = vadd.xlane.f32.xlu0 %v925
      %v927 = vpop.xlane.xlu0 %926
      %v928 = vsel %vm533, %v914, 0.0
      %929 = vadd.xlane.f32.xlu0 %v928
      %v930 = vpop.xlane.xlu0 %929
      %v931 = vsel %vm533, %v915, 0.0
      %932 = vadd.xlane.f32.xlu0 %v931
      %v933 = vpop.xlane.xlu0 %932
      %v934 = vsel %vm533, %v916, 0.0
      %935 = vadd.xlane.f32.xlu0 %v934
      %v936 = vpop.xlane.xlu0 %935
      %v937 = vsel %vm533, %v917, 0.0
      %938 = vadd.xlane.f32.xlu0 %v937
      %v939 = vpop.xlane.xlu0 %938
      %v940 = vsel %vm533, %v918, 0.0
      %941 = vadd.xlane.f32.xlu0 %v940
      %v942 = vpop.xlane.xlu0 %941
      %v943 = vmul.f32 %v921, %v894
      %v944 = vmul.f32 %v924, %v894
      %v945 = vmul.f32 %v927, %v894
      %v946 = vmul.f32 %v930, %v894
      %v947 = vmul.f32 %v933, %v894
      %v948 = vmul.f32 %v936, %v894
      %v949 = vmul.f32 %v939, %v894
      %v950 = vmul.f32 %v942, %v894
      %v951 = vadd.f32 %v943, 1e-05
      %v952 = vadd.f32 %v944, 1e-05
      %v953 = vadd.f32 %v945, 1e-05
      %v954 = vadd.f32 %v946, 1e-05
      %v955 = vadd.f32 %v947, 1e-05
      %v956 = vadd.f32 %v948, 1e-05
      %v957 = vadd.f32 %v949, 1e-05
      %v958 = vadd.f32 %v950, 1e-05
      %v959 = vrsqrt.pop %v951
      %v960 = vmul.f32 %v959, %v951
      %v961 = vmul.f32 %v960, %v959
      %v962 = vmul.f32 0.5, %v961
      %v963 = vsub.f32 1.5, %v962
      %v964 = vmul.f32 %v959, %v963
      %vm965 = vweird.f32 %v951
      %vm966 = vweird.f32 %v959
      %vm967 = vmor %vm965, %vm966
      %v968 = vsel %vm967, %v959, %v964
      %v969 = vrsqrt.pop %v952
      %v970 = vmul.f32 %v969, %v952
      %v971 = vmul.f32 %v970, %v969
      %v972 = vmul.f32 0.5, %v971
      %v973 = vsub.f32 1.5, %v972
      %v974 = vmul.f32 %v969, %v973
      %vm975 = vweird.f32 %v952
      %vm976 = vweird.f32 %v969
      %vm977 = vmor %vm975, %vm976
      %v978 = vsel %vm977, %v969, %v974
      %v979 = vrsqrt.pop %v953
      %v980 = vmul.f32 %v979, %v953
      %v981 = vmul.f32 %v980, %v979
      %v982 = vmul.f32 0.5, %v981
      %v983 = vsub.f32 1.5, %v982
      %v984 = vmul.f32 %v979, %v983
      %vm985 = vweird.f32 %v953
      %vm986 = vweird.f32 %v979
      %vm987 = vmor %vm985, %vm986
      %v988 = vsel %vm987, %v979, %v984
      %v989 = vrsqrt.pop %v954
      %v990 = vmul.f32 %v989, %v954
      %v991 = vmul.f32 %v990, %v989
      %v992 = vmul.f32 0.5, %v991
      %v993 = vsub.f32 1.5, %v992
      %v994 = vmul.f32 %v989, %v993
      %vm995 = vweird.f32 %v954
      %vm996 = vweird.f32 %v989
      %vm997 = vmor %vm995, %vm996
      %v998 = vsel %vm997, %v989, %v994
      %v999 = vrsqrt.pop %v955
      %v1000 = vmul.f32 %v999, %v955
      %v1001 = vmul.f32 %v1000, %v999
      %v1002 = vmul.f32 0.5, %v1001
      %v1003 = vsub.f32 1.5, %v1002
      %v1004 = vmul.f32 %v999, %v1003
      %vm1005 = vweird.f32 %v955
      %vm1006 = vweird.f32 %v999
      %vm1007 = vmor %vm1005, %vm1006
      %v1008 = vsel %vm1007, %v999, %v1004
      %v1009 = vrsqrt.pop %v956
      %v1010 = vmul.f32 %v1009, %v956
      %v1011 = vmul.f32 %v1010, %v1009
      %v1012 = vmul.f32 0.5, %v1011
      %v1013 = vsub.f32 1.5, %v1012
      %v1014 = vmul.f32 %v1009, %v1013
      %vm1015 = vweird.f32 %v956
      %vm1016 = vweird.f32 %v1009
      %vm1017 = vmor %vm1015, %vm1016
      %v1018 = vsel %vm1017, %v1009, %v1014
      %v1019 = vrsqrt.pop %v957
      %v1020 = vmul.f32 %v1019, %v957
      %v1021 = vmul.f32 %v1020, %v1019
      %v1022 = vmul.f32 0.5, %v1021
      %v1023 = vsub.f32 1.5, %v1022
      %v1024 = vmul.f32 %v1019, %v1023
      %vm1025 = vweird.f32 %v957
      %vm1026 = vweird.f32 %v1019
      %vm1027 = vmor %vm1025, %vm1026
      %v1028 = vsel %vm1027, %v1019, %v1024
      %v1029 = vrsqrt.pop %v958
      %v1030 = vmul.f32 %v1029, %v958
      %v1031 = vmul.f32 %v1030, %v1029
      %v1032 = vmul.f32 0.5, %v1031
      %v1033 = vsub.f32 1.5, %v1032
      %v1034 = vmul.f32 %v1029, %v1033
      %vm1035 = vweird.f32 %v958
      %vm1036 = vweird.f32 %v1029
      %vm1037 = vmor %vm1035, %vm1036
      %v1038 = vsel %vm1037, %v1029, %v1034
      %v1039 = vmul.f32 %v903, %v968
      %v1040 = vmul.f32 %v904, %v978
      %v1041 = vmul.f32 %v905, %v988
      %v1042 = vmul.f32 %v906, %v998
      %v1043 = vmul.f32 %v907, %v1008
      %v1044 = vmul.f32 %v908, %v1018
      %v1045 = vmul.f32 %v909, %v1028
      %v1046 = vmul.f32 %v910, %v1038
      %v1048 = vperm.slane %v862, 0
      %v1050 = vmul.f32 %v1039, %v1048
      %v1051 = vmul.f32 %v1040, %v1048
      %v1052 = vmul.f32 %v1041, %v1048
      %v1053 = vmul.f32 %v1042, %v1048
      %v1054 = vmul.f32 %v1043, %v1048
      %v1055 = vmul.f32 %v1044, %v1048
      %v1056 = vmul.f32 %v1045, %v1048
      %v1057 = vmul.f32 %v1046, %v1048
      %v1059 = vperm.slane %v863, 0
      %v1061 = vadd.f32 %v1050, %v1059
      %v1062 = vadd.f32 %v1051, %v1059
      %v1063 = vadd.f32 %v1052, %v1059
      %v1064 = vadd.f32 %v1053, %v1059
      %v1065 = vadd.f32 %v1054, %v1059
      %v1066 = vadd.f32 %v1055, %v1059
      %v1067 = vadd.f32 %v1056, %v1059
      %v1068 = vadd.f32 %v1057, %v1059
      %v1069 = vpack.c.bf16 %v1062, %v1061
      %v1070 = vpack.c.bf16 %v1064, %v1063
      %v1071 = vpack.c.bf16 %v1066, %v1065
      %v1072 = vpack.c.bf16 %v1068, %v1067
      %v1073 = vld [vmem:[%s5] sm:$0xf]
      %v1074 = vld [vmem:[%s5 + $0x4] sm:$0xf]
      %v1075 = vld [vmem:[%s5 + $0x8] sm:$0xf]
      %v1076 = vld [vmem:[%s5 + $0xc] sm:$0xf]
      %v1081 = vunpack.c.l.b16 %v1073
      %v1082 = vunpack.c.l.b16 %v1074
      %v1083 = vunpack.c.l.b16 %v1075
      %v1084 = vunpack.c.l.b16 %v1076
      %v1085 = vpack.c.b16 %v1082, %v1081
      %v1086 = vpack.c.b16 %v1084, %v1083
      %v1090 = vsel %vm533, %v1069, 0
      %v1093 = vsel %vm533, %v1070, 0
      %v1096 = vsel %vm533, %v1071, 0
      %v1099 = vsel %vm533, %v1072, 0
      %1101 = vmatpush.bf16.msra.mxu0 0
      %1102 = vmatpush.bf16.msra.mxu0 0
      %1103 = vmatpush.bf16.msra.mxu0 0
      %1104 = vmatpush.bf16.msra.mxu0 0
      %1105 = vmatpush.bf16.msra.mxu0 0
      %1106 = vmatpush.bf16.msra.mxu0 0
      %1107 = vmatpush.bf16.msra.mxu0 %v1086
      %1108 = vmatpush.bf16.msra.mxu0 %v1085
      %1109 = vmatmul.bf16.gmra.mxu0 %v1090
      %v1110 = vpop.f32.mrf.mxu0
      %v1111 = vadd.f32 0.0, %v1110
      %v1112 = vpop.f32.mrf.mxu0
      %v1113 = vadd.f32 0.0, %v1112
      %1114 = vmatmul.bf16.gmra.mxu0 %v1093
      %v1115 = vpop.f32.mrf.mxu0
      %v1116 = vadd.f32 0.0, %v1115
      %v1117 = vpop.f32.mrf.mxu0
      %v1118 = vadd.f32 0.0, %v1117
      %1119 = vmatmul.bf16.gmra.mxu0 %v1096
      %v1120 = vpop.f32.mrf.mxu0
      %v1121 = vadd.f32 0.0, %v1120
      %v1122 = vpop.f32.mrf.mxu0
      %v1123 = vadd.f32 0.0, %v1122
      %1124 = vmatmul.bf16.gmra.mxu0 %v1099
      %v1125 = vpop.f32.mrf.mxu0
      %v1126 = vadd.f32 0.0, %v1125
      %v1127 = vpop.f32.mrf.mxu0
      %v1128 = vadd.f32 0.0, %v1127
      %1129 = vdwg.mxu0
      %v1130 = vpack.c.bf16 %v1111, %v1111
      %v1131 = vpack.c.bf16 %v1113, %v1113
      %v1132 = vpack.c.bf16 %v1116, %v1116
      %v1133 = vpack.c.bf16 %v1118, %v1118
      %v1134 = vpack.c.bf16 %v1121, %v1121
      %v1135 = vpack.c.bf16 %v1123, %v1123
      %v1136 = vpack.c.bf16 %v1126, %v1126
      %v1137 = vpack.c.bf16 %v1128, %v1128
      %v1138 = vld [vmem:[%s6] sm:$0xf]
      %v1139 = vld [vmem:[%s6 + $0x4] sm:$0xf]
      %v1140 = vld [vmem:[%s6 + $0x8] sm:$0xf]
      %v1141 = vld [vmem:[%s6 + $0xc] sm:$0xf]
      %v1142 = vld [vmem:[%s6 + $0x10] sm:$0xf]
      %v1143 = vld [vmem:[%s6 + $0x14] sm:$0xf]
      %v1144 = vld [vmem:[%s6 + $0x18] sm:$0xf]
      %v1145 = vld [vmem:[%s6 + $0x1c] sm:$0xf]
      %v1146 = vunpack.c.l.bf16 %v1138
      %v1147 = vunpack.c.l.bf16 %v1139
      %v1148 = vunpack.c.l.bf16 %v1140
      %v1149 = vunpack.c.l.bf16 %v1141
      %v1150 = vunpack.c.l.bf16 %v1142
      %v1151 = vunpack.c.l.bf16 %v1143
      %v1152 = vunpack.c.l.bf16 %v1144
      %v1153 = vunpack.c.l.bf16 %v1145
      %v1162 = vunpack.c.l.b16 %v1130
      %v1163 = vunpack.c.l.b16 %v1131
      %v1164 = vunpack.c.l.b16 %v1132
      %v1165 = vunpack.c.l.b16 %v1133
      %v1166 = vunpack.c.l.b16 %v1134
      %v1167 = vunpack.c.l.b16 %v1135
      %v1168 = vunpack.c.l.b16 %v1136
      %v1169 = vunpack.c.l.b16 %v1137
      %v1170 = vpack.c.b16 %v1163, %v1162
      %v1171 = vpack.c.b16 %v1165, %v1164
      %v1172 = vpack.c.b16 %v1167, %v1166
      %v1173 = vpack.c.b16 %v1169, %v1168
      %1174 = vrot.lane.b32.xlu0 %v1170, 96
      %v1175 = vpop.permute.xlu0 %1174
      %1176 = vrot.lane.b32.xlu0 %v1171, 96
      %v1177 = vpop.permute.xlu0 %1176
      %1178 = vrot.lane.b32.xlu0 %v1172, 96
      %v1179 = vpop.permute.xlu0 %1178
      %1180 = vrot.lane.b32.xlu0 %v1173, 96
      %v1181 = vpop.permute.xlu0 %1180
      %vm1182 = vcmask 31744
      %v1184 = vsel %vm1182, %v1170, 0
      %v1187 = vsel %vm1182, %v1171, 0
      %v1190 = vsel %vm1182, %v1172, 0
      %v1193 = vsel %vm1182, %v1173, 0
      %v1196 = vsel %vm1182, %v1175, 0
      %v1199 = vsel %vm1182, %v1177, 0
      %v1202 = vsel %vm1182, %v1179, 0
      %v1205 = vsel %vm1182, %v1181, 0
      %1207 = vmatpush.bf16.xpose.msra.mxu0 0
      %1208 = vmatpush.bf16.xpose.msra.mxu0 0
      %1209 = vmatpush.bf16.xpose.msra.mxu0 0
      %1210 = vmatpush.bf16.xpose.msra.mxu0 0
      %1211 = vmatpush.bf16.xpose.msra.mxu0 %v1205
      %1212 = vmatpush.bf16.xpose.msra.mxu0 %v1202
      %1213 = vmatpush.bf16.xpose.msra.mxu0 %v1199
      %1214 = vmatpush.bf16.xpose.msra.mxu0 %v1196
      %1215 = vmatmul.bf16.gmra.mxu0 %v1184
      %v1216 = vpop.f32.mrf.mxu0
      %v1217 = vadd.f32 %v1146, %v1216
      %v1218 = vpop.f32.mrf.mxu0
      %v1219 = vadd.f32 %v1147, %v1218
      %1220 = vmatmul.bf16.gmra.mxu0 %v1187
      %v1221 = vpop.f32.mrf.mxu0
      %v1222 = vadd.f32 %v1148, %v1221
      %v1223 = vpop.f32.mrf.mxu0
      %v1224 = vadd.f32 %v1149, %v1223
      %1225 = vmatmul.bf16.gmra.mxu0 %v1190
      %v1226 = vpop.f32.mrf.mxu0
      %v1227 = vadd.f32 %v1150, %v1226
      %v1228 = vpop.f32.mrf.mxu0
      %v1229 = vadd.f32 %v1151, %v1228
      %1230 = vmatmul.bf16.gmra.mxu0 %v1193
      %v1231 = vpop.f32.mrf.mxu0
      %v1232 = vadd.f32 %v1152, %v1231
      %v1233 = vpop.f32.mrf.mxu0
      %v1234 = vadd.f32 %v1153, %v1233
      %1235 = vdwg.mxu0
      %vm1236 = vcmask 523264
      %v1237 = vsel %vm1236, %v1217, -inf
      %1238 = vmax.xlane.f32.xlu0 %v1237
      %v1239 = vpop.xlane.xlu0 %1238
      %v1240 = vsel %vm1236, %v1219, -inf
      %1241 = vmax.xlane.f32.xlu0 %v1240
      %v1242 = vpop.xlane.xlu0 %1241
      %v1243 = vsel %vm1236, %v1222, -inf
      %1244 = vmax.xlane.f32.xlu0 %v1243
      %v1245 = vpop.xlane.xlu0 %1244
      %v1246 = vsel %vm1236, %v1224, -inf
      %1247 = vmax.xlane.f32.xlu0 %v1246
      %v1248 = vpop.xlane.xlu0 %1247
      %v1249 = vsel %vm1236, %v1227, -inf
      %1250 = vmax.xlane.f32.xlu0 %v1249
      %v1251 = vpop.xlane.xlu0 %1250
      %v1252 = vsel %vm1236, %v1229, -inf
      %1253 = vmax.xlane.f32.xlu0 %v1252
      %v1254 = vpop.xlane.xlu0 %1253
      %v1255 = vsel %vm1236, %v1232, -inf
      %1256 = vmax.xlane.f32.xlu0 %v1255
      %v1257 = vpop.xlane.xlu0 %1256
      %v1258 = vsel %vm1236, %v1234, -inf
      %1259 = vmax.xlane.f32.xlu0 %v1258
      %v1260 = vpop.xlane.xlu0 %1259
      %v1261 = vsub.f32 %v1217, %v1239
      %v1262 = vsub.f32 %v1219, %v1242
      %v1263 = vsub.f32 %v1222, %v1245
      %v1264 = vsub.f32 %v1224, %v1248
      %v1265 = vsub.f32 %v1227, %v1251
      %v1266 = vsub.f32 %v1229, %v1254
      %v1267 = vsub.f32 %v1232, %v1257
      %v1268 = vsub.f32 %v1234, %v1260
      %v1269 = vmul.f32 %v1261, 1.442695
      %v1270 = vpow.pop %v1269
      %v1271 = vmul.f32 %v1262, 1.442695
      %v1272 = vpow.pop %v1271
      %v1273 = vmul.f32 %v1263, 1.442695
      %v1274 = vpow.pop %v1273
      %v1275 = vmul.f32 %v1264, 1.442695
      %v1276 = vpow.pop %v1275
      %v1277 = vmul.f32 %v1265, 1.442695
      %v1278 = vpow.pop %v1277
      %v1279 = vmul.f32 %v1266, 1.442695
      %v1280 = vpow.pop %v1279
      %v1281 = vmul.f32 %v1267, 1.442695
      %v1282 = vpow.pop %v1281
      %v1283 = vmul.f32 %v1268, 1.442695
      %v1284 = vpow.pop %v1283
      %v1285 = vsel %vm1236, %v1270, 0.0
      %1286 = vadd.xlane.f32.xlu0 %v1285
      %v1287 = vpop.xlane.xlu0 %1286
      %v1288 = vsel %vm1236, %v1272, 0.0
      %1289 = vadd.xlane.f32.xlu0 %v1288
      %v1290 = vpop.xlane.xlu0 %1289
      %v1291 = vsel %vm1236, %v1274, 0.0
      %1292 = vadd.xlane.f32.xlu0 %v1291
      %v1293 = vpop.xlane.xlu0 %1292
      %v1294 = vsel %vm1236, %v1276, 0.0
      %1295 = vadd.xlane.f32.xlu0 %v1294
      %v1296 = vpop.xlane.xlu0 %1295
      %v1297 = vsel %vm1236, %v1278, 0.0
      %1298 = vadd.xlane.f32.xlu0 %v1297
      %v1299 = vpop.xlane.xlu0 %1298
      %v1300 = vsel %vm1236, %v1280, 0.0
      %1301 = vadd.xlane.f32.xlu0 %v1300
      %v1302 = vpop.xlane.xlu0 %1301
      %v1303 = vsel %vm1236, %v1282, 0.0
      %1304 = vadd.xlane.f32.xlu0 %v1303
      %v1305 = vpop.xlane.xlu0 %1304
      %v1306 = vsel %vm1236, %v1284, 0.0
      %1307 = vadd.xlane.f32.xlu0 %v1306
      %v1308 = vpop.xlane.xlu0 %1307
      %v1309 = vrcp.pop %v1287
      %v1310 = vmul.f32 %v1287, %v1309
      %v1311 = vsub.f32 1.0, %v1310
      %v1312 = vmul.f32 %v1309, %v1311
      %v1313 = vadd.f32 %v1309, %v1312
      %vm1314 = vweird.f32 %v1287
      %vm1315 = vweird.f32 %v1309
      %vm1316 = vmor %vm1314, %vm1315
      %v1317 = vsel %vm1316, %v1309, %v1313
      %v1318 = vand.u32 2147483647, %v1287
      %vm1319 = vcmp.eq.f32.partialorder %v1318, 8.507059e+37
      %v1320 = vand.u32 %v1287, 2147483648
      %v1321 = vor.u32 1.1754944e-38, %v1320
      %v1322 = vsel %vm1319, %v1321, %v1317
      %v1323 = vmul.f32 %v1270, %v1322
      %v1324 = vrcp.pop %v1290
      %v1325 = vmul.f32 %v1290, %v1324
      %v1326 = vsub.f32 1.0, %v1325
      %v1327 = vmul.f32 %v1324, %v1326
      %v1328 = vadd.f32 %v1324, %v1327
      %vm1329 = vweird.f32 %v1290
      %vm1330 = vweird.f32 %v1324
      %vm1331 = vmor %vm1329, %vm1330
      %v1332 = vsel %vm1331, %v1324, %v1328
      %v1333 = vand.u32 2147483647, %v1290
      %vm1334 = vcmp.eq.f32.partialorder %v1333, 8.507059e+37
      %v1335 = vand.u32 %v1290, 2147483648
      %v1336 = vor.u32 1.1754944e-38, %v1335
      %v1337 = vsel %vm1334, %v1336, %v1332
      %v1338 = vmul.f32 %v1272, %v1337
      %v1339 = vrcp.pop %v1293
      %v1340 = vmul.f32 %v1293, %v1339
      %v1341 = vsub.f32 1.0, %v1340
      %v1342 = vmul.f32 %v1339, %v1341
      %v1343 = vadd.f32 %v1339, %v1342
      %vm1344 = vweird.f32 %v1293
      %vm1345 = vweird.f32 %v1339
      %vm1346 = vmor %vm1344, %vm1345
      %v1347 = vsel %vm1346, %v1339, %v1343
      %v1348 = vand.u32 2147483647, %v1293
      %vm1349 = vcmp.eq.f32.partialorder %v1348, 8.507059e+37
      %v1350 = vand.u32 %v1293, 2147483648
      %v1351 = vor.u32 1.1754944e-38, %v1350
      %v1352 = vsel %vm1349, %v1351, %v1347
      %v1353 = vmul.f32 %v1274, %v1352
      %v1354 = vrcp.pop %v1296
      %v1355 = vmul.f32 %v1296, %v1354
      %v1356 = vsub.f32 1.0, %v1355
      %v1357 = vmul.f32 %v1354, %v1356
      %v1358 = vadd.f32 %v1354, %v1357
      %vm1359 = vweird.f32 %v1296
      %vm1360 = vweird.f32 %v1354
      %vm1361 = vmor %vm1359, %vm1360
      %v1362 = vsel %vm1361, %v1354, %v1358
      %v1363 = vand.u32 2147483647, %v1296
      %vm1364 = vcmp.eq.f32.partialorder %v1363, 8.507059e+37
      %v1365 = vand.u32 %v1296, 2147483648
      %v1366 = vor.u32 1.1754944e-38, %v1365
      %v1367 = vsel %vm1364, %v1366, %v1362
      %v1368 = vmul.f32 %v1276, %v1367
      %v1369 = vrcp.pop %v1299
      %v1370 = vmul.f32 %v1299, %v1369
      %v1371 = vsub.f32 1.0, %v1370
      %v1372 = vmul.f32 %v1369, %v1371
      %v1373 = vadd.f32 %v1369, %v1372
      %vm1374 = vweird.f32 %v1299
      %vm1375 = vweird.f32 %v1369
      %vm1376 = vmor %vm1374, %vm1375
      %v1377 = vsel %vm1376, %v1369, %v1373
      %v1378 = vand.u32 2147483647, %v1299
      %vm1379 = vcmp.eq.f32.partialorder %v1378, 8.507059e+37
      %v1380 = vand.u32 %v1299, 2147483648
      %v1381 = vor.u32 1.1754944e-38, %v1380
      %v1382 = vsel %vm1379, %v1381, %v1377
      %v1383 = vmul.f32 %v1278, %v1382
      %v1384 = vrcp.pop %v1302
      %v1385 = vmul.f32 %v1302, %v1384
      %v1386 = vsub.f32 1.0, %v1385
      %v1387 = vmul.f32 %v1384, %v1386
      %v1388 = vadd.f32 %v1384, %v1387
      %vm1389 = vweird.f32 %v1302
      %vm1390 = vweird.f32 %v1384
      %vm1391 = vmor %vm1389, %vm1390
      %v1392 = vsel %vm1391, %v1384, %v1388
      %v1393 = vand.u32 2147483647, %v1302
      %vm1394 = vcmp.eq.f32.partialorder %v1393, 8.507059e+37
      %v1395 = vand.u32 %v1302, 2147483648
      %v1396 = vor.u32 1.1754944e-38, %v1395
      %v1397 = vsel %vm1394, %v1396, %v1392
      %v1398 = vmul.f32 %v1280, %v1397
      %v1399 = vrcp.pop %v1305
      %v1400 = vmul.f32 %v1305, %v1399
      %v1401 = vsub.f32 1.0, %v1400
      %v1402 = vmul.f32 %v1399, %v1401
      %v1403 = vadd.f32 %v1399, %v1402
      %vm1404 = vweird.f32 %v1305
      %vm1405 = vweird.f32 %v1399
      %vm1406 = vmor %vm1404, %vm1405
      %v1407 = vsel %vm1406, %v1399, %v1403
      %v1408 = vand.u32 2147483647, %v1305
      %vm1409 = vcmp.eq.f32.partialorder %v1408, 8.507059e+37
      %v1410 = vand.u32 %v1305, 2147483648
      %v1411 = vor.u32 1.1754944e-38, %v1410
      %v1412 = vsel %vm1409, %v1411, %v1407
      %v1413 = vmul.f32 %v1282, %v1412
      %v1414 = vrcp.pop %v1308
      %v1415 = vmul.f32 %v1308, %v1414
      %v1416 = vsub.f32 1.0, %v1415
      %v1417 = vmul.f32 %v1414, %v1416
      %v1418 = vadd.f32 %v1414, %v1417
      %vm1419 = vweird.f32 %v1308
      %vm1420 = vweird.f32 %v1414
      %vm1421 = vmor %vm1419, %vm1420
      %v1422 = vsel %vm1421, %v1414, %v1418
      %v1423 = vand.u32 2147483647, %v1308
      %vm1424 = vcmp.eq.f32.partialorder %v1423, 8.507059e+37
      %v1425 = vand.u32 %v1308, 2147483648
      %v1426 = vor.u32 1.1754944e-38, %v1425
      %v1427 = vsel %vm1424, %v1426, %v1422
      %v1428 = vmul.f32 %v1284, %v1427
      %v1429 = vpack.c.bf16 %v1338, %v1323
      %v1430 = vpack.c.bf16 %v1368, %v1353
      %v1431 = vpack.c.bf16 %v1398, %v1383
      %v1432 = vpack.c.bf16 %v1428, %v1413
      %1433 = vrot.lane.b32.xlu0 %v1170, 64
      %v1434 = vpop.permute.xlu0 %1433
      %1435 = vrot.lane.b32.xlu0 %v1171, 64
      %v1436 = vpop.permute.xlu0 %1435
      %1437 = vrot.lane.b32.xlu0 %v1172, 64
      %v1438 = vpop.permute.xlu0 %1437
      %1439 = vrot.lane.b32.xlu0 %v1173, 64
      %v1440 = vpop.permute.xlu0 %1439
      %v1446 = vsel %vm1236, %v1429, 0
      %v1449 = vsel %vm1236, %v1430, 0
      %v1452 = vsel %vm1236, %v1431, 0
      %v1455 = vsel %vm1236, %v1432, 0
      %1457 = vmatpush.bf16.msra.mxu0 0
      %1458 = vmatpush.bf16.msra.mxu0 0
      %1459 = vmatpush.bf16.msra.mxu0 0
      %1460 = vmatpush.bf16.msra.mxu0 0
      %1461 = vmatpush.bf16.msra.mxu0 %v1440
      %1462 = vmatpush.bf16.msra.mxu0 %v1438
      %1463 = vmatpush.bf16.msra.mxu0 %v1436
      %1464 = vmatpush.bf16.msra.mxu0 %v1434
      %1465 = vmatmul.bf16.gmra.mxu0 %v1446
      %v1466 = vpop.f32.mrf.mxu0
      %v1467 = vadd.f32 0.0, %v1466
      %v1468 = vpop.f32.mrf.mxu0
      %v1469 = vadd.f32 0.0, %v1468
      %1470 = vmatmul.bf16.gmra.mxu0 %v1449
      %v1471 = vpop.f32.mrf.mxu0
      %v1472 = vadd.f32 0.0, %v1471
      %v1473 = vpop.f32.mrf.mxu0
      %v1474 = vadd.f32 0.0, %v1473
      %1475 = vmatmul.bf16.gmra.mxu0 %v1452
      %v1476 = vpop.f32.mrf.mxu0
      %v1477 = vadd.f32 0.0, %v1476
      %v1478 = vpop.f32.mrf.mxu0
      %v1479 = vadd.f32 0.0, %v1478
      %1480 = vmatmul.bf16.gmra.mxu0 %v1455
      %v1481 = vpop.f32.mrf.mxu0
      %v1482 = vadd.f32 0.0, %v1481
      %v1483 = vpop.f32.mrf.mxu0
      %v1484 = vadd.f32 0.0, %v1483
      %1485 = vdwg.mxu0
      %1486 = vrot.lane.b32.xlu0 %v1170, 124
      %v1487 = vpop.permute.xlu0 %1486
      %1488 = vrot.lane.b32.xlu0 %v1171, 124
      %v1489 = vpop.permute.xlu0 %1488
      %1490 = vrot.lane.b32.xlu0 %v1172, 124
      %v1491 = vpop.permute.xlu0 %1490
      %1492 = vrot.lane.b32.xlu0 %v1173, 124
      %v1493 = vpop.permute.xlu0 %1492
      %1494 = vrot.lane.b32.xlu0 %v1170, 92
      %v1495 = vpop.permute.xlu0 %1494
      %1496 = vrot.lane.b32.xlu0 %v1171, 92
      %v1497 = vpop.permute.xlu0 %1496
      %1498 = vrot.lane.b32.xlu0 %v1172, 92
      %v1499 = vpop.permute.xlu0 %1498
      %1500 = vrot.lane.b32.xlu0 %v1173, 92
      %v1501 = vpop.permute.xlu0 %1500
      %v1503 = vsel %vm1182, %v1487, 0
      %v1506 = vsel %vm1182, %v1489, 0
      %v1509 = vsel %vm1182, %v1491, 0
      %v1512 = vsel %vm1182, %v1493, 0
      %v1515 = vsel %vm1182, %v1495, 0
      %v1518 = vsel %vm1182, %v1497, 0
      %v1521 = vsel %vm1182, %v1499, 0
      %v1524 = vsel %vm1182, %v1501, 0
      %1526 = vmatpush.bf16.xpose.msra.mxu0 0
      %1527 = vmatpush.bf16.xpose.msra.mxu0 0
      %1528 = vmatpush.bf16.xpose.msra.mxu0 0
      %1529 = vmatpush.bf16.xpose.msra.mxu0 0
      %1530 = vmatpush.bf16.xpose.msra.mxu0 %v1524
      %1531 = vmatpush.bf16.xpose.msra.mxu0 %v1521
      %1532 = vmatpush.bf16.xpose.msra.mxu0 %v1518
      %1533 = vmatpush.bf16.xpose.msra.mxu0 %v1515
      %1534 = vmatmul.bf16.gmra.mxu0 %v1503
      %v1535 = vpop.f32.mrf.mxu0
      %v1536 = vadd.f32 %v1146, %v1535
      %v1537 = vpop.f32.mrf.mxu0
      %v1538 = vadd.f32 %v1147, %v1537
      %1539 = vmatmul.bf16.gmra.mxu0 %v1506
      %v1540 = vpop.f32.mrf.mxu0
      %v1541 = vadd.f32 %v1148, %v1540
      %v1542 = vpop.f32.mrf.mxu0
      %v1543 = vadd.f32 %v1149, %v1542
      %1544 = vmatmul.bf16.gmra.mxu0 %v1509
      %v1545 = vpop.f32.mrf.mxu0
      %v1546 = vadd.f32 %v1150, %v1545
      %v1547 = vpop.f32.mrf.mxu0
      %v1548 = vadd.f32 %v1151, %v1547
      %1549 = vmatmul.bf16.gmra.mxu0 %v1512
      %v1550 = vpop.f32.mrf.mxu0
      %v1551 = vadd.f32 %v1152, %v1550
      %v1552 = vpop.f32.mrf.mxu0
      %v1553 = vadd.f32 %v1153, %v1552
      %1554 = vdwg.mxu0
      %v1555 = vsel %vm1236, %v1536, -inf
      %1556 = vmax.xlane.f32.xlu0 %v1555
      %v1557 = vpop.xlane.xlu0 %1556
      %v1558 = vsel %vm1236, %v1538, -inf
      %1559 = vmax.xlane.f32.xlu0 %v1558
      %v1560 = vpop.xlane.xlu0 %1559
      %v1561 = vsel %vm1236, %v1541, -inf
      %1562 = vmax.xlane.f32.xlu0 %v1561
      %v1563 = vpop.xlane.xlu0 %1562
      %v1564 = vsel %vm1236, %v1543, -inf
      %1565 = vmax.xlane.f32.xlu0 %v1564
      %v1566 = vpop.xlane.xlu0 %1565
      %v1567 = vsel %vm1236, %v1546, -inf
      %1568 = vmax.xlane.f32.xlu0 %v1567
      %v1569 = vpop.xlane.xlu0 %1568
      %v1570 = vsel %vm1236, %v1548, -inf
      %1571 = vmax.xlane.f32.xlu0 %v1570
      %v1572 = vpop.xlane.xlu0 %1571
      %v1573 = vsel %vm1236, %v1551, -inf
      %1574 = vmax.xlane.f32.xlu0 %v1573
      %v1575 = vpop.xlane.xlu0 %1574
      %v1576 = vsel %vm1236, %v1553, -inf
      %1577 = vmax.xlane.f32.xlu0 %v1576
      %v1578 = vpop.xlane.xlu0 %1577
      %v1579 = vsub.f32 %v1536, %v1557
      %v1580 = vsub.f32 %v1538, %v1560
      %v1581 = vsub.f32 %v1541, %v1563
      %v1582 = vsub.f32 %v1543, %v1566
      %v1583 = vsub.f32 %v1546, %v1569
      %v1584 = vsub.f32 %v1548, %v1572
      %v1585 = vsub.f32 %v1551, %v1575
      %v1586 = vsub.f32 %v1553, %v1578
      %v1587 = vmul.f32 %v1579, 1.442695
      %v1588 = vpow.pop %v1587
      %v1589 = vmul.f32 %v1580, 1.442695
      %v1590 = vpow.pop %v1589
      %v1591 = vmul.f32 %v1581, 1.442695
      %v1592 = vpow.pop %v1591
      %v1593 = vmul.f32 %v1582, 1.442695
      %v1594 = vpow.pop %v1593
      %v1595 = vmul.f32 %v1583, 1.442695
      %v1596 = vpow.pop %v1595
      %v1597 = vmul.f32 %v1584, 1.442695
      %v1598 = vpow.pop %v1597
      %v1599 = vmul.f32 %v1585, 1.442695
      %v1600 = vpow.pop %v1599
      %v1601 = vmul.f32 %v1586, 1.442695
      %v1602 = vpow.pop %v1601
      %v1603 = vsel %vm1236, %v1588, 0.0
      %1604 = vadd.xlane.f32.xlu0 %v1603
      %v1605 = vpop.xlane.xlu0 %1604
      %v1606 = vsel %vm1236, %v1590, 0.0
      %1607 = vadd.xlane.f32.xlu0 %v1606
      %v1608 = vpop.xlane.xlu0 %1607
      %v1609 = vsel %vm1236, %v1592, 0.0
      %1610 = vadd.xlane.f32.xlu0 %v1609
      %v1611 = vpop.xlane.xlu0 %1610
      %v1612 = vsel %vm1236, %v1594, 0.0
      %1613 = vadd.xlane.f32.xlu0 %v1612
      %v1614 = vpop.xlane.xlu0 %1613
      %v1615 = vsel %vm1236, %v1596, 0.0
      %1616 = vadd.xlane.f32.xlu0 %v1615
      %v1617 = vpop.xlane.xlu0 %1616
      %v1618 = vsel %vm1236, %v1598, 0.0
      %1619 = vadd.xlane.f32.xlu0 %v1618
      %v1620 = vpop.xlane.xlu0 %1619
      %v1621 = vsel %vm1236, %v1600, 0.0
      %1622 = vadd.xlane.f32.xlu0 %v1621
      %v1623 = vpop.xlane.xlu0 %1622
      %v1624 = vsel %vm1236, %v1602, 0.0
      %1625 = vadd.xlane.f32.xlu0 %v1624
      %v1626 = vpop.xlane.xlu0 %1625
      %v1627 = vrcp.pop %v1605
      %v1628 = vmul.f32 %v1605, %v1627
      %v1629 = vsub.f32 1.0, %v1628
      %v1630 = vmul.f32 %v1627, %v1629
      %v1631 = vadd.f32 %v1627, %v1630
      %vm1632 = vweird.f32 %v1605
      %vm1633 = vweird.f32 %v1627
      %vm1634 = vmor %vm1632, %vm1633
      %v1635 = vsel %vm1634, %v1627, %v1631
      %v1636 = vand.u32 2147483647, %v1605
      %vm1637 = vcmp.eq.f32.partialorder %v1636, 8.507059e+37
      %v1638 = vand.u32 %v1605, 2147483648
      %v1639 = vor.u32 1.1754944e-38, %v1638
      %v1640 = vsel %vm1637, %v1639, %v1635
      %v1641 = vmul.f32 %v1588, %v1640
      %v1642 = vrcp.pop %v1608
      %v1643 = vmul.f32 %v1608, %v1642
      %v1644 = vsub.f32 1.0, %v1643
      %v1645 = vmul.f32 %v1642, %v1644
      %v1646 = vadd.f32 %v1642, %v1645
      %vm1647 = vweird.f32 %v1608
      %vm1648 = vweird.f32 %v1642
      %vm1649 = vmor %vm1647, %vm1648
      %v1650 = vsel %vm1649, %v1642, %v1646
      %v1651 = vand.u32 2147483647, %v1608
      %vm1652 = vcmp.eq.f32.partialorder %v1651, 8.507059e+37
      %v1653 = vand.u32 %v1608, 2147483648
      %v1654 = vor.u32 1.1754944e-38, %v1653
      %v1655 = vsel %vm1652, %v1654, %v1650
      %v1656 = vmul.f32 %v1590, %v1655
      %v1657 = vrcp.pop %v1611
      %v1658 = vmul.f32 %v1611, %v1657
      %v1659 = vsub.f32 1.0, %v1658
      %v1660 = vmul.f32 %v1657, %v1659
      %v1661 = vadd.f32 %v1657, %v1660
      %vm1662 = vweird.f32 %v1611
      %vm1663 = vweird.f32 %v1657
      %vm1664 = vmor %vm1662, %vm1663
      %v1665 = vsel %vm1664, %v1657, %v1661
      %v1666 = vand.u32 2147483647, %v1611
      %vm1667 = vcmp.eq.f32.partialorder %v1666, 8.507059e+37
      %v1668 = vand.u32 %v1611, 2147483648
      %v1669 = vor.u32 1.1754944e-38, %v1668
      %v1670 = vsel %vm1667, %v1669, %v1665
      %v1671 = vmul.f32 %v1592, %v1670
      %v1672 = vrcp.pop %v1614
      %v1673 = vmul.f32 %v1614, %v1672
      %v1674 = vsub.f32 1.0, %v1673
      %v1675 = vmul.f32 %v1672, %v1674
      %v1676 = vadd.f32 %v1672, %v1675
      %vm1677 = vweird.f32 %v1614
      %vm1678 = vweird.f32 %v1672
      %vm1679 = vmor %vm1677, %vm1678
      %v1680 = vsel %vm1679, %v1672, %v1676
      %v1681 = vand.u32 2147483647, %v1614
      %vm1682 = vcmp.eq.f32.partialorder %v1681, 8.507059e+37
      %v1683 = vand.u32 %v1614, 2147483648
      %v1684 = vor.u32 1.1754944e-38, %v1683
      %v1685 = vsel %vm1682, %v1684, %v1680
      %v1686 = vmul.f32 %v1594, %v1685
      %v1687 = vrcp.pop %v1617
      %v1688 = vmul.f32 %v1617, %v1687
      %v1689 = vsub.f32 1.0, %v1688
      %v1690 = vmul.f32 %v1687, %v1689
      %v1691 = vadd.f32 %v1687, %v1690
      %vm1692 = vweird.f32 %v1617
      %vm1693 = vweird.f32 %v1687
      %vm1694 = vmor %vm1692, %vm1693
      %v1695 = vsel %vm1694, %v1687, %v1691
      %v1696 = vand.u32 2147483647, %v1617
      %vm1697 = vcmp.eq.f32.partialorder %v1696, 8.507059e+37
      %v1698 = vand.u32 %v1617, 2147483648
      %v1699 = vor.u32 1.1754944e-38, %v1698
      %v1700 = vsel %vm1697, %v1699, %v1695
      %v1701 = vmul.f32 %v1596, %v1700
      %v1702 = vrcp.pop %v1620
      %v1703 = vmul.f32 %v1620, %v1702
      %v1704 = vsub.f32 1.0, %v1703
      %v1705 = vmul.f32 %v1702, %v1704
      %v1706 = vadd.f32 %v1702, %v1705
      %vm1707 = vweird.f32 %v1620
      %vm1708 = vweird.f32 %v1702
      %vm1709 = vmor %vm1707, %vm1708
      %v1710 = vsel %vm1709, %v1702, %v1706
      %v1711 = vand.u32 2147483647, %v1620
      %vm1712 = vcmp.eq.f32.partialorder %v1711, 8.507059e+37
      %v1713 = vand.u32 %v1620, 2147483648
      %v1714 = vor.u32 1.1754944e-38, %v1713
      %v1715 = vsel %vm1712, %v1714, %v1710
      %v1716 = vmul.f32 %v1598, %v1715
      %v1717 = vrcp.pop %v1623
      %v1718 = vmul.f32 %v1623, %v1717
      %v1719 = vsub.f32 1.0, %v1718
      %v1720 = vmul.f32 %v1717, %v1719
      %v1721 = vadd.f32 %v1717, %v1720
      %vm1722 = vweird.f32 %v1623
      %vm1723 = vweird.f32 %v1717
      %vm1724 = vmor %vm1722, %vm1723
      %v1725 = vsel %vm1724, %v1717, %v1721
      %v1726 = vand.u32 2147483647, %v1623
      %vm1727 = vcmp.eq.f32.partialorder %v1726, 8.507059e+37
      %v1728 = vand.u32 %v1623, 2147483648
      %v1729 = vor.u32 1.1754944e-38, %v1728
      %v1730 = vsel %vm1727, %v1729, %v1725
      %v1731 = vmul.f32 %v1600, %v1730
      %v1732 = vrcp.pop %v1626
      %v1733 = vmul.f32 %v1626, %v1732
      %v1734 = vsub.f32 1.0, %v1733
      %v1735 = vmul.f32 %v1732, %v1734
      %v1736 = vadd.f32 %v1732, %v1735
      %vm1737 = vweird.f32 %v1626
      %vm1738 = vweird.f32 %v1732
      %vm1739 = vmor %vm1737, %vm1738
      %v1740 = vsel %vm1739, %v1732, %v1736
      %v1741 = vand.u32 2147483647, %v1626
      %vm1742 = vcmp.eq.f32.partialorder %v1741, 8.507059e+37
      %v1743 = vand.u32 %v1626, 2147483648
      %v1744 = vor.u32 1.1754944e-38, %v1743
      %v1745 = vsel %vm1742, %v1744, %v1740
      %v1746 = vmul.f32 %v1602, %v1745
      %v1747 = vpack.c.bf16 %v1656, %v1641
      %v1748 = vpack.c.bf16 %v1686, %v1671
      %v1749 = vpack.c.bf16 %v1716, %v1701
      %v1750 = vpack.c.bf16 %v1746, %v1731
      %1751 = vrot.lane.b32.xlu0 %v1170, 60
      %v1752 = vpop.permute.xlu0 %1751
      %1753 = vrot.lane.b32.xlu0 %v1171, 60
      %v1754 = vpop.permute.xlu0 %1753
      %1755 = vrot.lane.b32.xlu0 %v1172, 60
      %v1756 = vpop.permute.xlu0 %1755
      %1757 = vrot.lane.b32.xlu0 %v1173, 60
      %v1758 = vpop.permute.xlu0 %1757
      %v1764 = vsel %vm1236, %v1747, 0
      %v1767 = vsel %vm1236, %v1748, 0
      %v1770 = vsel %vm1236, %v1749, 0
      %v1773 = vsel %vm1236, %v1750, 0
      %1775 = vmatpush.bf16.msra.mxu0 0
      %1776 = vmatpush.bf16.msra.mxu0 0
      %1777 = vmatpush.bf16.msra.mxu0 0
      %1778 = vmatpush.bf16.msra.mxu0 0
      %1779 = vmatpush.bf16.msra.mxu0 %v1758
      %1780 = vmatpush.bf16.msra.mxu0 %v1756
      %1781 = vmatpush.bf16.msra.mxu0 %v1754
      %1782 = vmatpush.bf16.msra.mxu0 %v1752
      %1783 = vmatmul.bf16.gmra.mxu0 %v1764
      %v1784 = vpop.f32.mrf.mxu0
      %v1785 = vadd.f32 0.0, %v1784
      %v1786 = vpop.f32.mrf.mxu0
      %v1787 = vadd.f32 0.0, %v1786
      %1788 = vmatmul.bf16.gmra.mxu0 %v1767
      %v1789 = vpop.f32.mrf.mxu0
      %v1790 = vadd.f32 0.0, %v1789
      %v1791 = vpop.f32.mrf.mxu0
      %v1792 = vadd.f32 0.0, %v1791
      %1793 = vmatmul.bf16.gmra.mxu0 %v1770
      %v1794 = vpop.f32.mrf.mxu0
      %v1795 = vadd.f32 0.0, %v1794
      %v1796 = vpop.f32.mrf.mxu0
      %v1797 = vadd.f32 0.0, %v1796
      %1798 = vmatmul.bf16.gmra.mxu0 %v1773
      %v1799 = vpop.f32.mrf.mxu0
      %v1800 = vadd.f32 0.0, %v1799
      %v1801 = vpop.f32.mrf.mxu0
      %v1802 = vadd.f32 0.0, %v1801
      %1803 = vdwg.mxu0
      %1804 = vrot.lane.b32.xlu0 %v1170, 120
      %v1805 = vpop.permute.xlu0 %1804
      %1806 = vrot.lane.b32.xlu0 %v1171, 120
      %v1807 = vpop.permute.xlu0 %1806
      %1808 = vrot.lane.b32.xlu0 %v1172, 120
      %v1809 = vpop.permute.xlu0 %1808
      %1810 = vrot.lane.b32.xlu0 %v1173, 120
      %v1811 = vpop.permute.xlu0 %1810
      %1812 = vrot.lane.b32.xlu0 %v1170, 88
      %v1813 = vpop.permute.xlu0 %1812
      %1814 = vrot.lane.b32.xlu0 %v1171, 88
      %v1815 = vpop.permute.xlu0 %1814
      %1816 = vrot.lane.b32.xlu0 %v1172, 88
      %v1817 = vpop.permute.xlu0 %1816
      %1818 = vrot.lane.b32.xlu0 %v1173, 88
      %v1819 = vpop.permute.xlu0 %1818
      %v1821 = vsel %vm1182, %v1805, 0
      %v1824 = vsel %vm1182, %v1807, 0
      %v1827 = vsel %vm1182, %v1809, 0
      %v1830 = vsel %vm1182, %v1811, 0
      %v1833 = vsel %vm1182, %v1813, 0
      %v1836 = vsel %vm1182, %v1815, 0
      %v1839 = vsel %vm1182, %v1817, 0
      %v1842 = vsel %vm1182, %v1819, 0
      %1844 = vmatpush.bf16.xpose.msra.mxu0 0
      %1845 = vmatpush.bf16.xpose.msra.mxu0 0
      %1846 = vmatpush.bf16.xpose.msra.mxu0 0
      %1847 = vmatpush.bf16.xpose.msra.mxu0 0
      %1848 = vmatpush.bf16.xpose.msra.mxu0 %v1842
      %1849 = vmatpush.bf16.xpose.msra.mxu0 %v1839
      %1850 = vmatpush.bf16.xpose.msra.mxu0 %v1836
      %1851 = vmatpush.bf16.xpose.msra.mxu0 %v1833
      %1852 = vmatmul.bf16.gmra.mxu0 %v1821
      %v1853 = vpop.f32.mrf.mxu0
      %v1854 = vadd.f32 %v1146, %v1853
      %v1855 = vpop.f32.mrf.mxu0
      %v1856 = vadd.f32 %v1147, %v1855
      %1857 = vmatmul.bf16.gmra.mxu0 %v1824
      %v1858 = vpop.f32.mrf.mxu0
      %v1859 = vadd.f32 %v1148, %v1858
      %v1860 = vpop.f32.mrf.mxu0
      %v1861 = vadd.f32 %v1149, %v1860
      %1862 = vmatmul.bf16.gmra.mxu0 %v1827
      %v1863 = vpop.f32.mrf.mxu0
      %v1864 = vadd.f32 %v1150, %v1863
      %v1865 = vpop.f32.mrf.mxu0
      %v1866 = vadd.f32 %v1151, %v1865
      %1867 = vmatmul.bf16.gmra.mxu0 %v1830
      %v1868 = vpop.f32.mrf.mxu0
      %v1869 = vadd.f32 %v1152, %v1868
      %v1870 = vpop.f32.mrf.mxu0
      %v1871 = vadd.f32 %v1153, %v1870
      %1872 = vdwg.mxu0
      %v1873 = vsel %vm1236, %v1854, -inf
      %1874 = vmax.xlane.f32.xlu0 %v1873
      %v1875 = vpop.xlane.xlu0 %1874
      %v1876 = vsel %vm1236, %v1856, -inf
      %1877 = vmax.xlane.f32.xlu0 %v1876
      %v1878 = vpop.xlane.xlu0 %1877
      %v1879 = vsel %vm1236, %v1859, -inf
      %1880 = vmax.xlane.f32.xlu0 %v1879
      %v1881 = vpop.xlane.xlu0 %1880
      %v1882 = vsel %vm1236, %v1861, -inf
      %1883 = vmax.xlane.f32.xlu0 %v1882
      %v1884 = vpop.xlane.xlu0 %1883
      %v1885 = vsel %vm1236, %v1864, -inf
      %1886 = vmax.xlane.f32.xlu0 %v1885
      %v1887 = vpop.xlane.xlu0 %1886
      %v1888 = vsel %vm1236, %v1866, -inf
      %1889 = vmax.xlane.f32.xlu0 %v1888
      %v1890 = vpop.xlane.xlu0 %1889
      %v1891 = vsel %vm1236, %v1869, -inf
      %1892 = vmax.xlane.f32.xlu0 %v1891
      %v1893 = vpop.xlane.xlu0 %1892
      %v1894 = vsel %vm1236, %v1871, -inf
      %1895 = vmax.xlane.f32.xlu0 %v1894
      %v1896 = vpop.xlane.xlu0 %1895
      %v1897 = vsub.f32 %v1854, %v1875
      %v1898 = vsub.f32 %v1856, %v1878
      %v1899 = vsub.f32 %v1859, %v1881
      %v1900 = vsub.f32 %v1861, %v1884
      %v1901 = vsub.f32 %v1864, %v1887
      %v1902 = vsub.f32 %v1866, %v1890
      %v1903 = vsub.f32 %v1869, %v1893
      %v1904 = vsub.f32 %v1871, %v1896
      %v1905 = vmul.f32 %v1897, 1.442695
      %v1906 = vpow.pop %v1905
      %v1907 = vmul.f32 %v1898, 1.442695
      %v1908 = vpow.pop %v1907
      %v1909 = vmul.f32 %v1899, 1.442695
      %v1910 = vpow.pop %v1909
      %v1911 = vmul.f32 %v1900, 1.442695
      %v1912 = vpow.pop %v1911
      %v1913 = vmul.f32 %v1901, 1.442695
      %v1914 = vpow.pop %v1913
      %v1915 = vmul.f32 %v1902, 1.442695
      %v1916 = vpow.pop %v1915
      %v1917 = vmul.f32 %v1903, 1.442695
      %v1918 = vpow.pop %v1917
      %v1919 = vmul.f32 %v1904, 1.442695
      %v1920 = vpow.pop %v1919
      %v1921 = vsel %vm1236, %v1906, 0.0
      %1922 = vadd.xlane.f32.xlu0 %v1921
      %v1923 = vpop.xlane.xlu0 %1922
      %v1924 = vsel %vm1236, %v1908, 0.0
      %1925 = vadd.xlane.f32.xlu0 %v1924
      %v1926 = vpop.xlane.xlu0 %1925
      %v1927 = vsel %vm1236, %v1910, 0.0
      %1928 = vadd.xlane.f32.xlu0 %v1927
      %v1929 = vpop.xlane.xlu0 %1928
      %v1930 = vsel %vm1236, %v1912, 0.0
      %1931 = vadd.xlane.f32.xlu0 %v1930
      %v1932 = vpop.xlane.xlu0 %1931
      %v1933 = vsel %vm1236, %v1914, 0.0
      %1934 = vadd.xlane.f32.xlu0 %v1933
      %v1935 = vpop.xlane.xlu0 %1934
      %v1936 = vsel %vm1236, %v1916, 0.0
      %1937 = vadd.xlane.f32.xlu0 %v1936
      %v1938 = vpop.xlane.xlu0 %1937
      %v1939 = vsel %vm1236, %v1918, 0.0
      %1940 = vadd.xlane.f32.xlu0 %v1939
      %v1941 = vpop.xlane.xlu0 %1940
      %v1942 = vsel %vm1236, %v1920, 0.0
      %1943 = vadd.xlane.f32.xlu0 %v1942
      %v1944 = vpop.xlane.xlu0 %1943
      %v1945 = vrcp.pop %v1923
      %v1946 = vmul.f32 %v1923, %v1945
      %v1947 = vsub.f32 1.0, %v1946
      %v1948 = vmul.f32 %v1945, %v1947
      %v1949 = vadd.f32 %v1945, %v1948
      %vm1950 = vweird.f32 %v1923
      %vm1951 = vweird.f32 %v1945
      %vm1952 = vmor %vm1950, %vm1951
      %v1953 = vsel %vm1952, %v1945, %v1949
      %v1954 = vand.u32 2147483647, %v1923
      %vm1955 = vcmp.eq.f32.partialorder %v1954, 8.507059e+37
      %v1956 = vand.u32 %v1923, 2147483648
      %v1957 = vor.u32 1.1754944e-38, %v1956
      %v1958 = vsel %vm1955, %v1957, %v1953
      %v1959 = vmul.f32 %v1906, %v1958
      %v1960 = vrcp.pop %v1926
      %v1961 = vmul.f32 %v1926, %v1960
      %v1962 = vsub.f32 1.0, %v1961
      %v1963 = vmul.f32 %v1960, %v1962
      %v1964 = vadd.f32 %v1960, %v1963
      %vm1965 = vweird.f32 %v1926
      %vm1966 = vweird.f32 %v1960
      %vm1967 = vmor %vm1965, %vm1966
      %v1968 = vsel %vm1967, %v1960, %v1964
      %v1969 = vand.u32 2147483647, %v1926
      %vm1970 = vcmp.eq.f32.partialorder %v1969, 8.507059e+37
      %v1971 = vand.u32 %v1926, 2147483648
      %v1972 = vor.u32 1.1754944e-38, %v1971
      %v1973 = vsel %vm1970, %v1972, %v1968
      %v1974 = vmul.f32 %v1908, %v1973
      %v1975 = vrcp.pop %v1929
      %v1976 = vmul.f32 %v1929, %v1975
      %v1977 = vsub.f32 1.0, %v1976
      %v1978 = vmul.f32 %v1975, %v1977
      %v1979 = vadd.f32 %v1975, %v1978
      %vm1980 = vweird.f32 %v1929
      %vm1981 = vweird.f32 %v1975
      %vm1982 = vmor %vm1980, %vm1981
      %v1983 = vsel %vm1982, %v1975, %v1979
      %v1984 = vand.u32 2147483647, %v1929
      %vm1985 = vcmp.eq.f32.partialorder %v1984, 8.507059e+37
      %v1986 = vand.u32 %v1929, 2147483648
      %v1987 = vor.u32 1.1754944e-38, %v1986
      %v1988 = vsel %vm1985, %v1987, %v1983
      %v1989 = vmul.f32 %v1910, %v1988
      %v1990 = vrcp.pop %v1932
      %v1991 = vmul.f32 %v1932, %v1990
      %v1992 = vsub.f32 1.0, %v1991
      %v1993 = vmul.f32 %v1990, %v1992
      %v1994 = vadd.f32 %v1990, %v1993
      %vm1995 = vweird.f32 %v1932
      %vm1996 = vweird.f32 %v1990
      %vm1997 = vmor %vm1995, %vm1996
      %v1998 = vsel %vm1997, %v1990, %v1994
      %v1999 = vand.u32 2147483647, %v1932
      %vm2000 = vcmp.eq.f32.partialorder %v1999, 8.507059e+37
      %v2001 = vand.u32 %v1932, 2147483648
      %v2002 = vor.u32 1.1754944e-38, %v2001
      %v2003 = vsel %vm2000, %v2002, %v1998
      %v2004 = vmul.f32 %v1912, %v2003
      %v2005 = vrcp.pop %v1935
      %v2006 = vmul.f32 %v1935, %v2005
      %v2007 = vsub.f32 1.0, %v2006
      %v2008 = vmul.f32 %v2005, %v2007
      %v2009 = vadd.f32 %v2005, %v2008
      %vm2010 = vweird.f32 %v1935
      %vm2011 = vweird.f32 %v2005
      %vm2012 = vmor %vm2010, %vm2011
      %v2013 = vsel %vm2012, %v2005, %v2009
      %v2014 = vand.u32 2147483647, %v1935
      %vm2015 = vcmp.eq.f32.partialorder %v2014, 8.507059e+37
      %v2016 = vand.u32 %v1935, 2147483648
      %v2017 = vor.u32 1.1754944e-38, %v2016
      %v2018 = vsel %vm2015, %v2017, %v2013
      %v2019 = vmul.f32 %v1914, %v2018
      %v2020 = vrcp.pop %v1938
      %v2021 = vmul.f32 %v1938, %v2020
      %v2022 = vsub.f32 1.0, %v2021
      %v2023 = vmul.f32 %v2020, %v2022
      %v2024 = vadd.f32 %v2020, %v2023
      %vm2025 = vweird.f32 %v1938
      %vm2026 = vweird.f32 %v2020
      %vm2027 = vmor %vm2025, %vm2026
      %v2028 = vsel %vm2027, %v2020, %v2024
      %v2029 = vand.u32 2147483647, %v1938
      %vm2030 = vcmp.eq.f32.partialorder %v2029, 8.507059e+37
      %v2031 = vand.u32 %v1938, 2147483648
      %v2032 = vor.u32 1.1754944e-38, %v2031
      %v2033 = vsel %vm2030, %v2032, %v2028
      %v2034 = vmul.f32 %v1916, %v2033
      %v2035 = vrcp.pop %v1941
      %v2036 = vmul.f32 %v1941, %v2035
      %v2037 = vsub.f32 1.0, %v2036
      %v2038 = vmul.f32 %v2035, %v2037
      %v2039 = vadd.f32 %v2035, %v2038
      %vm2040 = vweird.f32 %v1941
      %vm2041 = vweird.f32 %v2035
      %vm2042 = vmor %vm2040, %vm2041
      %v2043 = vsel %vm2042, %v2035, %v2039
      %v2044 = vand.u32 2147483647, %v1941
      %vm2045 = vcmp.eq.f32.partialorder %v2044, 8.507059e+37
      %v2046 = vand.u32 %v1941, 2147483648
      %v2047 = vor.u32 1.1754944e-38, %v2046
      %v2048 = vsel %vm2045, %v2047, %v2043
      %v2049 = vmul.f32 %v1918, %v2048
      %v2050 = vrcp.pop %v1944
      %v2051 = vmul.f32 %v1944, %v2050
      %v2052 = vsub.f32 1.0, %v2051
      %v2053 = vmul.f32 %v2050, %v2052
      %v2054 = vadd.f32 %v2050, %v2053
      %vm2055 = vweird.f32 %v1944
      %vm2056 = vweird.f32 %v2050
      %vm2057 = vmor %vm2055, %vm2056
      %v2058 = vsel %vm2057, %v2050, %v2054
      %v2059 = vand.u32 2147483647, %v1944
      %vm2060 = vcmp.eq.f32.partialorder %v2059, 8.507059e+37
      %v2061 = vand.u32 %v1944, 2147483648
      %v2062 = vor.u32 1.1754944e-38, %v2061
      %v2063 = vsel %vm2060, %v2062, %v2058
      %v2064 = vmul.f32 %v1920, %v2063
      %v2065 = vpack.c.bf16 %v1974, %v1959
      %v2066 = vpack.c.bf16 %v2004, %v1989
      %v2067 = vpack.c.bf16 %v2034, %v2019
      %v2068 = vpack.c.bf16 %v2064, %v2049
      %2069 = vrot.lane.b32.xlu0 %v1170, 56
      %v2070 = vpop.permute.xlu0 %2069
      %2071 = vrot.lane.b32.xlu0 %v1171, 56
      %v2072 = vpop.permute.xlu0 %2071
      %2073 = vrot.lane.b32.xlu0 %v1172, 56
      %v2074 = vpop.permute.xlu0 %2073
      %2075 = vrot.lane.b32.xlu0 %v1173, 56
      %v2076 = vpop.permute.xlu0 %2075
      %v2082 = vsel %vm1236, %v2065, 0
      %v2085 = vsel %vm1236, %v2066, 0
      %v2088 = vsel %vm1236, %v2067, 0
      %v2091 = vsel %vm1236, %v2068, 0
      %2093 = vmatpush.bf16.msra.mxu0 0
      %2094 = vmatpush.bf16.msra.mxu0 0
      %2095 = vmatpush.bf16.msra.mxu0 0
      %2096 = vmatpush.bf16.msra.mxu0 0
      %2097 = vmatpush.bf16.msra.mxu0 %v2076
      %2098 = vmatpush.bf16.msra.mxu0 %v2074
      %2099 = vmatpush.bf16.msra.mxu0 %v2072
      %2100 = vmatpush.bf16.msra.mxu0 %v2070
      %2101 = vmatmul.bf16.gmra.mxu0 %v2082
      %v2102 = vpop.f32.mrf.mxu0
      %v2103 = vadd.f32 0.0, %v2102
      %v2104 = vpop.f32.mrf.mxu0
      %v2105 = vadd.f32 0.0, %v2104
      %2106 = vmatmul.bf16.gmra.mxu0 %v2085
      %v2107 = vpop.f32.mrf.mxu0
      %v2108 = vadd.f32 0.0, %v2107
      %v2109 = vpop.f32.mrf.mxu0
      %v2110 = vadd.f32 0.0, %v2109
      %2111 = vmatmul.bf16.gmra.mxu0 %v2088
      %v2112 = vpop.f32.mrf.mxu0
      %v2113 = vadd.f32 0.0, %v2112
      %v2114 = vpop.f32.mrf.mxu0
      %v2115 = vadd.f32 0.0, %v2114
      %2116 = vmatmul.bf16.gmra.mxu0 %v2091
      %v2117 = vpop.f32.mrf.mxu0
      %v2118 = vadd.f32 0.0, %v2117
      %v2119 = vpop.f32.mrf.mxu0
      %v2120 = vadd.f32 0.0, %v2119
      %2121 = vdwg.mxu0
      %2122 = vrot.lane.b32.xlu0 %v1170, 116
      %v2123 = vpop.permute.xlu0 %2122
      %2124 = vrot.lane.b32.xlu0 %v1171, 116
      %v2125 = vpop.permute.xlu0 %2124
      %2126 = vrot.lane.b32.xlu0 %v1172, 116
      %v2127 = vpop.permute.xlu0 %2126
      %2128 = vrot.lane.b32.xlu0 %v1173, 116
      %v2129 = vpop.permute.xlu0 %2128
      %2130 = vrot.lane.b32.xlu0 %v1170, 84
      %v2131 = vpop.permute.xlu0 %2130
      %2132 = vrot.lane.b32.xlu0 %v1171, 84
      %v2133 = vpop.permute.xlu0 %2132
      %2134 = vrot.lane.b32.xlu0 %v1172, 84
      %v2135 = vpop.permute.xlu0 %2134
      %2136 = vrot.lane.b32.xlu0 %v1173, 84
      %v2137 = vpop.permute.xlu0 %2136
      %v2139 = vsel %vm1182, %v2123, 0
      %v2142 = vsel %vm1182, %v2125, 0
      %v2145 = vsel %vm1182, %v2127, 0
      %v2148 = vsel %vm1182, %v2129, 0
      %v2151 = vsel %vm1182, %v2131, 0
      %v2154 = vsel %vm1182, %v2133, 0
      %v2157 = vsel %vm1182, %v2135, 0
      %v2160 = vsel %vm1182, %v2137, 0
      %2162 = vmatpush.bf16.xpose.msra.mxu0 0
      %2163 = vmatpush.bf16.xpose.msra.mxu0 0
      %2164 = vmatpush.bf16.xpose.msra.mxu0 0
      %2165 = vmatpush.bf16.xpose.msra.mxu0 0
      %2166 = vmatpush.bf16.xpose.msra.mxu0 %v2160
      %2167 = vmatpush.bf16.xpose.msra.mxu0 %v2157
      %2168 = vmatpush.bf16.xpose.msra.mxu0 %v2154
      %2169 = vmatpush.bf16.xpose.msra.mxu0 %v2151
      %2170 = vmatmul.bf16.gmra.mxu0 %v2139
      %v2171 = vpop.f32.mrf.mxu0
      %v2172 = vadd.f32 %v1146, %v2171
      %v2173 = vpop.f32.mrf.mxu0
      %v2174 = vadd.f32 %v1147, %v2173
      %2175 = vmatmul.bf16.gmra.mxu0 %v2142
      %v2176 = vpop.f32.mrf.mxu0
      %v2177 = vadd.f32 %v1148, %v2176
      %v2178 = vpop.f32.mrf.mxu0
      %v2179 = vadd.f32 %v1149, %v2178
      %2180 = vmatmul.bf16.gmra.mxu0 %v2145
      %v2181 = vpop.f32.mrf.mxu0
      %v2182 = vadd.f32 %v1150, %v2181
      %v2183 = vpop.f32.mrf.mxu0
      %v2184 = vadd.f32 %v1151, %v2183
      %2185 = vmatmul.bf16.gmra.mxu0 %v2148
      %v2186 = vpop.f32.mrf.mxu0
      %v2187 = vadd.f32 %v1152, %v2186
      %v2188 = vpop.f32.mrf.mxu0
      %v2189 = vadd.f32 %v1153, %v2188
      %2190 = vdwg.mxu0
      %v2191 = vsel %vm1236, %v2172, -inf
      %2192 = vmax.xlane.f32.xlu0 %v2191
      %v2193 = vpop.xlane.xlu0 %2192
      %v2194 = vsel %vm1236, %v2174, -inf
      %2195 = vmax.xlane.f32.xlu0 %v2194
      %v2196 = vpop.xlane.xlu0 %2195
      %v2197 = vsel %vm1236, %v2177, -inf
      %2198 = vmax.xlane.f32.xlu0 %v2197
      %v2199 = vpop.xlane.xlu0 %2198
      %v2200 = vsel %vm1236, %v2179, -inf
      %2201 = vmax.xlane.f32.xlu0 %v2200
      %v2202 = vpop.xlane.xlu0 %2201
      %v2203 = vsel %vm1236, %v2182, -inf
      %2204 = vmax.xlane.f32.xlu0 %v2203
      %v2205 = vpop.xlane.xlu0 %2204
      %v2206 = vsel %vm1236, %v2184, -inf
      %2207 = vmax.xlane.f32.xlu0 %v2206
      %v2208 = vpop.xlane.xlu0 %2207
      %v2209 = vsel %vm1236, %v2187, -inf
      %2210 = vmax.xlane.f32.xlu0 %v2209
      %v2211 = vpop.xlane.xlu0 %2210
      %v2212 = vsel %vm1236, %v2189, -inf
      %2213 = vmax.xlane.f32.xlu0 %v2212
      %v2214 = vpop.xlane.xlu0 %2213
      %v2215 = vsub.f32 %v2172, %v2193
      %v2216 = vsub.f32 %v2174, %v2196
      %v2217 = vsub.f32 %v2177, %v2199
      %v2218 = vsub.f32 %v2179, %v2202
      %v2219 = vsub.f32 %v2182, %v2205
      %v2220 = vsub.f32 %v2184, %v2208
      %v2221 = vsub.f32 %v2187, %v2211
      %v2222 = vsub.f32 %v2189, %v2214
      %v2223 = vmul.f32 %v2215, 1.442695
      %v2224 = vpow.pop %v2223
      %v2225 = vmul.f32 %v2216, 1.442695
      %v2226 = vpow.pop %v2225
      %v2227 = vmul.f32 %v2217, 1.442695
      %v2228 = vpow.pop %v2227
      %v2229 = vmul.f32 %v2218, 1.442695
      %v2230 = vpow.pop %v2229
      %v2231 = vmul.f32 %v2219, 1.442695
      %v2232 = vpow.pop %v2231
      %v2233 = vmul.f32 %v2220, 1.442695
      %v2234 = vpow.pop %v2233
      %v2235 = vmul.f32 %v2221, 1.442695
      %v2236 = vpow.pop %v2235
      %v2237 = vmul.f32 %v2222, 1.442695
      %v2238 = vpow.pop %v2237
      %v2239 = vsel %vm1236, %v2224, 0.0
      %2240 = vadd.xlane.f32.xlu0 %v2239
      %v2241 = vpop.xlane.xlu0 %2240
      %v2242 = vsel %vm1236, %v2226, 0.0
      %2243 = vadd.xlane.f32.xlu0 %v2242
      %v2244 = vpop.xlane.xlu0 %2243
      %v2245 = vsel %vm1236, %v2228, 0.0
      %2246 = vadd.xlane.f32.xlu0 %v2245
      %v2247 = vpop.xlane.xlu0 %2246
      %v2248 = vsel %vm1236, %v2230, 0.0
      %2249 = vadd.xlane.f32.xlu0 %v2248
      %v2250 = vpop.xlane.xlu0 %2249
      %v2251 = vsel %vm1236, %v2232, 0.0
      %2252 = vadd.xlane.f32.xlu0 %v2251
      %v2253 = vpop.xlane.xlu0 %2252
      %v2254 = vsel %vm1236, %v2234, 0.0
      %2255 = vadd.xlane.f32.xlu0 %v2254
      %v2256 = vpop.xlane.xlu0 %2255
      %v2257 = vsel %vm1236, %v2236, 0.0
      %2258 = vadd.xlane.f32.xlu0 %v2257
      %v2259 = vpop.xlane.xlu0 %2258
      %v2260 = vsel %vm1236, %v2238, 0.0
      %2261 = vadd.xlane.f32.xlu0 %v2260
      %v2262 = vpop.xlane.xlu0 %2261
      %v2263 = vrcp.pop %v2241
      %v2264 = vmul.f32 %v2241, %v2263
      %v2265 = vsub.f32 1.0, %v2264
      %v2266 = vmul.f32 %v2263, %v2265
      %v2267 = vadd.f32 %v2263, %v2266
      %vm2268 = vweird.f32 %v2241
      %vm2269 = vweird.f32 %v2263
      %vm2270 = vmor %vm2268, %vm2269
      %v2271 = vsel %vm2270, %v2263, %v2267
      %v2272 = vand.u32 2147483647, %v2241
      %vm2273 = vcmp.eq.f32.partialorder %v2272, 8.507059e+37
      %v2274 = vand.u32 %v2241, 2147483648
      %v2275 = vor.u32 1.1754944e-38, %v2274
      %v2276 = vsel %vm2273, %v2275, %v2271
      %v2277 = vmul.f32 %v2224, %v2276
      %v2278 = vrcp.pop %v2244
      %v2279 = vmul.f32 %v2244, %v2278
      %v2280 = vsub.f32 1.0, %v2279
      %v2281 = vmul.f32 %v2278, %v2280
      %v2282 = vadd.f32 %v2278, %v2281
      %vm2283 = vweird.f32 %v2244
      %vm2284 = vweird.f32 %v2278
      %vm2285 = vmor %vm2283, %vm2284
      %v2286 = vsel %vm2285, %v2278, %v2282
      %v2287 = vand.u32 2147483647, %v2244
      %vm2288 = vcmp.eq.f32.partialorder %v2287, 8.507059e+37
      %v2289 = vand.u32 %v2244, 2147483648
      %v2290 = vor.u32 1.1754944e-38, %v2289
      %v2291 = vsel %vm2288, %v2290, %v2286
      %v2292 = vmul.f32 %v2226, %v2291
      %v2293 = vrcp.pop %v2247
      %v2294 = vmul.f32 %v2247, %v2293
      %v2295 = vsub.f32 1.0, %v2294
      %v2296 = vmul.f32 %v2293, %v2295
      %v2297 = vadd.f32 %v2293, %v2296
      %vm2298 = vweird.f32 %v2247
      %vm2299 = vweird.f32 %v2293
      %vm2300 = vmor %vm2298, %vm2299
      %v2301 = vsel %vm2300, %v2293, %v2297
      %v2302 = vand.u32 2147483647, %v2247
      %vm2303 = vcmp.eq.f32.partialorder %v2302, 8.507059e+37
      %v2304 = vand.u32 %v2247, 2147483648
      %v2305 = vor.u32 1.1754944e-38, %v2304
      %v2306 = vsel %vm2303, %v2305, %v2301
      %v2307 = vmul.f32 %v2228, %v2306
      %v2308 = vrcp.pop %v2250
      %v2309 = vmul.f32 %v2250, %v2308
      %v2310 = vsub.f32 1.0, %v2309
      %v2311 = vmul.f32 %v2308, %v2310
      %v2312 = vadd.f32 %v2308, %v2311
      %vm2313 = vweird.f32 %v2250
      %vm2314 = vweird.f32 %v2308
      %vm2315 = vmor %vm2313, %vm2314
      %v2316 = vsel %vm2315, %v2308, %v2312
      %v2317 = vand.u32 2147483647, %v2250
      %vm2318 = vcmp.eq.f32.partialorder %v2317, 8.507059e+37
      %v2319 = vand.u32 %v2250, 2147483648
      %v2320 = vor.u32 1.1754944e-38, %v2319
      %v2321 = vsel %vm2318, %v2320, %v2316
      %v2322 = vmul.f32 %v2230, %v2321
      %v2323 = vrcp.pop %v2253
      %v2324 = vmul.f32 %v2253, %v2323
      %v2325 = vsub.f32 1.0, %v2324
      %v2326 = vmul.f32 %v2323, %v2325
      %v2327 = vadd.f32 %v2323, %v2326
      %vm2328 = vweird.f32 %v2253
      %vm2329 = vweird.f32 %v2323
      %vm2330 = vmor %vm2328, %vm2329
      %v2331 = vsel %vm2330, %v2323, %v2327
      %v2332 = vand.u32 2147483647, %v2253
      %vm2333 = vcmp.eq.f32.partialorder %v2332, 8.507059e+37
      %v2334 = vand.u32 %v2253, 2147483648
      %v2335 = vor.u32 1.1754944e-38, %v2334
      %v2336 = vsel %vm2333, %v2335, %v2331
      %v2337 = vmul.f32 %v2232, %v2336
      %v2338 = vrcp.pop %v2256
      %v2339 = vmul.f32 %v2256, %v2338
      %v2340 = vsub.f32 1.0, %v2339
      %v2341 = vmul.f32 %v2338, %v2340
      %v2342 = vadd.f32 %v2338, %v2341
      %vm2343 = vweird.f32 %v2256
      %vm2344 = vweird.f32 %v2338
      %vm2345 = vmor %vm2343, %vm2344
      %v2346 = vsel %vm2345, %v2338, %v2342
      %v2347 = vand.u32 2147483647, %v2256
      %vm2348 = vcmp.eq.f32.partialorder %v2347, 8.507059e+37
      %v2349 = vand.u32 %v2256, 2147483648
      %v2350 = vor.u32 1.1754944e-38, %v2349
      %v2351 = vsel %vm2348, %v2350, %v2346
      %v2352 = vmul.f32 %v2234, %v2351
      %v2353 = vrcp.pop %v2259
      %v2354 = vmul.f32 %v2259, %v2353
      %v2355 = vsub.f32 1.0, %v2354
      %v2356 = vmul.f32 %v2353, %v2355
      %v2357 = vadd.f32 %v2353, %v2356
      %vm2358 = vweird.f32 %v2259
      %vm2359 = vweird.f32 %v2353
      %vm2360 = vmor %vm2358, %vm2359
      %v2361 = vsel %vm2360, %v2353, %v2357
      %v2362 = vand.u32 2147483647, %v2259
      %vm2363 = vcmp.eq.f32.partialorder %v2362, 8.507059e+37
      %v2364 = vand.u32 %v2259, 2147483648
      %v2365 = vor.u32 1.1754944e-38, %v2364
      %v2366 = vsel %vm2363, %v2365, %v2361
      %v2367 = vmul.f32 %v2236, %v2366
      %v2368 = vrcp.pop %v2262
      %v2369 = vmul.f32 %v2262, %v2368
      %v2370 = vsub.f32 1.0, %v2369
      %v2371 = vmul.f32 %v2368, %v2370
      %v2372 = vadd.f32 %v2368, %v2371
      %vm2373 = vweird.f32 %v2262
      %vm2374 = vweird.f32 %v2368
      %vm2375 = vmor %vm2373, %vm2374
      %v2376 = vsel %vm2375, %v2368, %v2372
      %v2377 = vand.u32 2147483647, %v2262
      %vm2378 = vcmp.eq.f32.partialorder %v2377, 8.507059e+37
      %v2379 = vand.u32 %v2262, 2147483648
      %v2380 = vor.u32 1.1754944e-38, %v2379
      %v2381 = vsel %vm2378, %v2380, %v2376
      %v2382 = vmul.f32 %v2238, %v2381
      %v2383 = vpack.c.bf16 %v2292, %v2277
      %v2384 = vpack.c.bf16 %v2322, %v2307
      %v2385 = vpack.c.bf16 %v2352, %v2337
      %v2386 = vpack.c.bf16 %v2382, %v2367
      %2387 = vrot.lane.b32.xlu0 %v1170, 52
      %v2388 = vpop.permute.xlu0 %2387
      %2389 = vrot.lane.b32.xlu0 %v1171, 52
      %v2390 = vpop.permute.xlu0 %2389
      %2391 = vrot.lane.b32.xlu0 %v1172, 52
      %v2392 = vpop.permute.xlu0 %2391
      %2393 = vrot.lane.b32.xlu0 %v1173, 52
      %v2394 = vpop.permute.xlu0 %2393
      %v2400 = vsel %vm1236, %v2383, 0
      %v2403 = vsel %vm1236, %v2384, 0
      %v2406 = vsel %vm1236, %v2385, 0
      %v2409 = vsel %vm1236, %v2386, 0
      %2411 = vmatpush.bf16.msra.mxu0 0
      %2412 = vmatpush.bf16.msra.mxu0 0
      %2413 = vmatpush.bf16.msra.mxu0 0
      %2414 = vmatpush.bf16.msra.mxu0 0
      %2415 = vmatpush.bf16.msra.mxu0 %v2394
      %2416 = vmatpush.bf16.msra.mxu0 %v2392
      %2417 = vmatpush.bf16.msra.mxu0 %v2390
      %2418 = vmatpush.bf16.msra.mxu0 %v2388
      %2419 = vmatmul.bf16.gmra.mxu0 %v2400
      %v2420 = vpop.f32.mrf.mxu0
      %v2421 = vadd.f32 0.0, %v2420
      %v2422 = vpop.f32.mrf.mxu0
      %v2423 = vadd.f32 0.0, %v2422
      %2424 = vmatmul.bf16.gmra.mxu0 %v2403
      %v2425 = vpop.f32.mrf.mxu0
      %v2426 = vadd.f32 0.0, %v2425
      %v2427 = vpop.f32.mrf.mxu0
      %v2428 = vadd.f32 0.0, %v2427
      %2429 = vmatmul.bf16.gmra.mxu0 %v2406
      %v2430 = vpop.f32.mrf.mxu0
      %v2431 = vadd.f32 0.0, %v2430
      %v2432 = vpop.f32.mrf.mxu0
      %v2433 = vadd.f32 0.0, %v2432
      %2434 = vmatmul.bf16.gmra.mxu0 %v2409
      %v2435 = vpop.f32.mrf.mxu0
      %v2436 = vadd.f32 0.0, %v2435
      %v2437 = vpop.f32.mrf.mxu0
      %v2438 = vadd.f32 0.0, %v2437
      %2439 = vdwg.mxu0
      %2440 = vrot.lane.b32.xlu0 %v1170, 112
      %v2441 = vpop.permute.xlu0 %2440
      %2442 = vrot.lane.b32.xlu0 %v1171, 112
      %v2443 = vpop.permute.xlu0 %2442
      %2444 = vrot.lane.b32.xlu0 %v1172, 112
      %v2445 = vpop.permute.xlu0 %2444
      %2446 = vrot.lane.b32.xlu0 %v1173, 112
      %v2447 = vpop.permute.xlu0 %2446
      %2448 = vrot.lane.b32.xlu0 %v1170, 80
      %v2449 = vpop.permute.xlu0 %2448
      %2450 = vrot.lane.b32.xlu0 %v1171, 80
      %v2451 = vpop.permute.xlu0 %2450
      %2452 = vrot.lane.b32.xlu0 %v1172, 80
      %v2453 = vpop.permute.xlu0 %2452
      %2454 = vrot.lane.b32.xlu0 %v1173, 80
      %v2455 = vpop.permute.xlu0 %2454
      %v2457 = vsel %vm1182, %v2441, 0
      %v2460 = vsel %vm1182, %v2443, 0
      %v2463 = vsel %vm1182, %v2445, 0
      %v2466 = vsel %vm1182, %v2447, 0
      %v2469 = vsel %vm1182, %v2449, 0
      %v2472 = vsel %vm1182, %v2451, 0
      %v2475 = vsel %vm1182, %v2453, 0
      %v2478 = vsel %vm1182, %v2455, 0
      %2480 = vmatpush.bf16.xpose.msra.mxu0 0
      %2481 = vmatpush.bf16.xpose.msra.mxu0 0
      %2482 = vmatpush.bf16.xpose.msra.mxu0 0
      %2483 = vmatpush.bf16.xpose.msra.mxu0 0
      %2484 = vmatpush.bf16.xpose.msra.mxu0 %v2478
      %2485 = vmatpush.bf16.xpose.msra.mxu0 %v2475
      %2486 = vmatpush.bf16.xpose.msra.mxu0 %v2472
      %2487 = vmatpush.bf16.xpose.msra.mxu0 %v2469
      %2488 = vmatmul.bf16.gmra.mxu0 %v2457
      %v2489 = vpop.f32.mrf.mxu0
      %v2490 = vadd.f32 %v1146, %v2489
      %v2491 = vpop.f32.mrf.mxu0
      %v2492 = vadd.f32 %v1147, %v2491
      %2493 = vmatmul.bf16.gmra.mxu0 %v2460
      %v2494 = vpop.f32.mrf.mxu0
      %v2495 = vadd.f32 %v1148, %v2494
      %v2496 = vpop.f32.mrf.mxu0
      %v2497 = vadd.f32 %v1149, %v2496
      %2498 = vmatmul.bf16.gmra.mxu0 %v2463
      %v2499 = vpop.f32.mrf.mxu0
      %v2500 = vadd.f32 %v1150, %v2499
      %v2501 = vpop.f32.mrf.mxu0
      %v2502 = vadd.f32 %v1151, %v2501
      %2503 = vmatmul.bf16.gmra.mxu0 %v2466
      %v2504 = vpop.f32.mrf.mxu0
      %v2505 = vadd.f32 %v1152, %v2504
      %v2506 = vpop.f32.mrf.mxu0
      %v2507 = vadd.f32 %v1153, %v2506
      %2508 = vdwg.mxu0
      %v2509 = vsel %vm1236, %v2490, -inf
      %2510 = vmax.xlane.f32.xlu0 %v2509
      %v2511 = vpop.xlane.xlu0 %2510
      %v2512 = vsel %vm1236, %v2492, -inf
      %2513 = vmax.xlane.f32.xlu0 %v2512
      %v2514 = vpop.xlane.xlu0 %2513
      %v2515 = vsel %vm1236, %v2495, -inf
      %2516 = vmax.xlane.f32.xlu0 %v2515
      %v2517 = vpop.xlane.xlu0 %2516
      %v2518 = vsel %vm1236, %v2497, -inf
      %2519 = vmax.xlane.f32.xlu0 %v2518
      %v2520 = vpop.xlane.xlu0 %2519
      %v2521 = vsel %vm1236, %v2500, -inf
      %2522 = vmax.xlane.f32.xlu0 %v2521
      %v2523 = vpop.xlane.xlu0 %2522
      %v2524 = vsel %vm1236, %v2502, -inf
      %2525 = vmax.xlane.f32.xlu0 %v2524
      %v2526 = vpop.xlane.xlu0 %2525
      %v2527 = vsel %vm1236, %v2505, -inf
      %2528 = vmax.xlane.f32.xlu0 %v2527
      %v2529 = vpop.xlane.xlu0 %2528
      %v2530 = vsel %vm1236, %v2507, -inf
      %2531 = vmax.xlane.f32.xlu0 %v2530
      %v2532 = vpop.xlane.xlu0 %2531
      %v2533 = vsub.f32 %v2490, %v2511
      %v2534 = vsub.f32 %v2492, %v2514
      %v2535 = vsub.f32 %v2495, %v2517
      %v2536 = vsub.f32 %v2497, %v2520
      %v2537 = vsub.f32 %v2500, %v2523
      %v2538 = vsub.f32 %v2502, %v2526
      %v2539 = vsub.f32 %v2505, %v2529
      %v2540 = vsub.f32 %v2507, %v2532
      %v2541 = vmul.f32 %v2533, 1.442695
      %v2542 = vpow.pop %v2541
      %v2543 = vmul.f32 %v2534, 1.442695
      %v2544 = vpow.pop %v2543
      %v2545 = vmul.f32 %v2535, 1.442695
      %v2546 = vpow.pop %v2545
      %v2547 = vmul.f32 %v2536, 1.442695
      %v2548 = vpow.pop %v2547
      %v2549 = vmul.f32 %v2537, 1.442695
      %v2550 = vpow.pop %v2549
      %v2551 = vmul.f32 %v2538, 1.442695
      %v2552 = vpow.pop %v2551
      %v2553 = vmul.f32 %v2539, 1.442695
      %v2554 = vpow.pop %v2553
      %v2555 = vmul.f32 %v2540, 1.442695
      %v2556 = vpow.pop %v2555
      %v2557 = vsel %vm1236, %v2542, 0.0
      %2558 = vadd.xlane.f32.xlu0 %v2557
      %v2559 = vpop.xlane.xlu0 %2558
      %v2560 = vsel %vm1236, %v2544, 0.0
      %2561 = vadd.xlane.f32.xlu0 %v2560
      %v2562 = vpop.xlane.xlu0 %2561
      %v2563 = vsel %vm1236, %v2546, 0.0
      %2564 = vadd.xlane.f32.xlu0 %v2563
      %v2565 = vpop.xlane.xlu0 %2564
      %v2566 = vsel %vm1236, %v2548, 0.0
      %2567 = vadd.xlane.f32.xlu0 %v2566
      %v2568 = vpop.xlane.xlu0 %2567
      %v2569 = vsel %vm1236, %v2550, 0.0
      %2570 = vadd.xlane.f32.xlu0 %v2569
      %v2571 = vpop.xlane.xlu0 %2570
      %v2572 = vsel %vm1236, %v2552, 0.0
      %2573 = vadd.xlane.f32.xlu0 %v2572
      %v2574 = vpop.xlane.xlu0 %2573
      %v2575 = vsel %vm1236, %v2554, 0.0
      %2576 = vadd.xlane.f32.xlu0 %v2575
      %v2577 = vpop.xlane.xlu0 %2576
      %v2578 = vsel %vm1236, %v2556, 0.0
      %2579 = vadd.xlane.f32.xlu0 %v2578
      %v2580 = vpop.xlane.xlu0 %2579
      %v2581 = vrcp.pop %v2559
      %v2582 = vmul.f32 %v2559, %v2581
      %v2583 = vsub.f32 1.0, %v2582
      %v2584 = vmul.f32 %v2581, %v2583
      %v2585 = vadd.f32 %v2581, %v2584
      %vm2586 = vweird.f32 %v2559
      %vm2587 = vweird.f32 %v2581
      %vm2588 = vmor %vm2586, %vm2587
      %v2589 = vsel %vm2588, %v2581, %v2585
      %v2590 = vand.u32 2147483647, %v2559
      %vm2591 = vcmp.eq.f32.partialorder %v2590, 8.507059e+37
      %v2592 = vand.u32 %v2559, 2147483648
      %v2593 = vor.u32 1.1754944e-38, %v2592
      %v2594 = vsel %vm2591, %v2593, %v2589
      %v2595 = vmul.f32 %v2542, %v2594
      %v2596 = vrcp.pop %v2562
      %v2597 = vmul.f32 %v2562, %v2596
      %v2598 = vsub.f32 1.0, %v2597
      %v2599 = vmul.f32 %v2596, %v2598
      %v2600 = vadd.f32 %v2596, %v2599
      %vm2601 = vweird.f32 %v2562
      %vm2602 = vweird.f32 %v2596
      %vm2603 = vmor %vm2601, %vm2602
      %v2604 = vsel %vm2603, %v2596, %v2600
      %v2605 = vand.u32 2147483647, %v2562
      %vm2606 = vcmp.eq.f32.partialorder %v2605, 8.507059e+37
      %v2607 = vand.u32 %v2562, 2147483648
      %v2608 = vor.u32 1.1754944e-38, %v2607
      %v2609 = vsel %vm2606, %v2608, %v2604
      %v2610 = vmul.f32 %v2544, %v2609
      %v2611 = vrcp.pop %v2565
      %v2612 = vmul.f32 %v2565, %v2611
      %v2613 = vsub.f32 1.0, %v2612
      %v2614 = vmul.f32 %v2611, %v2613
      %v2615 = vadd.f32 %v2611, %v2614
      %vm2616 = vweird.f32 %v2565
      %vm2617 = vweird.f32 %v2611
      %vm2618 = vmor %vm2616, %vm2617
      %v2619 = vsel %vm2618, %v2611, %v2615
      %v2620 = vand.u32 2147483647, %v2565
      %vm2621 = vcmp.eq.f32.partialorder %v2620, 8.507059e+37
      %v2622 = vand.u32 %v2565, 2147483648
      %v2623 = vor.u32 1.1754944e-38, %v2622
      %v2624 = vsel %vm2621, %v2623, %v2619
      %v2625 = vmul.f32 %v2546, %v2624
      %v2626 = vrcp.pop %v2568
      %v2627 = vmul.f32 %v2568, %v2626
      %v2628 = vsub.f32 1.0, %v2627
      %v2629 = vmul.f32 %v2626, %v2628
      %v2630 = vadd.f32 %v2626, %v2629
      %vm2631 = vweird.f32 %v2568
      %vm2632 = vweird.f32 %v2626
      %vm2633 = vmor %vm2631, %vm2632
      %v2634 = vsel %vm2633, %v2626, %v2630
      %v2635 = vand.u32 2147483647, %v2568
      %vm2636 = vcmp.eq.f32.partialorder %v2635, 8.507059e+37
      %v2637 = vand.u32 %v2568, 2147483648
      %v2638 = vor.u32 1.1754944e-38, %v2637
      %v2639 = vsel %vm2636, %v2638, %v2634
      %v2640 = vmul.f32 %v2548, %v2639
      %v2641 = vrcp.pop %v2571
      %v2642 = vmul.f32 %v2571, %v2641
      %v2643 = vsub.f32 1.0, %v2642
      %v2644 = vmul.f32 %v2641, %v2643
      %v2645 = vadd.f32 %v2641, %v2644
      %vm2646 = vweird.f32 %v2571
      %vm2647 = vweird.f32 %v2641
      %vm2648 = vmor %vm2646, %vm2647
      %v2649 = vsel %vm2648, %v2641, %v2645
      %v2650 = vand.u32 2147483647, %v2571
      %vm2651 = vcmp.eq.f32.partialorder %v2650, 8.507059e+37
      %v2652 = vand.u32 %v2571, 2147483648
      %v2653 = vor.u32 1.1754944e-38, %v2652
      %v2654 = vsel %vm2651, %v2653, %v2649
      %v2655 = vmul.f32 %v2550, %v2654
      %v2656 = vrcp.pop %v2574
      %v2657 = vmul.f32 %v2574, %v2656
      %v2658 = vsub.f32 1.0, %v2657
      %v2659 = vmul.f32 %v2656, %v2658
      %v2660 = vadd.f32 %v2656, %v2659
      %vm2661 = vweird.f32 %v2574
      %vm2662 = vweird.f32 %v2656
      %vm2663 = vmor %vm2661, %vm2662
      %v2664 = vsel %vm2663, %v2656, %v2660
      %v2665 = vand.u32 2147483647, %v2574
      %vm2666 = vcmp.eq.f32.partialorder %v2665, 8.507059e+37
      %v2667 = vand.u32 %v2574, 2147483648
      %v2668 = vor.u32 1.1754944e-38, %v2667
      %v2669 = vsel %vm2666, %v2668, %v2664
      %v2670 = vmul.f32 %v2552, %v2669
      %v2671 = vrcp.pop %v2577
      %v2672 = vmul.f32 %v2577, %v2671
      %v2673 = vsub.f32 1.0, %v2672
      %v2674 = vmul.f32 %v2671, %v2673
      %v2675 = vadd.f32 %v2671, %v2674
      %vm2676 = vweird.f32 %v2577
      %vm2677 = vweird.f32 %v2671
      %vm2678 = vmor %vm2676, %vm2677
      %v2679 = vsel %vm2678, %v2671, %v2675
      %v2680 = vand.u32 2147483647, %v2577
      %vm2681 = vcmp.eq.f32.partialorder %v2680, 8.507059e+37
      %v2682 = vand.u32 %v2577, 2147483648
      %v2683 = vor.u32 1.1754944e-38, %v2682
      %v2684 = vsel %vm2681, %v2683, %v2679
      %v2685 = vmul.f32 %v2554, %v2684
      %v2686 = vrcp.pop %v2580
      %v2687 = vmul.f32 %v2580, %v2686
      %v2688 = vsub.f32 1.0, %v2687
      %v2689 = vmul.f32 %v2686, %v2688
      %v2690 = vadd.f32 %v2686, %v2689
      %vm2691 = vweird.f32 %v2580
      %vm2692 = vweird.f32 %v2686
      %vm2693 = vmor %vm2691, %vm2692
      %v2694 = vsel %vm2693, %v2686, %v2690
      %v2695 = vand.u32 2147483647, %v2580
      %vm2696 = vcmp.eq.f32.partialorder %v2695, 8.507059e+37
      %v2697 = vand.u32 %v2580, 2147483648
      %v2698 = vor.u32 1.1754944e-38, %v2697
      %v2699 = vsel %vm2696, %v2698, %v2694
      %v2700 = vmul.f32 %v2556, %v2699
      %v2701 = vpack.c.bf16 %v2610, %v2595
      %v2702 = vpack.c.bf16 %v2640, %v2625
      %v2703 = vpack.c.bf16 %v2670, %v2655
      %v2704 = vpack.c.bf16 %v2700, %v2685
      %2705 = vrot.lane.b32.xlu0 %v1170, 48
      %v2706 = vpop.permute.xlu0 %2705
      %2707 = vrot.lane.b32.xlu0 %v1171, 48
      %v2708 = vpop.permute.xlu0 %2707
      %2709 = vrot.lane.b32.xlu0 %v1172, 48
      %v2710 = vpop.permute.xlu0 %2709
      %2711 = vrot.lane.b32.xlu0 %v1173, 48
      %v2712 = vpop.permute.xlu0 %2711
      %v2718 = vsel %vm1236, %v2701, 0
      %v2721 = vsel %vm1236, %v2702, 0
      %v2724 = vsel %vm1236, %v2703, 0
      %v2727 = vsel %vm1236, %v2704, 0
      %2729 = vmatpush.bf16.msra.mxu0 0
      %2730 = vmatpush.bf16.msra.mxu0 0
      %2731 = vmatpush.bf16.msra.mxu0 0
      %2732 = vmatpush.bf16.msra.mxu0 0
      %2733 = vmatpush.bf16.msra.mxu0 %v2712
      %2734 = vmatpush.bf16.msra.mxu0 %v2710
      %2735 = vmatpush.bf16.msra.mxu0 %v2708
      %2736 = vmatpush.bf16.msra.mxu0 %v2706
      %2737 = vmatmul.bf16.gmra.mxu0 %v2718
      %v2738 = vpop.f32.mrf.mxu0
      %v2739 = vadd.f32 0.0, %v2738
      %v2740 = vpop.f32.mrf.mxu0
      %v2741 = vadd.f32 0.0, %v2740
      %2742 = vmatmul.bf16.gmra.mxu0 %v2721
      %v2743 = vpop.f32.mrf.mxu0
      %v2744 = vadd.f32 0.0, %v2743
      %v2745 = vpop.f32.mrf.mxu0
      %v2746 = vadd.f32 0.0, %v2745
      %2747 = vmatmul.bf16.gmra.mxu0 %v2724
      %v2748 = vpop.f32.mrf.mxu0
      %v2749 = vadd.f32 0.0, %v2748
      %v2750 = vpop.f32.mrf.mxu0
      %v2751 = vadd.f32 0.0, %v2750
      %2752 = vmatmul.bf16.gmra.mxu0 %v2727
      %v2753 = vpop.f32.mrf.mxu0
      %v2754 = vadd.f32 0.0, %v2753
      %v2755 = vpop.f32.mrf.mxu0
      %v2756 = vadd.f32 0.0, %v2755
      %2757 = vdwg.mxu0
      %2758 = vrot.lane.b32.xlu0 %v1170, 108
      %v2759 = vpop.permute.xlu0 %2758
      %2760 = vrot.lane.b32.xlu0 %v1171, 108
      %v2761 = vpop.permute.xlu0 %2760
      %2762 = vrot.lane.b32.xlu0 %v1172, 108
      %v2763 = vpop.permute.xlu0 %2762
      %2764 = vrot.lane.b32.xlu0 %v1173, 108
      %v2765 = vpop.permute.xlu0 %2764
      %2766 = vrot.lane.b32.xlu0 %v1170, 76
      %v2767 = vpop.permute.xlu0 %2766
      %2768 = vrot.lane.b32.xlu0 %v1171, 76
      %v2769 = vpop.permute.xlu0 %2768
      %2770 = vrot.lane.b32.xlu0 %v1172, 76
      %v2771 = vpop.permute.xlu0 %2770
      %2772 = vrot.lane.b32.xlu0 %v1173, 76
      %v2773 = vpop.permute.xlu0 %2772
      %v2775 = vsel %vm1182, %v2759, 0
      %v2778 = vsel %vm1182, %v2761, 0
      %v2781 = vsel %vm1182, %v2763, 0
      %v2784 = vsel %vm1182, %v2765, 0
      %v2787 = vsel %vm1182, %v2767, 0
      %v2790 = vsel %vm1182, %v2769, 0
      %v2793 = vsel %vm1182, %v2771, 0
      %v2796 = vsel %vm1182, %v2773, 0
      %2798 = vmatpush.bf16.xpose.msra.mxu0 0
      %2799 = vmatpush.bf16.xpose.msra.mxu0 0
      %2800 = vmatpush.bf16.xpose.msra.mxu0 0
      %2801 = vmatpush.bf16.xpose.msra.mxu0 0
      %2802 = vmatpush.bf16.xpose.msra.mxu0 %v2796
      %2803 = vmatpush.bf16.xpose.msra.mxu0 %v2793
      %2804 = vmatpush.bf16.xpose.msra.mxu0 %v2790
      %2805 = vmatpush.bf16.xpose.msra.mxu0 %v2787
      %2806 = vmatmul.bf16.gmra.mxu0 %v2775
      %v2807 = vpop.f32.mrf.mxu0
      %v2808 = vadd.f32 %v1146, %v2807
      %v2809 = vpop.f32.mrf.mxu0
      %v2810 = vadd.f32 %v1147, %v2809
      %2811 = vmatmul.bf16.gmra.mxu0 %v2778
      %v2812 = vpop.f32.mrf.mxu0
      %v2813 = vadd.f32 %v1148, %v2812
      %v2814 = vpop.f32.mrf.mxu0
      %v2815 = vadd.f32 %v1149, %v2814
      %2816 = vmatmul.bf16.gmra.mxu0 %v2781
      %v2817 = vpop.f32.mrf.mxu0
      %v2818 = vadd.f32 %v1150, %v2817
      %v2819 = vpop.f32.mrf.mxu0
      %v2820 = vadd.f32 %v1151, %v2819
      %2821 = vmatmul.bf16.gmra.mxu0 %v2784
      %v2822 = vpop.f32.mrf.mxu0
      %v2823 = vadd.f32 %v1152, %v2822
      %v2824 = vpop.f32.mrf.mxu0
      %v2825 = vadd.f32 %v1153, %v2824
      %2826 = vdwg.mxu0
      %v2827 = vsel %vm1236, %v2808, -inf
      %2828 = vmax.xlane.f32.xlu0 %v2827
      %v2829 = vpop.xlane.xlu0 %2828
      %v2830 = vsel %vm1236, %v2810, -inf
      %2831 = vmax.xlane.f32.xlu0 %v2830
      %v2832 = vpop.xlane.xlu0 %2831
      %v2833 = vsel %vm1236, %v2813, -inf
      %2834 = vmax.xlane.f32.xlu0 %v2833
      %v2835 = vpop.xlane.xlu0 %2834
      %v2836 = vsel %vm1236, %v2815, -inf
      %2837 = vmax.xlane.f32.xlu0 %v2836
      %v2838 = vpop.xlane.xlu0 %2837
      %v2839 = vsel %vm1236, %v2818, -inf
      %2840 = vmax.xlane.f32.xlu0 %v2839
      %v2841 = vpop.xlane.xlu0 %2840
      %v2842 = vsel %vm1236, %v2820, -inf
      %2843 = vmax.xlane.f32.xlu0 %v2842
      %v2844 = vpop.xlane.xlu0 %2843
      %v2845 = vsel %vm1236, %v2823, -inf
      %2846 = vmax.xlane.f32.xlu0 %v2845
      %v2847 = vpop.xlane.xlu0 %2846
      %v2848 = vsel %vm1236, %v2825, -inf
      %2849 = vmax.xlane.f32.xlu0 %v2848
      %v2850 = vpop.xlane.xlu0 %2849
      %v2851 = vsub.f32 %v2808, %v2829
      %v2852 = vsub.f32 %v2810, %v2832
      %v2853 = vsub.f32 %v2813, %v2835
      %v2854 = vsub.f32 %v2815, %v2838
      %v2855 = vsub.f32 %v2818, %v2841
      %v2856 = vsub.f32 %v2820, %v2844
      %v2857 = vsub.f32 %v2823, %v2847
      %v2858 = vsub.f32 %v2825, %v2850
      %v2859 = vmul.f32 %v2851, 1.442695
      %v2860 = vpow.pop %v2859
      %v2861 = vmul.f32 %v2852, 1.442695
      %v2862 = vpow.pop %v2861
      %v2863 = vmul.f32 %v2853, 1.442695
      %v2864 = vpow.pop %v2863
      %v2865 = vmul.f32 %v2854, 1.442695
      %v2866 = vpow.pop %v2865
      %v2867 = vmul.f32 %v2855, 1.442695
      %v2868 = vpow.pop %v2867
      %v2869 = vmul.f32 %v2856, 1.442695
      %v2870 = vpow.pop %v2869
      %v2871 = vmul.f32 %v2857, 1.442695
      %v2872 = vpow.pop %v2871
      %v2873 = vmul.f32 %v2858, 1.442695
      %v2874 = vpow.pop %v2873
      %v2875 = vsel %vm1236, %v2860, 0.0
      %2876 = vadd.xlane.f32.xlu0 %v2875
      %v2877 = vpop.xlane.xlu0 %2876
      %v2878 = vsel %vm1236, %v2862, 0.0
      %2879 = vadd.xlane.f32.xlu0 %v2878
      %v2880 = vpop.xlane.xlu0 %2879
      %v2881 = vsel %vm1236, %v2864, 0.0
      %2882 = vadd.xlane.f32.xlu0 %v2881
      %v2883 = vpop.xlane.xlu0 %2882
      %v2884 = vsel %vm1236, %v2866, 0.0
      %2885 = vadd.xlane.f32.xlu0 %v2884
      %v2886 = vpop.xlane.xlu0 %2885
      %v2887 = vsel %vm1236, %v2868, 0.0
      %2888 = vadd.xlane.f32.xlu0 %v2887
      %v2889 = vpop.xlane.xlu0 %2888
      %v2890 = vsel %vm1236, %v2870, 0.0
      %2891 = vadd.xlane.f32.xlu0 %v2890
      %v2892 = vpop.xlane.xlu0 %2891
      %v2893 = vsel %vm1236, %v2872, 0.0
      %2894 = vadd.xlane.f32.xlu0 %v2893
      %v2895 = vpop.xlane.xlu0 %2894
      %v2896 = vsel %vm1236, %v2874, 0.0
      %2897 = vadd.xlane.f32.xlu0 %v2896
      %v2898 = vpop.xlane.xlu0 %2897
      %v2899 = vrcp.pop %v2877
      %v2900 = vmul.f32 %v2877, %v2899
      %v2901 = vsub.f32 1.0, %v2900
      %v2902 = vmul.f32 %v2899, %v2901
      %v2903 = vadd.f32 %v2899, %v2902
      %vm2904 = vweird.f32 %v2877
      %vm2905 = vweird.f32 %v2899
      %vm2906 = vmor %vm2904, %vm2905
      %v2907 = vsel %vm2906, %v2899, %v2903
      %v2908 = vand.u32 2147483647, %v2877
      %vm2909 = vcmp.eq.f32.partialorder %v2908, 8.507059e+37
      %v2910 = vand.u32 %v2877, 2147483648
      %v2911 = vor.u32 1.1754944e-38, %v2910
      %v2912 = vsel %vm2909, %v2911, %v2907
      %v2913 = vmul.f32 %v2860, %v2912
      %v2914 = vrcp.pop %v2880
      %v2915 = vmul.f32 %v2880, %v2914
      %v2916 = vsub.f32 1.0, %v2915
      %v2917 = vmul.f32 %v2914, %v2916
      %v2918 = vadd.f32 %v2914, %v2917
      %vm2919 = vweird.f32 %v2880
      %vm2920 = vweird.f32 %v2914
      %vm2921 = vmor %vm2919, %vm2920
      %v2922 = vsel %vm2921, %v2914, %v2918
      %v2923 = vand.u32 2147483647, %v2880
      %vm2924 = vcmp.eq.f32.partialorder %v2923, 8.507059e+37
      %v2925 = vand.u32 %v2880, 2147483648
      %v2926 = vor.u32 1.1754944e-38, %v2925
      %v2927 = vsel %vm2924, %v2926, %v2922
      %v2928 = vmul.f32 %v2862, %v2927
      %v2929 = vrcp.pop %v2883
      %v2930 = vmul.f32 %v2883, %v2929
      %v2931 = vsub.f32 1.0, %v2930
      %v2932 = vmul.f32 %v2929, %v2931
      %v2933 = vadd.f32 %v2929, %v2932
      %vm2934 = vweird.f32 %v2883
      %vm2935 = vweird.f32 %v2929
      %vm2936 = vmor %vm2934, %vm2935
      %v2937 = vsel %vm2936, %v2929, %v2933
      %v2938 = vand.u32 2147483647, %v2883
      %vm2939 = vcmp.eq.f32.partialorder %v2938, 8.507059e+37
      %v2940 = vand.u32 %v2883, 2147483648
      %v2941 = vor.u32 1.1754944e-38, %v2940
      %v2942 = vsel %vm2939, %v2941, %v2937
      %v2943 = vmul.f32 %v2864, %v2942
      %v2944 = vrcp.pop %v2886
      %v2945 = vmul.f32 %v2886, %v2944
      %v2946 = vsub.f32 1.0, %v2945
      %v2947 = vmul.f32 %v2944, %v2946
      %v2948 = vadd.f32 %v2944, %v2947
      %vm2949 = vweird.f32 %v2886
      %vm2950 = vweird.f32 %v2944
      %vm2951 = vmor %vm2949, %vm2950
      %v2952 = vsel %vm2951, %v2944, %v2948
      %v2953 = vand.u32 2147483647, %v2886
      %vm2954 = vcmp.eq.f32.partialorder %v2953, 8.507059e+37
      %v2955 = vand.u32 %v2886, 2147483648
      %v2956 = vor.u32 1.1754944e-38, %v2955
      %v2957 = vsel %vm2954, %v2956, %v2952
      %v2958 = vmul.f32 %v2866, %v2957
      %v2959 = vrcp.pop %v2889
      %v2960 = vmul.f32 %v2889, %v2959
      %v2961 = vsub.f32 1.0, %v2960
      %v2962 = vmul.f32 %v2959, %v2961
      %v2963 = vadd.f32 %v2959, %v2962
      %vm2964 = vweird.f32 %v2889
      %vm2965 = vweird.f32 %v2959
      %vm2966 = vmor %vm2964, %vm2965
      %v2967 = vsel %vm2966, %v2959, %v2963
      %v2968 = vand.u32 2147483647, %v2889
      %vm2969 = vcmp.eq.f32.partialorder %v2968, 8.507059e+37
      %v2970 = vand.u32 %v2889, 2147483648
      %v2971 = vor.u32 1.1754944e-38, %v2970
      %v2972 = vsel %vm2969, %v2971, %v2967
      %v2973 = vmul.f32 %v2868, %v2972
      %v2974 = vrcp.pop %v2892
      %v2975 = vmul.f32 %v2892, %v2974
      %v2976 = vsub.f32 1.0, %v2975
      %v2977 = vmul.f32 %v2974, %v2976
      %v2978 = vadd.f32 %v2974, %v2977
      %vm2979 = vweird.f32 %v2892
      %vm2980 = vweird.f32 %v2974
      %vm2981 = vmor %vm2979, %vm2980
      %v2982 = vsel %vm2981, %v2974, %v2978
      %v2983 = vand.u32 2147483647, %v2892
      %vm2984 = vcmp.eq.f32.partialorder %v2983, 8.507059e+37
      %v2985 = vand.u32 %v2892, 2147483648
      %v2986 = vor.u32 1.1754944e-38, %v2985
      %v2987 = vsel %vm2984, %v2986, %v2982
      %v2988 = vmul.f32 %v2870, %v2987
      %v2989 = vrcp.pop %v2895
      %v2990 = vmul.f32 %v2895, %v2989
      %v2991 = vsub.f32 1.0, %v2990
      %v2992 = vmul.f32 %v2989, %v2991
      %v2993 = vadd.f32 %v2989, %v2992
      %vm2994 = vweird.f32 %v2895
      %vm2995 = vweird.f32 %v2989
      %vm2996 = vmor %vm2994, %vm2995
      %v2997 = vsel %vm2996, %v2989, %v2993
      %v2998 = vand.u32 2147483647, %v2895
      %vm2999 = vcmp.eq.f32.partialorder %v2998, 8.507059e+37
      %v3000 = vand.u32 %v2895, 2147483648
      %v3001 = vor.u32 1.1754944e-38, %v3000
      %v3002 = vsel %vm2999, %v3001, %v2997
      %v3003 = vmul.f32 %v2872, %v3002
      %v3004 = vrcp.pop %v2898
      %v3005 = vmul.f32 %v2898, %v3004
      %v3006 = vsub.f32 1.0, %v3005
      %v3007 = vmul.f32 %v3004, %v3006
      %v3008 = vadd.f32 %v3004, %v3007
      %vm3009 = vweird.f32 %v2898
      %vm3010 = vweird.f32 %v3004
      %vm3011 = vmor %vm3009, %vm3010
      %v3012 = vsel %vm3011, %v3004, %v3008
      %v3013 = vand.u32 2147483647, %v2898
      %vm3014 = vcmp.eq.f32.partialorder %v3013, 8.507059e+37
      %v3015 = vand.u32 %v2898, 2147483648
      %v3016 = vor.u32 1.1754944e-38, %v3015
      %v3017 = vsel %vm3014, %v3016, %v3012
      %v3018 = vmul.f32 %v2874, %v3017
      %v3019 = vpack.c.bf16 %v2928, %v2913
      %v3020 = vpack.c.bf16 %v2958, %v2943
      %v3021 = vpack.c.bf16 %v2988, %v2973
      %v3022 = vpack.c.bf16 %v3018, %v3003
      %3023 = vrot.lane.b32.xlu0 %v1170, 44
      %v3024 = vpop.permute.xlu0 %3023
      %3025 = vrot.lane.b32.xlu0 %v1171, 44
      %v3026 = vpop.permute.xlu0 %3025
      %3027 = vrot.lane.b32.xlu0 %v1172, 44
      %v3028 = vpop.permute.xlu0 %3027
      %3029 = vrot.lane.b32.xlu0 %v1173, 44
      %v3030 = vpop.permute.xlu0 %3029
      %v3036 = vsel %vm1236, %v3019, 0
      %v3039 = vsel %vm1236, %v3020, 0
      %v3042 = vsel %vm1236, %v3021, 0
      %v3045 = vsel %vm1236, %v3022, 0
      %3047 = vmatpush.bf16.msra.mxu0 0
      %3048 = vmatpush.bf16.msra.mxu0 0
      %3049 = vmatpush.bf16.msra.mxu0 0
      %3050 = vmatpush.bf16.msra.mxu0 0
      %3051 = vmatpush.bf16.msra.mxu0 %v3030
      %3052 = vmatpush.bf16.msra.mxu0 %v3028
      %3053 = vmatpush.bf16.msra.mxu0 %v3026
      %3054 = vmatpush.bf16.msra.mxu0 %v3024
      %3055 = vmatmul.bf16.gmra.mxu0 %v3036
      %v3056 = vpop.f32.mrf.mxu0
      %v3057 = vadd.f32 0.0, %v3056
      %v3058 = vpop.f32.mrf.mxu0
      %v3059 = vadd.f32 0.0, %v3058
      %3060 = vmatmul.bf16.gmra.mxu0 %v3039
      %v3061 = vpop.f32.mrf.mxu0
      %v3062 = vadd.f32 0.0, %v3061
      %v3063 = vpop.f32.mrf.mxu0
      %v3064 = vadd.f32 0.0, %v3063
      %3065 = vmatmul.bf16.gmra.mxu0 %v3042
      %v3066 = vpop.f32.mrf.mxu0
      %v3067 = vadd.f32 0.0, %v3066
      %v3068 = vpop.f32.mrf.mxu0
      %v3069 = vadd.f32 0.0, %v3068
      %3070 = vmatmul.bf16.gmra.mxu0 %v3045
      %v3071 = vpop.f32.mrf.mxu0
      %v3072 = vadd.f32 0.0, %v3071
      %v3073 = vpop.f32.mrf.mxu0
      %v3074 = vadd.f32 0.0, %v3073
      %3075 = vdwg.mxu0
      %3076 = vrot.lane.b32.xlu0 %v1170, 104
      %v3077 = vpop.permute.xlu0 %3076
      %3078 = vrot.lane.b32.xlu0 %v1171, 104
      %v3079 = vpop.permute.xlu0 %3078
      %3080 = vrot.lane.b32.xlu0 %v1172, 104
      %v3081 = vpop.permute.xlu0 %3080
      %3082 = vrot.lane.b32.xlu0 %v1173, 104
      %v3083 = vpop.permute.xlu0 %3082
      %3084 = vrot.lane.b32.xlu0 %v1170, 72
      %v3085 = vpop.permute.xlu0 %3084
      %3086 = vrot.lane.b32.xlu0 %v1171, 72
      %v3087 = vpop.permute.xlu0 %3086
      %3088 = vrot.lane.b32.xlu0 %v1172, 72
      %v3089 = vpop.permute.xlu0 %3088
      %3090 = vrot.lane.b32.xlu0 %v1173, 72
      %v3091 = vpop.permute.xlu0 %3090
      %v3093 = vsel %vm1182, %v3077, 0
      %v3096 = vsel %vm1182, %v3079, 0
      %v3099 = vsel %vm1182, %v3081, 0
      %v3102 = vsel %vm1182, %v3083, 0
      %v3105 = vsel %vm1182, %v3085, 0
      %v3108 = vsel %vm1182, %v3087, 0
      %v3111 = vsel %vm1182, %v3089, 0
      %v3114 = vsel %vm1182, %v3091, 0
      %3116 = vmatpush.bf16.xpose.msra.mxu0 0
      %3117 = vmatpush.bf16.xpose.msra.mxu0 0
      %3118 = vmatpush.bf16.xpose.msra.mxu0 0
      %3119 = vmatpush.bf16.xpose.msra.mxu0 0
      %3120 = vmatpush.bf16.xpose.msra.mxu0 %v3114
      %3121 = vmatpush.bf16.xpose.msra.mxu0 %v3111
      %3122 = vmatpush.bf16.xpose.msra.mxu0 %v3108
      %3123 = vmatpush.bf16.xpose.msra.mxu0 %v3105
      %3124 = vmatmul.bf16.gmra.mxu0 %v3093
      %v3125 = vpop.f32.mrf.mxu0
      %v3126 = vadd.f32 %v1146, %v3125
      %v3127 = vpop.f32.mrf.mxu0
      %v3128 = vadd.f32 %v1147, %v3127
      %3129 = vmatmul.bf16.gmra.mxu0 %v3096
      %v3130 = vpop.f32.mrf.mxu0
      %v3131 = vadd.f32 %v1148, %v3130
      %v3132 = vpop.f32.mrf.mxu0
      %v3133 = vadd.f32 %v1149, %v3132
      %3134 = vmatmul.bf16.gmra.mxu0 %v3099
      %v3135 = vpop.f32.mrf.mxu0
      %v3136 = vadd.f32 %v1150, %v3135
      %v3137 = vpop.f32.mrf.mxu0
      %v3138 = vadd.f32 %v1151, %v3137
      %3139 = vmatmul.bf16.gmra.mxu0 %v3102
      %v3140 = vpop.f32.mrf.mxu0
      %v3141 = vadd.f32 %v1152, %v3140
      %v3142 = vpop.f32.mrf.mxu0
      %v3143 = vadd.f32 %v1153, %v3142
      %3144 = vdwg.mxu0
      %v3145 = vsel %vm1236, %v3126, -inf
      %3146 = vmax.xlane.f32.xlu0 %v3145
      %v3147 = vpop.xlane.xlu0 %3146
      %v3148 = vsel %vm1236, %v3128, -inf
      %3149 = vmax.xlane.f32.xlu0 %v3148
      %v3150 = vpop.xlane.xlu0 %3149
      %v3151 = vsel %vm1236, %v3131, -inf
      %3152 = vmax.xlane.f32.xlu0 %v3151
      %v3153 = vpop.xlane.xlu0 %3152
      %v3154 = vsel %vm1236, %v3133, -inf
      %3155 = vmax.xlane.f32.xlu0 %v3154
      %v3156 = vpop.xlane.xlu0 %3155
      %v3157 = vsel %vm1236, %v3136, -inf
      %3158 = vmax.xlane.f32.xlu0 %v3157
      %v3159 = vpop.xlane.xlu0 %3158
      %v3160 = vsel %vm1236, %v3138, -inf
      %3161 = vmax.xlane.f32.xlu0 %v3160
      %v3162 = vpop.xlane.xlu0 %3161
      %v3163 = vsel %vm1236, %v3141, -inf
      %3164 = vmax.xlane.f32.xlu0 %v3163
      %v3165 = vpop.xlane.xlu0 %3164
      %v3166 = vsel %vm1236, %v3143, -inf
      %3167 = vmax.xlane.f32.xlu0 %v3166
      %v3168 = vpop.xlane.xlu0 %3167
      %v3169 = vsub.f32 %v3126, %v3147
      %v3170 = vsub.f32 %v3128, %v3150
      %v3171 = vsub.f32 %v3131, %v3153
      %v3172 = vsub.f32 %v3133, %v3156
      %v3173 = vsub.f32 %v3136, %v3159
      %v3174 = vsub.f32 %v3138, %v3162
      %v3175 = vsub.f32 %v3141, %v3165
      %v3176 = vsub.f32 %v3143, %v3168
      %v3177 = vmul.f32 %v3169, 1.442695
      %v3178 = vpow.pop %v3177
      %v3179 = vmul.f32 %v3170, 1.442695
      %v3180 = vpow.pop %v3179
      %v3181 = vmul.f32 %v3171, 1.442695
      %v3182 = vpow.pop %v3181
      %v3183 = vmul.f32 %v3172, 1.442695
      %v3184 = vpow.pop %v3183
      %v3185 = vmul.f32 %v3173, 1.442695
      %v3186 = vpow.pop %v3185
      %v3187 = vmul.f32 %v3174, 1.442695
      %v3188 = vpow.pop %v3187
      %v3189 = vmul.f32 %v3175, 1.442695
      %v3190 = vpow.pop %v3189
      %v3191 = vmul.f32 %v3176, 1.442695
      %v3192 = vpow.pop %v3191
      %v3193 = vsel %vm1236, %v3178, 0.0
      %3194 = vadd.xlane.f32.xlu0 %v3193
      %v3195 = vpop.xlane.xlu0 %3194
      %v3196 = vsel %vm1236, %v3180, 0.0
      %3197 = vadd.xlane.f32.xlu0 %v3196
      %v3198 = vpop.xlane.xlu0 %3197
      %v3199 = vsel %vm1236, %v3182, 0.0
      %3200 = vadd.xlane.f32.xlu0 %v3199
      %v3201 = vpop.xlane.xlu0 %3200
      %v3202 = vsel %vm1236, %v3184, 0.0
      %3203 = vadd.xlane.f32.xlu0 %v3202
      %v3204 = vpop.xlane.xlu0 %3203
      %v3205 = vsel %vm1236, %v3186, 0.0
      %3206 = vadd.xlane.f32.xlu0 %v3205
      %v3207 = vpop.xlane.xlu0 %3206
      %v3208 = vsel %vm1236, %v3188, 0.0
      %3209 = vadd.xlane.f32.xlu0 %v3208
      %v3210 = vpop.xlane.xlu0 %3209
      %v3211 = vsel %vm1236, %v3190, 0.0
      %3212 = vadd.xlane.f32.xlu0 %v3211
      %v3213 = vpop.xlane.xlu0 %3212
      %v3214 = vsel %vm1236, %v3192, 0.0
      %3215 = vadd.xlane.f32.xlu0 %v3214
      %v3216 = vpop.xlane.xlu0 %3215
      %v3217 = vrcp.pop %v3195
      %v3218 = vmul.f32 %v3195, %v3217
      %v3219 = vsub.f32 1.0, %v3218
      %v3220 = vmul.f32 %v3217, %v3219
      %v3221 = vadd.f32 %v3217, %v3220
      %vm3222 = vweird.f32 %v3195
      %vm3223 = vweird.f32 %v3217
      %vm3224 = vmor %vm3222, %vm3223
      %v3225 = vsel %vm3224, %v3217, %v3221
      %v3226 = vand.u32 2147483647, %v3195
      %vm3227 = vcmp.eq.f32.partialorder %v3226, 8.507059e+37
      %v3228 = vand.u32 %v3195, 2147483648
      %v3229 = vor.u32 1.1754944e-38, %v3228
      %v3230 = vsel %vm3227, %v3229, %v3225
      %v3231 = vmul.f32 %v3178, %v3230
      %v3232 = vrcp.pop %v3198
      %v3233 = vmul.f32 %v3198, %v3232
      %v3234 = vsub.f32 1.0, %v3233
      %v3235 = vmul.f32 %v3232, %v3234
      %v3236 = vadd.f32 %v3232, %v3235
      %vm3237 = vweird.f32 %v3198
      %vm3238 = vweird.f32 %v3232
      %vm3239 = vmor %vm3237, %vm3238
      %v3240 = vsel %vm3239, %v3232, %v3236
      %v3241 = vand.u32 2147483647, %v3198
      %vm3242 = vcmp.eq.f32.partialorder %v3241, 8.507059e+37
      %v3243 = vand.u32 %v3198, 2147483648
      %v3244 = vor.u32 1.1754944e-38, %v3243
      %v3245 = vsel %vm3242, %v3244, %v3240
      %v3246 = vmul.f32 %v3180, %v3245
      %v3247 = vrcp.pop %v3201
      %v3248 = vmul.f32 %v3201, %v3247
      %v3249 = vsub.f32 1.0, %v3248
      %v3250 = vmul.f32 %v3247, %v3249
      %v3251 = vadd.f32 %v3247, %v3250
      %vm3252 = vweird.f32 %v3201
      %vm3253 = vweird.f32 %v3247
      %vm3254 = vmor %vm3252, %vm3253
      %v3255 = vsel %vm3254, %v3247, %v3251
      %v3256 = vand.u32 2147483647, %v3201
      %vm3257 = vcmp.eq.f32.partialorder %v3256, 8.507059e+37
      %v3258 = vand.u32 %v3201, 2147483648
      %v3259 = vor.u32 1.1754944e-38, %v3258
      %v3260 = vsel %vm3257, %v3259, %v3255
      %v3261 = vmul.f32 %v3182, %v3260
      %v3262 = vrcp.pop %v3204
      %v3263 = vmul.f32 %v3204, %v3262
      %v3264 = vsub.f32 1.0, %v3263
      %v3265 = vmul.f32 %v3262, %v3264
      %v3266 = vadd.f32 %v3262, %v3265
      %vm3267 = vweird.f32 %v3204
      %vm3268 = vweird.f32 %v3262
      %vm3269 = vmor %vm3267, %vm3268
      %v3270 = vsel %vm3269, %v3262, %v3266
      %v3271 = vand.u32 2147483647, %v3204
      %vm3272 = vcmp.eq.f32.partialorder %v3271, 8.507059e+37
      %v3273 = vand.u32 %v3204, 2147483648
      %v3274 = vor.u32 1.1754944e-38, %v3273
      %v3275 = vsel %vm3272, %v3274, %v3270
      %v3276 = vmul.f32 %v3184, %v3275
      %v3277 = vrcp.pop %v3207
      %v3278 = vmul.f32 %v3207, %v3277
      %v3279 = vsub.f32 1.0, %v3278
      %v3280 = vmul.f32 %v3277, %v3279
      %v3281 = vadd.f32 %v3277, %v3280
      %vm3282 = vweird.f32 %v3207
      %vm3283 = vweird.f32 %v3277
      %vm3284 = vmor %vm3282, %vm3283
      %v3285 = vsel %vm3284, %v3277, %v3281
      %v3286 = vand.u32 2147483647, %v3207
      %vm3287 = vcmp.eq.f32.partialorder %v3286, 8.507059e+37
      %v3288 = vand.u32 %v3207, 2147483648
      %v3289 = vor.u32 1.1754944e-38, %v3288
      %v3290 = vsel %vm3287, %v3289, %v3285
      %v3291 = vmul.f32 %v3186, %v3290
      %v3292 = vrcp.pop %v3210
      %v3293 = vmul.f32 %v3210, %v3292
      %v3294 = vsub.f32 1.0, %v3293
      %v3295 = vmul.f32 %v3292, %v3294
      %v3296 = vadd.f32 %v3292, %v3295
      %vm3297 = vweird.f32 %v3210
      %vm3298 = vweird.f32 %v3292
      %vm3299 = vmor %vm3297, %vm3298
      %v3300 = vsel %vm3299, %v3292, %v3296
      %v3301 = vand.u32 2147483647, %v3210
      %vm3302 = vcmp.eq.f32.partialorder %v3301, 8.507059e+37
      %v3303 = vand.u32 %v3210, 2147483648
      %v3304 = vor.u32 1.1754944e-38, %v3303
      %v3305 = vsel %vm3302, %v3304, %v3300
      %v3306 = vmul.f32 %v3188, %v3305
      %v3307 = vrcp.pop %v3213
      %v3308 = vmul.f32 %v3213, %v3307
      %v3309 = vsub.f32 1.0, %v3308
      %v3310 = vmul.f32 %v3307, %v3309
      %v3311 = vadd.f32 %v3307, %v3310
      %vm3312 = vweird.f32 %v3213
      %vm3313 = vweird.f32 %v3307
      %vm3314 = vmor %vm3312, %vm3313
      %v3315 = vsel %vm3314, %v3307, %v3311
      %v3316 = vand.u32 2147483647, %v3213
      %vm3317 = vcmp.eq.f32.partialorder %v3316, 8.507059e+37
      %v3318 = vand.u32 %v3213, 2147483648
      %v3319 = vor.u32 1.1754944e-38, %v3318
      %v3320 = vsel %vm3317, %v3319, %v3315
      %v3321 = vmul.f32 %v3190, %v3320
      %v3322 = vrcp.pop %v3216
      %v3323 = vmul.f32 %v3216, %v3322
      %v3324 = vsub.f32 1.0, %v3323
      %v3325 = vmul.f32 %v3322, %v3324
      %v3326 = vadd.f32 %v3322, %v3325
      %vm3327 = vweird.f32 %v3216
      %vm3328 = vweird.f32 %v3322
      %vm3329 = vmor %vm3327, %vm3328
      %v3330 = vsel %vm3329, %v3322, %v3326
      %v3331 = vand.u32 2147483647, %v3216
      %vm3332 = vcmp.eq.f32.partialorder %v3331, 8.507059e+37
      %v3333 = vand.u32 %v3216, 2147483648
      %v3334 = vor.u32 1.1754944e-38, %v3333
      %v3335 = vsel %vm3332, %v3334, %v3330
      %v3336 = vmul.f32 %v3192, %v3335
      %v3337 = vpack.c.bf16 %v3246, %v3231
      %v3338 = vpack.c.bf16 %v3276, %v3261
      %v3339 = vpack.c.bf16 %v3306, %v3291
      %v3340 = vpack.c.bf16 %v3336, %v3321
      %3341 = vrot.lane.b32.xlu0 %v1170, 40
      %v3342 = vpop.permute.xlu0 %3341
      %3343 = vrot.lane.b32.xlu0 %v1171, 40
      %v3344 = vpop.permute.xlu0 %3343
      %3345 = vrot.lane.b32.xlu0 %v1172, 40
      %v3346 = vpop.permute.xlu0 %3345
      %3347 = vrot.lane.b32.xlu0 %v1173, 40
      %v3348 = vpop.permute.xlu0 %3347
      %v3354 = vsel %vm1236, %v3337, 0
      %v3357 = vsel %vm1236, %v3338, 0
      %v3360 = vsel %vm1236, %v3339, 0
      %v3363 = vsel %vm1236, %v3340, 0
      %3365 = vmatpush.bf16.msra.mxu0 0
      %3366 = vmatpush.bf16.msra.mxu0 0
      %3367 = vmatpush.bf16.msra.mxu0 0
      %3368 = vmatpush.bf16.msra.mxu0 0
      %3369 = vmatpush.bf16.msra.mxu0 %v3348
      %3370 = vmatpush.bf16.msra.mxu0 %v3346
      %3371 = vmatpush.bf16.msra.mxu0 %v3344
      %3372 = vmatpush.bf16.msra.mxu0 %v3342
      %3373 = vmatmul.bf16.gmra.mxu0 %v3354
      %v3374 = vpop.f32.mrf.mxu0
      %v3375 = vadd.f32 0.0, %v3374
      %v3376 = vpop.f32.mrf.mxu0
      %v3377 = vadd.f32 0.0, %v3376
      %3378 = vmatmul.bf16.gmra.mxu0 %v3357
      %v3379 = vpop.f32.mrf.mxu0
      %v3380 = vadd.f32 0.0, %v3379
      %v3381 = vpop.f32.mrf.mxu0
      %v3382 = vadd.f32 0.0, %v3381
      %3383 = vmatmul.bf16.gmra.mxu0 %v3360
      %v3384 = vpop.f32.mrf.mxu0
      %v3385 = vadd.f32 0.0, %v3384
      %v3386 = vpop.f32.mrf.mxu0
      %v3387 = vadd.f32 0.0, %v3386
      %3388 = vmatmul.bf16.gmra.mxu0 %v3363
      %v3389 = vpop.f32.mrf.mxu0
      %v3390 = vadd.f32 0.0, %v3389
      %v3391 = vpop.f32.mrf.mxu0
      %v3392 = vadd.f32 0.0, %v3391
      %3393 = vdwg.mxu0
      %3394 = vrot.lane.b32.xlu0 %v1170, 100
      %v3395 = vpop.permute.xlu0 %3394
      %3396 = vrot.lane.b32.xlu0 %v1171, 100
      %v3397 = vpop.permute.xlu0 %3396
      %3398 = vrot.lane.b32.xlu0 %v1172, 100
      %v3399 = vpop.permute.xlu0 %3398
      %3400 = vrot.lane.b32.xlu0 %v1173, 100
      %v3401 = vpop.permute.xlu0 %3400
      %3402 = vrot.lane.b32.xlu0 %v1170, 68
      %v3403 = vpop.permute.xlu0 %3402
      %3404 = vrot.lane.b32.xlu0 %v1171, 68
      %v3405 = vpop.permute.xlu0 %3404
      %3406 = vrot.lane.b32.xlu0 %v1172, 68
      %v3407 = vpop.permute.xlu0 %3406
      %3408 = vrot.lane.b32.xlu0 %v1173, 68
      %v3409 = vpop.permute.xlu0 %3408
      %v3411 = vsel %vm1182, %v3395, 0
      %v3414 = vsel %vm1182, %v3397, 0
      %v3417 = vsel %vm1182, %v3399, 0
      %v3420 = vsel %vm1182, %v3401, 0
      %v3423 = vsel %vm1182, %v3403, 0
      %v3426 = vsel %vm1182, %v3405, 0
      %v3429 = vsel %vm1182, %v3407, 0
      %v3432 = vsel %vm1182, %v3409, 0
      %3434 = vmatpush.bf16.xpose.msra.mxu0 0
      %3435 = vmatpush.bf16.xpose.msra.mxu0 0
      %3436 = vmatpush.bf16.xpose.msra.mxu0 0
      %3437 = vmatpush.bf16.xpose.msra.mxu0 0
      %3438 = vmatpush.bf16.xpose.msra.mxu0 %v3432
      %3439 = vmatpush.bf16.xpose.msra.mxu0 %v3429
      %3440 = vmatpush.bf16.xpose.msra.mxu0 %v3426
      %3441 = vmatpush.bf16.xpose.msra.mxu0 %v3423
      %3442 = vmatmul.bf16.gmra.mxu0 %v3411
      %v3443 = vpop.f32.mrf.mxu0
      %v3444 = vadd.f32 %v1146, %v3443
      %v3445 = vpop.f32.mrf.mxu0
      %v3446 = vadd.f32 %v1147, %v3445
      %3447 = vmatmul.bf16.gmra.mxu0 %v3414
      %v3448 = vpop.f32.mrf.mxu0
      %v3449 = vadd.f32 %v1148, %v3448
      %v3450 = vpop.f32.mrf.mxu0
      %v3451 = vadd.f32 %v1149, %v3450
      %3452 = vmatmul.bf16.gmra.mxu0 %v3417
      %v3453 = vpop.f32.mrf.mxu0
      %v3454 = vadd.f32 %v1150, %v3453
      %v3455 = vpop.f32.mrf.mxu0
      %v3456 = vadd.f32 %v1151, %v3455
      %3457 = vmatmul.bf16.gmra.mxu0 %v3420
      %v3458 = vpop.f32.mrf.mxu0
      %v3459 = vadd.f32 %v1152, %v3458
      %v3460 = vpop.f32.mrf.mxu0
      %v3461 = vadd.f32 %v1153, %v3460
      %3462 = vdwg.mxu0
      %v3463 = vsel %vm1236, %v3444, -inf
      %3464 = vmax.xlane.f32.xlu0 %v3463
      %v3465 = vpop.xlane.xlu0 %3464
      %v3466 = vsel %vm1236, %v3446, -inf
      %3467 = vmax.xlane.f32.xlu0 %v3466
      %v3468 = vpop.xlane.xlu0 %3467
      %v3469 = vsel %vm1236, %v3449, -inf
      %3470 = vmax.xlane.f32.xlu0 %v3469
      %v3471 = vpop.xlane.xlu0 %3470
      %v3472 = vsel %vm1236, %v3451, -inf
      %3473 = vmax.xlane.f32.xlu0 %v3472
      %v3474 = vpop.xlane.xlu0 %3473
      %v3475 = vsel %vm1236, %v3454, -inf
      %3476 = vmax.xlane.f32.xlu0 %v3475
      %v3477 = vpop.xlane.xlu0 %3476
      %v3478 = vsel %vm1236, %v3456, -inf
      %3479 = vmax.xlane.f32.xlu0 %v3478
      %v3480 = vpop.xlane.xlu0 %3479
      %v3481 = vsel %vm1236, %v3459, -inf
      %3482 = vmax.xlane.f32.xlu0 %v3481
      %v3483 = vpop.xlane.xlu0 %3482
      %v3484 = vsel %vm1236, %v3461, -inf
      %3485 = vmax.xlane.f32.xlu0 %v3484
      %v3486 = vpop.xlane.xlu0 %3485
      %v3487 = vsub.f32 %v3444, %v3465
      %v3488 = vsub.f32 %v3446, %v3468
      %v3489 = vsub.f32 %v3449, %v3471
      %v3490 = vsub.f32 %v3451, %v3474
      %v3491 = vsub.f32 %v3454, %v3477
      %v3492 = vsub.f32 %v3456, %v3480
      %v3493 = vsub.f32 %v3459, %v3483
      %v3494 = vsub.f32 %v3461, %v3486
      %v3495 = vmul.f32 %v3487, 1.442695
      %v3496 = vpow.pop %v3495
      %v3497 = vmul.f32 %v3488, 1.442695
      %v3498 = vpow.pop %v3497
      %v3499 = vmul.f32 %v3489, 1.442695
      %v3500 = vpow.pop %v3499
      %v3501 = vmul.f32 %v3490, 1.442695
      %v3502 = vpow.pop %v3501
      %v3503 = vmul.f32 %v3491, 1.442695
      %v3504 = vpow.pop %v3503
      %v3505 = vmul.f32 %v3492, 1.442695
      %v3506 = vpow.pop %v3505
      %v3507 = vmul.f32 %v3493, 1.442695
      %v3508 = vpow.pop %v3507
      %v3509 = vmul.f32 %v3494, 1.442695
      %v3510 = vpow.pop %v3509
      %v3511 = vsel %vm1236, %v3496, 0.0
      %3512 = vadd.xlane.f32.xlu0 %v3511
      %v3513 = vpop.xlane.xlu0 %3512
      %v3514 = vsel %vm1236, %v3498, 0.0
      %3515 = vadd.xlane.f32.xlu0 %v3514
      %v3516 = vpop.xlane.xlu0 %3515
      %v3517 = vsel %vm1236, %v3500, 0.0
      %3518 = vadd.xlane.f32.xlu0 %v3517
      %v3519 = vpop.xlane.xlu0 %3518
      %v3520 = vsel %vm1236, %v3502, 0.0
      %3521 = vadd.xlane.f32.xlu0 %v3520
      %v3522 = vpop.xlane.xlu0 %3521
      %v3523 = vsel %vm1236, %v3504, 0.0
      %3524 = vadd.xlane.f32.xlu0 %v3523
      %v3525 = vpop.xlane.xlu0 %3524
      %v3526 = vsel %vm1236, %v3506, 0.0
      %3527 = vadd.xlane.f32.xlu0 %v3526
      %v3528 = vpop.xlane.xlu0 %3527
      %v3529 = vsel %vm1236, %v3508, 0.0
      %3530 = vadd.xlane.f32.xlu0 %v3529
      %v3531 = vpop.xlane.xlu0 %3530
      %v3532 = vsel %vm1236, %v3510, 0.0
      %3533 = vadd.xlane.f32.xlu0 %v3532
      %v3534 = vpop.xlane.xlu0 %3533
      %v3535 = vrcp.pop %v3513
      %v3536 = vmul.f32 %v3513, %v3535
      %v3537 = vsub.f32 1.0, %v3536
      %v3538 = vmul.f32 %v3535, %v3537
      %v3539 = vadd.f32 %v3535, %v3538
      %vm3540 = vweird.f32 %v3513
      %vm3541 = vweird.f32 %v3535
      %vm3542 = vmor %vm3540, %vm3541
      %v3543 = vsel %vm3542, %v3535, %v3539
      %v3544 = vand.u32 2147483647, %v3513
      %vm3545 = vcmp.eq.f32.partialorder %v3544, 8.507059e+37
      %v3546 = vand.u32 %v3513, 2147483648
      %v3547 = vor.u32 1.1754944e-38, %v3546
      %v3548 = vsel %vm3545, %v3547, %v3543
      %v3549 = vmul.f32 %v3496, %v3548
      %v3550 = vrcp.pop %v3516
      %v3551 = vmul.f32 %v3516, %v3550
      %v3552 = vsub.f32 1.0, %v3551
      %v3553 = vmul.f32 %v3550, %v3552
      %v3554 = vadd.f32 %v3550, %v3553
      %vm3555 = vweird.f32 %v3516
      %vm3556 = vweird.f32 %v3550
      %vm3557 = vmor %vm3555, %vm3556
      %v3558 = vsel %vm3557, %v3550, %v3554
      %v3559 = vand.u32 2147483647, %v3516
      %vm3560 = vcmp.eq.f32.partialorder %v3559, 8.507059e+37
      %v3561 = vand.u32 %v3516, 2147483648
      %v3562 = vor.u32 1.1754944e-38, %v3561
      %v3563 = vsel %vm3560, %v3562, %v3558
      %v3564 = vmul.f32 %v3498, %v3563
      %v3565 = vrcp.pop %v3519
      %v3566 = vmul.f32 %v3519, %v3565
      %v3567 = vsub.f32 1.0, %v3566
      %v3568 = vmul.f32 %v3565, %v3567
      %v3569 = vadd.f32 %v3565, %v3568
      %vm3570 = vweird.f32 %v3519
      %vm3571 = vweird.f32 %v3565
      %vm3572 = vmor %vm3570, %vm3571
      %v3573 = vsel %vm3572, %v3565, %v3569
      %v3574 = vand.u32 2147483647, %v3519
      %vm3575 = vcmp.eq.f32.partialorder %v3574, 8.507059e+37
      %v3576 = vand.u32 %v3519, 2147483648
      %v3577 = vor.u32 1.1754944e-38, %v3576
      %v3578 = vsel %vm3575, %v3577, %v3573
      %v3579 = vmul.f32 %v3500, %v3578
      %v3580 = vrcp.pop %v3522
      %v3581 = vmul.f32 %v3522, %v3580
      %v3582 = vsub.f32 1.0, %v3581
      %v3583 = vmul.f32 %v3580, %v3582
      %v3584 = vadd.f32 %v3580, %v3583
      %vm3585 = vweird.f32 %v3522
      %vm3586 = vweird.f32 %v3580
      %vm3587 = vmor %vm3585, %vm3586
      %v3588 = vsel %vm3587, %v3580, %v3584
      %v3589 = vand.u32 2147483647, %v3522
      %vm3590 = vcmp.eq.f32.partialorder %v3589, 8.507059e+37
      %v3591 = vand.u32 %v3522, 2147483648
      %v3592 = vor.u32 1.1754944e-38, %v3591
      %v3593 = vsel %vm3590, %v3592, %v3588
      %v3594 = vmul.f32 %v3502, %v3593
      %v3595 = vrcp.pop %v3525
      %v3596 = vmul.f32 %v3525, %v3595
      %v3597 = vsub.f32 1.0, %v3596
      %v3598 = vmul.f32 %v3595, %v3597
      %v3599 = vadd.f32 %v3595, %v3598
      %vm3600 = vweird.f32 %v3525
      %vm3601 = vweird.f32 %v3595
      %vm3602 = vmor %vm3600, %vm3601
      %v3603 = vsel %vm3602, %v3595, %v3599
      %v3604 = vand.u32 2147483647, %v3525
      %vm3605 = vcmp.eq.f32.partialorder %v3604, 8.507059e+37
      %v3606 = vand.u32 %v3525, 2147483648
      %v3607 = vor.u32 1.1754944e-38, %v3606
      %v3608 = vsel %vm3605, %v3607, %v3603
      %v3609 = vmul.f32 %v3504, %v3608
      %v3610 = vrcp.pop %v3528
      %v3611 = vmul.f32 %v3528, %v3610
      %v3612 = vsub.f32 1.0, %v3611
      %v3613 = vmul.f32 %v3610, %v3612
      %v3614 = vadd.f32 %v3610, %v3613
      %vm3615 = vweird.f32 %v3528
      %vm3616 = vweird.f32 %v3610
      %vm3617 = vmor %vm3615, %vm3616
      %v3618 = vsel %vm3617, %v3610, %v3614
      %v3619 = vand.u32 2147483647, %v3528
      %vm3620 = vcmp.eq.f32.partialorder %v3619, 8.507059e+37
      %v3621 = vand.u32 %v3528, 2147483648
      %v3622 = vor.u32 1.1754944e-38, %v3621
      %v3623 = vsel %vm3620, %v3622, %v3618
      %v3624 = vmul.f32 %v3506, %v3623
      %v3625 = vrcp.pop %v3531
      %v3626 = vmul.f32 %v3531, %v3625
      %v3627 = vsub.f32 1.0, %v3626
      %v3628 = vmul.f32 %v3625, %v3627
      %v3629 = vadd.f32 %v3625, %v3628
      %vm3630 = vweird.f32 %v3531
      %vm3631 = vweird.f32 %v3625
      %vm3632 = vmor %vm3630, %vm3631
      %v3633 = vsel %vm3632, %v3625, %v3629
      %v3634 = vand.u32 2147483647, %v3531
      %vm3635 = vcmp.eq.f32.partialorder %v3634, 8.507059e+37
      %v3636 = vand.u32 %v3531, 2147483648
      %v3637 = vor.u32 1.1754944e-38, %v3636
      %v3638 = vsel %vm3635, %v3637, %v3633
      %v3639 = vmul.f32 %v3508, %v3638
      %v3640 = vrcp.pop %v3534
      %v3641 = vmul.f32 %v3534, %v3640
      %v3642 = vsub.f32 1.0, %v3641
      %v3643 = vmul.f32 %v3640, %v3642
      %v3644 = vadd.f32 %v3640, %v3643
      %vm3645 = vweird.f32 %v3534
      %vm3646 = vweird.f32 %v3640
      %vm3647 = vmor %vm3645, %vm3646
      %v3648 = vsel %vm3647, %v3640, %v3644
      %v3649 = vand.u32 2147483647, %v3534
      %vm3650 = vcmp.eq.f32.partialorder %v3649, 8.507059e+37
      %v3651 = vand.u32 %v3534, 2147483648
      %v3652 = vor.u32 1.1754944e-38, %v3651
      %v3653 = vsel %vm3650, %v3652, %v3648
      %v3654 = vmul.f32 %v3510, %v3653
      %v3655 = vpack.c.bf16 %v3564, %v3549
      %v3656 = vpack.c.bf16 %v3594, %v3579
      %v3657 = vpack.c.bf16 %v3624, %v3609
      %v3658 = vpack.c.bf16 %v3654, %v3639
      %3659 = vrot.lane.b32.xlu0 %v1170, 36
      %v3660 = vpop.permute.xlu0 %3659
      %3661 = vrot.lane.b32.xlu0 %v1171, 36
      %v3662 = vpop.permute.xlu0 %3661
      %3663 = vrot.lane.b32.xlu0 %v1172, 36
      %v3664 = vpop.permute.xlu0 %3663
      %3665 = vrot.lane.b32.xlu0 %v1173, 36
      %v3666 = vpop.permute.xlu0 %3665
      %v3672 = vsel %vm1236, %v3655, 0
      %v3675 = vsel %vm1236, %v3656, 0
      %v3678 = vsel %vm1236, %v3657, 0
      %v3681 = vsel %vm1236, %v3658, 0
      %3683 = vmatpush.bf16.msra.mxu0 0
      %3684 = vmatpush.bf16.msra.mxu0 0
      %3685 = vmatpush.bf16.msra.mxu0 0
      %3686 = vmatpush.bf16.msra.mxu0 0
      %3687 = vmatpush.bf16.msra.mxu0 %v3666
      %3688 = vmatpush.bf16.msra.mxu0 %v3664
      %3689 = vmatpush.bf16.msra.mxu0 %v3662
      %3690 = vmatpush.bf16.msra.mxu0 %v3660
      %3691 = vmatmul.bf16.gmra.mxu0 %v3672
      %v3692 = vpop.f32.mrf.mxu0
      %v3693 = vadd.f32 0.0, %v3692
      %v3694 = vpop.f32.mrf.mxu0
      %v3695 = vadd.f32 0.0, %v3694
      %3696 = vmatmul.bf16.gmra.mxu0 %v3675
      %v3697 = vpop.f32.mrf.mxu0
      %v3698 = vadd.f32 0.0, %v3697
      %v3699 = vpop.f32.mrf.mxu0
      %v3700 = vadd.f32 0.0, %v3699
      %3701 = vmatmul.bf16.gmra.mxu0 %v3678
      %v3702 = vpop.f32.mrf.mxu0
      %v3703 = vadd.f32 0.0, %v3702
      %v3704 = vpop.f32.mrf.mxu0
      %v3705 = vadd.f32 0.0, %v3704
      %3706 = vmatmul.bf16.gmra.mxu0 %v3681
      %v3707 = vpop.f32.mrf.mxu0
      %v3708 = vadd.f32 0.0, %v3707
      %v3709 = vpop.f32.mrf.mxu0
      %v3710 = vadd.f32 0.0, %v3709
      %3711 = vdwg.mxu0
      %3720 = vrot.lane.b32.xlu0 %v1785, 4
      %v3721 = vpop.permute.xlu0 %3720
      %3722 = vrot.lane.b32.xlu0 %v1787, 4
      %v3723 = vpop.permute.xlu0 %3722
      %3724 = vrot.lane.b32.xlu0 %v1790, 4
      %v3725 = vpop.permute.xlu0 %3724
      %3726 = vrot.lane.b32.xlu0 %v1792, 4
      %v3727 = vpop.permute.xlu0 %3726
      %3728 = vrot.lane.b32.xlu0 %v1795, 4
      %v3729 = vpop.permute.xlu0 %3728
      %3730 = vrot.lane.b32.xlu0 %v1797, 4
      %v3731 = vpop.permute.xlu0 %3730
      %3732 = vrot.lane.b32.xlu0 %v1800, 4
      %v3733 = vpop.permute.xlu0 %3732
      %3734 = vrot.lane.b32.xlu0 %v1802, 4
      %v3735 = vpop.permute.xlu0 %3734
      %3752 = vrot.lane.b32.xlu0 %v2103, 8
      %v3753 = vpop.permute.xlu0 %3752
      %3754 = vrot.lane.b32.xlu0 %v2105, 8
      %v3755 = vpop.permute.xlu0 %3754
      %3756 = vrot.lane.b32.xlu0 %v2108, 8
      %v3757 = vpop.permute.xlu0 %3756
      %3758 = vrot.lane.b32.xlu0 %v2110, 8
      %v3759 = vpop.permute.xlu0 %3758
      %3760 = vrot.lane.b32.xlu0 %v2113, 8
      %v3761 = vpop.permute.xlu0 %3760
      %3762 = vrot.lane.b32.xlu0 %v2115, 8
      %v3763 = vpop.permute.xlu0 %3762
      %3764 = vrot.lane.b32.xlu0 %v2118, 8
      %v3765 = vpop.permute.xlu0 %3764
      %3766 = vrot.lane.b32.xlu0 %v2120, 8
      %v3767 = vpop.permute.xlu0 %3766
      %3784 = vrot.lane.b32.xlu0 %v2421, 12
      %v3785 = vpop.permute.xlu0 %3784
      %3786 = vrot.lane.b32.xlu0 %v2423, 12
      %v3787 = vpop.permute.xlu0 %3786
      %3788 = vrot.lane.b32.xlu0 %v2426, 12
      %v3789 = vpop.permute.xlu0 %3788
      %3790 = vrot.lane.b32.xlu0 %v2428, 12
      %v3791 = vpop.permute.xlu0 %3790
      %3792 = vrot.lane.b32.xlu0 %v2431, 12
      %v3793 = vpop.permute.xlu0 %3792
      %3794 = vrot.lane.b32.xlu0 %v2433, 12
      %v3795 = vpop.permute.xlu0 %3794
      %3796 = vrot.lane.b32.xlu0 %v2436, 12
      %v3797 = vpop.permute.xlu0 %3796
      %3798 = vrot.lane.b32.xlu0 %v2438, 12
      %v3799 = vpop.permute.xlu0 %3798
      %3816 = vrot.lane.b32.xlu0 %v2739, 16
      %v3817 = vpop.permute.xlu0 %3816
      %3818 = vrot.lane.b32.xlu0 %v2741, 16
      %v3819 = vpop.permute.xlu0 %3818
      %3820 = vrot.lane.b32.xlu0 %v2744, 16
      %v3821 = vpop.permute.xlu0 %3820
      %3822 = vrot.lane.b32.xlu0 %v2746, 16
      %v3823 = vpop.permute.xlu0 %3822
      %3824 = vrot.lane.b32.xlu0 %v2749, 16
      %v3825 = vpop.permute.xlu0 %3824
      %3826 = vrot.lane.b32.xlu0 %v2751, 16
      %v3827 = vpop.permute.xlu0 %3826
      %3828 = vrot.lane.b32.xlu0 %v2754, 16
      %v3829 = vpop.permute.xlu0 %3828
      %3830 = vrot.lane.b32.xlu0 %v2756, 16
      %v3831 = vpop.permute.xlu0 %3830
      %3848 = vrot.lane.b32.xlu0 %v3057, 20
      %v3849 = vpop.permute.xlu0 %3848
      %3850 = vrot.lane.b32.xlu0 %v3059, 20
      %v3851 = vpop.permute.xlu0 %3850
      %3852 = vrot.lane.b32.xlu0 %v3062, 20
      %v3853 = vpop.permute.xlu0 %3852
      %3854 = vrot.lane.b32.xlu0 %v3064, 20
      %v3855 = vpop.permute.xlu0 %3854
      %3856 = vrot.lane.b32.xlu0 %v3067, 20
      %v3857 = vpop.permute.xlu0 %3856
      %3858 = vrot.lane.b32.xlu0 %v3069, 20
      %v3859 = vpop.permute.xlu0 %3858
      %3860 = vrot.lane.b32.xlu0 %v3072, 20
      %v3861 = vpop.permute.xlu0 %3860
      %3862 = vrot.lane.b32.xlu0 %v3074, 20
      %v3863 = vpop.permute.xlu0 %3862
      %3880 = vrot.lane.b32.xlu0 %v3375, 24
      %v3881 = vpop.permute.xlu0 %3880
      %3882 = vrot.lane.b32.xlu0 %v3377, 24
      %v3883 = vpop.permute.xlu0 %3882
      %3884 = vrot.lane.b32.xlu0 %v3380, 24
      %v3885 = vpop.permute.xlu0 %3884
      %3886 = vrot.lane.b32.xlu0 %v3382, 24
      %v3887 = vpop.permute.xlu0 %3886
      %3888 = vrot.lane.b32.xlu0 %v3385, 24
      %v3889 = vpop.permute.xlu0 %3888
      %3890 = vrot.lane.b32.xlu0 %v3387, 24
      %v3891 = vpop.permute.xlu0 %3890
      %3892 = vrot.lane.b32.xlu0 %v3390, 24
      %v3893 = vpop.permute.xlu0 %3892
      %3894 = vrot.lane.b32.xlu0 %v3392, 24
      %v3895 = vpop.permute.xlu0 %3894
      %3912 = vrot.lane.b32.xlu0 %v3693, 28
      %v3913 = vpop.permute.xlu0 %3912
      %3914 = vrot.lane.b32.xlu0 %v3695, 28
      %v3915 = vpop.permute.xlu0 %3914
      %3916 = vrot.lane.b32.xlu0 %v3698, 28
      %v3917 = vpop.permute.xlu0 %3916
      %3918 = vrot.lane.b32.xlu0 %v3700, 28
      %v3919 = vpop.permute.xlu0 %3918
      %3920 = vrot.lane.b32.xlu0 %v3703, 28
      %v3921 = vpop.permute.xlu0 %3920
      %3922 = vrot.lane.b32.xlu0 %v3705, 28
      %v3923 = vpop.permute.xlu0 %3922
      %3924 = vrot.lane.b32.xlu0 %v3708, 28
      %v3925 = vpop.permute.xlu0 %3924
      %3926 = vrot.lane.b32.xlu0 %v3710, 28
      %v3927 = vpop.permute.xlu0 %3926
      %v3936 = vsel %vm1182, %v1467, %v3721
      %v3937 = vsel %vm1182, %v1469, %v3723
      %v3938 = vsel %vm1182, %v1472, %v3725
      %v3939 = vsel %vm1182, %v1474, %v3727
      %v3940 = vsel %vm1182, %v1477, %v3729
      %v3941 = vsel %vm1182, %v1479, %v3731
      %v3942 = vsel %vm1182, %v1482, %v3733
      %v3943 = vsel %vm1182, %v1484, %v3735
      %vm3944 = vcmask 64512
      %v3945 = vsel %vm3944, %v3936, %v3753
      %v3946 = vsel %vm3944, %v3937, %v3755
      %v3947 = vsel %vm3944, %v3938, %v3757
      %v3948 = vsel %vm3944, %v3939, %v3759
      %v3949 = vsel %vm3944, %v3940, %v3761
      %v3950 = vsel %vm3944, %v3941, %v3763
      %v3951 = vsel %vm3944, %v3942, %v3765
      %v3952 = vsel %vm3944, %v3943, %v3767
      %vm3953 = vcmask 97280
      %v3954 = vsel %vm3953, %v3945, %v3785
      %v3955 = vsel %vm3953, %v3946, %v3787
      %v3956 = vsel %vm3953, %v3947, %v3789
      %v3957 = vsel %vm3953, %v3948, %v3791
      %v3958 = vsel %vm3953, %v3949, %v3793
      %v3959 = vsel %vm3953, %v3950, %v3795
      %v3960 = vsel %vm3953, %v3951, %v3797
      %v3961 = vsel %vm3953, %v3952, %v3799
      %vm3962 = vcmask 130048
      %v3963 = vsel %vm3962, %v3954, %v3817
      %v3964 = vsel %vm3962, %v3955, %v3819
      %v3965 = vsel %vm3962, %v3956, %v3821
      %v3966 = vsel %vm3962, %v3957, %v3823
      %v3967 = vsel %vm3962, %v3958, %v3825
      %v3968 = vsel %vm3962, %v3959, %v3827
      %v3969 = vsel %vm3962, %v3960, %v3829
      %v3970 = vsel %vm3962, %v3961, %v3831
      %vm3971 = vcmask 162816
      %v3972 = vsel %vm3971, %v3963, %v3849
      %v3973 = vsel %vm3971, %v3964, %v3851
      %v3974 = vsel %vm3971, %v3965, %v3853
      %v3975 = vsel %vm3971, %v3966, %v3855
      %v3976 = vsel %vm3971, %v3967, %v3857
      %v3977 = vsel %vm3971, %v3968, %v3859
      %v3978 = vsel %vm3971, %v3969, %v3861
      %v3979 = vsel %vm3971, %v3970, %v3863
      %vm3980 = vcmask 195584
      %v3981 = vsel %vm3980, %v3972, %v3881
      %v3982 = vsel %vm3980, %v3973, %v3883
      %v3983 = vsel %vm3980, %v3974, %v3885
      %v3984 = vsel %vm3980, %v3975, %v3887
      %v3985 = vsel %vm3980, %v3976, %v3889
      %v3986 = vsel %vm3980, %v3977, %v3891
      %v3987 = vsel %vm3980, %v3978, %v3893
      %v3988 = vsel %vm3980, %v3979, %v3895
      %vm3989 = vcmask 228352
      %v3990 = vsel %vm3989, %v3981, %v3913
      %v3991 = vsel %vm3989, %v3982, %v3915
      %v3992 = vsel %vm3989, %v3983, %v3917
      %v3993 = vsel %vm3989, %v3984, %v3919
      %v3994 = vsel %vm3989, %v3985, %v3921
      %v3995 = vsel %vm3989, %v3986, %v3923
      %v3996 = vsel %vm3989, %v3987, %v3925
      %v3997 = vsel %vm3989, %v3988, %v3927
      %v3998 = vpack.c.bf16 %v3991, %v3990
      %v3999 = vpack.c.bf16 %v3993, %v3992
      %v4000 = vpack.c.bf16 %v3995, %v3994
      %v4001 = vpack.c.bf16 %v3997, %v3996
      %v4002 = vld [vmem:[%s7] sm:$0xf]
      %v4003 = vld [vmem:[%s7 + $0x4] sm:$0xf]
      %v4004 = vld [vmem:[%s7 + $0x8] sm:$0xf]
      %v4005 = vld [vmem:[%s7 + $0xc] sm:$0xf]
      %v4006 = vld [vmem:[%s8] sm:$0x1]
      %v4008 = vperm.slane %v4006, 0
      %v4014 = vunpack.c.l.b16 %v4002
      %v4015 = vunpack.c.l.b16 %v4003
      %v4016 = vunpack.c.l.b16 %v4004
      %v4017 = vunpack.c.l.b16 %v4005
      %v4018 = vpack.c.b16 %v4015, %v4014
      %v4019 = vpack.c.b16 %v4017, %v4016
      %v4023 = vsel %vm533, %v3998, 0
      %v4026 = vsel %vm533, %v3999, 0
      %v4029 = vsel %vm533, %v4000, 0
      %v4032 = vsel %vm533, %v4001, 0
      %4034 = vmatpush.bf16.msra.mxu0 0
      %4035 = vmatpush.bf16.msra.mxu0 0
      %4036 = vmatpush.bf16.msra.mxu0 0
      %4037 = vmatpush.bf16.msra.mxu0 0
      %4038 = vmatpush.bf16.msra.mxu0 0
      %4039 = vmatpush.bf16.msra.mxu0 0
      %4040 = vmatpush.bf16.msra.mxu0 %v4019
      %4041 = vmatpush.bf16.msra.mxu0 %v4018
      %4042 = vmatmul.bf16.gmra.mxu0 %v4023
      %v4043 = vpop.f32.mrf.mxu0
      %v4044 = vadd.f32 %v4008, %v4043
      %v4045 = vpop.f32.mrf.mxu0
      %v4046 = vadd.f32 %v4008, %v4045
      %4047 = vmatmul.bf16.gmra.mxu0 %v4026
      %v4048 = vpop.f32.mrf.mxu0
      %v4049 = vadd.f32 %v4008, %v4048
      %v4050 = vpop.f32.mrf.mxu0
      %v4051 = vadd.f32 %v4008, %v4050
      %4052 = vmatmul.bf16.gmra.mxu0 %v4029
      %v4053 = vpop.f32.mrf.mxu0
      %v4054 = vadd.f32 %v4008, %v4053
      %v4055 = vpop.f32.mrf.mxu0
      %v4056 = vadd.f32 %v4008, %v4055
      %4057 = vmatmul.bf16.gmra.mxu0 %v4032
      %v4058 = vpop.f32.mrf.mxu0
      %v4059 = vadd.f32 %v4008, %v4058
      %v4060 = vpop.f32.mrf.mxu0
      %v4061 = vadd.f32 %v4008, %v4060
      %4062 = vdwg.mxu0
      %v4063 = vadd.f32 %v854, %v4044
      %v4064 = vadd.f32 %v855, %v4046
      %v4065 = vadd.f32 %v856, %v4049
      %v4066 = vadd.f32 %v857, %v4051
      %v4067 = vadd.f32 %v858, %v4054
      %v4068 = vadd.f32 %v859, %v4056
      %v4069 = vadd.f32 %v860, %v4059
      %v4070 = vadd.f32 %v861, %v4061
      %4071 = vst.msk [vmem:[%s510] sm:$0xff] %vm533, %v4063
      %4072 = vst.msk [vmem:[%s510 + $0x8] sm:$0xff] %vm533, %v4064
      %4073 = vst.msk [vmem:[%s510 + $0x10] sm:$0xff] %vm533, %v4065
      %4074 = vst.msk [vmem:[%s510 + $0x18] sm:$0xff] %vm533, %v4066
      %4075 = vst.msk [vmem:[%s510 + $0x20] sm:$0xff] %vm533, %v4067
      %4076 = vst.msk [vmem:[%s510 + $0x28] sm:$0xff] %vm533, %v4068
      %4077 = vst.msk [vmem:[%s510 + $0x30] sm:$0xff] %vm533, %v4069
      %4078 = vst.msk [vmem:[%s510 + $0x38] sm:$0xff] %vm533, %v4070
      %v4079 = vld [vmem:[%s9] sm:$0x1]
      %v4080 = vld [vmem:[%s10] sm:$0x1]
      %v4081 = vsel %vm533, %v4063, 0.0
      %4082 = vadd.xlane.f32.xlu0 %v4081
      %v4083 = vpop.xlane.xlu0 %4082
      %v4084 = vsel %vm533, %v4064, 0.0
      %4085 = vadd.xlane.f32.xlu0 %v4084
      %v4086 = vpop.xlane.xlu0 %4085
      %v4087 = vsel %vm533, %v4065, 0.0
      %4088 = vadd.xlane.f32.xlu0 %v4087
      %v4089 = vpop.xlane.xlu0 %4088
      %v4090 = vsel %vm533, %v4066, 0.0
      %4091 = vadd.xlane.f32.xlu0 %v4090
      %v4092 = vpop.xlane.xlu0 %4091
      %v4093 = vsel %vm533, %v4067, 0.0
      %4094 = vadd.xlane.f32.xlu0 %v4093
      %v4095 = vpop.xlane.xlu0 %4094
      %v4096 = vsel %vm533, %v4068, 0.0
      %4097 = vadd.xlane.f32.xlu0 %v4096
      %v4098 = vpop.xlane.xlu0 %4097
      %v4099 = vsel %vm533, %v4069, 0.0
      %4100 = vadd.xlane.f32.xlu0 %v4099
      %v4101 = vpop.xlane.xlu0 %4100
      %v4102 = vsel %vm533, %v4070, 0.0
      %4103 = vadd.xlane.f32.xlu0 %v4102
      %v4104 = vpop.xlane.xlu0 %4103
      %v4105 = vmul.f32 %v4083, %v894
      %v4106 = vmul.f32 %v4086, %v894
      %v4107 = vmul.f32 %v4089, %v894
      %v4108 = vmul.f32 %v4092, %v894
      %v4109 = vmul.f32 %v4095, %v894
      %v4110 = vmul.f32 %v4098, %v894
      %v4111 = vmul.f32 %v4101, %v894
      %v4112 = vmul.f32 %v4104, %v894
      %v4113 = vsub.f32 %v4063, %v4105
      %v4114 = vsub.f32 %v4064, %v4106
      %v4115 = vsub.f32 %v4065, %v4107
      %v4116 = vsub.f32 %v4066, %v4108
      %v4117 = vsub.f32 %v4067, %v4109
      %v4118 = vsub.f32 %v4068, %v4110
      %v4119 = vsub.f32 %v4069, %v4111
      %v4120 = vsub.f32 %v4070, %v4112
      %v4121 = vmul.f32 %v4113, %v4113
      %v4122 = vmul.f32 %v4114, %v4114
      %v4123 = vmul.f32 %v4115, %v4115
      %v4124 = vmul.f32 %v4116, %v4116
      %v4125 = vmul.f32 %v4117, %v4117
      %v4126 = vmul.f32 %v4118, %v4118
      %v4127 = vmul.f32 %v4119, %v4119
      %v4128 = vmul.f32 %v4120, %v4120
      %v4129 = vsel %vm533, %v4121, 0.0
      %4130 = vadd.xlane.f32.xlu0 %v4129
      %v4131 = vpop.xlane.xlu0 %4130
      %v4132 = vsel %vm533, %v4122, 0.0
      %4133 = vadd.xlane.f32.xlu0 %v4132
      %v4134 = vpop.xlane.xlu0 %4133
      %v4135 = vsel %vm533, %v4123, 0.0
      %4136 = vadd.xlane.f32.xlu0 %v4135
      %v4137 = vpop.xlane.xlu0 %4136
      %v4138 = vsel %vm533, %v4124, 0.0
      %4139 = vadd.xlane.f32.xlu0 %v4138
      %v4140 = vpop.xlane.xlu0 %4139
      %v4141 = vsel %vm533, %v4125, 0.0
      %4142 = vadd.xlane.f32.xlu0 %v4141
      %v4143 = vpop.xlane.xlu0 %4142
      %v4144 = vsel %vm533, %v4126, 0.0
      %4145 = vadd.xlane.f32.xlu0 %v4144
      %v4146 = vpop.xlane.xlu0 %4145
      %v4147 = vsel %vm533, %v4127, 0.0
      %4148 = vadd.xlane.f32.xlu0 %v4147
      %v4149 = vpop.xlane.xlu0 %4148
      %v4150 = vsel %vm533, %v4128, 0.0
      %4151 = vadd.xlane.f32.xlu0 %v4150
      %v4152 = vpop.xlane.xlu0 %4151
      %v4153 = vmul.f32 %v4131, %v894
      %v4154 = vmul.f32 %v4134, %v894
      %v4155 = vmul.f32 %v4137, %v894
      %v4156 = vmul.f32 %v4140, %v894
      %v4157 = vmul.f32 %v4143, %v894
      %v4158 = vmul.f32 %v4146, %v894
      %v4159 = vmul.f32 %v4149, %v894
      %v4160 = vmul.f32 %v4152, %v894
      %v4161 = vadd.f32 %v4153, 1e-05
      %v4162 = vadd.f32 %v4154, 1e-05
      %v4163 = vadd.f32 %v4155, 1e-05
      %v4164 = vadd.f32 %v4156, 1e-05
      %v4165 = vadd.f32 %v4157, 1e-05
      %v4166 = vadd.f32 %v4158, 1e-05
      %v4167 = vadd.f32 %v4159, 1e-05
      %v4168 = vadd.f32 %v4160, 1e-05
      %v4169 = vrsqrt.pop %v4161
      %v4170 = vmul.f32 %v4169, %v4161
      %v4171 = vmul.f32 %v4170, %v4169
      %v4172 = vmul.f32 0.5, %v4171
      %v4173 = vsub.f32 1.5, %v4172
      %v4174 = vmul.f32 %v4169, %v4173
      %vm4175 = vweird.f32 %v4161
      %vm4176 = vweird.f32 %v4169
      %vm4177 = vmor %vm4175, %vm4176
      %v4178 = vsel %vm4177, %v4169, %v4174
      %v4179 = vrsqrt.pop %v4162
      %v4180 = vmul.f32 %v4179, %v4162
      %v4181 = vmul.f32 %v4180, %v4179
      %v4182 = vmul.f32 0.5, %v4181
      %v4183 = vsub.f32 1.5, %v4182
      %v4184 = vmul.f32 %v4179, %v4183
      %vm4185 = vweird.f32 %v4162
      %vm4186 = vweird.f32 %v4179
      %vm4187 = vmor %vm4185, %vm4186
      %v4188 = vsel %vm4187, %v4179, %v4184
      %v4189 = vrsqrt.pop %v4163
      %v4190 = vmul.f32 %v4189, %v4163
      %v4191 = vmul.f32 %v4190, %v4189
      %v4192 = vmul.f32 0.5, %v4191
      %v4193 = vsub.f32 1.5, %v4192
      %v4194 = vmul.f32 %v4189, %v4193
      %vm4195 = vweird.f32 %v4163
      %vm4196 = vweird.f32 %v4189
      %vm4197 = vmor %vm4195, %vm4196
      %v4198 = vsel %vm4197, %v4189, %v4194
      %v4199 = vrsqrt.pop %v4164
      %v4200 = vmul.f32 %v4199, %v4164
      %v4201 = vmul.f32 %v4200, %v4199
      %v4202 = vmul.f32 0.5, %v4201
      %v4203 = vsub.f32 1.5, %v4202
      %v4204 = vmul.f32 %v4199, %v4203
      %vm4205 = vweird.f32 %v4164
      %vm4206 = vweird.f32 %v4199
      %vm4207 = vmor %vm4205, %vm4206
      %v4208 = vsel %vm4207, %v4199, %v4204
      %v4209 = vrsqrt.pop %v4165
      %v4210 = vmul.f32 %v4209, %v4165
      %v4211 = vmul.f32 %v4210, %v4209
      %v4212 = vmul.f32 0.5, %v4211
      %v4213 = vsub.f32 1.5, %v4212
      %v4214 = vmul.f32 %v4209, %v4213
      %vm4215 = vweird.f32 %v4165
      %vm4216 = vweird.f32 %v4209
      %vm4217 = vmor %vm4215, %vm4216
      %v4218 = vsel %vm4217, %v4209, %v4214
      %v4219 = vrsqrt.pop %v4166
      %v4220 = vmul.f32 %v4219, %v4166
      %v4221 = vmul.f32 %v4220, %v4219
      %v4222 = vmul.f32 0.5, %v4221
      %v4223 = vsub.f32 1.5, %v4222
      %v4224 = vmul.f32 %v4219, %v4223
      %vm4225 = vweird.f32 %v4166
      %vm4226 = vweird.f32 %v4219
      %vm4227 = vmor %vm4225, %vm4226
      %v4228 = vsel %vm4227, %v4219, %v4224
      %v4229 = vrsqrt.pop %v4167
      %v4230 = vmul.f32 %v4229, %v4167
      %v4231 = vmul.f32 %v4230, %v4229
      %v4232 = vmul.f32 0.5, %v4231
      %v4233 = vsub.f32 1.5, %v4232
      %v4234 = vmul.f32 %v4229, %v4233
      %vm4235 = vweird.f32 %v4167
      %vm4236 = vweird.f32 %v4229
      %vm4237 = vmor %vm4235, %vm4236
      %v4238 = vsel %vm4237, %v4229, %v4234
      %v4239 = vrsqrt.pop %v4168
      %v4240 = vmul.f32 %v4239, %v4168
      %v4241 = vmul.f32 %v4240, %v4239
      %v4242 = vmul.f32 0.5, %v4241
      %v4243 = vsub.f32 1.5, %v4242
      %v4244 = vmul.f32 %v4239, %v4243
      %vm4245 = vweird.f32 %v4168
      %vm4246 = vweird.f32 %v4239
      %vm4247 = vmor %vm4245, %vm4246
      %v4248 = vsel %vm4247, %v4239, %v4244
      %v4249 = vmul.f32 %v4113, %v4178
      %v4250 = vmul.f32 %v4114, %v4188
      %v4251 = vmul.f32 %v4115, %v4198
      %v4252 = vmul.f32 %v4116, %v4208
      %v4253 = vmul.f32 %v4117, %v4218
      %v4254 = vmul.f32 %v4118, %v4228
      %v4255 = vmul.f32 %v4119, %v4238
      %v4256 = vmul.f32 %v4120, %v4248
      %v4258 = vperm.slane %v4079, 0
      %v4260 = vmul.f32 %v4249, %v4258
      %v4261 = vmul.f32 %v4250, %v4258
      %v4262 = vmul.f32 %v4251, %v4258
      %v4263 = vmul.f32 %v4252, %v4258
      %v4264 = vmul.f32 %v4253, %v4258
      %v4265 = vmul.f32 %v4254, %v4258
      %v4266 = vmul.f32 %v4255, %v4258
      %v4267 = vmul.f32 %v4256, %v4258
      %v4269 = vperm.slane %v4080, 0
      %v4271 = vadd.f32 %v4260, %v4269
      %v4272 = vadd.f32 %v4261, %v4269
      %v4273 = vadd.f32 %v4262, %v4269
      %v4274 = vadd.f32 %v4263, %v4269
      %v4275 = vadd.f32 %v4264, %v4269
      %v4276 = vadd.f32 %v4265, %v4269
      %v4277 = vadd.f32 %v4266, %v4269
      %v4278 = vadd.f32 %v4267, %v4269
      %v4279 = vpack.c.bf16 %v4272, %v4271
      %v4280 = vpack.c.bf16 %v4274, %v4273
      %v4281 = vpack.c.bf16 %v4276, %v4275
      %v4282 = vpack.c.bf16 %v4278, %v4277
      %v4283 = vld [vmem:[%s11] sm:$0xf]
      %v4284 = vld [vmem:[%s11 + $0x4] sm:$0xf]
      %v4285 = vld [vmem:[%s11 + $0x8] sm:$0xf]
      %v4286 = vld [vmem:[%s11 + $0xc] sm:$0xf]
      %v4287 = vld [vmem:[%s12] sm:$0x1]
      %v4289 = vperm.slane %v4287, 0
      %v4295 = vunpack.c.l.b16 %v4283
      %v4296 = vunpack.c.l.b16 %v4284
      %v4297 = vunpack.c.l.b16 %v4285
      %v4298 = vunpack.c.l.b16 %v4286
      %v4299 = vpack.c.b16 %v4296, %v4295
      %v4300 = vpack.c.b16 %v4298, %v4297
      %v4304 = vsel %vm533, %v4279, 0
      %v4307 = vsel %vm533, %v4280, 0
      %v4310 = vsel %vm533, %v4281, 0
      %v4313 = vsel %vm533, %v4282, 0
      %4315 = vmatpush.bf16.msra.mxu0 0
      %4316 = vmatpush.bf16.msra.mxu0 0
      %4317 = vmatpush.bf16.msra.mxu0 0
      %4318 = vmatpush.bf16.msra.mxu0 0
      %4319 = vmatpush.bf16.msra.mxu0 0
      %4320 = vmatpush.bf16.msra.mxu0 0
      %4321 = vmatpush.bf16.msra.mxu0 %v4300
      %4322 = vmatpush.bf16.msra.mxu0 %v4299
      %4323 = vmatmul.bf16.gmra.mxu0 %v4304
      %v4324 = vpop.f32.mrf.mxu0
      %v4325 = vadd.f32 %v4289, %v4324
      %v4326 = vpop.f32.mrf.mxu0
      %v4327 = vadd.f32 %v4289, %v4326
      %4328 = vmatmul.bf16.gmra.mxu0 %v4307
      %v4329 = vpop.f32.mrf.mxu0
      %v4330 = vadd.f32 %v4289, %v4329
      %v4331 = vpop.f32.mrf.mxu0
      %v4332 = vadd.f32 %v4289, %v4331
      %4333 = vmatmul.bf16.gmra.mxu0 %v4310
      %v4334 = vpop.f32.mrf.mxu0
      %v4335 = vadd.f32 %v4289, %v4334
      %v4336 = vpop.f32.mrf.mxu0
      %v4337 = vadd.f32 %v4289, %v4336
      %4338 = vmatmul.bf16.gmra.mxu0 %v4313
      %v4339 = vpop.f32.mrf.mxu0
      %v4340 = vadd.f32 %v4289, %v4339
      %v4341 = vpop.f32.mrf.mxu0
      %v4342 = vadd.f32 %v4289, %v4341
      %4343 = vdwg.mxu0
      %v4344 = vmul.f32 %v4325, 0.5
      %v4345 = vmul.f32 %v4327, 0.5
      %v4346 = vmul.f32 %v4330, 0.5
      %v4347 = vmul.f32 %v4332, 0.5
      %v4348 = vmul.f32 %v4335, 0.5
      %v4349 = vmul.f32 %v4337, 0.5
      %v4350 = vmul.f32 %v4340, 0.5
      %v4351 = vmul.f32 %v4342, 0.5
      %v4352 = vmul.f32 %v4325, 0.70710677
      %v4353 = vmul.f32 %v4327, 0.70710677
      %v4354 = vmul.f32 %v4330, 0.70710677
      %v4355 = vmul.f32 %v4332, 0.70710677
      %v4356 = vmul.f32 %v4335, 0.70710677
      %v4357 = vmul.f32 %v4337, 0.70710677
      %v4358 = vmul.f32 %v4340, 0.70710677
      %v4359 = vmul.f32 %v4342, 0.70710677
      %v4360 = vand.u32 2147483647, %v4352
      %v4361 = vand.u32 2147483647, %v4353
      %v4362 = vand.u32 2147483647, %v4354
      %v4363 = vand.u32 2147483647, %v4355
      %v4364 = vand.u32 2147483647, %v4356
      %v4365 = vand.u32 2147483647, %v4357
      %v4366 = vand.u32 2147483647, %v4358
      %v4367 = vand.u32 2147483647, %v4359
      %v4368 = vmul.f32 %v4360, 0.3275911
      %v4369 = vmul.f32 %v4361, 0.3275911
      %v4370 = vmul.f32 %v4362, 0.3275911
      %v4371 = vmul.f32 %v4363, 0.3275911
      %v4372 = vmul.f32 %v4364, 0.3275911
      %v4373 = vmul.f32 %v4365, 0.3275911
      %v4374 = vmul.f32 %v4366, 0.3275911
      %v4375 = vmul.f32 %v4367, 0.3275911
      %v4376 = vadd.f32 %v4368, 1.0
      %v4377 = vadd.f32 %v4369, 1.0
      %v4378 = vadd.f32 %v4370, 1.0
      %v4379 = vadd.f32 %v4371, 1.0
      %v4380 = vadd.f32 %v4372, 1.0
      %v4381 = vadd.f32 %v4373, 1.0
      %v4382 = vadd.f32 %v4374, 1.0
      %v4383 = vadd.f32 %v4375, 1.0
      %v4384 = vrcp.pop %v4376
      %v4385 = vmul.f32 %v4376, %v4384
      %v4386 = vsub.f32 1.0, %v4385
      %v4387 = vmul.f32 %v4384, %v4386
      %v4388 = vadd.f32 %v4384, %v4387
      %vm4389 = vweird.f32 %v4376
      %vm4390 = vweird.f32 %v4384
      %vm4391 = vmor %vm4389, %vm4390
      %v4392 = vsel %vm4391, %v4384, %v4388
      %v4393 = vand.u32 2147483647, %v4376
      %vm4394 = vcmp.eq.f32.partialorder %v4393, 8.507059e+37
      %v4395 = vand.u32 %v4376, 2147483648
      %v4396 = vor.u32 1.1754944e-38, %v4395
      %v4397 = vsel %vm4394, %v4396, %v4392
      %v4398 = vmul.f32 1.0, %v4397
      %v4399 = vrcp.pop %v4377
      %v4400 = vmul.f32 %v4377, %v4399
      %v4401 = vsub.f32 1.0, %v4400
      %v4402 = vmul.f32 %v4399, %v4401
      %v4403 = vadd.f32 %v4399, %v4402
      %vm4404 = vweird.f32 %v4377
      %vm4405 = vweird.f32 %v4399
      %vm4406 = vmor %vm4404, %vm4405
      %v4407 = vsel %vm4406, %v4399, %v4403
      %v4408 = vand.u32 2147483647, %v4377
      %vm4409 = vcmp.eq.f32.partialorder %v4408, 8.507059e+37
      %v4410 = vand.u32 %v4377, 2147483648
      %v4411 = vor.u32 1.1754944e-38, %v4410
      %v4412 = vsel %vm4409, %v4411, %v4407
      %v4413 = vmul.f32 1.0, %v4412
      %v4414 = vrcp.pop %v4378
      %v4415 = vmul.f32 %v4378, %v4414
      %v4416 = vsub.f32 1.0, %v4415
      %v4417 = vmul.f32 %v4414, %v4416
      %v4418 = vadd.f32 %v4414, %v4417
      %vm4419 = vweird.f32 %v4378
      %vm4420 = vweird.f32 %v4414
      %vm4421 = vmor %vm4419, %vm4420
      %v4422 = vsel %vm4421, %v4414, %v4418
      %v4423 = vand.u32 2147483647, %v4378
      %vm4424 = vcmp.eq.f32.partialorder %v4423, 8.507059e+37
      %v4425 = vand.u32 %v4378, 2147483648
      %v4426 = vor.u32 1.1754944e-38, %v4425
      %v4427 = vsel %vm4424, %v4426, %v4422
      %v4428 = vmul.f32 1.0, %v4427
      %v4429 = vrcp.pop %v4379
      %v4430 = vmul.f32 %v4379, %v4429
      %v4431 = vsub.f32 1.0, %v4430
      %v4432 = vmul.f32 %v4429, %v4431
      %v4433 = vadd.f32 %v4429, %v4432
      %vm4434 = vweird.f32 %v4379
      %vm4435 = vweird.f32 %v4429
      %vm4436 = vmor %vm4434, %vm4435
      %v4437 = vsel %vm4436, %v4429, %v4433
      %v4438 = vand.u32 2147483647, %v4379
      %vm4439 = vcmp.eq.f32.partialorder %v4438, 8.507059e+37
      %v4440 = vand.u32 %v4379, 2147483648
      %v4441 = vor.u32 1.1754944e-38, %v4440
      %v4442 = vsel %vm4439, %v4441, %v4437
      %v4443 = vmul.f32 1.0, %v4442
      %v4444 = vrcp.pop %v4380
      %v4445 = vmul.f32 %v4380, %v4444
      %v4446 = vsub.f32 1.0, %v4445
      %v4447 = vmul.f32 %v4444, %v4446
      %v4448 = vadd.f32 %v4444, %v4447
      %vm4449 = vweird.f32 %v4380
      %vm4450 = vweird.f32 %v4444
      %vm4451 = vmor %vm4449, %vm4450
      %v4452 = vsel %vm4451, %v4444, %v4448
      %v4453 = vand.u32 2147483647, %v4380
      %vm4454 = vcmp.eq.f32.partialorder %v4453, 8.507059e+37
      %v4455 = vand.u32 %v4380, 2147483648
      %v4456 = vor.u32 1.1754944e-38, %v4455
      %v4457 = vsel %vm4454, %v4456, %v4452
      %v4458 = vmul.f32 1.0, %v4457
      %v4459 = vrcp.pop %v4381
      %v4460 = vmul.f32 %v4381, %v4459
      %v4461 = vsub.f32 1.0, %v4460
      %v4462 = vmul.f32 %v4459, %v4461
      %v4463 = vadd.f32 %v4459, %v4462
      %vm4464 = vweird.f32 %v4381
      %vm4465 = vweird.f32 %v4459
      %vm4466 = vmor %vm4464, %vm4465
      %v4467 = vsel %vm4466, %v4459, %v4463
      %v4468 = vand.u32 2147483647, %v4381
      %vm4469 = vcmp.eq.f32.partialorder %v4468, 8.507059e+37
      %v4470 = vand.u32 %v4381, 2147483648
      %v4471 = vor.u32 1.1754944e-38, %v4470
      %v4472 = vsel %vm4469, %v4471, %v4467
      %v4473 = vmul.f32 1.0, %v4472
      %v4474 = vrcp.pop %v4382
      %v4475 = vmul.f32 %v4382, %v4474
      %v4476 = vsub.f32 1.0, %v4475
      %v4477 = vmul.f32 %v4474, %v4476
      %v4478 = vadd.f32 %v4474, %v4477
      %vm4479 = vweird.f32 %v4382
      %vm4480 = vweird.f32 %v4474
      %vm4481 = vmor %vm4479, %vm4480
      %v4482 = vsel %vm4481, %v4474, %v4478
      %v4483 = vand.u32 2147483647, %v4382
      %vm4484 = vcmp.eq.f32.partialorder %v4483, 8.507059e+37
      %v4485 = vand.u32 %v4382, 2147483648
      %v4486 = vor.u32 1.1754944e-38, %v4485
      %v4487 = vsel %vm4484, %v4486, %v4482
      %v4488 = vmul.f32 1.0, %v4487
      %v4489 = vrcp.pop %v4383
      %v4490 = vmul.f32 %v4383, %v4489
      %v4491 = vsub.f32 1.0, %v4490
      %v4492 = vmul.f32 %v4489, %v4491
      %v4493 = vadd.f32 %v4489, %v4492
      %vm4494 = vweird.f32 %v4383
      %vm4495 = vweird.f32 %v4489
      %vm4496 = vmor %vm4494, %vm4495
      %v4497 = vsel %vm4496, %v4489, %v4493
      %v4498 = vand.u32 2147483647, %v4383
      %vm4499 = vcmp.eq.f32.partialorder %v4498, 8.507059e+37
      %v4500 = vand.u32 %v4383, 2147483648
      %v4501 = vor.u32 1.1754944e-38, %v4500
      %v4502 = vsel %vm4499, %v4501, %v4497
      %v4503 = vmul.f32 1.0, %v4502
      %v4504 = vmul.f32 %v4398, 1.0614054
      %v4505 = vmul.f32 %v4413, 1.0614054
      %v4506 = vmul.f32 %v4428, 1.0614054
      %v4507 = vmul.f32 %v4443, 1.0614054
      %v4508 = vmul.f32 %v4458, 1.0614054
      %v4509 = vmul.f32 %v4473, 1.0614054
      %v4510 = vmul.f32 %v4488, 1.0614054
      %v4511 = vmul.f32 %v4503, 1.0614054
      %v4512 = vadd.f32 %v4504, -1.4531521
      %v4513 = vadd.f32 %v4505, -1.4531521
      %v4514 = vadd.f32 %v4506, -1.4531521
      %v4515 = vadd.f32 %v4507, -1.4531521
      %v4516 = vadd.f32 %v4508, -1.4531521
      %v4517 = vadd.f32 %v4509, -1.4531521
      %v4518 = vadd.f32 %v4510, -1.4531521
      %v4519 = vadd.f32 %v4511, -1.4531521
      %v4520 = vmul.f32 %v4512, %v4398
      %v4521 = vmul.f32 %v4513, %v4413
      %v4522 = vmul.f32 %v4514, %v4428
      %v4523 = vmul.f32 %v4515, %v4443
      %v4524 = vmul.f32 %v4516, %v4458
      %v4525 = vmul.f32 %v4517, %v4473
      %v4526 = vmul.f32 %v4518, %v4488
      %v4527 = vmul.f32 %v4519, %v4503
      %v4528 = vadd.f32 %v4520, 1.4214138
      %v4529 = vadd.f32 %v4521, 1.4214138
      %v4530 = vadd.f32 %v4522, 1.4214138
      %v4531 = vadd.f32 %v4523, 1.4214138
      %v4532 = vadd.f32 %v4524, 1.4214138
      %v4533 = vadd.f32 %v4525, 1.4214138
      %v4534 = vadd.f32 %v4526, 1.4214138
      %v4535 = vadd.f32 %v4527, 1.4214138
      %v4536 = vmul.f32 %v4528, %v4398
      %v4537 = vmul.f32 %v4529, %v4413
      %v4538 = vmul.f32 %v4530, %v4428
      %v4539 = vmul.f32 %v4531, %v4443
      %v4540 = vmul.f32 %v4532, %v4458
      %v4541 = vmul.f32 %v4533, %v4473
      %v4542 = vmul.f32 %v4534, %v4488
      %v4543 = vmul.f32 %v4535, %v4503
      %v4544 = vadd.f32 %v4536, -0.28449672
      %v4545 = vadd.f32 %v4537, -0.28449672
      %v4546 = vadd.f32 %v4538, -0.28449672
      %v4547 = vadd.f32 %v4539, -0.28449672
      %v4548 = vadd.f32 %v4540, -0.28449672
      %v4549 = vadd.f32 %v4541, -0.28449672
      %v4550 = vadd.f32 %v4542, -0.28449672
      %v4551 = vadd.f32 %v4543, -0.28449672
      %v4552 = vmul.f32 %v4544, %v4398
      %v4553 = vmul.f32 %v4545, %v4413
      %v4554 = vmul.f32 %v4546, %v4428
      %v4555 = vmul.f32 %v4547, %v4443
      %v4556 = vmul.f32 %v4548, %v4458
      %v4557 = vmul.f32 %v4549, %v4473
      %v4558 = vmul.f32 %v4550, %v4488
      %v4559 = vmul.f32 %v4551, %v4503
      %v4560 = vadd.f32 %v4552, 0.2548296
      %v4561 = vadd.f32 %v4553, 0.2548296
      %v4562 = vadd.f32 %v4554, 0.2548296
      %v4563 = vadd.f32 %v4555, 0.2548296
      %v4564 = vadd.f32 %v4556, 0.2548296
      %v4565 = vadd.f32 %v4557, 0.2548296
      %v4566 = vadd.f32 %v4558, 0.2548296
      %v4567 = vadd.f32 %v4559, 0.2548296
      %v4568 = vmul.f32 %v4560, %v4398
      %v4569 = vmul.f32 %v4561, %v4413
      %v4570 = vmul.f32 %v4562, %v4428
      %v4571 = vmul.f32 %v4563, %v4443
      %v4572 = vmul.f32 %v4564, %v4458
      %v4573 = vmul.f32 %v4565, %v4473
      %v4574 = vmul.f32 %v4566, %v4488
      %v4575 = vmul.f32 %v4567, %v4503
      %v4576 = vsub.f32 0.0, %v4360
      %v4577 = vsub.f32 0.0, %v4361
      %v4578 = vsub.f32 0.0, %v4362
      %v4579 = vsub.f32 0.0, %v4363
      %v4580 = vsub.f32 0.0, %v4364
      %v4581 = vsub.f32 0.0, %v4365
      %v4582 = vsub.f32 0.0, %v4366
      %v4583 = vsub.f32 0.0, %v4367
      %v4584 = vmul.f32 %v4576, %v4360
      %v4585 = vmul.f32 %v4577, %v4361
      %v4586 = vmul.f32 %v4578, %v4362
      %v4587 = vmul.f32 %v4579, %v4363
      %v4588 = vmul.f32 %v4580, %v4364
      %v4589 = vmul.f32 %v4581, %v4365
      %v4590 = vmul.f32 %v4582, %v4366
      %v4591 = vmul.f32 %v4583, %v4367
      %v4592 = vmul.f32 %v4584, 1.442695
      %v4593 = vpow.pop %v4592
      %v4594 = vmul.f32 %v4585, 1.442695
      %v4595 = vpow.pop %v4594
      %v4596 = vmul.f32 %v4586, 1.442695
      %v4597 = vpow.pop %v4596
      %v4598 = vmul.f32 %v4587, 1.442695
      %v4599 = vpow.pop %v4598
      %v4600 = vmul.f32 %v4588, 1.442695
      %v4601 = vpow.pop %v4600
      %v4602 = vmul.f32 %v4589, 1.442695
      %v4603 = vpow.pop %v4602
      %v4604 = vmul.f32 %v4590, 1.442695
      %v4605 = vpow.pop %v4604
      %v4606 = vmul.f32 %v4591, 1.442695
      %v4607 = vpow.pop %v4606
      %v4608 = vmul.f32 %v4568, %v4593
      %v4609 = vmul.f32 %v4569, %v4595
      %v4610 = vmul.f32 %v4570, %v4597
      %v4611 = vmul.f32 %v4571, %v4599
      %v4612 = vmul.f32 %v4572, %v4601
      %v4613 = vmul.f32 %v4573, %v4603
      %v4614 = vmul.f32 %v4574, %v4605
      %v4615 = vmul.f32 %v4575, %v4607
      %v4616 = vsub.f32 1.0, %v4608
      %v4617 = vsub.f32 1.0, %v4609
      %v4618 = vsub.f32 1.0, %v4610
      %v4619 = vsub.f32 1.0, %v4611
      %v4620 = vsub.f32 1.0, %v4612
      %v4621 = vsub.f32 1.0, %v4613
      %v4622 = vsub.f32 1.0, %v4614
      %v4623 = vsub.f32 1.0, %v4615
      %vm4624 = vcmp.ge.f32.partialorder %v4352, 0.0
      %vm4625 = vcmp.ge.f32.partialorder %v4353, 0.0
      %vm4626 = vcmp.ge.f32.partialorder %v4354, 0.0
      %vm4627 = vcmp.ge.f32.partialorder %v4355, 0.0
      %vm4628 = vcmp.ge.f32.partialorder %v4356, 0.0
      %vm4629 = vcmp.ge.f32.partialorder %v4357, 0.0
      %vm4630 = vcmp.ge.f32.partialorder %v4358, 0.0
      %vm4631 = vcmp.ge.f32.partialorder %v4359, 0.0
      %v4632 = vsub.f32 0.0, %v4616
      %v4633 = vsub.f32 0.0, %v4617
      %v4634 = vsub.f32 0.0, %v4618
      %v4635 = vsub.f32 0.0, %v4619
      %v4636 = vsub.f32 0.0, %v4620
      %v4637 = vsub.f32 0.0, %v4621
      %v4638 = vsub.f32 0.0, %v4622
      %v4639 = vsub.f32 0.0, %v4623
      %v4640 = vsel %vm4624, %v4616, %v4632
      %v4641 = vsel %vm4625, %v4617, %v4633
      %v4642 = vsel %vm4626, %v4618, %v4634
      %v4643 = vsel %vm4627, %v4619, %v4635
      %v4644 = vsel %vm4628, %v4620, %v4636
      %v4645 = vsel %vm4629, %v4621, %v4637
      %v4646 = vsel %vm4630, %v4622, %v4638
      %v4647 = vsel %vm4631, %v4623, %v4639
      %v4648 = vadd.f32 %v4640, 1.0
      %v4649 = vadd.f32 %v4641, 1.0
      %v4650 = vadd.f32 %v4642, 1.0
      %v4651 = vadd.f32 %v4643, 1.0
      %v4652 = vadd.f32 %v4644, 1.0
      %v4653 = vadd.f32 %v4645, 1.0
      %v4654 = vadd.f32 %v4646, 1.0
      %v4655 = vadd.f32 %v4647, 1.0
      %v4656 = vmul.f32 %v4344, %v4648
      %v4657 = vmul.f32 %v4345, %v4649
      %v4658 = vmul.f32 %v4346, %v4650
      %v4659 = vmul.f32 %v4347, %v4651
      %v4660 = vmul.f32 %v4348, %v4652
      %v4661 = vmul.f32 %v4349, %v4653
      %v4662 = vmul.f32 %v4350, %v4654
      %v4663 = vmul.f32 %v4351, %v4655
      %v4664 = vpack.c.bf16 %v4656, %v4656
      %v4665 = vpack.c.bf16 %v4657, %v4657
      %v4666 = vpack.c.bf16 %v4658, %v4658
      %v4667 = vpack.c.bf16 %v4659, %v4659
      %v4668 = vpack.c.bf16 %v4660, %v4660
      %v4669 = vpack.c.bf16 %v4661, %v4661
      %v4670 = vpack.c.bf16 %v4662, %v4662
      %v4671 = vpack.c.bf16 %v4663, %v4663
      %4672 = vst [vmem:[%s516] sm:$0xf] %v4664
      %4673 = vst [vmem:[%s516 + $0x4] sm:$0xf] %v4665
      %4674 = vst [vmem:[%s516 + $0x8] sm:$0xf] %v4666
      %4675 = vst [vmem:[%s516 + $0xc] sm:$0xf] %v4667
      %4676 = vst [vmem:[%s516 + $0x10] sm:$0xf] %v4668
      %4677 = vst [vmem:[%s516 + $0x14] sm:$0xf] %v4669
      %4678 = vst [vmem:[%s516 + $0x18] sm:$0xf] %v4670
      %4679 = vst [vmem:[%s516 + $0x1c] sm:$0xf] %v4671
      %v4680 = vadd.f32 %v4656, %v4657
      %v4681 = vadd.f32 %v4680, %v4658
      %v4682 = vadd.f32 %v4681, %v4659
      %v4683 = vadd.f32 %v4682, %v4660
      %v4684 = vadd.f32 %v4683, %v4661
      %v4685 = vadd.f32 %v4684, %v4662
      %v4686 = vadd.f32 %v4685, %v4663
      %v4687 = vrot.slane %v4686, 4
      %v4688 = vadd.f32 %v4686, %v4687
      %v4689 = vrot.slane %v4688, 2
      %v4690 = vadd.f32 %v4688, %v4689
      %v4691 = vrot.slane %v4690, 1
      %v4692 = vadd.f32 %v4690, %v4691
      %v4693 = vmul.f32 %v4656, %v4656
      %v4694 = vmul.f32 %v4657, %v4657
      %v4695 = vmul.f32 %v4658, %v4658
      %v4696 = vmul.f32 %v4659, %v4659
      %v4697 = vmul.f32 %v4660, %v4660
      %v4698 = vmul.f32 %v4661, %v4661
      %v4699 = vmul.f32 %v4662, %v4662
      %v4700 = vmul.f32 %v4663, %v4663
      %v4701 = vadd.f32 %v4693, %v4694
      %v4702 = vadd.f32 %v4701, %v4695
      %v4703 = vadd.f32 %v4702, %v4696
      %v4704 = vadd.f32 %v4703, %v4697
      %v4705 = vadd.f32 %v4704, %v4698
      %v4706 = vadd.f32 %v4705, %v4699
      %v4707 = vadd.f32 %v4706, %v4700
      %v4708 = vrot.slane %v4707, 4
      %v4709 = vadd.f32 %v4707, %v4708
      %v4710 = vrot.slane %v4709, 2
      %v4711 = vadd.f32 %v4709, %v4710
      %v4712 = vrot.slane %v4711, 1
      %v4713 = vadd.f32 %v4711, %v4712
      %vm4714 = vcmask 1040384
      %v4715 = vsel %vm4714, %v4692, %v4713
      %vm4716 = vcmask 1041408
      %v4717 = vsel %vm4716, %v4715, 0.0
      %4718 = vst [vmem:[%s521] sm:$0xff] %v4717
      %s4719 = smul.u32 8, %s27
      %p4720 = scmp.lt.s32.totalorder %s4719, 15
      %s4721 = scalar_select %p4720, %s4719, 15
      %s4722 = smul.addr %s4721, 8
      %s4723 = scalar_lea.vmem %s13, %s4722
      %s4724 = smul.u32 8, %s27
      %p4725 = scmp.lt.s32.totalorder %s4724, 15
      %s4726 = scalar_select %p4725, %s4724, 15
      %s4727 = smul.addr %s4726, 4
      %s4728 = scalar_lea.vmem %s14, %s4727
      %p4729 = scmp.lt.s32.totalorder %s27, 1
      %s4730 = scalar_select %p4729, %s27, 1
      %s4731 = smul.addr %s4730, 8
      %s4732 = scalar_lea.vmem %s15, %s4731
      // Predicated region
      $region73: #{cmt_layer_forward.3} parent=71 // pred_check
        %p4733 = pneg %p323
      $region74: #{cmt_layer_forward.3} parent=71 // pred_check_branch
        %4735 = sbr.rel (%p4733) target = $region76
      $region75: #{cmt_layer_forward.3} parent=71 // pred_region
        %s4736 = smul.u32 8, %s27
      $region76: #{cmt_layer_forward.3} parent=71 // pred_fallthru
        _
      // Predicated region
      $region77: #{cmt_layer_forward.3} parent=71 // pred_check
        %p4737 = pneg %p349
      $region78: #{cmt_layer_forward.3} parent=71 // pred_check_branch
        %4739 = sbr.rel (%p4737) target = $region80
      $region79: #{cmt_layer_forward.3} parent=71 // pred_region
        %s4740 = smul.u32 8, %s27
      $region80: #{cmt_layer_forward.3} parent=71 // pred_fallthru
        _
      // Predicated region
      $region81: #{cmt_layer_forward.3} parent=71 // pred_check
        %p4741 = pneg %p375
      $region82: #{cmt_layer_forward.3} parent=71 // pred_check_branch
        %4743 = sbr.rel (%p4741) target = $region84
      $region83: #{cmt_layer_forward.3} parent=71 // pred_region
        _
      $region84: #{cmt_layer_forward.3} parent=71 // pred_fallthru
        _
    $region72: #{cmt_layer_forward.3} parent=5 // pred_fallthru
      _
    %p4744 = scmp.le.s32.totalorder 2, %s22
    // Predicated region
    $region85: #{cmt_layer_forward.3} parent=5 // pred_check
      %p4745 = pneg %p4744
    $region86: #{cmt_layer_forward.3} parent=5 // pred_check_branch
      %4747 = sbr.rel (%p4745) target = $region88
    $region87: #{cmt_layer_forward.3} parent=5 // pred_region
      %s4748 = ssub.s32 %s22, 2
      // Predicated region
      $region89: #{cmt_layer_forward.3} parent=87 // pred_check
        %p4749 = pneg %p329
      $region90: #{cmt_layer_forward.3} parent=87 // pred_check_branch
        %4751 = sbr.rel (%p4749) target = $region92
      $region91: #{cmt_layer_forward.3} parent=87 // pred_region
        %s4752 = smul.u32 8, %s28
        %p4753 = scmp.lt.s32.totalorder %s4752, 15
        %s4754 = scalar_select %p4753, %s4752, 15
        %s4755 = smul.addr %s4754, 8
        %s4756 = scalar_lea.vmem %s13, %s4755
      $region92: #{cmt_layer_forward.3} parent=87 // pred_fallthru
        _
      // Predicated region
      $region93: #{cmt_layer_forward.3} parent=87 // pred_check
        %p4757 = pneg %p355
      $region94: #{cmt_layer_forward.3} parent=87 // pred_check_branch
        %4759 = sbr.rel (%p4757) target = $region96
      $region95: #{cmt_layer_forward.3} parent=87 // pred_region
        %s4760 = smul.u32 8, %s28
        %p4761 = scmp.lt.s32.totalorder %s4760, 15
        %s4762 = scalar_select %p4761, %s4760, 15
        %s4763 = smul.addr %s4762, 4
        %s4764 = scalar_lea.vmem %s14, %s4763
      $region96: #{cmt_layer_forward.3} parent=87 // pred_fallthru
        _
      // Predicated region
      $region97: #{cmt_layer_forward.3} parent=87 // pred_check
        %p4765 = pneg %p381
      $region98: #{cmt_layer_forward.3} parent=87 // pred_check_branch
        %4767 = sbr.rel (%p4765) target = $region100
      $region99: #{cmt_layer_forward.3} parent=87 // pred_region
        %p4768 = scmp.lt.s32.totalorder %s28, 1
        %s4769 = scalar_select %p4768, %s28, 1
        %s4770 = smul.addr %s4769, 8
        %s4771 = scalar_lea.vmem %s15, %s4770
      $region100: #{cmt_layer_forward.3} parent=87 // pred_fallthru
        _
    $region88: #{cmt_layer_forward.3} parent=5 // pred_fallthru
      _
  $region6: #{cmt_layer_forward.3} parent=0 // loop_footer
    %s26 = sadd.s32 1, %s22
  $region7: #{cmt_layer_forward.3} parent=0 // loop_footer_branch
    %21 = sbr.rel target = $region3
  $region8: #{cmt_layer_forward.3} parent=0 // loop_exit
    _

</llo_original>
